<compile_context>
chip_gen: v6e
topology: v6e:2x2x1
jax: 0.10.0
libtpu: 0.0.40
codegen_flags: <defaults>
</compile_context>

<pallas_src>
import functools
import math

import jax
import jax.numpy as jnp
from jax.experimental import pallas as pl
from jax.experimental.pallas import tpu as pltpu

# ---------------- config (small synthetic, lane-dense feature dims) ----------------
BATCH = 2
C_IN = 3
IMG = 16
KSIZE = 3
PATCH_K = C_IN * KSIZE * KSIZE        # 27
HW = IMG * IMG                        # 256
NHW = BATCH * HW                      # 512
BACKBONE_DIM = 128                    # backbone.output_dim
PROJ_HID = 128                        # projection_MLP hidden_dim
PROJ_OUT = 128                        # projection_MLP out_dim
RNN_HID = 128                         # prediction_RNN hidden_size
RNN_OUT = PROJ_OUT                    # prediction_RNN out_dim (must match z dim)
ANGLE = 10.0
ROTATE_TIMES = 3

VMEM_SPEC = pl.BlockSpec(memory_space=pltpu.MemorySpace.VMEM)


# ---------------- fully fused forward kernel ----------------
def _neg_cos_mean(p, z):
    # D(p, z) 'simplified' = -mean(cosine_similarity(p, z, dim=-1)), eps=1e-8
    dot = jnp.sum(p * z, axis=-1, keepdims=True)
    pn = jnp.sqrt(jnp.sum(p * p, axis=-1, keepdims=True))
    zn = jnp.sqrt(jnp.sum(z * z, axis=-1, keepdims=True))
    cos = dot / jnp.maximum(pn * zn, 1e-8)
    return -jnp.mean(cos, axis=0, keepdims=True)                       # (1, 1)


def _hipposiam_kernel(patches_ref, pool_ref, cw_ref, cb_ref,
                      p1w_ref, p1b_ref, p1g_ref, p1bt_ref,
                      p2w_ref, p2b_ref, p2g_ref, p2bt_ref,
                      p3w_ref, p3b_ref, p3g_ref, p3bt_ref,
                      wi_ref, bi_ref, wh_ref, bh_ref, wo_ref, bo_ref,
                      loss_ref, *, rotate_times):
    # ---- hoist every weight load out of the unrolled loops (no re-loads) ----
    cw, cb = cw_ref[...], cb_ref[...]
    pool = pool_ref[...]
    w1, b1, g1, be1 = p1w_ref[...], p1b_ref[...], p1g_ref[...], p1bt_ref[...]
    w2, b2, g2, be2 = p2w_ref[...], p2b_ref[...], p2g_ref[...], p2bt_ref[...]
    w3, b3, g3, be3 = p3w_ref[...], p3b_ref[...], p3g_ref[...], p3bt_ref[...]
    wi, bi = wi_ref[...], bi_ref[...]
    wh, bh = wh_ref[...], bh_ref[...]
    wo, bo = wo_ref[...], bo_ref[...]

    def linear_bn(x, w, b, g, beta, relu):
        # Linear -> BatchNorm1d (training mode: batch stats, biased var) -> [ReLU]
        y = jnp.dot(x, w, preferred_element_type=jnp.float32) + b
        mean = jnp.mean(y, axis=0, keepdims=True)
        var = jnp.mean(jnp.square(y - mean), axis=0, keepdims=True)
        out = (y - mean) * jax.lax.rsqrt(var + 1e-5) * g + beta
        return jnp.maximum(out, 0.0) if relu else out

    def encode(t):
        # One encoder call == one rotation branch (own N=BATCH batch, own BN stats).
        patches = patches_ref[t]                                        # (NHW, PATCH_K)
        y = jnp.dot(patches, cw, preferred_element_type=jnp.float32) + cb
        y = jnp.maximum(y, 0.0)                                         # (NHW, BACKBONE_DIM)
        # Global average pool over each sample's HW rows as a tiny MXU matmul.
        feat = jnp.dot(pool, y, preferred_element_type=jnp.float32)     # (BATCH, BACKBONE_DIM)
        x = linear_bn(feat, w1, b1, g1, be1, relu=True)
        x = linear_bn(x, w2, b2, g2, be2, relu=True)
        return linear_bn(x, w3, b3, g3, be3, relu=False)                # (BATCH, PROJ_OUT)

    # use_aug=False -> z1 == z2 == encode(0); zt1 == zt2 == encode(i). Each
    # unique image is encoded exactly once (static unroll over T+1 branches).
    z = [encode(t) for t in range(rotate_times + 1)]

    # prediction_RNN: fed z1/z2 at EVERY step (matches the reference module), so
    # the i2h contribution is a loop invariant computed once.
    zin = jnp.dot(z[0], wi, preferred_element_type=jnp.float32) + bi + bh

    def step(h):
        h_new = jnp.tanh(zin + jnp.dot(h, wh, preferred_element_type=jnp.float32))
        p = jnp.dot(h_new, wo, preferred_element_type=jnp.float32) + bo
        return h_new, p

    h = jnp.zeros((BATCH, RNN_HID), jnp.float32)                        # predictor.init_hidden
    h, p1 = step(h)                                                     # p1 = h(z1) (stateful)
    h, p2 = step(h)                                                     # p2 = h(z2) (stateful)
    total = 0.5 * (_neg_cos_mean(p1, z[0]) + _neg_cos_mean(p2, z[0]))   # sym_loss, z2 == z1
    for i in range(1, rotate_times + 1):                                # static unroll (T=3)
        h, p1 = step(h)                                                 # still fed z1/z2
        h, p2 = step(h)
        total = total + 0.5 * (_neg_cos_mean(p1, z[i]) + _neg_cos_mean(p2, z[i]))
    loss_ref[...] = total / (rotate_times + 1)


# ---------------- wrapper-side glue (rotation + im2col, done once per forward) ----------------
def _rotate_indices(H, W, angle_deg):
    # TF.rotate(img, angle): nearest interpolation, expand=False, fill=0.
    # TODO(synk): torchvision's exact center / half-pixel grid alignment and rotation
    # sign convention are not reproduced bit-for-bit.
    theta = jnp.deg2rad(jnp.float32(angle_deg))
    cy, cx = (H - 1) / 2.0, (W - 1) / 2.0
    yy, xx = jnp.meshgrid(jnp.arange(H, dtype=jnp.float32),
                          jnp.arange(W, dtype=jnp.float32), indexing="ij")
    cos_t, sin_t = jnp.cos(theta), jnp.sin(theta)
    xo, yo = xx - cx, yy - cy
    xs = cos_t * xo + sin_t * yo + cx
    ys = -sin_t * xo + cos_t * yo + cy
    xi = jnp.round(xs).astype(jnp.int32)
    yi = jnp.round(ys).astype(jnp.int32)
    valid = (xi >= 0) & (xi < W) & (yi >= 0) & (yi < H)
    xi = jnp.clip(xi, 0, W - 1)
    yi = jnp.clip(yi, 0, H - 1)
    return yi, xi, valid


def _apply_rotate(x, yi, xi, valid):
    gathered = x[:, :, yi, xi]                                          # (N, C, H, W)
    return jnp.where(valid[None, None], gathered, 0.0)


def _im2col(x_stack):
    # (B, N, C, H, W) -> (B, N*H*W, C*3*3), computed once for all rotation branches.
    B, N, C, H, W = x_stack.shape
    xp = jnp.pad(x_stack, ((0, 0), (0, 0), (0, 0), (1, 1), (1, 1)))
    cols = [xp[:, :, :, dh:dh + H, dw:dw + W] for dh in range(KSIZE) for dw in range(KSIZE)]
    p = jnp.stack(cols, axis=3)                                         # (B, N, C, 9, H, W)
    p = p.reshape(B, N, C * KSIZE * KSIZE, H, W)                        # (c, kh, kw) flattened
    p = p.transpose(0, 1, 3, 4, 2)                                      # (B, N, H, W, C*9)
    return p.reshape(B, N * H * W, C * KSIZE * KSIZE)


def hipposiam_forward(params, x1, x2, *, angle=ANGLE, rotate_times=ROTATE_TIMES):
    # use_aug=False -> both branches use x1; x2 is unused (matches the PyTorch default path).
    del x2
    _, _, H, W = x1.shape
    yi, xi, valid = _rotate_indices(H, W, angle)                        # hoisted out of the loop
    branches = [x1]
    xt = x1                                                             # xt1 == xt2 -> rotate once
    for _ in range(rotate_times):
        xt = _apply_rotate(xt, yi, xi, valid)                           # iterative nearest rotate
        branches.append(xt)
    x_stack = jnp.stack(branches, axis=0)                               # (T+1, N, C, H, W)
    patches = _im2col(x_stack)                                          # (T+1, N*H*W, C*9)
    # Per-sample global-average-pool matrix (1/HW block-diagonal), built once.
    pool_mat = ((jnp.arange(NHW) // HW) == jnp.arange(BATCH)[:, None]).astype(jnp.float32) / HW

    loss = pl.pallas_call(
        functools.partial(_hipposiam_kernel, rotate_times=rotate_times),
        out_shape=jax.ShapeDtypeStruct((1, 1), jnp.float32),
        in_specs=[VMEM_SPEC] * 22,
        out_specs=VMEM_SPEC,
    )(patches, pool_mat, params["conv_w"], params["conv_b"],
      params["p1_w"], params["p1_b"], params["p1_g"], params["p1_beta"],
      params["p2_w"], params["p2_b"], params["p2_g"], params["p2_beta"],
      params["p3_w"], params["p3_b"], params["p3_g"], params["p3_beta"],
      params["rnn_wi"], params["rnn_bi"], params["rnn_wh"], params["rnn_bh"],
      params["rnn_wo"], params["rnn_bo"])
    return {"loss": loss[0, 0]}


# ---------------- deterministic parameter init ----------------
def _linear_init(key, fan_in, fan_out):
    kw, kb = jax.random.split(key)
    bound = 1.0 / math.sqrt(fan_in)
    w = jax.random.uniform(kw, (fan_in, fan_out), jnp.float32, -bound, bound)
    b = jax.random.uniform(kb, (1, fan_out), jnp.float32, -bound, bound)
    return w, b


def init_params(key):
    ks = jax.random.split(key, 7)
    conv_w, conv_b = _linear_init(ks[0], PATCH_K, BACKBONE_DIM)         # conv weight (C*kh*kw, F)
    p1_w, p1_b = _linear_init(ks[1], BACKBONE_DIM, PROJ_HID)
    p2_w, p2_b = _linear_init(ks[2], PROJ_HID, PROJ_HID)
    p3_w, p3_b = _linear_init(ks[3], PROJ_HID, PROJ_OUT)
    rnn_wi, rnn_bi = _linear_init(ks[4], PROJ_OUT, RNN_HID)
    rnn_wh, rnn_bh = _linear_init(ks[5], RNN_HID, RNN_HID)
    rnn_wo, rnn_bo = _linear_init(ks[6], RNN_HID, RNN_OUT)
    ones = lambda n: jnp.ones((1, n), jnp.float32)
    zeros = lambda n: jnp.zeros((1, n), jnp.float32)
    return dict(
        conv_w=conv_w, conv_b=conv_b,
        p1_w=p1_w, p1_b=p1_b, p1_g=ones(PROJ_HID), p1_beta=zeros(PROJ_HID),
        p2_w=p2_w, p2_b=p2_b, p2_g=ones(PROJ_HID), p2_beta=zeros(PROJ_HID),
        p3_w=p3_w, p3_b=p3_b, p3_g=ones(PROJ_OUT), p3_beta=zeros(PROJ_OUT),
        rnn_wi=rnn_wi, rnn_bi=rnn_bi, rnn_wh=rnn_wh, rnn_bh=rnn_bh,
        rnn_wo=rnn_wo, rnn_bo=rnn_bo,
    )


if __name__ == "__main__":
    key = jax.random.PRNGKey(0)
    kx1, kx2, kp = jax.random.split(key, 3)
    x1 = jax.random.normal(kx1, (BATCH, C_IN, IMG, IMG), jnp.float32)
    x2 = jax.random.normal(kx2, (BATCH, C_IN, IMG, IMG), jnp.float32)
    params = init_params(kp)

    fwd = jax.jit(functools.partial(hipposiam_forward, angle=ANGLE, rotate_times=ROTATE_TIMES))
    out = fwd(params, x1, x2)
    jax.block_until_ready(out["loss"])
    assert out["loss"].shape == ()
    print("KERNEL_OK")
</pallas_src>

<mosaic_0001>
module attributes {stable_mosaic.version = 11 : i64} {
  func.func @_hipposiam_kernel(%arg0: memref<4x512x27xf32, #tpu.memory_space<vmem>>, %arg1: memref<2x512xf32, #tpu.memory_space<vmem>>, %arg2: memref<27x128xf32, #tpu.memory_space<vmem>>, %arg3: memref<1x128xf32, #tpu.memory_space<vmem>>, %arg4: memref<128x128xf32, #tpu.memory_space<vmem>>, %arg5: memref<1x128xf32, #tpu.memory_space<vmem>>, %arg6: memref<1x128xf32, #tpu.memory_space<vmem>>, %arg7: memref<1x128xf32, #tpu.memory_space<vmem>>, %arg8: memref<128x128xf32, #tpu.memory_space<vmem>>, %arg9: memref<1x128xf32, #tpu.memory_space<vmem>>, %arg10: memref<1x128xf32, #tpu.memory_space<vmem>>, %arg11: memref<1x128xf32, #tpu.memory_space<vmem>>, %arg12: memref<128x128xf32, #tpu.memory_space<vmem>>, %arg13: memref<1x128xf32, #tpu.memory_space<vmem>>, %arg14: memref<1x128xf32, #tpu.memory_space<vmem>>, %arg15: memref<1x128xf32, #tpu.memory_space<vmem>>, %arg16: memref<128x128xf32, #tpu.memory_space<vmem>>, %arg17: memref<1x128xf32, #tpu.memory_space<vmem>>, %arg18: memref<128x128xf32, #tpu.memory_space<vmem>>, %arg19: memref<1x128xf32, #tpu.memory_space<vmem>>, %arg20: memref<128x128xf32, #tpu.memory_space<vmem>>, %arg21: memref<1x128xf32, #tpu.memory_space<vmem>>, %arg22: memref<1x1xf32, #tpu.memory_space<vmem>>) attributes {dimension_semantics = [], scalar_prefetch = 0 : i64, scratch_operands = 0 : i64, tpu.core_type = #tpu.core_type<tc>} {
    %c0 = arith.constant 0 : index
    %c0_0 = arith.constant 0 : index
    %0 = vector.load %arg2[%c0, %c0_0] : memref<27x128xf32, #tpu.memory_space<vmem>>, vector<27x128xf32>
    %c0_1 = arith.constant 0 : index
    %c0_2 = arith.constant 0 : index
    %1 = vector.load %arg3[%c0_1, %c0_2] : memref<1x128xf32, #tpu.memory_space<vmem>>, vector<1x128xf32>
    %c0_3 = arith.constant 0 : index
    %c0_4 = arith.constant 0 : index
    %2 = vector.load %arg1[%c0_3, %c0_4] : memref<2x512xf32, #tpu.memory_space<vmem>>, vector<2x512xf32>
    %c0_5 = arith.constant 0 : index
    %c0_6 = arith.constant 0 : index
    %3 = vector.load %arg4[%c0_5, %c0_6] : memref<128x128xf32, #tpu.memory_space<vmem>>, vector<128x128xf32>
    %c0_7 = arith.constant 0 : index
    %c0_8 = arith.constant 0 : index
    %4 = vector.load %arg5[%c0_7, %c0_8] : memref<1x128xf32, #tpu.memory_space<vmem>>, vector<1x128xf32>
    %c0_9 = arith.constant 0 : index
    %c0_10 = arith.constant 0 : index
    %5 = vector.load %arg6[%c0_9, %c0_10] : memref<1x128xf32, #tpu.memory_space<vmem>>, vector<1x128xf32>
    %c0_11 = arith.constant 0 : index
    %c0_12 = arith.constant 0 : index
    %6 = vector.load %arg7[%c0_11, %c0_12] : memref<1x128xf32, #tpu.memory_space<vmem>>, vector<1x128xf32>
    %c0_13 = arith.constant 0 : index
    %c0_14 = arith.constant 0 : index
    %7 = vector.load %arg8[%c0_13, %c0_14] : memref<128x128xf32, #tpu.memory_space<vmem>>, vector<128x128xf32>
    %c0_15 = arith.constant 0 : index
    %c0_16 = arith.constant 0 : index
    %8 = vector.load %arg9[%c0_15, %c0_16] : memref<1x128xf32, #tpu.memory_space<vmem>>, vector<1x128xf32>
    %c0_17 = arith.constant 0 : index
    %c0_18 = arith.constant 0 : index
    %9 = vector.load %arg10[%c0_17, %c0_18] : memref<1x128xf32, #tpu.memory_space<vmem>>, vector<1x128xf32>
    %c0_19 = arith.constant 0 : index
    %c0_20 = arith.constant 0 : index
    %10 = vector.load %arg11[%c0_19, %c0_20] : memref<1x128xf32, #tpu.memory_space<vmem>>, vector<1x128xf32>
    %c0_21 = arith.constant 0 : index
    %c0_22 = arith.constant 0 : index
    %11 = vector.load %arg12[%c0_21, %c0_22] : memref<128x128xf32, #tpu.memory_space<vmem>>, vector<128x128xf32>
    %c0_23 = arith.constant 0 : index
    %c0_24 = arith.constant 0 : index
    %12 = vector.load %arg13[%c0_23, %c0_24] : memref<1x128xf32, #tpu.memory_space<vmem>>, vector<1x128xf32>
    %c0_25 = arith.constant 0 : index
    %c0_26 = arith.constant 0 : index
    %13 = vector.load %arg14[%c0_25, %c0_26] : memref<1x128xf32, #tpu.memory_space<vmem>>, vector<1x128xf32>
    %c0_27 = arith.constant 0 : index
    %c0_28 = arith.constant 0 : index
    %14 = vector.load %arg15[%c0_27, %c0_28] : memref<1x128xf32, #tpu.memory_space<vmem>>, vector<1x128xf32>
    %c0_29 = arith.constant 0 : index
    %c0_30 = arith.constant 0 : index
    %15 = vector.load %arg16[%c0_29, %c0_30] : memref<128x128xf32, #tpu.memory_space<vmem>>, vector<128x128xf32>
    %c0_31 = arith.constant 0 : index
    %c0_32 = arith.constant 0 : index
    %16 = vector.load %arg17[%c0_31, %c0_32] : memref<1x128xf32, #tpu.memory_space<vmem>>, vector<1x128xf32>
    %c0_33 = arith.constant 0 : index
    %c0_34 = arith.constant 0 : index
    %17 = vector.load %arg18[%c0_33, %c0_34] : memref<128x128xf32, #tpu.memory_space<vmem>>, vector<128x128xf32>
    %c0_35 = arith.constant 0 : index
    %c0_36 = arith.constant 0 : index
    %18 = vector.load %arg19[%c0_35, %c0_36] : memref<1x128xf32, #tpu.memory_space<vmem>>, vector<1x128xf32>
    %c0_37 = arith.constant 0 : index
    %c0_38 = arith.constant 0 : index
    %19 = vector.load %arg20[%c0_37, %c0_38] : memref<128x128xf32, #tpu.memory_space<vmem>>, vector<128x128xf32>
    %c0_39 = arith.constant 0 : index
    %c0_40 = arith.constant 0 : index
    %20 = vector.load %arg21[%c0_39, %c0_40] : memref<1x128xf32, #tpu.memory_space<vmem>>, vector<1x128xf32>
    %c0_41 = arith.constant 0 : index
    %c0_42 = arith.constant 0 : index
    %c0_43 = arith.constant 0 : index
    %21 = vector.load %arg0[%c0_41, %c0_42, %c0_43] : memref<4x512x27xf32, #tpu.memory_space<vmem>>, vector<1x512x27xf32>
    %22 = vector.shape_cast %21 : vector<1x512x27xf32> to vector<512x27xf32>
    %cst = arith.constant dense<0.000000e+00> : vector<512x128xf32>
    %23 = tpu.matmul %22, %0, %cst {dimension_numbers = #tpu.dot_dimension_numbers<[1], [0], [0], [1], [0, 0, 1, 1], [], []>} : vector<512x27xf32>, vector<27x128xf32>, vector<512x128xf32> -> vector<512x128xf32>
    %24 = vector.broadcast %1 : vector<1x128xf32> to vector<512x128xf32>
    %25 = arith.addf %23, %24 : vector<512x128xf32>
    %cst_44 = arith.constant 0.000000e+00 : f32
    %26 = vector.broadcast %cst_44 : f32 to vector<512x128xf32>
    %27 = arith.maximumf %25, %26 : vector<512x128xf32>
    %cst_45 = arith.constant dense<0.000000e+00> : vector<2x128xf32>
    %28 = tpu.matmul %2, %27, %cst_45 {dimension_numbers = #tpu.dot_dimension_numbers<[1], [0], [0], [1], [0, 0, 1, 1], [], []>} : vector<2x512xf32>, vector<512x128xf32>, vector<2x128xf32> -> vector<2x128xf32>
    %cst_46 = arith.constant dense<0.000000e+00> : vector<2x128xf32>
    %29 = tpu.matmul %28, %3, %cst_46 {dimension_numbers = #tpu.dot_dimension_numbers<[1], [0], [0], [1], [0, 0, 1, 1], [], []>} : vector<2x128xf32>, vector<128x128xf32>, vector<2x128xf32> -> vector<2x128xf32>
    %30 = vector.broadcast %4 : vector<1x128xf32> to vector<2x128xf32>
    %31 = arith.addf %29, %30 : vector<2x128xf32>
    %cst_47 = arith.constant dense<0.000000e+00> : vector<128xf32>
    %32 = vector.multi_reduction <add>, %31, %cst_47 [0] : vector<2x128xf32> to vector<128xf32>
    %33 = vector.shape_cast %32 : vector<128xf32> to vector<1x128xf32>
    %cst_48 = arith.constant 2.000000e+00 : f32
    %34 = vector.broadcast %cst_48 : f32 to vector<1x128xf32>
    %35 = arith.divf %33, %34 : vector<1x128xf32>
    %36 = vector.broadcast %35 : vector<1x128xf32> to vector<2x128xf32>
    %37 = arith.subf %31, %36 : vector<2x128xf32>
    %38 = arith.mulf %37, %37 : vector<2x128xf32>
    %cst_49 = arith.constant dense<0.000000e+00> : vector<128xf32>
    %39 = vector.multi_reduction <add>, %38, %cst_49 [0] : vector<2x128xf32> to vector<128xf32>
    %40 = vector.shape_cast %39 : vector<128xf32> to vector<1x128xf32>
    %cst_50 = arith.constant 2.000000e+00 : f32
    %41 = vector.broadcast %cst_50 : f32 to vector<1x128xf32>
    %42 = arith.divf %40, %41 : vector<1x128xf32>
    %43 = vector.broadcast %35 : vector<1x128xf32> to vector<2x128xf32>
    %44 = arith.subf %31, %43 : vector<2x128xf32>
    %cst_51 = arith.constant 9.99999974E-6 : f32
    %45 = vector.broadcast %cst_51 : f32 to vector<1x128xf32>
    %46 = arith.addf %42, %45 : vector<1x128xf32>
    %47 = math.rsqrt %46 : vector<1x128xf32>
    %48 = vector.broadcast %47 : vector<1x128xf32> to vector<2x128xf32>
    %49 = arith.mulf %44, %48 : vector<2x128xf32>
    %50 = vector.broadcast %5 : vector<1x128xf32> to vector<2x128xf32>
    %51 = arith.mulf %49, %50 : vector<2x128xf32>
    %52 = vector.broadcast %6 : vector<1x128xf32> to vector<2x128xf32>
    %53 = arith.addf %51, %52 : vector<2x128xf32>
    %cst_52 = arith.constant 0.000000e+00 : f32
    %54 = vector.broadcast %cst_52 : f32 to vector<2x128xf32>
    %55 = arith.maximumf %53, %54 : vector<2x128xf32>
    %cst_53 = arith.constant dense<0.000000e+00> : vector<2x128xf32>
    %56 = tpu.matmul %55, %7, %cst_53 {dimension_numbers = #tpu.dot_dimension_numbers<[1], [0], [0], [1], [0, 0, 1, 1], [], []>} : vector<2x128xf32>, vector<128x128xf32>, vector<2x128xf32> -> vector<2x128xf32>
    %57 = vector.broadcast %8 : vector<1x128xf32> to vector<2x128xf32>
    %58 = arith.addf %56, %57 : vector<2x128xf32>
    %cst_54 = arith.constant dense<0.000000e+00> : vector<128xf32>
    %59 = vector.multi_reduction <add>, %58, %cst_54 [0] : vector<2x128xf32> to vector<128xf32>
    %60 = vector.shape_cast %59 : vector<128xf32> to vector<1x128xf32>
    %cst_55 = arith.constant 2.000000e+00 : f32
    %61 = vector.broadcast %cst_55 : f32 to vector<1x128xf32>
    %62 = arith.divf %60, %61 : vector<1x128xf32>
    %63 = vector.broadcast %62 : vector<1x128xf32> to vector<2x128xf32>
    %64 = arith.subf %58, %63 : vector<2x128xf32>
    %65 = arith.mulf %64, %64 : vector<2x128xf32>
    %cst_56 = arith.constant dense<0.000000e+00> : vector<128xf32>
    %66 = vector.multi_reduction <add>, %65, %cst_56 [0] : vector<2x128xf32> to vector<128xf32>
    %67 = vector.shape_cast %66 : vector<128xf32> to vector<1x128xf32>
    %cst_57 = arith.constant 2.000000e+00 : f32
    %68 = vector.broadcast %cst_57 : f32 to vector<1x128xf32>
    %69 = arith.divf %67, %68 : vector<1x128xf32>
    %70 = vector.broadcast %62 : vector<1x128xf32> to vector<2x128xf32>
    %71 = arith.subf %58, %70 : vector<2x128xf32>
    %cst_58 = arith.constant 9.99999974E-6 : f32
    %72 = vector.broadcast %cst_58 : f32 to vector<1x128xf32>
    %73 = arith.addf %69, %72 : vector<1x128xf32>
    %74 = math.rsqrt %73 : vector<1x128xf32>
    %75 = vector.broadcast %74 : vector<1x128xf32> to vector<2x128xf32>
    %76 = arith.mulf %71, %75 : vector<2x128xf32>
    %77 = vector.broadcast %9 : vector<1x128xf32> to vector<2x128xf32>
    %78 = arith.mulf %76, %77 : vector<2x128xf32>
    %79 = vector.broadcast %10 : vector<1x128xf32> to vector<2x128xf32>
    %80 = arith.addf %78, %79 : vector<2x128xf32>
    %cst_59 = arith.constant 0.000000e+00 : f32
    %81 = vector.broadcast %cst_59 : f32 to vector<2x128xf32>
    %82 = arith.maximumf %80, %81 : vector<2x128xf32>
    %cst_60 = arith.constant dense<0.000000e+00> : vector<2x128xf32>
    %83 = tpu.matmul %82, %11, %cst_60 {dimension_numbers = #tpu.dot_dimension_numbers<[1], [0], [0], [1], [0, 0, 1, 1], [], []>} : vector<2x128xf32>, vector<128x128xf32>, vector<2x128xf32> -> vector<2x128xf32>
    %84 = vector.broadcast %12 : vector<1x128xf32> to vector<2x128xf32>
    %85 = arith.addf %83, %84 : vector<2x128xf32>
    %cst_61 = arith.constant dense<0.000000e+00> : vector<128xf32>
    %86 = vector.multi_reduction <add>, %85, %cst_61 [0] : vector<2x128xf32> to vector<128xf32>
    %87 = vector.shape_cast %86 : vector<128xf32> to vector<1x128xf32>
    %cst_62 = arith.constant 2.000000e+00 : f32
    %88 = vector.broadcast %cst_62 : f32 to vector<1x128xf32>
    %89 = arith.divf %87, %88 : vector<1x128xf32>
    %90 = vector.broadcast %89 : vector<1x128xf32> to vector<2x128xf32>
    %91 = arith.subf %85, %90 : vector<2x128xf32>
    %92 = arith.mulf %91, %91 : vector<2x128xf32>
    %cst_63 = arith.constant dense<0.000000e+00> : vector<128xf32>
    %93 = vector.multi_reduction <add>, %92, %cst_63 [0] : vector<2x128xf32> to vector<128xf32>
    %94 = vector.shape_cast %93 : vector<128xf32> to vector<1x128xf32>
    %cst_64 = arith.constant 2.000000e+00 : f32
    %95 = vector.broadcast %cst_64 : f32 to vector<1x128xf32>
    %96 = arith.divf %94, %95 : vector<1x128xf32>
    %97 = vector.broadcast %89 : vector<1x128xf32> to vector<2x128xf32>
    %98 = arith.subf %85, %97 : vector<2x128xf32>
    %cst_65 = arith.constant 9.99999974E-6 : f32
    %99 = vector.broadcast %cst_65 : f32 to vector<1x128xf32>
    %100 = arith.addf %96, %99 : vector<1x128xf32>
    %101 = math.rsqrt %100 : vector<1x128xf32>
    %102 = vector.broadcast %101 : vector<1x128xf32> to vector<2x128xf32>
    %103 = arith.mulf %98, %102 : vector<2x128xf32>
    %104 = vector.broadcast %13 : vector<1x128xf32> to vector<2x128xf32>
    %105 = arith.mulf %103, %104 : vector<2x128xf32>
    %106 = vector.broadcast %14 : vector<1x128xf32> to vector<2x128xf32>
    %107 = arith.addf %105, %106 : vector<2x128xf32>
    %c1 = arith.constant 1 : index
    %c0_66 = arith.constant 0 : index
    %c0_67 = arith.constant 0 : index
    %108 = vector.load %arg0[%c1, %c0_66, %c0_67] : memref<4x512x27xf32, #tpu.memory_space<vmem>>, vector<1x512x27xf32>
    %109 = vector.shape_cast %108 : vector<1x512x27xf32> to vector<512x27xf32>
    %cst_68 = arith.constant dense<0.000000e+00> : vector<512x128xf32>
    %110 = tpu.matmul %109, %0, %cst_68 {dimension_numbers = #tpu.dot_dimension_numbers<[1], [0], [0], [1], [0, 0, 1, 1], [], []>} : vector<512x27xf32>, vector<27x128xf32>, vector<512x128xf32> -> vector<512x128xf32>
    %111 = vector.broadcast %1 : vector<1x128xf32> to vector<512x128xf32>
    %112 = arith.addf %110, %111 : vector<512x128xf32>
    %cst_69 = arith.constant 0.000000e+00 : f32
    %113 = vector.broadcast %cst_69 : f32 to vector<512x128xf32>
    %114 = arith.maximumf %112, %113 : vector<512x128xf32>
    %cst_70 = arith.constant dense<0.000000e+00> : vector<2x128xf32>
    %115 = tpu.matmul %2, %114, %cst_70 {dimension_numbers = #tpu.dot_dimension_numbers<[1], [0], [0], [1], [0, 0, 1, 1], [], []>} : vector<2x512xf32>, vector<512x128xf32>, vector<2x128xf32> -> vector<2x128xf32>
    %cst_71 = arith.constant dense<0.000000e+00> : vector<2x128xf32>
    %116 = tpu.matmul %115, %3, %cst_71 {dimension_numbers = #tpu.dot_dimension_numbers<[1], [0], [0], [1], [0, 0, 1, 1], [], []>} : vector<2x128xf32>, vector<128x128xf32>, vector<2x128xf32> -> vector<2x128xf32>
    %117 = vector.broadcast %4 : vector<1x128xf32> to vector<2x128xf32>
    %118 = arith.addf %116, %117 : vector<2x128xf32>
    %cst_72 = arith.constant dense<0.000000e+00> : vector<128xf32>
    %119 = vector.multi_reduction <add>, %118, %cst_72 [0] : vector<2x128xf32> to vector<128xf32>
    %120 = vector.shape_cast %119 : vector<128xf32> to vector<1x128xf32>
    %cst_73 = arith.constant 2.000000e+00 : f32
    %121 = vector.broadcast %cst_73 : f32 to vector<1x128xf32>
    %122 = arith.divf %120, %121 : vector<1x128xf32>
    %123 = vector.broadcast %122 : vector<1x128xf32> to vector<2x128xf32>
    %124 = arith.subf %118, %123 : vector<2x128xf32>
    %125 = arith.mulf %124, %124 : vector<2x128xf32>
    %cst_74 = arith.constant dense<0.000000e+00> : vector<128xf32>
    %126 = vector.multi_reduction <add>, %125, %cst_74 [0] : vector<2x128xf32> to vector<128xf32>
    %127 = vector.shape_cast %126 : vector<128xf32> to vector<1x128xf32>
    %cst_75 = arith.constant 2.000000e+00 : f32
    %128 = vector.broadcast %cst_75 : f32 to vector<1x128xf32>
    %129 = arith.divf %127, %128 : vector<1x128xf32>
    %130 = vector.broadcast %122 : vector<1x128xf32> to vector<2x128xf32>
    %131 = arith.subf %118, %130 : vector<2x128xf32>
    %cst_76 = arith.constant 9.99999974E-6 : f32
    %132 = vector.broadcast %cst_76 : f32 to vector<1x128xf32>
    %133 = arith.addf %129, %132 : vector<1x128xf32>
    %134 = math.rsqrt %133 : vector<1x128xf32>
    %135 = vector.broadcast %134 : vector<1x128xf32> to vector<2x128xf32>
    %136 = arith.mulf %131, %135 : vector<2x128xf32>
    %137 = vector.broadcast %5 : vector<1x128xf32> to vector<2x128xf32>
    %138 = arith.mulf %136, %137 : vector<2x128xf32>
    %139 = vector.broadcast %6 : vector<1x128xf32> to vector<2x128xf32>
    %140 = arith.addf %138, %139 : vector<2x128xf32>
    %cst_77 = arith.constant 0.000000e+00 : f32
    %141 = vector.broadcast %cst_77 : f32 to vector<2x128xf32>
    %142 = arith.maximumf %140, %141 : vector<2x128xf32>
    %cst_78 = arith.constant dense<0.000000e+00> : vector<2x128xf32>
    %143 = tpu.matmul %142, %7, %cst_78 {dimension_numbers = #tpu.dot_dimension_numbers<[1], [0], [0], [1], [0, 0, 1, 1], [], []>} : vector<2x128xf32>, vector<128x128xf32>, vector<2x128xf32> -> vector<2x128xf32>
    %144 = vector.broadcast %8 : vector<1x128xf32> to vector<2x128xf32>
    %145 = arith.addf %143, %144 : vector<2x128xf32>
    %cst_79 = arith.constant dense<0.000000e+00> : vector<128xf32>
    %146 = vector.multi_reduction <add>, %145, %cst_79 [0] : vector<2x128xf32> to vector<128xf32>
    %147 = vector.shape_cast %146 : vector<128xf32> to vector<1x128xf32>
    %cst_80 = arith.constant 2.000000e+00 : f32
    %148 = vector.broadcast %cst_80 : f32 to vector<1x128xf32>
    %149 = arith.divf %147, %148 : vector<1x128xf32>
    %150 = vector.broadcast %149 : vector<1x128xf32> to vector<2x128xf32>
    %151 = arith.subf %145, %150 : vector<2x128xf32>
    %152 = arith.mulf %151, %151 : vector<2x128xf32>
    %cst_81 = arith.constant dense<0.000000e+00> : vector<128xf32>
    %153 = vector.multi_reduction <add>, %152, %cst_81 [0] : vector<2x128xf32> to vector<128xf32>
    %154 = vector.shape_cast %153 : vector<128xf32> to vector<1x128xf32>
    %cst_82 = arith.constant 2.000000e+00 : f32
    %155 = vector.broadcast %cst_82 : f32 to vector<1x128xf32>
    %156 = arith.divf %154, %155 : vector<1x128xf32>
    %157 = vector.broadcast %149 : vector<1x128xf32> to vector<2x128xf32>
    %158 = arith.subf %145, %157 : vector<2x128xf32>
    %cst_83 = arith.constant 9.99999974E-6 : f32
    %159 = vector.broadcast %cst_83 : f32 to vector<1x128xf32>
    %160 = arith.addf %156, %159 : vector<1x128xf32>
    %161 = math.rsqrt %160 : vector<1x128xf32>
    %162 = vector.broadcast %161 : vector<1x128xf32> to vector<2x128xf32>
    %163 = arith.mulf %158, %162 : vector<2x128xf32>
    %164 = vector.broadcast %9 : vector<1x128xf32> to vector<2x128xf32>
    %165 = arith.mulf %163, %164 : vector<2x128xf32>
    %166 = vector.broadcast %10 : vector<1x128xf32> to vector<2x128xf32>
    %167 = arith.addf %165, %166 : vector<2x128xf32>
    %cst_84 = arith.constant 0.000000e+00 : f32
    %168 = vector.broadcast %cst_84 : f32 to vector<2x128xf32>
    %169 = arith.maximumf %167, %168 : vector<2x128xf32>
    %cst_85 = arith.constant dense<0.000000e+00> : vector<2x128xf32>
    %170 = tpu.matmul %169, %11, %cst_85 {dimension_numbers = #tpu.dot_dimension_numbers<[1], [0], [0], [1], [0, 0, 1, 1], [], []>} : vector<2x128xf32>, vector<128x128xf32>, vector<2x128xf32> -> vector<2x128xf32>
    %171 = vector.broadcast %12 : vector<1x128xf32> to vector<2x128xf32>
    %172 = arith.addf %170, %171 : vector<2x128xf32>
    %cst_86 = arith.constant dense<0.000000e+00> : vector<128xf32>
    %173 = vector.multi_reduction <add>, %172, %cst_86 [0] : vector<2x128xf32> to vector<128xf32>
    %174 = vector.shape_cast %173 : vector<128xf32> to vector<1x128xf32>
    %cst_87 = arith.constant 2.000000e+00 : f32
    %175 = vector.broadcast %cst_87 : f32 to vector<1x128xf32>
    %176 = arith.divf %174, %175 : vector<1x128xf32>
    %177 = vector.broadcast %176 : vector<1x128xf32> to vector<2x128xf32>
    %178 = arith.subf %172, %177 : vector<2x128xf32>
    %179 = arith.mulf %178, %178 : vector<2x128xf32>
    %cst_88 = arith.constant dense<0.000000e+00> : vector<128xf32>
    %180 = vector.multi_reduction <add>, %179, %cst_88 [0] : vector<2x128xf32> to vector<128xf32>
    %181 = vector.shape_cast %180 : vector<128xf32> to vector<1x128xf32>
    %cst_89 = arith.constant 2.000000e+00 : f32
    %182 = vector.broadcast %cst_89 : f32 to vector<1x128xf32>
    %183 = arith.divf %181, %182 : vector<1x128xf32>
    %184 = vector.broadcast %176 : vector<1x128xf32> to vector<2x128xf32>
    %185 = arith.subf %172, %184 : vector<2x128xf32>
    %cst_90 = arith.constant 9.99999974E-6 : f32
    %186 = vector.broadcast %cst_90 : f32 to vector<1x128xf32>
    %187 = arith.addf %183, %186 : vector<1x128xf32>
    %188 = math.rsqrt %187 : vector<1x128xf32>
    %189 = vector.broadcast %188 : vector<1x128xf32> to vector<2x128xf32>
    %190 = arith.mulf %185, %189 : vector<2x128xf32>
    %191 = vector.broadcast %13 : vector<1x128xf32> to vector<2x128xf32>
    %192 = arith.mulf %190, %191 : vector<2x128xf32>
    %193 = vector.broadcast %14 : vector<1x128xf32> to vector<2x128xf32>
    %194 = arith.addf %192, %193 : vector<2x128xf32>
    %c2 = arith.constant 2 : index
    %c0_91 = arith.constant 0 : index
    %c0_92 = arith.constant 0 : index
    %195 = vector.load %arg0[%c2, %c0_91, %c0_92] : memref<4x512x27xf32, #tpu.memory_space<vmem>>, vector<1x512x27xf32>
    %196 = vector.shape_cast %195 : vector<1x512x27xf32> to vector<512x27xf32>
    %cst_93 = arith.constant dense<0.000000e+00> : vector<512x128xf32>
    %197 = tpu.matmul %196, %0, %cst_93 {dimension_numbers = #tpu.dot_dimension_numbers<[1], [0], [0], [1], [0, 0, 1, 1], [], []>} : vector<512x27xf32>, vector<27x128xf32>, vector<512x128xf32> -> vector<512x128xf32>
    %198 = vector.broadcast %1 : vector<1x128xf32> to vector<512x128xf32>
    %199 = arith.addf %197, %198 : vector<512x128xf32>
    %cst_94 = arith.constant 0.000000e+00 : f32
    %200 = vector.broadcast %cst_94 : f32 to vector<512x128xf32>
    %201 = arith.maximumf %199, %200 : vector<512x128xf32>
    %cst_95 = arith.constant dense<0.000000e+00> : vector<2x128xf32>
    %202 = tpu.matmul %2, %201, %cst_95 {dimension_numbers = #tpu.dot_dimension_numbers<[1], [0], [0], [1], [0, 0, 1, 1], [], []>} : vector<2x512xf32>, vector<512x128xf32>, vector<2x128xf32> -> vector<2x128xf32>
    %cst_96 = arith.constant dense<0.000000e+00> : vector<2x128xf32>
    %203 = tpu.matmul %202, %3, %cst_96 {dimension_numbers = #tpu.dot_dimension_numbers<[1], [0], [0], [1], [0, 0, 1, 1], [], []>} : vector<2x128xf32>, vector<128x128xf32>, vector<2x128xf32> -> vector<2x128xf32>
    %204 = vector.broadcast %4 : vector<1x128xf32> to vector<2x128xf32>
    %205 = arith.addf %203, %204 : vector<2x128xf32>
    %cst_97 = arith.constant dense<0.000000e+00> : vector<128xf32>
    %206 = vector.multi_reduction <add>, %205, %cst_97 [0] : vector<2x128xf32> to vector<128xf32>
    %207 = vector.shape_cast %206 : vector<128xf32> to vector<1x128xf32>
    %cst_98 = arith.constant 2.000000e+00 : f32
    %208 = vector.broadcast %cst_98 : f32 to vector<1x128xf32>
    %209 = arith.divf %207, %208 : vector<1x128xf32>
    %210 = vector.broadcast %209 : vector<1x128xf32> to vector<2x128xf32>
    %211 = arith.subf %205, %210 : vector<2x128xf32>
    %212 = arith.mulf %211, %211 : vector<2x128xf32>
    %cst_99 = arith.constant dense<0.000000e+00> : vector<128xf32>
    %213 = vector.multi_reduction <add>, %212, %cst_99 [0] : vector<2x128xf32> to vector<128xf32>
    %214 = vector.shape_cast %213 : vector<128xf32> to vector<1x128xf32>
    %cst_100 = arith.constant 2.000000e+00 : f32
    %215 = vector.broadcast %cst_100 : f32 to vector<1x128xf32>
    %216 = arith.divf %214, %215 : vector<1x128xf32>
    %217 = vector.broadcast %209 : vector<1x128xf32> to vector<2x128xf32>
    %218 = arith.subf %205, %217 : vector<2x128xf32>
    %cst_101 = arith.constant 9.99999974E-6 : f32
    %219 = vector.broadcast %cst_101 : f32 to vector<1x128xf32>
    %220 = arith.addf %216, %219 : vector<1x128xf32>
    %221 = math.rsqrt %220 : vector<1x128xf32>
    %222 = vector.broadcast %221 : vector<1x128xf32> to vector<2x128xf32>
    %223 = arith.mulf %218, %222 : vector<2x128xf32>
    %224 = vector.broadcast %5 : vector<1x128xf32> to vector<2x128xf32>
    %225 = arith.mulf %223, %224 : vector<2x128xf32>
    %226 = vector.broadcast %6 : vector<1x128xf32> to vector<2x128xf32>
    %227 = arith.addf %225, %226 : vector<2x128xf32>
    %cst_102 = arith.constant 0.000000e+00 : f32
    %228 = vector.broadcast %cst_102 : f32 to vector<2x128xf32>
    %229 = arith.maximumf %227, %228 : vector<2x128xf32>
    %cst_103 = arith.constant dense<0.000000e+00> : vector<2x128xf32>
    %230 = tpu.matmul %229, %7, %cst_103 {dimension_numbers = #tpu.dot_dimension_numbers<[1], [0], [0], [1], [0, 0, 1, 1], [], []>} : vector<2x128xf32>, vector<128x128xf32>, vector<2x128xf32> -> vector<2x128xf32>
    %231 = vector.broadcast %8 : vector<1x128xf32> to vector<2x128xf32>
    %232 = arith.addf %230, %231 : vector<2x128xf32>
    %cst_104 = arith.constant dense<0.000000e+00> : vector<128xf32>
    %233 = vector.multi_reduction <add>, %232, %cst_104 [0] : vector<2x128xf32> to vector<128xf32>
    %234 = vector.shape_cast %233 : vector<128xf32> to vector<1x128xf32>
    %cst_105 = arith.constant 2.000000e+00 : f32
    %235 = vector.broadcast %cst_105 : f32 to vector<1x128xf32>
    %236 = arith.divf %234, %235 : vector<1x128xf32>
    %237 = vector.broadcast %236 : vector<1x128xf32> to vector<2x128xf32>
    %238 = arith.subf %232, %237 : vector<2x128xf32>
    %239 = arith.mulf %238, %238 : vector<2x128xf32>
    %cst_106 = arith.constant dense<0.000000e+00> : vector<128xf32>
    %240 = vector.multi_reduction <add>, %239, %cst_106 [0] : vector<2x128xf32> to vector<128xf32>
    %241 = vector.shape_cast %240 : vector<128xf32> to vector<1x128xf32>
    %cst_107 = arith.constant 2.000000e+00 : f32
    %242 = vector.broadcast %cst_107 : f32 to vector<1x128xf32>
    %243 = arith.divf %241, %242 : vector<1x128xf32>
    %244 = vector.broadcast %236 : vector<1x128xf32> to vector<2x128xf32>
    %245 = arith.subf %232, %244 : vector<2x128xf32>
    %cst_108 = arith.constant 9.99999974E-6 : f32
    %246 = vector.broadcast %cst_108 : f32 to vector<1x128xf32>
    %247 = arith.addf %243, %246 : vector<1x128xf32>
    %248 = math.rsqrt %247 : vector<1x128xf32>
    %249 = vector.broadcast %248 : vector<1x128xf32> to vector<2x128xf32>
    %250 = arith.mulf %245, %249 : vector<2x128xf32>
    %251 = vector.broadcast %9 : vector<1x128xf32> to vector<2x128xf32>
    %252 = arith.mulf %250, %251 : vector<2x128xf32>
    %253 = vector.broadcast %10 : vector<1x128xf32> to vector<2x128xf32>
    %254 = arith.addf %252, %253 : vector<2x128xf32>
    %cst_109 = arith.constant 0.000000e+00 : f32
    %255 = vector.broadcast %cst_109 : f32 to vector<2x128xf32>
    %256 = arith.maximumf %254, %255 : vector<2x128xf32>
    %cst_110 = arith.constant dense<0.000000e+00> : vector<2x128xf32>
    %257 = tpu.matmul %256, %11, %cst_110 {dimension_numbers = #tpu.dot_dimension_numbers<[1], [0], [0], [1], [0, 0, 1, 1], [], []>} : vector<2x128xf32>, vector<128x128xf32>, vector<2x128xf32> -> vector<2x128xf32>
    %258 = vector.broadcast %12 : vector<1x128xf32> to vector<2x128xf32>
    %259 = arith.addf %257, %258 : vector<2x128xf32>
    %cst_111 = arith.constant dense<0.000000e+00> : vector<128xf32>
    %260 = vector.multi_reduction <add>, %259, %cst_111 [0] : vector<2x128xf32> to vector<128xf32>
    %261 = vector.shape_cast %260 : vector<128xf32> to vector<1x128xf32>
    %cst_112 = arith.constant 2.000000e+00 : f32
    %262 = vector.broadcast %cst_112 : f32 to vector<1x128xf32>
    %263 = arith.divf %261, %262 : vector<1x128xf32>
    %264 = vector.broadcast %263 : vector<1x128xf32> to vector<2x128xf32>
    %265 = arith.subf %259, %264 : vector<2x128xf32>
    %266 = arith.mulf %265, %265 : vector<2x128xf32>
    %cst_113 = arith.constant dense<0.000000e+00> : vector<128xf32>
    %267 = vector.multi_reduction <add>, %266, %cst_113 [0] : vector<2x128xf32> to vector<128xf32>
    %268 = vector.shape_cast %267 : vector<128xf32> to vector<1x128xf32>
    %cst_114 = arith.constant 2.000000e+00 : f32
    %269 = vector.broadcast %cst_114 : f32 to vector<1x128xf32>
    %270 = arith.divf %268, %269 : vector<1x128xf32>
    %271 = vector.broadcast %263 : vector<1x128xf32> to vector<2x128xf32>
    %272 = arith.subf %259, %271 : vector<2x128xf32>
    %cst_115 = arith.constant 9.99999974E-6 : f32
    %273 = vector.broadcast %cst_115 : f32 to vector<1x128xf32>
    %274 = arith.addf %270, %273 : vector<1x128xf32>
    %275 = math.rsqrt %274 : vector<1x128xf32>
    %276 = vector.broadcast %275 : vector<1x128xf32> to vector<2x128xf32>
    %277 = arith.mulf %272, %276 : vector<2x128xf32>
    %278 = vector.broadcast %13 : vector<1x128xf32> to vector<2x128xf32>
    %279 = arith.mulf %277, %278 : vector<2x128xf32>
    %280 = vector.broadcast %14 : vector<1x128xf32> to vector<2x128xf32>
    %281 = arith.addf %279, %280 : vector<2x128xf32>
    %c3 = arith.constant 3 : index
    %c0_116 = arith.constant 0 : index
    %c0_117 = arith.constant 0 : index
    %282 = vector.load %arg0[%c3, %c0_116, %c0_117] : memref<4x512x27xf32, #tpu.memory_space<vmem>>, vector<1x512x27xf32>
    %283 = vector.shape_cast %282 : vector<1x512x27xf32> to vector<512x27xf32>
    %cst_118 = arith.constant dense<0.000000e+00> : vector<512x128xf32>
    %284 = tpu.matmul %283, %0, %cst_118 {dimension_numbers = #tpu.dot_dimension_numbers<[1], [0], [0], [1], [0, 0, 1, 1], [], []>} : vector<512x27xf32>, vector<27x128xf32>, vector<512x128xf32> -> vector<512x128xf32>
    %285 = vector.broadcast %1 : vector<1x128xf32> to vector<512x128xf32>
    %286 = arith.addf %284, %285 : vector<512x128xf32>
    %cst_119 = arith.constant 0.000000e+00 : f32
    %287 = vector.broadcast %cst_119 : f32 to vector<512x128xf32>
    %288 = arith.maximumf %286, %287 : vector<512x128xf32>
    %cst_120 = arith.constant dense<0.000000e+00> : vector<2x128xf32>
    %289 = tpu.matmul %2, %288, %cst_120 {dimension_numbers = #tpu.dot_dimension_numbers<[1], [0], [0], [1], [0, 0, 1, 1], [], []>} : vector<2x512xf32>, vector<512x128xf32>, vector<2x128xf32> -> vector<2x128xf32>
    %cst_121 = arith.constant dense<0.000000e+00> : vector<2x128xf32>
    %290 = tpu.matmul %289, %3, %cst_121 {dimension_numbers = #tpu.dot_dimension_numbers<[1], [0], [0], [1], [0, 0, 1, 1], [], []>} : vector<2x128xf32>, vector<128x128xf32>, vector<2x128xf32> -> vector<2x128xf32>
    %291 = vector.broadcast %4 : vector<1x128xf32> to vector<2x128xf32>
    %292 = arith.addf %290, %291 : vector<2x128xf32>
    %cst_122 = arith.constant dense<0.000000e+00> : vector<128xf32>
    %293 = vector.multi_reduction <add>, %292, %cst_122 [0] : vector<2x128xf32> to vector<128xf32>
    %294 = vector.shape_cast %293 : vector<128xf32> to vector<1x128xf32>
    %cst_123 = arith.constant 2.000000e+00 : f32
    %295 = vector.broadcast %cst_123 : f32 to vector<1x128xf32>
    %296 = arith.divf %294, %295 : vector<1x128xf32>
    %297 = vector.broadcast %296 : vector<1x128xf32> to vector<2x128xf32>
    %298 = arith.subf %292, %297 : vector<2x128xf32>
    %299 = arith.mulf %298, %298 : vector<2x128xf32>
    %cst_124 = arith.constant dense<0.000000e+00> : vector<128xf32>
    %300 = vector.multi_reduction <add>, %299, %cst_124 [0] : vector<2x128xf32> to vector<128xf32>
    %301 = vector.shape_cast %300 : vector<128xf32> to vector<1x128xf32>
    %cst_125 = arith.constant 2.000000e+00 : f32
    %302 = vector.broadcast %cst_125 : f32 to vector<1x128xf32>
    %303 = arith.divf %301, %302 : vector<1x128xf32>
    %304 = vector.broadcast %296 : vector<1x128xf32> to vector<2x128xf32>
    %305 = arith.subf %292, %304 : vector<2x128xf32>
    %cst_126 = arith.constant 9.99999974E-6 : f32
    %306 = vector.broadcast %cst_126 : f32 to vector<1x128xf32>
    %307 = arith.addf %303, %306 : vector<1x128xf32>
    %308 = math.rsqrt %307 : vector<1x128xf32>
    %309 = vector.broadcast %308 : vector<1x128xf32> to vector<2x128xf32>
    %310 = arith.mulf %305, %309 : vector<2x128xf32>
    %311 = vector.broadcast %5 : vector<1x128xf32> to vector<2x128xf32>
    %312 = arith.mulf %310, %311 : vector<2x128xf32>
    %313 = vector.broadcast %6 : vector<1x128xf32> to vector<2x128xf32>
    %314 = arith.addf %312, %313 : vector<2x128xf32>
    %cst_127 = arith.constant 0.000000e+00 : f32
    %315 = vector.broadcast %cst_127 : f32 to vector<2x128xf32>
    %316 = arith.maximumf %314, %315 : vector<2x128xf32>
    %cst_128 = arith.constant dense<0.000000e+00> : vector<2x128xf32>
    %317 = tpu.matmul %316, %7, %cst_128 {dimension_numbers = #tpu.dot_dimension_numbers<[1], [0], [0], [1], [0, 0, 1, 1], [], []>} : vector<2x128xf32>, vector<128x128xf32>, vector<2x128xf32> -> vector<2x128xf32>
    %318 = vector.broadcast %8 : vector<1x128xf32> to vector<2x128xf32>
    %319 = arith.addf %317, %318 : vector<2x128xf32>
    %cst_129 = arith.constant dense<0.000000e+00> : vector<128xf32>
    %320 = vector.multi_reduction <add>, %319, %cst_129 [0] : vector<2x128xf32> to vector<128xf32>
    %321 = vector.shape_cast %320 : vector<128xf32> to vector<1x128xf32>
    %cst_130 = arith.constant 2.000000e+00 : f32
    %322 = vector.broadcast %cst_130 : f32 to vector<1x128xf32>
    %323 = arith.divf %321, %322 : vector<1x128xf32>
    %324 = vector.broadcast %323 : vector<1x128xf32> to vector<2x128xf32>
    %325 = arith.subf %319, %324 : vector<2x128xf32>
    %326 = arith.mulf %325, %325 : vector<2x128xf32>
    %cst_131 = arith.constant dense<0.000000e+00> : vector<128xf32>
    %327 = vector.multi_reduction <add>, %326, %cst_131 [0] : vector<2x128xf32> to vector<128xf32>
    %328 = vector.shape_cast %327 : vector<128xf32> to vector<1x128xf32>
    %cst_132 = arith.constant 2.000000e+00 : f32
    %329 = vector.broadcast %cst_132 : f32 to vector<1x128xf32>
    %330 = arith.divf %328, %329 : vector<1x128xf32>
    %331 = vector.broadcast %323 : vector<1x128xf32> to vector<2x128xf32>
    %332 = arith.subf %319, %331 : vector<2x128xf32>
    %cst_133 = arith.constant 9.99999974E-6 : f32
    %333 = vector.broadcast %cst_133 : f32 to vector<1x128xf32>
    %334 = arith.addf %330, %333 : vector<1x128xf32>
    %335 = math.rsqrt %334 : vector<1x128xf32>
    %336 = vector.broadcast %335 : vector<1x128xf32> to vector<2x128xf32>
    %337 = arith.mulf %332, %336 : vector<2x128xf32>
    %338 = vector.broadcast %9 : vector<1x128xf32> to vector<2x128xf32>
    %339 = arith.mulf %337, %338 : vector<2x128xf32>
    %340 = vector.broadcast %10 : vector<1x128xf32> to vector<2x128xf32>
    %341 = arith.addf %339, %340 : vector<2x128xf32>
    %cst_134 = arith.constant 0.000000e+00 : f32
    %342 = vector.broadcast %cst_134 : f32 to vector<2x128xf32>
    %343 = arith.maximumf %341, %342 : vector<2x128xf32>
    %cst_135 = arith.constant dense<0.000000e+00> : vector<2x128xf32>
    %344 = tpu.matmul %343, %11, %cst_135 {dimension_numbers = #tpu.dot_dimension_numbers<[1], [0], [0], [1], [0, 0, 1, 1], [], []>} : vector<2x128xf32>, vector<128x128xf32>, vector<2x128xf32> -> vector<2x128xf32>
    %345 = vector.broadcast %12 : vector<1x128xf32> to vector<2x128xf32>
    %346 = arith.addf %344, %345 : vector<2x128xf32>
    %cst_136 = arith.constant dense<0.000000e+00> : vector<128xf32>
    %347 = vector.multi_reduction <add>, %346, %cst_136 [0] : vector<2x128xf32> to vector<128xf32>
    %348 = vector.shape_cast %347 : vector<128xf32> to vector<1x128xf32>
    %cst_137 = arith.constant 2.000000e+00 : f32
    %349 = vector.broadcast %cst_137 : f32 to vector<1x128xf32>
    %350 = arith.divf %348, %349 : vector<1x128xf32>
    %351 = vector.broadcast %350 : vector<1x128xf32> to vector<2x128xf32>
    %352 = arith.subf %346, %351 : vector<2x128xf32>
    %353 = arith.mulf %352, %352 : vector<2x128xf32>
    %cst_138 = arith.constant dense<0.000000e+00> : vector<128xf32>
    %354 = vector.multi_reduction <add>, %353, %cst_138 [0] : vector<2x128xf32> to vector<128xf32>
    %355 = vector.shape_cast %354 : vector<128xf32> to vector<1x128xf32>
    %cst_139 = arith.constant 2.000000e+00 : f32
    %356 = vector.broadcast %cst_139 : f32 to vector<1x128xf32>
    %357 = arith.divf %355, %356 : vector<1x128xf32>
    %358 = vector.broadcast %350 : vector<1x128xf32> to vector<2x128xf32>
    %359 = arith.subf %346, %358 : vector<2x128xf32>
    %cst_140 = arith.constant 9.99999974E-6 : f32
    %360 = vector.broadcast %cst_140 : f32 to vector<1x128xf32>
    %361 = arith.addf %357, %360 : vector<1x128xf32>
    %362 = math.rsqrt %361 : vector<1x128xf32>
    %363 = vector.broadcast %362 : vector<1x128xf32> to vector<2x128xf32>
    %364 = arith.mulf %359, %363 : vector<2x128xf32>
    %365 = vector.broadcast %13 : vector<1x128xf32> to vector<2x128xf32>
    %366 = arith.mulf %364, %365 : vector<2x128xf32>
    %367 = vector.broadcast %14 : vector<1x128xf32> to vector<2x128xf32>
    %368 = arith.addf %366, %367 : vector<2x128xf32>
    %cst_141 = arith.constant dense<0.000000e+00> : vector<2x128xf32>
    %369 = tpu.matmul %107, %15, %cst_141 {dimension_numbers = #tpu.dot_dimension_numbers<[1], [0], [0], [1], [0, 0, 1, 1], [], []>} : vector<2x128xf32>, vector<128x128xf32>, vector<2x128xf32> -> vector<2x128xf32>
    %370 = vector.broadcast %16 : vector<1x128xf32> to vector<2x128xf32>
    %371 = arith.addf %369, %370 : vector<2x128xf32>
    %372 = vector.broadcast %18 : vector<1x128xf32> to vector<2x128xf32>
    %373 = arith.addf %371, %372 : vector<2x128xf32>
    %cst_142 = arith.constant 0.000000e+00 : f32
    %374 = vector.broadcast %cst_142 : f32 to vector<2x128xf32>
    %cst_143 = arith.constant dense<0.000000e+00> : vector<2x128xf32>
    %375 = tpu.matmul %374, %17, %cst_143 {dimension_numbers = #tpu.dot_dimension_numbers<[1], [0], [0], [1], [0, 0, 1, 1], [], []>} : vector<2x128xf32>, vector<128x128xf32>, vector<2x128xf32> -> vector<2x128xf32>
    %376 = arith.addf %373, %375 : vector<2x128xf32>
    %377 = math.tanh %376 : vector<2x128xf32>
    %cst_144 = arith.constant dense<0.000000e+00> : vector<2x128xf32>
    %378 = tpu.matmul %377, %19, %cst_144 {dimension_numbers = #tpu.dot_dimension_numbers<[1], [0], [0], [1], [0, 0, 1, 1], [], []>} : vector<2x128xf32>, vector<128x128xf32>, vector<2x128xf32> -> vector<2x128xf32>
    %379 = vector.broadcast %20 : vector<1x128xf32> to vector<2x128xf32>
    %380 = arith.addf %378, %379 : vector<2x128xf32>
    %cst_145 = arith.constant dense<0.000000e+00> : vector<2x128xf32>
    %381 = tpu.matmul %377, %17, %cst_145 {dimension_numbers = #tpu.dot_dimension_numbers<[1], [0], [0], [1], [0, 0, 1, 1], [], []>} : vector<2x128xf32>, vector<128x128xf32>, vector<2x128xf32> -> vector<2x128xf32>
    %382 = arith.addf %373, %381 : vector<2x128xf32>
    %383 = math.tanh %382 : vector<2x128xf32>
    %cst_146 = arith.constant dense<0.000000e+00> : vector<2x128xf32>
    %384 = tpu.matmul %383, %19, %cst_146 {dimension_numbers = #tpu.dot_dimension_numbers<[1], [0], [0], [1], [0, 0, 1, 1], [], []>} : vector<2x128xf32>, vector<128x128xf32>, vector<2x128xf32> -> vector<2x128xf32>
    %385 = vector.broadcast %20 : vector<1x128xf32> to vector<2x128xf32>
    %386 = arith.addf %384, %385 : vector<2x128xf32>
    %387 = arith.mulf %380, %107 : vector<2x128xf32>
    %cst_147 = arith.constant dense<0.000000e+00> : vector<2xf32>
    %388 = vector.multi_reduction <add>, %387, %cst_147 [1] : vector<2x128xf32> to vector<2xf32>
    %389 = vector.shape_cast %388 : vector<2xf32> to vector<2x1xf32>
    %390 = arith.mulf %380, %380 : vector<2x128xf32>
    %cst_148 = arith.constant dense<0.000000e+00> : vector<2xf32>
    %391 = vector.multi_reduction <add>, %390, %cst_148 [1] : vector<2x128xf32> to vector<2xf32>
    %392 = vector.shape_cast %391 : vector<2xf32> to vector<2x1xf32>
    %393 = math.sqrt %392 : vector<2x1xf32>
    %394 = arith.mulf %107, %107 : vector<2x128xf32>
    %cst_149 = arith.constant dense<0.000000e+00> : vector<2xf32>
    %395 = vector.multi_reduction <add>, %394, %cst_149 [1] : vector<2x128xf32> to vector<2xf32>
    %396 = vector.shape_cast %395 : vector<2xf32> to vector<2x1xf32>
    %397 = math.sqrt %396 : vector<2x1xf32>
    %398 = arith.mulf %393, %397 : vector<2x1xf32>
    %cst_150 = arith.constant 9.99999993E-9 : f32
    %399 = vector.broadcast %cst_150 : f32 to vector<2x1xf32>
    %400 = arith.maximumf %398, %399 : vector<2x1xf32>
    %401 = arith.divf %389, %400 : vector<2x1xf32>
    %cst_151 = arith.constant dense<0.000000e+00> : vector<1xf32>
    %402 = vector.multi_reduction <add>, %401, %cst_151 [0] : vector<2x1xf32> to vector<1xf32>
    %403 = vector.shape_cast %402 : vector<1xf32> to vector<1x1xf32>
    %cst_152 = arith.constant 2.000000e+00 : f32
    %404 = vector.broadcast %cst_152 : f32 to vector<1x1xf32>
    %405 = arith.divf %403, %404 : vector<1x1xf32>
    %cst_153 = arith.constant 0.000000e+00 : f32
    %406 = vector.broadcast %cst_153 : f32 to vector<1x1xf32>
    %407 = arith.subf %406, %405 : vector<1x1xf32>
    %408 = arith.mulf %386, %107 : vector<2x128xf32>
    %cst_154 = arith.constant dense<0.000000e+00> : vector<2xf32>
    %409 = vector.multi_reduction <add>, %408, %cst_154 [1] : vector<2x128xf32> to vector<2xf32>
    %410 = vector.shape_cast %409 : vector<2xf32> to vector<2x1xf32>
    %411 = arith.mulf %386, %386 : vector<2x128xf32>
    %cst_155 = arith.constant dense<0.000000e+00> : vector<2xf32>
    %412 = vector.multi_reduction <add>, %411, %cst_155 [1] : vector<2x128xf32> to vector<2xf32>
    %413 = vector.shape_cast %412 : vector<2xf32> to vector<2x1xf32>
    %414 = math.sqrt %413 : vector<2x1xf32>
    %415 = arith.mulf %107, %107 : vector<2x128xf32>
    %cst_156 = arith.constant dense<0.000000e+00> : vector<2xf32>
    %416 = vector.multi_reduction <add>, %415, %cst_156 [1] : vector<2x128xf32> to vector<2xf32>
    %417 = vector.shape_cast %416 : vector<2xf32> to vector<2x1xf32>
    %418 = math.sqrt %417 : vector<2x1xf32>
    %419 = arith.mulf %414, %418 : vector<2x1xf32>
    %cst_157 = arith.constant 9.99999993E-9 : f32
    %420 = vector.broadcast %cst_157 : f32 to vector<2x1xf32>
    %421 = arith.maximumf %419, %420 : vector<2x1xf32>
    %422 = arith.divf %410, %421 : vector<2x1xf32>
    %cst_158 = arith.constant dense<0.000000e+00> : vector<1xf32>
    %423 = vector.multi_reduction <add>, %422, %cst_158 [0] : vector<2x1xf32> to vector<1xf32>
    %424 = vector.shape_cast %423 : vector<1xf32> to vector<1x1xf32>
    %cst_159 = arith.constant 2.000000e+00 : f32
    %425 = vector.broadcast %cst_159 : f32 to vector<1x1xf32>
    %426 = arith.divf %424, %425 : vector<1x1xf32>
    %cst_160 = arith.constant 0.000000e+00 : f32
    %427 = vector.broadcast %cst_160 : f32 to vector<1x1xf32>
    %428 = arith.subf %427, %426 : vector<1x1xf32>
    %429 = arith.addf %407, %428 : vector<1x1xf32>
    %cst_161 = arith.constant 5.000000e-01 : f32
    %430 = vector.broadcast %cst_161 : f32 to vector<1x1xf32>
    %431 = arith.mulf %430, %429 : vector<1x1xf32>
    %cst_162 = arith.constant dense<0.000000e+00> : vector<2x128xf32>
    %432 = tpu.matmul %383, %17, %cst_162 {dimension_numbers = #tpu.dot_dimension_numbers<[1], [0], [0], [1], [0, 0, 1, 1], [], []>} : vector<2x128xf32>, vector<128x128xf32>, vector<2x128xf32> -> vector<2x128xf32>
    %433 = arith.addf %373, %432 : vector<2x128xf32>
    %434 = math.tanh %433 : vector<2x128xf32>
    %cst_163 = arith.constant dense<0.000000e+00> : vector<2x128xf32>
    %435 = tpu.matmul %434, %19, %cst_163 {dimension_numbers = #tpu.dot_dimension_numbers<[1], [0], [0], [1], [0, 0, 1, 1], [], []>} : vector<2x128xf32>, vector<128x128xf32>, vector<2x128xf32> -> vector<2x128xf32>
    %436 = vector.broadcast %20 : vector<1x128xf32> to vector<2x128xf32>
    %437 = arith.addf %435, %436 : vector<2x128xf32>
    %cst_164 = arith.constant dense<0.000000e+00> : vector<2x128xf32>
    %438 = tpu.matmul %434, %17, %cst_164 {dimension_numbers = #tpu.dot_dimension_numbers<[1], [0], [0], [1], [0, 0, 1, 1], [], []>} : vector<2x128xf32>, vector<128x128xf32>, vector<2x128xf32> -> vector<2x128xf32>
    %439 = arith.addf %373, %438 : vector<2x128xf32>
    %440 = math.tanh %439 : vector<2x128xf32>
    %cst_165 = arith.constant dense<0.000000e+00> : vector<2x128xf32>
    %441 = tpu.matmul %440, %19, %cst_165 {dimension_numbers = #tpu.dot_dimension_numbers<[1], [0], [0], [1], [0, 0, 1, 1], [], []>} : vector<2x128xf32>, vector<128x128xf32>, vector<2x128xf32> -> vector<2x128xf32>
    %442 = vector.broadcast %20 : vector<1x128xf32> to vector<2x128xf32>
    %443 = arith.addf %441, %442 : vector<2x128xf32>
    %444 = arith.mulf %437, %194 : vector<2x128xf32>
    %cst_166 = arith.constant dense<0.000000e+00> : vector<2xf32>
    %445 = vector.multi_reduction <add>, %444, %cst_166 [1] : vector<2x128xf32> to vector<2xf32>
    %446 = vector.shape_cast %445 : vector<2xf32> to vector<2x1xf32>
    %447 = arith.mulf %437, %437 : vector<2x128xf32>
    %cst_167 = arith.constant dense<0.000000e+00> : vector<2xf32>
    %448 = vector.multi_reduction <add>, %447, %cst_167 [1] : vector<2x128xf32> to vector<2xf32>
    %449 = vector.shape_cast %448 : vector<2xf32> to vector<2x1xf32>
    %450 = math.sqrt %449 : vector<2x1xf32>
    %451 = arith.mulf %194, %194 : vector<2x128xf32>
    %cst_168 = arith.constant dense<0.000000e+00> : vector<2xf32>
    %452 = vector.multi_reduction <add>, %451, %cst_168 [1] : vector<2x128xf32> to vector<2xf32>
    %453 = vector.shape_cast %452 : vector<2xf32> to vector<2x1xf32>
    %454 = math.sqrt %453 : vector<2x1xf32>
    %455 = arith.mulf %450, %454 : vector<2x1xf32>
    %cst_169 = arith.constant 9.99999993E-9 : f32
    %456 = vector.broadcast %cst_169 : f32 to vector<2x1xf32>
    %457 = arith.maximumf %455, %456 : vector<2x1xf32>
    %458 = arith.divf %446, %457 : vector<2x1xf32>
    %cst_170 = arith.constant dense<0.000000e+00> : vector<1xf32>
    %459 = vector.multi_reduction <add>, %458, %cst_170 [0] : vector<2x1xf32> to vector<1xf32>
    %460 = vector.shape_cast %459 : vector<1xf32> to vector<1x1xf32>
    %cst_171 = arith.constant 2.000000e+00 : f32
    %461 = vector.broadcast %cst_171 : f32 to vector<1x1xf32>
    %462 = arith.divf %460, %461 : vector<1x1xf32>
    %cst_172 = arith.constant 0.000000e+00 : f32
    %463 = vector.broadcast %cst_172 : f32 to vector<1x1xf32>
    %464 = arith.subf %463, %462 : vector<1x1xf32>
    %465 = arith.mulf %443, %194 : vector<2x128xf32>
    %cst_173 = arith.constant dense<0.000000e+00> : vector<2xf32>
    %466 = vector.multi_reduction <add>, %465, %cst_173 [1] : vector<2x128xf32> to vector<2xf32>
    %467 = vector.shape_cast %466 : vector<2xf32> to vector<2x1xf32>
    %468 = arith.mulf %443, %443 : vector<2x128xf32>
    %cst_174 = arith.constant dense<0.000000e+00> : vector<2xf32>
    %469 = vector.multi_reduction <add>, %468, %cst_174 [1] : vector<2x128xf32> to vector<2xf32>
    %470 = vector.shape_cast %469 : vector<2xf32> to vector<2x1xf32>
    %471 = math.sqrt %470 : vector<2x1xf32>
    %472 = arith.mulf %194, %194 : vector<2x128xf32>
    %cst_175 = arith.constant dense<0.000000e+00> : vector<2xf32>
    %473 = vector.multi_reduction <add>, %472, %cst_175 [1] : vector<2x128xf32> to vector<2xf32>
    %474 = vector.shape_cast %473 : vector<2xf32> to vector<2x1xf32>
    %475 = math.sqrt %474 : vector<2x1xf32>
    %476 = arith.mulf %471, %475 : vector<2x1xf32>
    %cst_176 = arith.constant 9.99999993E-9 : f32
    %477 = vector.broadcast %cst_176 : f32 to vector<2x1xf32>
    %478 = arith.maximumf %476, %477 : vector<2x1xf32>
    %479 = arith.divf %467, %478 : vector<2x1xf32>
    %cst_177 = arith.constant dense<0.000000e+00> : vector<1xf32>
    %480 = vector.multi_reduction <add>, %479, %cst_177 [0] : vector<2x1xf32> to vector<1xf32>
    %481 = vector.shape_cast %480 : vector<1xf32> to vector<1x1xf32>
    %cst_178 = arith.constant 2.000000e+00 : f32
    %482 = vector.broadcast %cst_178 : f32 to vector<1x1xf32>
    %483 = arith.divf %481, %482 : vector<1x1xf32>
    %cst_179 = arith.constant 0.000000e+00 : f32
    %484 = vector.broadcast %cst_179 : f32 to vector<1x1xf32>
    %485 = arith.subf %484, %483 : vector<1x1xf32>
    %486 = arith.addf %464, %485 : vector<1x1xf32>
    %cst_180 = arith.constant 5.000000e-01 : f32
    %487 = vector.broadcast %cst_180 : f32 to vector<1x1xf32>
    %488 = arith.mulf %487, %486 : vector<1x1xf32>
    %489 = arith.addf %431, %488 : vector<1x1xf32>
    %cst_181 = arith.constant dense<0.000000e+00> : vector<2x128xf32>
    %490 = tpu.matmul %440, %17, %cst_181 {dimension_numbers = #tpu.dot_dimension_numbers<[1], [0], [0], [1], [0, 0, 1, 1], [], []>} : vector<2x128xf32>, vector<128x128xf32>, vector<2x128xf32> -> vector<2x128xf32>
    %491 = arith.addf %373, %490 : vector<2x128xf32>
    %492 = math.tanh %491 : vector<2x128xf32>
    %cst_182 = arith.constant dense<0.000000e+00> : vector<2x128xf32>
    %493 = tpu.matmul %492, %19, %cst_182 {dimension_numbers = #tpu.dot_dimension_numbers<[1], [0], [0], [1], [0, 0, 1, 1], [], []>} : vector<2x128xf32>, vector<128x128xf32>, vector<2x128xf32> -> vector<2x128xf32>
    %494 = vector.broadcast %20 : vector<1x128xf32> to vector<2x128xf32>
    %495 = arith.addf %493, %494 : vector<2x128xf32>
    %cst_183 = arith.constant dense<0.000000e+00> : vector<2x128xf32>
    %496 = tpu.matmul %492, %17, %cst_183 {dimension_numbers = #tpu.dot_dimension_numbers<[1], [0], [0], [1], [0, 0, 1, 1], [], []>} : vector<2x128xf32>, vector<128x128xf32>, vector<2x128xf32> -> vector<2x128xf32>
    %497 = arith.addf %373, %496 : vector<2x128xf32>
    %498 = math.tanh %497 : vector<2x128xf32>
    %cst_184 = arith.constant dense<0.000000e+00> : vector<2x128xf32>
    %499 = tpu.matmul %498, %19, %cst_184 {dimension_numbers = #tpu.dot_dimension_numbers<[1], [0], [0], [1], [0, 0, 1, 1], [], []>} : vector<2x128xf32>, vector<128x128xf32>, vector<2x128xf32> -> vector<2x128xf32>
    %500 = vector.broadcast %20 : vector<1x128xf32> to vector<2x128xf32>
    %501 = arith.addf %499, %500 : vector<2x128xf32>
    %502 = arith.mulf %495, %281 : vector<2x128xf32>
    %cst_185 = arith.constant dense<0.000000e+00> : vector<2xf32>
    %503 = vector.multi_reduction <add>, %502, %cst_185 [1] : vector<2x128xf32> to vector<2xf32>
    %504 = vector.shape_cast %503 : vector<2xf32> to vector<2x1xf32>
    %505 = arith.mulf %495, %495 : vector<2x128xf32>
    %cst_186 = arith.constant dense<0.000000e+00> : vector<2xf32>
    %506 = vector.multi_reduction <add>, %505, %cst_186 [1] : vector<2x128xf32> to vector<2xf32>
    %507 = vector.shape_cast %506 : vector<2xf32> to vector<2x1xf32>
    %508 = math.sqrt %507 : vector<2x1xf32>
    %509 = arith.mulf %281, %281 : vector<2x128xf32>
    %cst_187 = arith.constant dense<0.000000e+00> : vector<2xf32>
    %510 = vector.multi_reduction <add>, %509, %cst_187 [1] : vector<2x128xf32> to vector<2xf32>
    %511 = vector.shape_cast %510 : vector<2xf32> to vector<2x1xf32>
    %512 = math.sqrt %511 : vector<2x1xf32>
    %513 = arith.mulf %508, %512 : vector<2x1xf32>
    %cst_188 = arith.constant 9.99999993E-9 : f32
    %514 = vector.broadcast %cst_188 : f32 to vector<2x1xf32>
    %515 = arith.maximumf %513, %514 : vector<2x1xf32>
    %516 = arith.divf %504, %515 : vector<2x1xf32>
    %cst_189 = arith.constant dense<0.000000e+00> : vector<1xf32>
    %517 = vector.multi_reduction <add>, %516, %cst_189 [0] : vector<2x1xf32> to vector<1xf32>
    %518 = vector.shape_cast %517 : vector<1xf32> to vector<1x1xf32>
    %cst_190 = arith.constant 2.000000e+00 : f32
    %519 = vector.broadcast %cst_190 : f32 to vector<1x1xf32>
    %520 = arith.divf %518, %519 : vector<1x1xf32>
    %cst_191 = arith.constant 0.000000e+00 : f32
    %521 = vector.broadcast %cst_191 : f32 to vector<1x1xf32>
    %522 = arith.subf %521, %520 : vector<1x1xf32>
    %523 = arith.mulf %501, %281 : vector<2x128xf32>
    %cst_192 = arith.constant dense<0.000000e+00> : vector<2xf32>
    %524 = vector.multi_reduction <add>, %523, %cst_192 [1] : vector<2x128xf32> to vector<2xf32>
    %525 = vector.shape_cast %524 : vector<2xf32> to vector<2x1xf32>
    %526 = arith.mulf %501, %501 : vector<2x128xf32>
    %cst_193 = arith.constant dense<0.000000e+00> : vector<2xf32>
    %527 = vector.multi_reduction <add>, %526, %cst_193 [1] : vector<2x128xf32> to vector<2xf32>
    %528 = vector.shape_cast %527 : vector<2xf32> to vector<2x1xf32>
    %529 = math.sqrt %528 : vector<2x1xf32>
    %530 = arith.mulf %281, %281 : vector<2x128xf32>
    %cst_194 = arith.constant dense<0.000000e+00> : vector<2xf32>
    %531 = vector.multi_reduction <add>, %530, %cst_194 [1] : vector<2x128xf32> to vector<2xf32>
    %532 = vector.shape_cast %531 : vector<2xf32> to vector<2x1xf32>
    %533 = math.sqrt %532 : vector<2x1xf32>
    %534 = arith.mulf %529, %533 : vector<2x1xf32>
    %cst_195 = arith.constant 9.99999993E-9 : f32
    %535 = vector.broadcast %cst_195 : f32 to vector<2x1xf32>
    %536 = arith.maximumf %534, %535 : vector<2x1xf32>
    %537 = arith.divf %525, %536 : vector<2x1xf32>
    %cst_196 = arith.constant dense<0.000000e+00> : vector<1xf32>
    %538 = vector.multi_reduction <add>, %537, %cst_196 [0] : vector<2x1xf32> to vector<1xf32>
    %539 = vector.shape_cast %538 : vector<1xf32> to vector<1x1xf32>
    %cst_197 = arith.constant 2.000000e+00 : f32
    %540 = vector.broadcast %cst_197 : f32 to vector<1x1xf32>
    %541 = arith.divf %539, %540 : vector<1x1xf32>
    %cst_198 = arith.constant 0.000000e+00 : f32
    %542 = vector.broadcast %cst_198 : f32 to vector<1x1xf32>
    %543 = arith.subf %542, %541 : vector<1x1xf32>
    %544 = arith.addf %522, %543 : vector<1x1xf32>
    %cst_199 = arith.constant 5.000000e-01 : f32
    %545 = vector.broadcast %cst_199 : f32 to vector<1x1xf32>
    %546 = arith.mulf %545, %544 : vector<1x1xf32>
    %547 = arith.addf %489, %546 : vector<1x1xf32>
    %cst_200 = arith.constant dense<0.000000e+00> : vector<2x128xf32>
    %548 = tpu.matmul %498, %17, %cst_200 {dimension_numbers = #tpu.dot_dimension_numbers<[1], [0], [0], [1], [0, 0, 1, 1], [], []>} : vector<2x128xf32>, vector<128x128xf32>, vector<2x128xf32> -> vector<2x128xf32>
    %549 = arith.addf %373, %548 : vector<2x128xf32>
    %550 = math.tanh %549 : vector<2x128xf32>
    %cst_201 = arith.constant dense<0.000000e+00> : vector<2x128xf32>
    %551 = tpu.matmul %550, %19, %cst_201 {dimension_numbers = #tpu.dot_dimension_numbers<[1], [0], [0], [1], [0, 0, 1, 1], [], []>} : vector<2x128xf32>, vector<128x128xf32>, vector<2x128xf32> -> vector<2x128xf32>
    %552 = vector.broadcast %20 : vector<1x128xf32> to vector<2x128xf32>
    %553 = arith.addf %551, %552 : vector<2x128xf32>
    %cst_202 = arith.constant dense<0.000000e+00> : vector<2x128xf32>
    %554 = tpu.matmul %550, %17, %cst_202 {dimension_numbers = #tpu.dot_dimension_numbers<[1], [0], [0], [1], [0, 0, 1, 1], [], []>} : vector<2x128xf32>, vector<128x128xf32>, vector<2x128xf32> -> vector<2x128xf32>
    %555 = arith.addf %373, %554 : vector<2x128xf32>
    %556 = math.tanh %555 : vector<2x128xf32>
    %cst_203 = arith.constant dense<0.000000e+00> : vector<2x128xf32>
    %557 = tpu.matmul %556, %19, %cst_203 {dimension_numbers = #tpu.dot_dimension_numbers<[1], [0], [0], [1], [0, 0, 1, 1], [], []>} : vector<2x128xf32>, vector<128x128xf32>, vector<2x128xf32> -> vector<2x128xf32>
    %558 = vector.broadcast %20 : vector<1x128xf32> to vector<2x128xf32>
    %559 = arith.addf %557, %558 : vector<2x128xf32>
    %560 = arith.mulf %553, %368 : vector<2x128xf32>
    %cst_204 = arith.constant dense<0.000000e+00> : vector<2xf32>
    %561 = vector.multi_reduction <add>, %560, %cst_204 [1] : vector<2x128xf32> to vector<2xf32>
    %562 = vector.shape_cast %561 : vector<2xf32> to vector<2x1xf32>
    %563 = arith.mulf %553, %553 : vector<2x128xf32>
    %cst_205 = arith.constant dense<0.000000e+00> : vector<2xf32>
    %564 = vector.multi_reduction <add>, %563, %cst_205 [1] : vector<2x128xf32> to vector<2xf32>
    %565 = vector.shape_cast %564 : vector<2xf32> to vector<2x1xf32>
    %566 = math.sqrt %565 : vector<2x1xf32>
    %567 = arith.mulf %368, %368 : vector<2x128xf32>
    %cst_206 = arith.constant dense<0.000000e+00> : vector<2xf32>
    %568 = vector.multi_reduction <add>, %567, %cst_206 [1] : vector<2x128xf32> to vector<2xf32>
    %569 = vector.shape_cast %568 : vector<2xf32> to vector<2x1xf32>
    %570 = math.sqrt %569 : vector<2x1xf32>
    %571 = arith.mulf %566, %570 : vector<2x1xf32>
    %cst_207 = arith.constant 9.99999993E-9 : f32
    %572 = vector.broadcast %cst_207 : f32 to vector<2x1xf32>
    %573 = arith.maximumf %571, %572 : vector<2x1xf32>
    %574 = arith.divf %562, %573 : vector<2x1xf32>
    %cst_208 = arith.constant dense<0.000000e+00> : vector<1xf32>
    %575 = vector.multi_reduction <add>, %574, %cst_208 [0] : vector<2x1xf32> to vector<1xf32>
    %576 = vector.shape_cast %575 : vector<1xf32> to vector<1x1xf32>
    %cst_209 = arith.constant 2.000000e+00 : f32
    %577 = vector.broadcast %cst_209 : f32 to vector<1x1xf32>
    %578 = arith.divf %576, %577 : vector<1x1xf32>
    %cst_210 = arith.constant 0.000000e+00 : f32
    %579 = vector.broadcast %cst_210 : f32 to vector<1x1xf32>
    %580 = arith.subf %579, %578 : vector<1x1xf32>
    %581 = arith.mulf %559, %368 : vector<2x128xf32>
    %cst_211 = arith.constant dense<0.000000e+00> : vector<2xf32>
    %582 = vector.multi_reduction <add>, %581, %cst_211 [1] : vector<2x128xf32> to vector<2xf32>
    %583 = vector.shape_cast %582 : vector<2xf32> to vector<2x1xf32>
    %584 = arith.mulf %559, %559 : vector<2x128xf32>
    %cst_212 = arith.constant dense<0.000000e+00> : vector<2xf32>
    %585 = vector.multi_reduction <add>, %584, %cst_212 [1] : vector<2x128xf32> to vector<2xf32>
    %586 = vector.shape_cast %585 : vector<2xf32> to vector<2x1xf32>
    %587 = math.sqrt %586 : vector<2x1xf32>
    %588 = arith.mulf %368, %368 : vector<2x128xf32>
    %cst_213 = arith.constant dense<0.000000e+00> : vector<2xf32>
    %589 = vector.multi_reduction <add>, %588, %cst_213 [1] : vector<2x128xf32> to vector<2xf32>
    %590 = vector.shape_cast %589 : vector<2xf32> to vector<2x1xf32>
    %591 = math.sqrt %590 : vector<2x1xf32>
    %592 = arith.mulf %587, %591 : vector<2x1xf32>
    %cst_214 = arith.constant 9.99999993E-9 : f32
    %593 = vector.broadcast %cst_214 : f32 to vector<2x1xf32>
    %594 = arith.maximumf %592, %593 : vector<2x1xf32>
    %595 = arith.divf %583, %594 : vector<2x1xf32>
    %cst_215 = arith.constant dense<0.000000e+00> : vector<1xf32>
    %596 = vector.multi_reduction <add>, %595, %cst_215 [0] : vector<2x1xf32> to vector<1xf32>
    %597 = vector.shape_cast %596 : vector<1xf32> to vector<1x1xf32>
    %cst_216 = arith.constant 2.000000e+00 : f32
    %598 = vector.broadcast %cst_216 : f32 to vector<1x1xf32>
    %599 = arith.divf %597, %598 : vector<1x1xf32>
    %cst_217 = arith.constant 0.000000e+00 : f32
    %600 = vector.broadcast %cst_217 : f32 to vector<1x1xf32>
    %601 = arith.subf %600, %599 : vector<1x1xf32>
    %602 = arith.addf %580, %601 : vector<1x1xf32>
    %cst_218 = arith.constant 5.000000e-01 : f32
    %603 = vector.broadcast %cst_218 : f32 to vector<1x1xf32>
    %604 = arith.mulf %603, %602 : vector<1x1xf32>
    %605 = arith.addf %547, %604 : vector<1x1xf32>
    %cst_219 = arith.constant 4.000000e+00 : f32
    %606 = vector.broadcast %cst_219 : f32 to vector<1x1xf32>
    %607 = arith.divf %605, %606 : vector<1x1xf32>
    %c0_220 = arith.constant 0 : index
    %c0_221 = arith.constant 0 : index
    %608 = vector.load %arg22[%c0_220, %c0_221] : memref<1x1xf32, #tpu.memory_space<vmem>>, vector<1x1xf32>
    tpu.vector_store %arg22[%c0_220, %c0_221], %607 {strides = array<i32>} : memref<1x1xf32, #tpu.memory_space<vmem>>, vector<1x1xf32>,
    return
  }
}

</mosaic_0001>

<llo_original>
// kernel: hipposiam_forward.1
$region0: #{hipposiam_forward.1}
  #allocation0 [shape = 'u32[]', space=smem, size = 0x4, offset = 0x4, fixed_abs, tag = 'smem constant byte address 0x4 - core index']
  #allocation1 [shape = 'u32[144,128]{1,0:T(1,128)}', space=vmem, size = 0x12000, scoped, tag = 'internal scratch']
  %s0 = inlined_call_operand.vmem [shape: f32[4,512,27], index: 0, kind: input, shape index: {}]
  %s1 = inlined_call_operand.vmem [shape: f32[2,512], index: 1, kind: input, shape index: {}]
  %s2 = inlined_call_operand.vmem [shape: f32[27,128], index: 2, kind: input, shape index: {}]
  %s3 = inlined_call_operand.vmem [shape: f32[1,128], index: 3, kind: input, shape index: {}]
  %s4 = inlined_call_operand.vmem [shape: f32[128,128], index: 4, kind: input, shape index: {}]
  %s5 = inlined_call_operand.vmem [shape: f32[1,128], index: 5, kind: input, shape index: {}]
  %s6 = inlined_call_operand.vmem [shape: f32[1,128], index: 6, kind: input, shape index: {}]
  %s7 = inlined_call_operand.vmem [shape: f32[1,128], index: 7, kind: input, shape index: {}]
  %s8 = inlined_call_operand.vmem [shape: f32[128,128], index: 8, kind: input, shape index: {}]
  %s9 = inlined_call_operand.vmem [shape: f32[1,128], index: 9, kind: input, shape index: {}]
  %s10 = inlined_call_operand.vmem [shape: f32[1,128], index: 10, kind: input, shape index: {}]
  %s11 = inlined_call_operand.vmem [shape: f32[1,128], index: 11, kind: input, shape index: {}]
  %s12 = inlined_call_operand.vmem [shape: f32[128,128], index: 12, kind: input, shape index: {}]
  %s13 = inlined_call_operand.vmem [shape: f32[1,128], index: 13, kind: input, shape index: {}]
  %s14 = inlined_call_operand.vmem [shape: f32[1,128], index: 14, kind: input, shape index: {}]
  %s15 = inlined_call_operand.vmem [shape: f32[1,128], index: 15, kind: input, shape index: {}]
  %s16 = inlined_call_operand.vmem [shape: f32[128,128], index: 16, kind: input, shape index: {}]
  %s17 = inlined_call_operand.vmem [shape: f32[1,128], index: 17, kind: input, shape index: {}]
  %s18 = inlined_call_operand.vmem [shape: f32[128,128], index: 18, kind: input, shape index: {}]
  %s19 = inlined_call_operand.vmem [shape: f32[1,128], index: 19, kind: input, shape index: {}]
  %s20 = inlined_call_operand.vmem [shape: f32[128,128], index: 20, kind: input, shape index: {}]
  %s21 = inlined_call_operand.vmem [shape: f32[1,128], index: 21, kind: input, shape index: {}]
  %s22 = inlined_call_operand.hbm [shape: f32[1,1], index: 22, kind: output, shape index: {}]
  %s23 = sld [smem:[#allocation0]]
  $region98: #{hipposiam_forward.1} parent=0
    _
  %s25 = ssub.s32 1, %s23
  %s26 = scalar_select 0, %s25, %s23
  $region1: #{hipposiam_forward.1} parent=0
    #allocation2 [shape = 'u8[512]{0}', space=vmem, size = 0x400, scoped, tag = 'output window, operand 0, single buffered']
    #allocation3 [shape = 's32[1]{0}', space=sflag, size = 0x4, scoped, tag = 'scoped memory for hipposiam_forward.1']
    %27 = vsyncpa [#allocation3], 0
    // Predicated region
    $region2: #{hipposiam_forward.1} parent=1 // pred_check
      _
    $region3: #{hipposiam_forward.1} parent=1 // pred_check_branch
      %29 = sbr.rel (0) target = $region5
    $region4: #{hipposiam_forward.1} parent=1 // pred_region
      _
    $region5: #{hipposiam_forward.1} parent=1 // pred_fallthru
      _
    // Predicated region
    $region6: #{hipposiam_forward.1} parent=1 // pred_check
      _
    $region7: #{hipposiam_forward.1} parent=1 // pred_check_branch
      %31 = sbr.rel (0) target = $region9
    $region8: #{hipposiam_forward.1} parent=1 // pred_region
      _
    $region9: #{hipposiam_forward.1} parent=1 // pred_fallthru
      _
    // Predicated region
    $region10: #{hipposiam_forward.1} parent=1 // pred_check
      _
    $region11: #{hipposiam_forward.1} parent=1 // pred_check_branch
      %33 = sbr.rel (0) target = $region13
    $region12: #{hipposiam_forward.1} parent=1 // pred_region
      _
    $region13: #{hipposiam_forward.1} parent=1 // pred_fallthru
      _
    // Predicated region
    $region14: #{hipposiam_forward.1} parent=1 // pred_check
      _
    $region15: #{hipposiam_forward.1} parent=1 // pred_check_branch
      %35 = sbr.rel (0) target = $region17
    $region16: #{hipposiam_forward.1} parent=1 // pred_region
      _
    $region17: #{hipposiam_forward.1} parent=1 // pred_fallthru
      _
    // Predicated region
    $region18: #{hipposiam_forward.1} parent=1 // pred_check
      _
    $region19: #{hipposiam_forward.1} parent=1 // pred_check_branch
      %37 = sbr.rel (0) target = $region21
    $region20: #{hipposiam_forward.1} parent=1 // pred_region
      _
    $region21: #{hipposiam_forward.1} parent=1 // pred_fallthru
      _
    // Predicated region
    $region22: #{hipposiam_forward.1} parent=1 // pred_check
      _
    $region23: #{hipposiam_forward.1} parent=1 // pred_check_branch
      %39 = sbr.rel (0) target = $region25
    $region24: #{hipposiam_forward.1} parent=1 // pred_region
      _
    $region25: #{hipposiam_forward.1} parent=1 // pred_fallthru
      _
    // Predicated region
    $region26: #{hipposiam_forward.1} parent=1 // pred_check
      _
    $region27: #{hipposiam_forward.1} parent=1 // pred_check_branch
      %41 = sbr.rel (0) target = $region29
    $region28: #{hipposiam_forward.1} parent=1 // pred_region
      _
    $region29: #{hipposiam_forward.1} parent=1 // pred_fallthru
      _
    // Predicated region
    $region30: #{hipposiam_forward.1} parent=1 // pred_check
      _
    $region31: #{hipposiam_forward.1} parent=1 // pred_check_branch
      %43 = sbr.rel (0) target = $region33
    $region32: #{hipposiam_forward.1} parent=1 // pred_region
      _
    $region33: #{hipposiam_forward.1} parent=1 // pred_fallthru
      _
    // Predicated region
    $region34: #{hipposiam_forward.1} parent=1 // pred_check
      _
    $region35: #{hipposiam_forward.1} parent=1 // pred_check_branch
      %45 = sbr.rel (0) target = $region37
    $region36: #{hipposiam_forward.1} parent=1 // pred_region
      _
    $region37: #{hipposiam_forward.1} parent=1 // pred_fallthru
      _
    // Predicated region
    $region38: #{hipposiam_forward.1} parent=1 // pred_check
      _
    $region39: #{hipposiam_forward.1} parent=1 // pred_check_branch
      %47 = sbr.rel (0) target = $region41
    $region40: #{hipposiam_forward.1} parent=1 // pred_region
      _
    $region41: #{hipposiam_forward.1} parent=1 // pred_fallthru
      _
    // Predicated region
    $region42: #{hipposiam_forward.1} parent=1 // pred_check
      _
    $region43: #{hipposiam_forward.1} parent=1 // pred_check_branch
      %49 = sbr.rel (0) target = $region45
    $region44: #{hipposiam_forward.1} parent=1 // pred_region
      _
    $region45: #{hipposiam_forward.1} parent=1 // pred_fallthru
      _
    // Predicated region
    $region46: #{hipposiam_forward.1} parent=1 // pred_check
      _
    $region47: #{hipposiam_forward.1} parent=1 // pred_check_branch
      %51 = sbr.rel (0) target = $region49
    $region48: #{hipposiam_forward.1} parent=1 // pred_region
      _
    $region49: #{hipposiam_forward.1} parent=1 // pred_fallthru
      _
    // Predicated region
    $region50: #{hipposiam_forward.1} parent=1 // pred_check
      _
    $region51: #{hipposiam_forward.1} parent=1 // pred_check_branch
      %53 = sbr.rel (0) target = $region53
    $region52: #{hipposiam_forward.1} parent=1 // pred_region
      _
    $region53: #{hipposiam_forward.1} parent=1 // pred_fallthru
      _
    // Predicated region
    $region54: #{hipposiam_forward.1} parent=1 // pred_check
      _
    $region55: #{hipposiam_forward.1} parent=1 // pred_check_branch
      %55 = sbr.rel (0) target = $region57
    $region56: #{hipposiam_forward.1} parent=1 // pred_region
      _
    $region57: #{hipposiam_forward.1} parent=1 // pred_fallthru
      _
    // Predicated region
    $region58: #{hipposiam_forward.1} parent=1 // pred_check
      _
    $region59: #{hipposiam_forward.1} parent=1 // pred_check_branch
      %57 = sbr.rel (0) target = $region61
    $region60: #{hipposiam_forward.1} parent=1 // pred_region
      _
    $region61: #{hipposiam_forward.1} parent=1 // pred_fallthru
      _
    // Predicated region
    $region62: #{hipposiam_forward.1} parent=1 // pred_check
      _
    $region63: #{hipposiam_forward.1} parent=1 // pred_check_branch
      %59 = sbr.rel (0) target = $region65
    $region64: #{hipposiam_forward.1} parent=1 // pred_region
      _
    $region65: #{hipposiam_forward.1} parent=1 // pred_fallthru
      _
    // Predicated region
    $region66: #{hipposiam_forward.1} parent=1 // pred_check
      _
    $region67: #{hipposiam_forward.1} parent=1 // pred_check_branch
      %61 = sbr.rel (0) target = $region69
    $region68: #{hipposiam_forward.1} parent=1 // pred_region
      _
    $region69: #{hipposiam_forward.1} parent=1 // pred_fallthru
      _
    // Predicated region
    $region70: #{hipposiam_forward.1} parent=1 // pred_check
      _
    $region71: #{hipposiam_forward.1} parent=1 // pred_check_branch
      %63 = sbr.rel (0) target = $region73
    $region72: #{hipposiam_forward.1} parent=1 // pred_region
      _
    $region73: #{hipposiam_forward.1} parent=1 // pred_fallthru
      _
    // Predicated region
    $region74: #{hipposiam_forward.1} parent=1 // pred_check
      _
    $region75: #{hipposiam_forward.1} parent=1 // pred_check_branch
      %65 = sbr.rel (0) target = $region77
    $region76: #{hipposiam_forward.1} parent=1 // pred_region
      _
    $region77: #{hipposiam_forward.1} parent=1 // pred_fallthru
      _
    // Predicated region
    $region78: #{hipposiam_forward.1} parent=1 // pred_check
      _
    $region79: #{hipposiam_forward.1} parent=1 // pred_check_branch
      %67 = sbr.rel (0) target = $region81
    $region80: #{hipposiam_forward.1} parent=1 // pred_region
      _
    $region81: #{hipposiam_forward.1} parent=1 // pred_fallthru
      _
    // Predicated region
    $region82: #{hipposiam_forward.1} parent=1 // pred_check
      _
    $region83: #{hipposiam_forward.1} parent=1 // pred_check_branch
      %69 = sbr.rel (0) target = $region85
    $region84: #{hipposiam_forward.1} parent=1 // pred_region
      _
    $region85: #{hipposiam_forward.1} parent=1 // pred_fallthru
      _
    // Predicated region
    $region86: #{hipposiam_forward.1} parent=1 // pred_check
      _
    $region87: #{hipposiam_forward.1} parent=1 // pred_check_branch
      %71 = sbr.rel (0) target = $region89
    $region88: #{hipposiam_forward.1} parent=1 // pred_region
      _
    $region89: #{hipposiam_forward.1} parent=1 // pred_fallthru
      _
    %v72 = vld [vmem:[%s2] sm:$0xff]
    %v73 = vld [vmem:[%s2 + $0x8] sm:$0xff]
    %v74 = vld [vmem:[%s2 + $0x10] sm:$0xff]
    %v75 = vld [vmem:[%s2 + $0x18] sm:$0x7]
    %v76 = vld [vmem:[%s3] sm:$0x1]
    %v77 = vld [vmem:[%s1] sm:$0xff]
    %v78 = vld [vmem:[%s4] sm:$0xff]
    %v79 = vld [vmem:[%s4 + $0x8] sm:$0xff]
    %v80 = vld [vmem:[%s4 + $0x10] sm:$0xff]
    %v81 = vld [vmem:[%s4 + $0x18] sm:$0xff]
    %v82 = vld [vmem:[%s4 + $0x20] sm:$0xff]
    %v83 = vld [vmem:[%s4 + $0x28] sm:$0xff]
    %v84 = vld [vmem:[%s4 + $0x30] sm:$0xff]
    %v85 = vld [vmem:[%s4 + $0x38] sm:$0xff]
    %v86 = vld [vmem:[%s4 + $0x40] sm:$0xff]
    %v87 = vld [vmem:[%s4 + $0x48] sm:$0xff]
    %v88 = vld [vmem:[%s4 + $0x50] sm:$0xff]
    %v89 = vld [vmem:[%s4 + $0x58] sm:$0xff]
    %v90 = vld [vmem:[%s4 + $0x60] sm:$0xff]
    %v91 = vld [vmem:[%s4 + $0x68] sm:$0xff]
    %v92 = vld [vmem:[%s4 + $0x70] sm:$0xff]
    %v93 = vld [vmem:[%s4 + $0x78] sm:$0xff]
    %v94 = vld [vmem:[%s5] sm:$0x1]
    %v95 = vld [vmem:[%s6] sm:$0x1]
    %v96 = vld [vmem:[%s7] sm:$0x1]
    %v97 = vld [vmem:[%s8] sm:$0xff]
    %v98 = vld [vmem:[%s8 + $0x8] sm:$0xff]
    %v99 = vld [vmem:[%s8 + $0x10] sm:$0xff]
    %v100 = vld [vmem:[%s8 + $0x18] sm:$0xff]
    %v101 = vld [vmem:[%s8 + $0x20] sm:$0xff]
    %v102 = vld [vmem:[%s8 + $0x28] sm:$0xff]
    %v103 = vld [vmem:[%s8 + $0x30] sm:$0xff]
    %v104 = vld [vmem:[%s8 + $0x38] sm:$0xff]
    %v105 = vld [vmem:[%s8 + $0x40] sm:$0xff]
    %v106 = vld [vmem:[%s8 + $0x48] sm:$0xff]
    %v107 = vld [vmem:[%s8 + $0x50] sm:$0xff]
    %v108 = vld [vmem:[%s8 + $0x58] sm:$0xff]
    %v109 = vld [vmem:[%s8 + $0x60] sm:$0xff]
    %v110 = vld [vmem:[%s8 + $0x68] sm:$0xff]
    %v111 = vld [vmem:[%s8 + $0x70] sm:$0xff]
    %v112 = vld [vmem:[%s8 + $0x78] sm:$0xff]
    %v113 = vld [vmem:[%s9] sm:$0x1]
    %v114 = vld [vmem:[%s10] sm:$0x1]
    %v115 = vld [vmem:[%s11] sm:$0x1]
    %v116 = vld [vmem:[%s12] sm:$0xff]
    %v117 = vld [vmem:[%s12 + $0x8] sm:$0xff]
    %v118 = vld [vmem:[%s12 + $0x10] sm:$0xff]
    %v119 = vld [vmem:[%s12 + $0x18] sm:$0xff]
    %v120 = vld [vmem:[%s12 + $0x20] sm:$0xff]
    %v121 = vld [vmem:[%s12 + $0x28] sm:$0xff]
    %v122 = vld [vmem:[%s12 + $0x30] sm:$0xff]
    %v123 = vld [vmem:[%s12 + $0x38] sm:$0xff]
    %v124 = vld [vmem:[%s12 + $0x40] sm:$0xff]
    %v125 = vld [vmem:[%s12 + $0x48] sm:$0xff]
    %v126 = vld [vmem:[%s12 + $0x50] sm:$0xff]
    %v127 = vld [vmem:[%s12 + $0x58] sm:$0xff]
    %v128 = vld [vmem:[%s12 + $0x60] sm:$0xff]
    %v129 = vld [vmem:[%s12 + $0x68] sm:$0xff]
    %v130 = vld [vmem:[%s12 + $0x70] sm:$0xff]
    %v131 = vld [vmem:[%s12 + $0x78] sm:$0xff]
    %v132 = vld [vmem:[%s13] sm:$0x1]
    %v133 = vld [vmem:[%s14] sm:$0x1]
    %v134 = vld [vmem:[%s15] sm:$0x1]
    %v135 = vld [vmem:[%s16] sm:$0xff]
    %v136 = vld [vmem:[%s16 + $0x8] sm:$0xff]
    %v137 = vld [vmem:[%s16 + $0x10] sm:$0xff]
    %v138 = vld [vmem:[%s16 + $0x18] sm:$0xff]
    %v139 = vld [vmem:[%s16 + $0x20] sm:$0xff]
    %v140 = vld [vmem:[%s16 + $0x28] sm:$0xff]
    %v141 = vld [vmem:[%s16 + $0x30] sm:$0xff]
    %v142 = vld [vmem:[%s16 + $0x38] sm:$0xff]
    %v143 = vld [vmem:[%s16 + $0x40] sm:$0xff]
    %v144 = vld [vmem:[%s16 + $0x48] sm:$0xff]
    %v145 = vld [vmem:[%s16 + $0x50] sm:$0xff]
    %v146 = vld [vmem:[%s16 + $0x58] sm:$0xff]
    %v147 = vld [vmem:[%s16 + $0x60] sm:$0xff]
    %v148 = vld [vmem:[%s16 + $0x68] sm:$0xff]
    %v149 = vld [vmem:[%s16 + $0x70] sm:$0xff]
    %v150 = vld [vmem:[%s16 + $0x78] sm:$0xff]
    %v151 = vld [vmem:[%s17] sm:$0x1]
    %v152 = vld [vmem:[%s18] sm:$0xff]
    %v153 = vld [vmem:[%s18 + $0x8] sm:$0xff]
    %v154 = vld [vmem:[%s18 + $0x10] sm:$0xff]
    %v155 = vld [vmem:[%s18 + $0x18] sm:$0xff]
    %v156 = vld [vmem:[%s18 + $0x20] sm:$0xff]
    %v157 = vld [vmem:[%s18 + $0x28] sm:$0xff]
    %v158 = vld [vmem:[%s18 + $0x30] sm:$0xff]
    %v159 = vld [vmem:[%s18 + $0x38] sm:$0xff]
    %v160 = vld [vmem:[%s18 + $0x40] sm:$0xff]
    %v161 = vld [vmem:[%s18 + $0x48] sm:$0xff]
    %v162 = vld [vmem:[%s18 + $0x50] sm:$0xff]
    %v163 = vld [vmem:[%s18 + $0x58] sm:$0xff]
    %v164 = vld [vmem:[%s18 + $0x60] sm:$0xff]
    %v165 = vld [vmem:[%s18 + $0x68] sm:$0xff]
    %v166 = vld [vmem:[%s18 + $0x70] sm:$0xff]
    %v167 = vld [vmem:[%s18 + $0x78] sm:$0xff]
    %v168 = vld [vmem:[%s19] sm:$0x1]
    %v169 = vld [vmem:[%s20] sm:$0xff]
    %v170 = vld [vmem:[%s20 + $0x8] sm:$0xff]
    %v171 = vld [vmem:[%s20 + $0x10] sm:$0xff]
    %v172 = vld [vmem:[%s20 + $0x18] sm:$0xff]
    %v173 = vld [vmem:[%s20 + $0x20] sm:$0xff]
    %v174 = vld [vmem:[%s20 + $0x28] sm:$0xff]
    %v175 = vld [vmem:[%s20 + $0x30] sm:$0xff]
    %v176 = vld [vmem:[%s20 + $0x38] sm:$0xff]
    %v177 = vld [vmem:[%s20 + $0x40] sm:$0xff]
    %v178 = vld [vmem:[%s20 + $0x48] sm:$0xff]
    %v179 = vld [vmem:[%s20 + $0x50] sm:$0xff]
    %v180 = vld [vmem:[%s20 + $0x58] sm:$0xff]
    %v181 = vld [vmem:[%s20 + $0x60] sm:$0xff]
    %v182 = vld [vmem:[%s20 + $0x68] sm:$0xff]
    %v183 = vld [vmem:[%s20 + $0x70] sm:$0xff]
    %v184 = vld [vmem:[%s20 + $0x78] sm:$0xff]
    %v185 = vld [vmem:[%s21] sm:$0x1]
    %v186 = vld [vmem:[%s0] sm:$0xff]
    %v187 = vld [vmem:[%s0 + $0x8] sm:$0xff]
    %v188 = vld [vmem:[%s0 + $0x10] sm:$0xff]
    %v189 = vld [vmem:[%s0 + $0x18] sm:$0xff]
    %v190 = vld [vmem:[%s0 + $0x20] sm:$0xff]
    %v191 = vld [vmem:[%s0 + $0x28] sm:$0xff]
    %v192 = vld [vmem:[%s0 + $0x30] sm:$0xff]
    %v193 = vld [vmem:[%s0 + $0x38] sm:$0xff]
    %v194 = vld [vmem:[%s0 + $0x40] sm:$0xff]
    %v195 = vld [vmem:[%s0 + $0x48] sm:$0xff]
    %v196 = vld [vmem:[%s0 + $0x50] sm:$0xff]
    %v197 = vld [vmem:[%s0 + $0x58] sm:$0xff]
    %v198 = vld [vmem:[%s0 + $0x60] sm:$0xff]
    %v199 = vld [vmem:[%s0 + $0x68] sm:$0xff]
    %v200 = vld [vmem:[%s0 + $0x70] sm:$0xff]
    %v201 = vld [vmem:[%s0 + $0x78] sm:$0xff]
    %v202 = vld [vmem:[%s0 + $0x80] sm:$0xff]
    %v203 = vld [vmem:[%s0 + $0x88] sm:$0xff]
    %v204 = vld [vmem:[%s0 + $0x90] sm:$0xff]
    %v205 = vld [vmem:[%s0 + $0x98] sm:$0xff]
    %v206 = vld [vmem:[%s0 + $0xa0] sm:$0xff]
    %v207 = vld [vmem:[%s0 + $0xa8] sm:$0xff]
    %v208 = vld [vmem:[%s0 + $0xb0] sm:$0xff]
    %v209 = vld [vmem:[%s0 + $0xb8] sm:$0xff]
    %v210 = vld [vmem:[%s0 + $0xc0] sm:$0xff]
    %v211 = vld [vmem:[%s0 + $0xc8] sm:$0xff]
    %v212 = vld [vmem:[%s0 + $0xd0] sm:$0xff]
    %v213 = vld [vmem:[%s0 + $0xd8] sm:$0xff]
    %v214 = vld [vmem:[%s0 + $0xe0] sm:$0xff]
    %v215 = vld [vmem:[%s0 + $0xe8] sm:$0xff]
    %v216 = vld [vmem:[%s0 + $0xf0] sm:$0xff]
    %v217 = vld [vmem:[%s0 + $0xf8] sm:$0xff]
    %v218 = vld [vmem:[%s0 + $0x100] sm:$0xff]
    %v219 = vld [vmem:[%s0 + $0x108] sm:$0xff]
    %v220 = vld [vmem:[%s0 + $0x110] sm:$0xff]
    %v221 = vld [vmem:[%s0 + $0x118] sm:$0xff]
    %v222 = vld [vmem:[%s0 + $0x120] sm:$0xff]
    %v223 = vld [vmem:[%s0 + $0x128] sm:$0xff]
    %v224 = vld [vmem:[%s0 + $0x130] sm:$0xff]
    %v225 = vld [vmem:[%s0 + $0x138] sm:$0xff]
    %v226 = vld [vmem:[%s0 + $0x140] sm:$0xff]
    %v227 = vld [vmem:[%s0 + $0x148] sm:$0xff]
    %v228 = vld [vmem:[%s0 + $0x150] sm:$0xff]
    %v229 = vld [vmem:[%s0 + $0x158] sm:$0xff]
    %v230 = vld [vmem:[%s0 + $0x160] sm:$0xff]
    %v231 = vld [vmem:[%s0 + $0x168] sm:$0xff]
    %v232 = vld [vmem:[%s0 + $0x170] sm:$0xff]
    %v233 = vld [vmem:[%s0 + $0x178] sm:$0xff]
    %v234 = vld [vmem:[%s0 + $0x180] sm:$0xff]
    %v235 = vld [vmem:[%s0 + $0x188] sm:$0xff]
    %v236 = vld [vmem:[%s0 + $0x190] sm:$0xff]
    %v237 = vld [vmem:[%s0 + $0x198] sm:$0xff]
    %v238 = vld [vmem:[%s0 + $0x1a0] sm:$0xff]
    %v239 = vld [vmem:[%s0 + $0x1a8] sm:$0xff]
    %v240 = vld [vmem:[%s0 + $0x1b0] sm:$0xff]
    %v241 = vld [vmem:[%s0 + $0x1b8] sm:$0xff]
    %v242 = vld [vmem:[%s0 + $0x1c0] sm:$0xff]
    %v243 = vld [vmem:[%s0 + $0x1c8] sm:$0xff]
    %v244 = vld [vmem:[%s0 + $0x1d0] sm:$0xff]
    %v245 = vld [vmem:[%s0 + $0x1d8] sm:$0xff]
    %v246 = vld [vmem:[%s0 + $0x1e0] sm:$0xff]
    %v247 = vld [vmem:[%s0 + $0x1e8] sm:$0xff]
    %v248 = vld [vmem:[%s0 + $0x1f0] sm:$0xff]
    %v249 = vld [vmem:[%s0 + $0x1f8] sm:$0xff]
    %v251 = vlaneseq
    %v252 = vshrl.u32 %v251, 7
    %v253 = vsub.s32 0, %v252
    %v254 = vrot.slane %v76, %v253
    %vm256 = vcmask 220160
    %v258 = vsel %vm256, %v186, 0
    %v261 = vsel %vm256, %v187, 0
    %v264 = vsel %vm256, %v188, 0
    %v267 = vsel %vm256, %v189, 0
    %v270 = vsel %vm256, %v190, 0
    %v273 = vsel %vm256, %v191, 0
    %v276 = vsel %vm256, %v192, 0
    %v279 = vsel %vm256, %v193, 0
    %v282 = vsel %vm256, %v194, 0
    %v285 = vsel %vm256, %v195, 0
    %v288 = vsel %vm256, %v196, 0
    %v291 = vsel %vm256, %v197, 0
    %v294 = vsel %vm256, %v198, 0
    %v297 = vsel %vm256, %v199, 0
    %v300 = vsel %vm256, %v200, 0
    %v303 = vsel %vm256, %v201, 0
    %v306 = vsel %vm256, %v202, 0
    %v309 = vsel %vm256, %v203, 0
    %v312 = vsel %vm256, %v204, 0
    %v315 = vsel %vm256, %v205, 0
    %v318 = vsel %vm256, %v206, 0
    %v321 = vsel %vm256, %v207, 0
    %v324 = vsel %vm256, %v208, 0
    %v327 = vsel %vm256, %v209, 0
    %v330 = vsel %vm256, %v210, 0
    %v333 = vsel %vm256, %v211, 0
    %v336 = vsel %vm256, %v212, 0
    %v339 = vsel %vm256, %v213, 0
    %v342 = vsel %vm256, %v214, 0
    %v345 = vsel %vm256, %v215, 0
    %v348 = vsel %vm256, %v216, 0
    %v351 = vsel %vm256, %v217, 0
    %v354 = vsel %vm256, %v218, 0
    %v357 = vsel %vm256, %v219, 0
    %v360 = vsel %vm256, %v220, 0
    %v363 = vsel %vm256, %v221, 0
    %v366 = vsel %vm256, %v222, 0
    %v369 = vsel %vm256, %v223, 0
    %v372 = vsel %vm256, %v224, 0
    %v375 = vsel %vm256, %v225, 0
    %v378 = vsel %vm256, %v226, 0
    %v381 = vsel %vm256, %v227, 0
    %v384 = vsel %vm256, %v228, 0
    %v387 = vsel %vm256, %v229, 0
    %v390 = vsel %vm256, %v230, 0
    %v393 = vsel %vm256, %v231, 0
    %v396 = vsel %vm256, %v232, 0
    %v399 = vsel %vm256, %v233, 0
    %v402 = vsel %vm256, %v234, 0
    %v405 = vsel %vm256, %v235, 0
    %v408 = vsel %vm256, %v236, 0
    %v411 = vsel %vm256, %v237, 0
    %v414 = vsel %vm256, %v238, 0
    %v417 = vsel %vm256, %v239, 0
    %v420 = vsel %vm256, %v240, 0
    %v423 = vsel %vm256, %v241, 0
    %v426 = vsel %vm256, %v242, 0
    %v429 = vsel %vm256, %v243, 0
    %v432 = vsel %vm256, %v244, 0
    %v435 = vsel %vm256, %v245, 0
    %v438 = vsel %vm256, %v246, 0
    %v441 = vsel %vm256, %v247, 0
    %v444 = vsel %vm256, %v248, 0
    %v447 = vsel %vm256, %v249, 0
    %vm449 = vcmask 1042432
    %v451 = vsel %vm449, %v75, 0
    %453 = vmatprep.subr.mxu0 0.0
    %454 = vmatpush1.msra.mxu0 0.0
    %455 = vmatprep.subr.mxu0 0.0
    %456 = vmatpush1.msra.mxu0 0.0
    %457 = vmatprep.subr.mxu0 0.0
    %458 = vmatpush1.msra.mxu0 0.0
    %459 = vmatprep.subr.mxu0 0.0
    %460 = vmatpush1.msra.mxu0 0.0
    %461 = vmatprep.subr.mxu0 0.0
    %462 = vmatpush1.msra.mxu0 0.0
    %463 = vmatprep.subr.mxu0 0.0
    %464 = vmatpush1.msra.mxu0 0.0
    %465 = vmatprep.subr.mxu0 0.0
    %466 = vmatpush1.msra.mxu0 0.0
    %467 = vmatprep.subr.mxu0 0.0
    %468 = vmatpush1.msra.mxu0 0.0
    %469 = vmatprep.subr.mxu0 0.0
    %470 = vmatpush1.msra.mxu0 0.0
    %471 = vmatprep.subr.mxu0 0.0
    %472 = vmatpush1.msra.mxu0 0.0
    %473 = vmatprep.subr.mxu0 0.0
    %474 = vmatpush1.msra.mxu0 0.0
    %475 = vmatprep.subr.mxu0 0.0
    %476 = vmatpush1.msra.mxu0 0.0
    %477 = vmatprep.subr.mxu0 0.0
    %478 = vmatpush1.msra.mxu0 %v451
    %479 = vmatprep.subr.mxu0 0.0
    %480 = vmatpush1.msra.mxu0 %v74
    %481 = vmatprep.subr.mxu0 0.0
    %482 = vmatpush1.msra.mxu0 %v73
    %483 = vmatprep.subr.mxu0 0.0
    %484 = vmatpush1.msra.mxu0 %v72
    %485 = vmatprep.subr.mxu0 0.0
    %486 = vmatpush2.msra.mxu0 0.0
    %487 = vmatprep.subr.mxu0 0.0
    %488 = vmatpush2.msra.mxu0 0.0
    %489 = vmatprep.subr.mxu0 0.0
    %490 = vmatpush2.msra.mxu0 0.0
    %491 = vmatprep.subr.mxu0 0.0
    %492 = vmatpush2.msra.mxu0 0.0
    %493 = vmatprep.subr.mxu0 0.0
    %494 = vmatpush2.msra.mxu0 0.0
    %495 = vmatprep.subr.mxu0 0.0
    %496 = vmatpush2.msra.mxu0 0.0
    %497 = vmatprep.subr.mxu0 0.0
    %498 = vmatpush2.msra.mxu0 0.0
    %499 = vmatprep.subr.mxu0 0.0
    %500 = vmatpush2.msra.mxu0 0.0
    %501 = vmatprep.subr.mxu0 0.0
    %502 = vmatpush2.msra.mxu0 0.0
    %503 = vmatprep.subr.mxu0 0.0
    %504 = vmatpush2.msra.mxu0 0.0
    %505 = vmatprep.subr.mxu0 0.0
    %506 = vmatpush2.msra.mxu0 0.0
    %507 = vmatprep.subr.mxu0 0.0
    %508 = vmatpush2.msra.mxu0 0.0
    %509 = vmatprep.subr.mxu0 0.0
    %510 = vmatpush2.msra.mxu0 0.0
    %511 = vmatprep.subr.mxu0 0.0
    %512 = vmatpush2.msra.mxu0 0.0
    %513 = vmatprep.subr.mxu0 0.0
    %514 = vmatpush2.msra.mxu0 0.0
    %515 = vmatprep.subr.mxu0 0.0
    %516 = vmatpush2.msra.mxu0 0.0
    %517 = vmatprep.mubr.f32.mxu0 0.0
    %518 = vmatmul.mubr.f32.gmra.mxu0 %v258
    %v519 = vpop.f32.mrf.mxu0
    %v520 = vadd.f32 %v254, %v519
    %v521 = vpop.f32.mrf.mxu0
    %522 = vmatprep.mubr.f32.mxu0 0.0
    %523 = vmatmul.mubr.f32.gmra.mxu0 %v261
    %v524 = vpop.f32.mrf.mxu0
    %v525 = vadd.f32 %v254, %v524
    %v526 = vpop.f32.mrf.mxu0
    %527 = vmatprep.mubr.f32.mxu0 0.0
    %528 = vmatmul.mubr.f32.gmra.mxu0 %v264
    %v529 = vpop.f32.mrf.mxu0
    %v530 = vadd.f32 %v254, %v529
    %v531 = vpop.f32.mrf.mxu0
    %532 = vmatprep.mubr.f32.mxu0 0.0
    %533 = vmatmul.mubr.f32.gmra.mxu0 %v267
    %v534 = vpop.f32.mrf.mxu0
    %v535 = vadd.f32 %v254, %v534
    %v536 = vpop.f32.mrf.mxu0
    %537 = vmatprep.mubr.f32.mxu0 0.0
    %538 = vmatmul.mubr.f32.gmra.mxu0 %v270
    %v539 = vpop.f32.mrf.mxu0
    %v540 = vadd.f32 %v254, %v539
    %v541 = vpop.f32.mrf.mxu0
    %542 = vmatprep.mubr.f32.mxu0 0.0
    %543 = vmatmul.mubr.f32.gmra.mxu0 %v273
    %v544 = vpop.f32.mrf.mxu0
    %v545 = vadd.f32 %v254, %v544
    %v546 = vpop.f32.mrf.mxu0
    %547 = vmatprep.mubr.f32.mxu0 0.0
    %548 = vmatmul.mubr.f32.gmra.mxu0 %v276
    %v549 = vpop.f32.mrf.mxu0
    %v550 = vadd.f32 %v254, %v549
    %v551 = vpop.f32.mrf.mxu0
    %552 = vmatprep.mubr.f32.mxu0 0.0
    %553 = vmatmul.mubr.f32.gmra.mxu0 %v279
    %v554 = vpop.f32.mrf.mxu0
    %v555 = vadd.f32 %v254, %v554
    %v556 = vpop.f32.mrf.mxu0
    %557 = vmatprep.mubr.f32.mxu0 0.0
    %558 = vmatmul.mubr.f32.gmra.mxu0 %v282
    %v559 = vpop.f32.mrf.mxu0
    %v560 = vadd.f32 %v254, %v559
    %v561 = vpop.f32.mrf.mxu0
    %562 = vmatprep.mubr.f32.mxu0 0.0
    %563 = vmatmul.mubr.f32.gmra.mxu0 %v285
    %v564 = vpop.f32.mrf.mxu0
    %v565 = vadd.f32 %v254, %v564
    %v566 = vpop.f32.mrf.mxu0
    %567 = vmatprep.mubr.f32.mxu0 0.0
    %568 = vmatmul.mubr.f32.gmra.mxu0 %v288
    %v569 = vpop.f32.mrf.mxu0
    %v570 = vadd.f32 %v254, %v569
    %v571 = vpop.f32.mrf.mxu0
    %572 = vmatprep.mubr.f32.mxu0 0.0
    %573 = vmatmul.mubr.f32.gmra.mxu0 %v291
    %v574 = vpop.f32.mrf.mxu0
    %v575 = vadd.f32 %v254, %v574
    %v576 = vpop.f32.mrf.mxu0
    %577 = vmatprep.mubr.f32.mxu0 0.0
    %578 = vmatmul.mubr.f32.gmra.mxu0 %v294
    %v579 = vpop.f32.mrf.mxu0
    %v580 = vadd.f32 %v254, %v579
    %v581 = vpop.f32.mrf.mxu0
    %582 = vmatprep.mubr.f32.mxu0 0.0
    %583 = vmatmul.mubr.f32.gmra.mxu0 %v297
    %v584 = vpop.f32.mrf.mxu0
    %v585 = vadd.f32 %v254, %v584
    %v586 = vpop.f32.mrf.mxu0
    %587 = vmatprep.mubr.f32.mxu0 0.0
    %588 = vmatmul.mubr.f32.gmra.mxu0 %v300
    %v589 = vpop.f32.mrf.mxu0
    %v590 = vadd.f32 %v254, %v589
    %v591 = vpop.f32.mrf.mxu0
    %592 = vmatprep.mubr.f32.mxu0 0.0
    %593 = vmatmul.mubr.f32.gmra.mxu0 %v303
    %v594 = vpop.f32.mrf.mxu0
    %v595 = vadd.f32 %v254, %v594
    %v596 = vpop.f32.mrf.mxu0
    %597 = vmatprep.mubr.f32.mxu0 0.0
    %598 = vmatmul.mubr.f32.gmra.mxu0 %v306
    %v599 = vpop.f32.mrf.mxu0
    %v600 = vadd.f32 %v254, %v599
    %v601 = vpop.f32.mrf.mxu0
    %602 = vmatprep.mubr.f32.mxu0 0.0
    %603 = vmatmul.mubr.f32.gmra.mxu0 %v309
    %v604 = vpop.f32.mrf.mxu0
    %v605 = vadd.f32 %v254, %v604
    %v606 = vpop.f32.mrf.mxu0
    %607 = vmatprep.mubr.f32.mxu0 0.0
    %608 = vmatmul.mubr.f32.gmra.mxu0 %v312
    %v609 = vpop.f32.mrf.mxu0
    %v610 = vadd.f32 %v254, %v609
    %v611 = vpop.f32.mrf.mxu0
    %612 = vmatprep.mubr.f32.mxu0 0.0
    %613 = vmatmul.mubr.f32.gmra.mxu0 %v315
    %v614 = vpop.f32.mrf.mxu0
    %v615 = vadd.f32 %v254, %v614
    %v616 = vpop.f32.mrf.mxu0
    %617 = vmatprep.mubr.f32.mxu0 0.0
    %618 = vmatmul.mubr.f32.gmra.mxu0 %v318
    %v619 = vpop.f32.mrf.mxu0
    %v620 = vadd.f32 %v254, %v619
    %v621 = vpop.f32.mrf.mxu0
    %622 = vmatprep.mubr.f32.mxu0 0.0
    %623 = vmatmul.mubr.f32.gmra.mxu0 %v321
    %v624 = vpop.f32.mrf.mxu0
    %v625 = vadd.f32 %v254, %v624
    %v626 = vpop.f32.mrf.mxu0
    %627 = vmatprep.mubr.f32.mxu0 0.0
    %628 = vmatmul.mubr.f32.gmra.mxu0 %v324
    %v629 = vpop.f32.mrf.mxu0
    %v630 = vadd.f32 %v254, %v629
    %v631 = vpop.f32.mrf.mxu0
    %632 = vmatprep.mubr.f32.mxu0 0.0
    %633 = vmatmul.mubr.f32.gmra.mxu0 %v327
    %v634 = vpop.f32.mrf.mxu0
    %v635 = vadd.f32 %v254, %v634
    %v636 = vpop.f32.mrf.mxu0
    %637 = vmatprep.mubr.f32.mxu0 0.0
    %638 = vmatmul.mubr.f32.gmra.mxu0 %v330
    %v639 = vpop.f32.mrf.mxu0
    %v640 = vadd.f32 %v254, %v639
    %v641 = vpop.f32.mrf.mxu0
    %642 = vmatprep.mubr.f32.mxu0 0.0
    %643 = vmatmul.mubr.f32.gmra.mxu0 %v333
    %v644 = vpop.f32.mrf.mxu0
    %v645 = vadd.f32 %v254, %v644
    %v646 = vpop.f32.mrf.mxu0
    %647 = vmatprep.mubr.f32.mxu0 0.0
    %648 = vmatmul.mubr.f32.gmra.mxu0 %v336
    %v649 = vpop.f32.mrf.mxu0
    %v650 = vadd.f32 %v254, %v649
    %v651 = vpop.f32.mrf.mxu0
    %652 = vmatprep.mubr.f32.mxu0 0.0
    %653 = vmatmul.mubr.f32.gmra.mxu0 %v339
    %v654 = vpop.f32.mrf.mxu0
    %v655 = vadd.f32 %v254, %v654
    %v656 = vpop.f32.mrf.mxu0
    %657 = vmatprep.mubr.f32.mxu0 0.0
    %658 = vmatmul.mubr.f32.gmra.mxu0 %v342
    %v659 = vpop.f32.mrf.mxu0
    %v660 = vadd.f32 %v254, %v659
    %v661 = vpop.f32.mrf.mxu0
    %662 = vmatprep.mubr.f32.mxu0 0.0
    %663 = vmatmul.mubr.f32.gmra.mxu0 %v345
    %v664 = vpop.f32.mrf.mxu0
    %v665 = vadd.f32 %v254, %v664
    %v666 = vpop.f32.mrf.mxu0
    %667 = vmatprep.mubr.f32.mxu0 0.0
    %668 = vmatmul.mubr.f32.gmra.mxu0 %v348
    %v669 = vpop.f32.mrf.mxu0
    %v670 = vadd.f32 %v254, %v669
    %v671 = vpop.f32.mrf.mxu0
    %672 = vmatprep.mubr.f32.mxu0 0.0
    %673 = vmatmul.mubr.f32.gmra.mxu0 %v351
    %v674 = vpop.f32.mrf.mxu0
    %v675 = vadd.f32 %v254, %v674
    %v676 = vpop.f32.mrf.mxu0
    %677 = vmatprep.mubr.f32.mxu0 0.0
    %678 = vmatmul.mubr.f32.gmra.mxu0 %v354
    %v679 = vpop.f32.mrf.mxu0
    %v680 = vadd.f32 %v254, %v679
    %v681 = vpop.f32.mrf.mxu0
    %682 = vmatprep.mubr.f32.mxu0 0.0
    %683 = vmatmul.mubr.f32.gmra.mxu0 %v357
    %v684 = vpop.f32.mrf.mxu0
    %v685 = vadd.f32 %v254, %v684
    %v686 = vpop.f32.mrf.mxu0
    %687 = vmatprep.mubr.f32.mxu0 0.0
    %688 = vmatmul.mubr.f32.gmra.mxu0 %v360
    %v689 = vpop.f32.mrf.mxu0
    %v690 = vadd.f32 %v254, %v689
    %v691 = vpop.f32.mrf.mxu0
    %692 = vmatprep.mubr.f32.mxu0 0.0
    %693 = vmatmul.mubr.f32.gmra.mxu0 %v363
    %v694 = vpop.f32.mrf.mxu0
    %v695 = vadd.f32 %v254, %v694
    %v696 = vpop.f32.mrf.mxu0
    %697 = vmatprep.mubr.f32.mxu0 0.0
    %698 = vmatmul.mubr.f32.gmra.mxu0 %v366
    %v699 = vpop.f32.mrf.mxu0
    %v700 = vadd.f32 %v254, %v699
    %v701 = vpop.f32.mrf.mxu0
    %702 = vmatprep.mubr.f32.mxu0 0.0
    %703 = vmatmul.mubr.f32.gmra.mxu0 %v369
    %v704 = vpop.f32.mrf.mxu0
    %v705 = vadd.f32 %v254, %v704
    %v706 = vpop.f32.mrf.mxu0
    %707 = vmatprep.mubr.f32.mxu0 0.0
    %708 = vmatmul.mubr.f32.gmra.mxu0 %v372
    %v709 = vpop.f32.mrf.mxu0
    %v710 = vadd.f32 %v254, %v709
    %v711 = vpop.f32.mrf.mxu0
    %712 = vmatprep.mubr.f32.mxu0 0.0
    %713 = vmatmul.mubr.f32.gmra.mxu0 %v375
    %v714 = vpop.f32.mrf.mxu0
    %v715 = vadd.f32 %v254, %v714
    %v716 = vpop.f32.mrf.mxu0
    %717 = vmatprep.mubr.f32.mxu0 0.0
    %718 = vmatmul.mubr.f32.gmra.mxu0 %v378
    %v719 = vpop.f32.mrf.mxu0
    %v720 = vadd.f32 %v254, %v719
    %v721 = vpop.f32.mrf.mxu0
    %722 = vmatprep.mubr.f32.mxu0 0.0
    %723 = vmatmul.mubr.f32.gmra.mxu0 %v381
    %v724 = vpop.f32.mrf.mxu0
    %v725 = vadd.f32 %v254, %v724
    %v726 = vpop.f32.mrf.mxu0
    %727 = vmatprep.mubr.f32.mxu0 0.0
    %728 = vmatmul.mubr.f32.gmra.mxu0 %v384
    %v729 = vpop.f32.mrf.mxu0
    %v730 = vadd.f32 %v254, %v729
    %v731 = vpop.f32.mrf.mxu0
    %732 = vmatprep.mubr.f32.mxu0 0.0
    %733 = vmatmul.mubr.f32.gmra.mxu0 %v387
    %v734 = vpop.f32.mrf.mxu0
    %v735 = vadd.f32 %v254, %v734
    %v736 = vpop.f32.mrf.mxu0
    %737 = vmatprep.mubr.f32.mxu0 0.0
    %738 = vmatmul.mubr.f32.gmra.mxu0 %v390
    %v739 = vpop.f32.mrf.mxu0
    %v740 = vadd.f32 %v254, %v739
    %v741 = vpop.f32.mrf.mxu0
    %742 = vmatprep.mubr.f32.mxu0 0.0
    %743 = vmatmul.mubr.f32.gmra.mxu0 %v393
    %v744 = vpop.f32.mrf.mxu0
    %v745 = vadd.f32 %v254, %v744
    %v746 = vpop.f32.mrf.mxu0
    %747 = vmatprep.mubr.f32.mxu0 0.0
    %748 = vmatmul.mubr.f32.gmra.mxu0 %v396
    %v749 = vpop.f32.mrf.mxu0
    %v750 = vadd.f32 %v254, %v749
    %v751 = vpop.f32.mrf.mxu0
    %752 = vmatprep.mubr.f32.mxu0 0.0
    %753 = vmatmul.mubr.f32.gmra.mxu0 %v399
    %v754 = vpop.f32.mrf.mxu0
    %v755 = vadd.f32 %v254, %v754
    %v756 = vpop.f32.mrf.mxu0
    %757 = vmatprep.mubr.f32.mxu0 0.0
    %758 = vmatmul.mubr.f32.gmra.mxu0 %v402
    %v759 = vpop.f32.mrf.mxu0
    %v760 = vadd.f32 %v254, %v759
    %v761 = vpop.f32.mrf.mxu0
    %762 = vmatprep.mubr.f32.mxu0 0.0
    %763 = vmatmul.mubr.f32.gmra.mxu0 %v405
    %v764 = vpop.f32.mrf.mxu0
    %v765 = vadd.f32 %v254, %v764
    %v766 = vpop.f32.mrf.mxu0
    %767 = vmatprep.mubr.f32.mxu0 0.0
    %768 = vmatmul.mubr.f32.gmra.mxu0 %v408
    %v769 = vpop.f32.mrf.mxu0
    %v770 = vadd.f32 %v254, %v769
    %v771 = vpop.f32.mrf.mxu0
    %772 = vmatprep.mubr.f32.mxu0 0.0
    %773 = vmatmul.mubr.f32.gmra.mxu0 %v411
    %v774 = vpop.f32.mrf.mxu0
    %v775 = vadd.f32 %v254, %v774
    %v776 = vpop.f32.mrf.mxu0
    %777 = vmatprep.mubr.f32.mxu0 0.0
    %778 = vmatmul.mubr.f32.gmra.mxu0 %v414
    %v779 = vpop.f32.mrf.mxu0
    %v780 = vadd.f32 %v254, %v779
    %v781 = vpop.f32.mrf.mxu0
    %782 = vmatprep.mubr.f32.mxu0 0.0
    %783 = vmatmul.mubr.f32.gmra.mxu0 %v417
    %v784 = vpop.f32.mrf.mxu0
    %v785 = vadd.f32 %v254, %v784
    %v786 = vpop.f32.mrf.mxu0
    %787 = vmatprep.mubr.f32.mxu0 0.0
    %788 = vmatmul.mubr.f32.gmra.mxu0 %v420
    %v789 = vpop.f32.mrf.mxu0
    %v790 = vadd.f32 %v254, %v789
    %v791 = vpop.f32.mrf.mxu0
    %792 = vmatprep.mubr.f32.mxu0 0.0
    %793 = vmatmul.mubr.f32.gmra.mxu0 %v423
    %v794 = vpop.f32.mrf.mxu0
    %v795 = vadd.f32 %v254, %v794
    %v796 = vpop.f32.mrf.mxu0
    %797 = vmatprep.mubr.f32.mxu0 0.0
    %798 = vmatmul.mubr.f32.gmra.mxu0 %v426
    %v799 = vpop.f32.mrf.mxu0
    %v800 = vadd.f32 %v254, %v799
    %v801 = vpop.f32.mrf.mxu0
    %802 = vmatprep.mubr.f32.mxu0 0.0
    %803 = vmatmul.mubr.f32.gmra.mxu0 %v429
    %v804 = vpop.f32.mrf.mxu0
    %v805 = vadd.f32 %v254, %v804
    %v806 = vpop.f32.mrf.mxu0
    %807 = vmatprep.mubr.f32.mxu0 0.0
    %808 = vmatmul.mubr.f32.gmra.mxu0 %v432
    %v809 = vpop.f32.mrf.mxu0
    %v810 = vadd.f32 %v254, %v809
    %v811 = vpop.f32.mrf.mxu0
    %812 = vmatprep.mubr.f32.mxu0 0.0
    %813 = vmatmul.mubr.f32.gmra.mxu0 %v435
    %v814 = vpop.f32.mrf.mxu0
    %v815 = vadd.f32 %v254, %v814
    %v816 = vpop.f32.mrf.mxu0
    %817 = vmatprep.mubr.f32.mxu0 0.0
    %818 = vmatmul.mubr.f32.gmra.mxu0 %v438
    %v819 = vpop.f32.mrf.mxu0
    %v820 = vadd.f32 %v254, %v819
    %v821 = vpop.f32.mrf.mxu0
    %822 = vmatprep.mubr.f32.mxu0 0.0
    %823 = vmatmul.mubr.f32.gmra.mxu0 %v441
    %v824 = vpop.f32.mrf.mxu0
    %v825 = vadd.f32 %v254, %v824
    %v826 = vpop.f32.mrf.mxu0
    %827 = vmatprep.mubr.f32.mxu0 0.0
    %828 = vmatmul.mubr.f32.gmra.mxu0 %v444
    %v829 = vpop.f32.mrf.mxu0
    %v830 = vadd.f32 %v254, %v829
    %v831 = vpop.f32.mrf.mxu0
    %832 = vmatprep.mubr.f32.mxu0 0.0
    %833 = vmatmul.mubr.f32.gmra.mxu0 %v447
    %v834 = vpop.f32.mrf.mxu0
    %v835 = vadd.f32 %v254, %v834
    %v836 = vpop.f32.mrf.mxu0
    %837 = vdwg.mxu0
    %v838 = vmax.f32 %v520, 0.0
    %v839 = vmax.f32 %v525, 0.0
    %v840 = vmax.f32 %v530, 0.0
    %v841 = vmax.f32 %v535, 0.0
    %v842 = vmax.f32 %v540, 0.0
    %v843 = vmax.f32 %v545, 0.0
    %v844 = vmax.f32 %v550, 0.0
    %v845 = vmax.f32 %v555, 0.0
    %v846 = vmax.f32 %v560, 0.0
    %v847 = vmax.f32 %v565, 0.0
    %v848 = vmax.f32 %v570, 0.0
    %v849 = vmax.f32 %v575, 0.0
    %v850 = vmax.f32 %v580, 0.0
    %v851 = vmax.f32 %v585, 0.0
    %v852 = vmax.f32 %v590, 0.0
    %v853 = vmax.f32 %v595, 0.0
    %v854 = vmax.f32 %v600, 0.0
    %v855 = vmax.f32 %v605, 0.0
    %v856 = vmax.f32 %v610, 0.0
    %v857 = vmax.f32 %v615, 0.0
    %v858 = vmax.f32 %v620, 0.0
    %v859 = vmax.f32 %v625, 0.0
    %v860 = vmax.f32 %v630, 0.0
    %v861 = vmax.f32 %v635, 0.0
    %v862 = vmax.f32 %v640, 0.0
    %v863 = vmax.f32 %v645, 0.0
    %v864 = vmax.f32 %v650, 0.0
    %v865 = vmax.f32 %v655, 0.0
    %v866 = vmax.f32 %v660, 0.0
    %v867 = vmax.f32 %v665, 0.0
    %v868 = vmax.f32 %v670, 0.0
    %v869 = vmax.f32 %v675, 0.0
    %v870 = vmax.f32 %v680, 0.0
    %v871 = vmax.f32 %v685, 0.0
    %v872 = vmax.f32 %v690, 0.0
    %v873 = vmax.f32 %v695, 0.0
    %v874 = vmax.f32 %v700, 0.0
    %v875 = vmax.f32 %v705, 0.0
    %v876 = vmax.f32 %v710, 0.0
    %v877 = vmax.f32 %v715, 0.0
    %v878 = vmax.f32 %v720, 0.0
    %v879 = vmax.f32 %v725, 0.0
    %v880 = vmax.f32 %v730, 0.0
    %v881 = vmax.f32 %v735, 0.0
    %v882 = vmax.f32 %v740, 0.0
    %v883 = vmax.f32 %v745, 0.0
    %v884 = vmax.f32 %v750, 0.0
    %v885 = vmax.f32 %v755, 0.0
    %v886 = vmax.f32 %v760, 0.0
    %v887 = vmax.f32 %v765, 0.0
    %v888 = vmax.f32 %v770, 0.0
    %v889 = vmax.f32 %v775, 0.0
    %v890 = vmax.f32 %v780, 0.0
    %v891 = vmax.f32 %v785, 0.0
    %v892 = vmax.f32 %v790, 0.0
    %v893 = vmax.f32 %v795, 0.0
    %v894 = vmax.f32 %v800, 0.0
    %v895 = vmax.f32 %v805, 0.0
    %v896 = vmax.f32 %v810, 0.0
    %v897 = vmax.f32 %v815, 0.0
    %v898 = vmax.f32 %v820, 0.0
    %v899 = vmax.f32 %v825, 0.0
    %v900 = vmax.f32 %v830, 0.0
    %v901 = vmax.f32 %v835, 0.0
    %v903 = vcombine.high %v77, %v77
    %v905 = vunpack.c.l.s4 1983009808
    %v906 = vunpack.c.0.s8 %v905
    %v907 = vlaneseq
    %v908 = vshrl.u32 %v907, 7
    %v909 = vsub.s32 %v906, %v908
    %v910 = vrot.slane %v77, %v909
    %v912 = vunpack.c.l.s4 1983009808
    %v913 = vunpack.c.0.s8 %v912
    %v914 = vlaneseq
    %v915 = vshrl.u32 %v914, 7
    %v916 = vsub.s32 %v913, %v915
    %v917 = vrot.slane %v903, %v916
    %v918 = vcombine.high %v910, %v910
    %v919 = vcombine.high %v917, %v917
    %924 = vmatprep.subr.mxu0 0.0
    %925 = vmatpush1.msra.mxu0 %v853
    %926 = vmatprep.subr.mxu0 0.0
    %927 = vmatpush1.msra.mxu0 %v852
    %928 = vmatprep.subr.mxu0 0.0
    %929 = vmatpush1.msra.mxu0 %v851
    %930 = vmatprep.subr.mxu0 0.0
    %931 = vmatpush1.msra.mxu0 %v850
    %932 = vmatprep.subr.mxu0 0.0
    %933 = vmatpush1.msra.mxu0 %v849
    %934 = vmatprep.subr.mxu0 0.0
    %935 = vmatpush1.msra.mxu0 %v848
    %936 = vmatprep.subr.mxu0 0.0
    %937 = vmatpush1.msra.mxu0 %v847
    %938 = vmatprep.subr.mxu0 0.0
    %939 = vmatpush1.msra.mxu0 %v846
    %940 = vmatprep.subr.mxu0 0.0
    %941 = vmatpush1.msra.mxu0 %v845
    %942 = vmatprep.subr.mxu0 0.0
    %943 = vmatpush1.msra.mxu0 %v844
    %944 = vmatprep.subr.mxu0 0.0
    %945 = vmatpush1.msra.mxu0 %v843
    %946 = vmatprep.subr.mxu0 0.0
    %947 = vmatpush1.msra.mxu0 %v842
    %948 = vmatprep.subr.mxu0 0.0
    %949 = vmatpush1.msra.mxu0 %v841
    %950 = vmatprep.subr.mxu0 0.0
    %951 = vmatpush1.msra.mxu0 %v840
    %952 = vmatprep.subr.mxu0 0.0
    %953 = vmatpush1.msra.mxu0 %v839
    %954 = vmatprep.subr.mxu0 0.0
    %955 = vmatpush1.msra.mxu0 %v838
    %956 = vmatprep.subr.mxu0 0.0
    %957 = vmatpush2.msra.mxu0 %v869
    %958 = vmatprep.subr.mxu0 0.0
    %959 = vmatpush2.msra.mxu0 %v868
    %960 = vmatprep.subr.mxu0 0.0
    %961 = vmatpush2.msra.mxu0 %v867
    %962 = vmatprep.subr.mxu0 0.0
    %963 = vmatpush2.msra.mxu0 %v866
    %964 = vmatprep.subr.mxu0 0.0
    %965 = vmatpush2.msra.mxu0 %v865
    %966 = vmatprep.subr.mxu0 0.0
    %967 = vmatpush2.msra.mxu0 %v864
    %968 = vmatprep.subr.mxu0 0.0
    %969 = vmatpush2.msra.mxu0 %v863
    %970 = vmatprep.subr.mxu0 0.0
    %971 = vmatpush2.msra.mxu0 %v862
    %972 = vmatprep.subr.mxu0 0.0
    %973 = vmatpush2.msra.mxu0 %v861
    %974 = vmatprep.subr.mxu0 0.0
    %975 = vmatpush2.msra.mxu0 %v860
    %976 = vmatprep.subr.mxu0 0.0
    %977 = vmatpush2.msra.mxu0 %v859
    %978 = vmatprep.subr.mxu0 0.0
    %979 = vmatpush2.msra.mxu0 %v858
    %980 = vmatprep.subr.mxu0 0.0
    %981 = vmatpush2.msra.mxu0 %v857
    %982 = vmatprep.subr.mxu0 0.0
    %983 = vmatpush2.msra.mxu0 %v856
    %984 = vmatprep.subr.mxu0 0.0
    %985 = vmatpush2.msra.mxu0 %v855
    %986 = vmatprep.subr.mxu0 0.0
    %987 = vmatpush2.msra.mxu0 %v854
    %988 = vmatprep.mubr.f32.mxu0 %v918
    %989 = vmatmul.mubr.f32.gmra.mxu0 %v910
    %v990 = vpop.f32.mrf.mxu0
    %v991 = vadd.f32 0.0, %v990
    %v992 = vpop.f32.mrf.mxu0
    %993 = vdwg.mxu0
    %994 = vmatprep.subr.mxu0 0.0
    %995 = vmatpush1.msra.mxu0 %v885
    %996 = vmatprep.subr.mxu0 0.0
    %997 = vmatpush1.msra.mxu0 %v884
    %998 = vmatprep.subr.mxu0 0.0
    %999 = vmatpush1.msra.mxu0 %v883
    %1000 = vmatprep.subr.mxu0 0.0
    %1001 = vmatpush1.msra.mxu0 %v882
    %1002 = vmatprep.subr.mxu0 0.0
    %1003 = vmatpush1.msra.mxu0 %v881
    %1004 = vmatprep.subr.mxu0 0.0
    %1005 = vmatpush1.msra.mxu0 %v880
    %1006 = vmatprep.subr.mxu0 0.0
    %1007 = vmatpush1.msra.mxu0 %v879
    %1008 = vmatprep.subr.mxu0 0.0
    %1009 = vmatpush1.msra.mxu0 %v878
    %1010 = vmatprep.subr.mxu0 0.0
    %1011 = vmatpush1.msra.mxu0 %v877
    %1012 = vmatprep.subr.mxu0 0.0
    %1013 = vmatpush1.msra.mxu0 %v876
    %1014 = vmatprep.subr.mxu0 0.0
    %1015 = vmatpush1.msra.mxu0 %v875
    %1016 = vmatprep.subr.mxu0 0.0
    %1017 = vmatpush1.msra.mxu0 %v874
    %1018 = vmatprep.subr.mxu0 0.0
    %1019 = vmatpush1.msra.mxu0 %v873
    %1020 = vmatprep.subr.mxu0 0.0
    %1021 = vmatpush1.msra.mxu0 %v872
    %1022 = vmatprep.subr.mxu0 0.0
    %1023 = vmatpush1.msra.mxu0 %v871
    %1024 = vmatprep.subr.mxu0 0.0
    %1025 = vmatpush1.msra.mxu0 %v870
    %1026 = vmatprep.subr.mxu0 0.0
    %1027 = vmatpush2.msra.mxu0 %v901
    %1028 = vmatprep.subr.mxu0 0.0
    %1029 = vmatpush2.msra.mxu0 %v900
    %1030 = vmatprep.subr.mxu0 0.0
    %1031 = vmatpush2.msra.mxu0 %v899
    %1032 = vmatprep.subr.mxu0 0.0
    %1033 = vmatpush2.msra.mxu0 %v898
    %1034 = vmatprep.subr.mxu0 0.0
    %1035 = vmatpush2.msra.mxu0 %v897
    %1036 = vmatprep.subr.mxu0 0.0
    %1037 = vmatpush2.msra.mxu0 %v896
    %1038 = vmatprep.subr.mxu0 0.0
    %1039 = vmatpush2.msra.mxu0 %v895
    %1040 = vmatprep.subr.mxu0 0.0
    %1041 = vmatpush2.msra.mxu0 %v894
    %1042 = vmatprep.subr.mxu0 0.0
    %1043 = vmatpush2.msra.mxu0 %v893
    %1044 = vmatprep.subr.mxu0 0.0
    %1045 = vmatpush2.msra.mxu0 %v892
    %1046 = vmatprep.subr.mxu0 0.0
    %1047 = vmatpush2.msra.mxu0 %v891
    %1048 = vmatprep.subr.mxu0 0.0
    %1049 = vmatpush2.msra.mxu0 %v890
    %1050 = vmatprep.subr.mxu0 0.0
    %1051 = vmatpush2.msra.mxu0 %v889
    %1052 = vmatprep.subr.mxu0 0.0
    %1053 = vmatpush2.msra.mxu0 %v888
    %1054 = vmatprep.subr.mxu0 0.0
    %1055 = vmatpush2.msra.mxu0 %v887
    %1056 = vmatprep.subr.mxu0 0.0
    %1057 = vmatpush2.msra.mxu0 %v886
    %1058 = vmatprep.mubr.f32.mxu0 %v919
    %1059 = vmatmul.mubr.f32.gmra.mxu0 %v917
    %v1060 = vpop.f32.mrf.mxu0
    %v1061 = vadd.f32 %v991, %v1060
    %v1062 = vpop.f32.mrf.mxu0
    %1063 = vdwg.mxu0
    %v1065 = vlaneseq
    %v1066 = vshrl.u32 %v1065, 7
    %v1067 = vsub.s32 0, %v1066
    %v1068 = vrot.slane %v94, %v1067
    %1070 = vmatprep.subr.mxu0 0.0
    %1071 = vmatpush1.msra.mxu0 %v93
    %1072 = vmatprep.subr.mxu0 0.0
    %1073 = vmatpush1.msra.mxu0 %v92
    %1074 = vmatprep.subr.mxu0 0.0
    %1075 = vmatpush1.msra.mxu0 %v91
    %1076 = vmatprep.subr.mxu0 0.0
    %1077 = vmatpush1.msra.mxu0 %v90
    %1078 = vmatprep.subr.mxu0 0.0
    %1079 = vmatpush1.msra.mxu0 %v89
    %1080 = vmatprep.subr.mxu0 0.0
    %1081 = vmatpush1.msra.mxu0 %v88
    %1082 = vmatprep.subr.mxu0 0.0
    %1083 = vmatpush1.msra.mxu0 %v87
    %1084 = vmatprep.subr.mxu0 0.0
    %1085 = vmatpush1.msra.mxu0 %v86
    %1086 = vmatprep.subr.mxu0 0.0
    %1087 = vmatpush1.msra.mxu0 %v85
    %1088 = vmatprep.subr.mxu0 0.0
    %1089 = vmatpush1.msra.mxu0 %v84
    %1090 = vmatprep.subr.mxu0 0.0
    %1091 = vmatpush1.msra.mxu0 %v83
    %1092 = vmatprep.subr.mxu0 0.0
    %1093 = vmatpush1.msra.mxu0 %v82
    %1094 = vmatprep.subr.mxu0 0.0
    %1095 = vmatpush1.msra.mxu0 %v81
    %1096 = vmatprep.subr.mxu0 0.0
    %1097 = vmatpush1.msra.mxu0 %v80
    %1098 = vmatprep.subr.mxu0 0.0
    %1099 = vmatpush1.msra.mxu0 %v79
    %1100 = vmatprep.subr.mxu0 0.0
    %1101 = vmatpush1.msra.mxu0 %v78
    %1102 = vmatprep.subr.mxu0 0.0
    %1103 = vmatpush2.msra.mxu0 0.0
    %1104 = vmatprep.subr.mxu0 0.0
    %1105 = vmatpush2.msra.mxu0 0.0
    %1106 = vmatprep.subr.mxu0 0.0
    %1107 = vmatpush2.msra.mxu0 0.0
    %1108 = vmatprep.subr.mxu0 0.0
    %1109 = vmatpush2.msra.mxu0 0.0
    %1110 = vmatprep.subr.mxu0 0.0
    %1111 = vmatpush2.msra.mxu0 0.0
    %1112 = vmatprep.subr.mxu0 0.0
    %1113 = vmatpush2.msra.mxu0 0.0
    %1114 = vmatprep.subr.mxu0 0.0
    %1115 = vmatpush2.msra.mxu0 0.0
    %1116 = vmatprep.subr.mxu0 0.0
    %1117 = vmatpush2.msra.mxu0 0.0
    %1118 = vmatprep.subr.mxu0 0.0
    %1119 = vmatpush2.msra.mxu0 0.0
    %1120 = vmatprep.subr.mxu0 0.0
    %1121 = vmatpush2.msra.mxu0 0.0
    %1122 = vmatprep.subr.mxu0 0.0
    %1123 = vmatpush2.msra.mxu0 0.0
    %1124 = vmatprep.subr.mxu0 0.0
    %1125 = vmatpush2.msra.mxu0 0.0
    %1126 = vmatprep.subr.mxu0 0.0
    %1127 = vmatpush2.msra.mxu0 0.0
    %1128 = vmatprep.subr.mxu0 0.0
    %1129 = vmatpush2.msra.mxu0 0.0
    %1130 = vmatprep.subr.mxu0 0.0
    %1131 = vmatpush2.msra.mxu0 0.0
    %1132 = vmatprep.subr.mxu0 0.0
    %1133 = vmatpush2.msra.mxu0 0.0
    %1134 = vmatprep.mubr.f32.mxu0 0.0
    %1135 = vmatmul.mubr.f32.gmra.mxu0 %v1061
    %v1136 = vpop.f32.mrf.mxu0
    %v1137 = vadd.f32 %v1068, %v1136
    %v1138 = vpop.f32.mrf.mxu0
    %1139 = vdwg.mxu0
    %vm1140 = vcmask 1041408
    %v1141 = vsel %vm1140, %v1137, 0.0
    %v1142 = vrot.slane %v1141, 4
    %v1143 = vadd.f32 %v1141, %v1142
    %v1144 = vrot.slane %v1143, 2
    %v1145 = vadd.f32 %v1143, %v1144
    %v1146 = vrot.slane %v1145, 1
    %v1147 = vadd.f32 %v1145, %v1146
    %v1148 = vrcp.pop 2.0
    %v1149 = vmul.f32 %v1147, %v1148
    %v1150 = vsub.f32 %v1137, %v1149
    %v1151 = vmul.f32 %v1150, %v1150
    %v1152 = vsel %vm1140, %v1151, 0.0
    %v1153 = vrot.slane %v1152, 4
    %v1154 = vadd.f32 %v1152, %v1153
    %v1155 = vrot.slane %v1154, 2
    %v1156 = vadd.f32 %v1154, %v1155
    %v1157 = vrot.slane %v1156, 1
    %v1158 = vadd.f32 %v1156, %v1157
    %v1159 = vmul.f32 %v1158, %v1148
    %v1160 = vadd.f32 %v1159, 1e-05
    %v1161 = vrsqrt.pop %v1160
    %v1162 = vmul.f32 %v1150, %v1161
    %v1164 = vlaneseq
    %v1165 = vshrl.u32 %v1164, 7
    %v1166 = vsub.s32 0, %v1165
    %v1167 = vrot.slane %v95, %v1166
    %v1169 = vmul.f32 %v1162, %v1167
    %v1171 = vlaneseq
    %v1172 = vshrl.u32 %v1171, 7
    %v1173 = vsub.s32 0, %v1172
    %v1174 = vrot.slane %v96, %v1173
    %v1176 = vadd.f32 %v1169, %v1174
    %v1177 = vmax.f32 %v1176, 0.0
    %v1179 = vlaneseq
    %v1180 = vshrl.u32 %v1179, 7
    %v1181 = vsub.s32 0, %v1180
    %v1182 = vrot.slane %v113, %v1181
    %1184 = vmatprep.subr.mxu0 0.0
    %1185 = vmatpush1.msra.mxu0 %v112
    %1186 = vmatprep.subr.mxu0 0.0
    %1187 = vmatpush1.msra.mxu0 %v111
    %1188 = vmatprep.subr.mxu0 0.0
    %1189 = vmatpush1.msra.mxu0 %v110
    %1190 = vmatprep.subr.mxu0 0.0
    %1191 = vmatpush1.msra.mxu0 %v109
    %1192 = vmatprep.subr.mxu0 0.0
    %1193 = vmatpush1.msra.mxu0 %v108
    %1194 = vmatprep.subr.mxu0 0.0
    %1195 = vmatpush1.msra.mxu0 %v107
    %1196 = vmatprep.subr.mxu0 0.0
    %1197 = vmatpush1.msra.mxu0 %v106
    %1198 = vmatprep.subr.mxu0 0.0
    %1199 = vmatpush1.msra.mxu0 %v105
    %1200 = vmatprep.subr.mxu0 0.0
    %1201 = vmatpush1.msra.mxu0 %v104
    %1202 = vmatprep.subr.mxu0 0.0
    %1203 = vmatpush1.msra.mxu0 %v103
    %1204 = vmatprep.subr.mxu0 0.0
    %1205 = vmatpush1.msra.mxu0 %v102
    %1206 = vmatprep.subr.mxu0 0.0
    %1207 = vmatpush1.msra.mxu0 %v101
    %1208 = vmatprep.subr.mxu0 0.0
    %1209 = vmatpush1.msra.mxu0 %v100
    %1210 = vmatprep.subr.mxu0 0.0
    %1211 = vmatpush1.msra.mxu0 %v99
    %1212 = vmatprep.subr.mxu0 0.0
    %1213 = vmatpush1.msra.mxu0 %v98
    %1214 = vmatprep.subr.mxu0 0.0
    %1215 = vmatpush1.msra.mxu0 %v97
    %1216 = vmatprep.subr.mxu0 0.0
    %1217 = vmatpush2.msra.mxu0 0.0
    %1218 = vmatprep.subr.mxu0 0.0
    %1219 = vmatpush2.msra.mxu0 0.0
    %1220 = vmatprep.subr.mxu0 0.0
    %1221 = vmatpush2.msra.mxu0 0.0
    %1222 = vmatprep.subr.mxu0 0.0
    %1223 = vmatpush2.msra.mxu0 0.0
    %1224 = vmatprep.subr.mxu0 0.0
    %1225 = vmatpush2.msra.mxu0 0.0
    %1226 = vmatprep.subr.mxu0 0.0
    %1227 = vmatpush2.msra.mxu0 0.0
    %1228 = vmatprep.subr.mxu0 0.0
    %1229 = vmatpush2.msra.mxu0 0.0
    %1230 = vmatprep.subr.mxu0 0.0
    %1231 = vmatpush2.msra.mxu0 0.0
    %1232 = vmatprep.subr.mxu0 0.0
    %1233 = vmatpush2.msra.mxu0 0.0
    %1234 = vmatprep.subr.mxu0 0.0
    %1235 = vmatpush2.msra.mxu0 0.0
    %1236 = vmatprep.subr.mxu0 0.0
    %1237 = vmatpush2.msra.mxu0 0.0
    %1238 = vmatprep.subr.mxu0 0.0
    %1239 = vmatpush2.msra.mxu0 0.0
    %1240 = vmatprep.subr.mxu0 0.0
    %1241 = vmatpush2.msra.mxu0 0.0
    %1242 = vmatprep.subr.mxu0 0.0
    %1243 = vmatpush2.msra.mxu0 0.0
    %1244 = vmatprep.subr.mxu0 0.0
    %1245 = vmatpush2.msra.mxu0 0.0
    %1246 = vmatprep.subr.mxu0 0.0
    %1247 = vmatpush2.msra.mxu0 0.0
    %1248 = vmatprep.mubr.f32.mxu0 0.0
    %1249 = vmatmul.mubr.f32.gmra.mxu0 %v1177
    %v1250 = vpop.f32.mrf.mxu0
    %v1251 = vadd.f32 %v1182, %v1250
    %v1252 = vpop.f32.mrf.mxu0
    %1253 = vdwg.mxu0
    %v1254 = vsel %vm1140, %v1251, 0.0
    %v1255 = vrot.slane %v1254, 4
    %v1256 = vadd.f32 %v1254, %v1255
    %v1257 = vrot.slane %v1256, 2
    %v1258 = vadd.f32 %v1256, %v1257
    %v1259 = vrot.slane %v1258, 1
    %v1260 = vadd.f32 %v1258, %v1259
    %v1261 = vmul.f32 %v1260, %v1148
    %v1262 = vsub.f32 %v1251, %v1261
    %v1263 = vmul.f32 %v1262, %v1262
    %v1264 = vsel %vm1140, %v1263, 0.0
    %v1265 = vrot.slane %v1264, 4
    %v1266 = vadd.f32 %v1264, %v1265
    %v1267 = vrot.slane %v1266, 2
    %v1268 = vadd.f32 %v1266, %v1267
    %v1269 = vrot.slane %v1268, 1
    %v1270 = vadd.f32 %v1268, %v1269
    %v1271 = vmul.f32 %v1270, %v1148
    %v1272 = vadd.f32 %v1271, 1e-05
    %v1273 = vrsqrt.pop %v1272
    %v1274 = vmul.f32 %v1262, %v1273
    %v1276 = vlaneseq
    %v1277 = vshrl.u32 %v1276, 7
    %v1278 = vsub.s32 0, %v1277
    %v1279 = vrot.slane %v114, %v1278
    %v1281 = vmul.f32 %v1274, %v1279
    %v1283 = vlaneseq
    %v1284 = vshrl.u32 %v1283, 7
    %v1285 = vsub.s32 0, %v1284
    %v1286 = vrot.slane %v115, %v1285
    %v1288 = vadd.f32 %v1281, %v1286
    %v1289 = vmax.f32 %v1288, 0.0
    %v1291 = vlaneseq
    %v1292 = vshrl.u32 %v1291, 7
    %v1293 = vsub.s32 0, %v1292
    %v1294 = vrot.slane %v132, %v1293
    %1296 = vmatprep.subr.mxu0 0.0
    %1297 = vmatpush1.msra.mxu0 %v131
    %1298 = vmatprep.subr.mxu0 0.0
    %1299 = vmatpush1.msra.mxu0 %v130
    %1300 = vmatprep.subr.mxu0 0.0
    %1301 = vmatpush1.msra.mxu0 %v129
    %1302 = vmatprep.subr.mxu0 0.0
    %1303 = vmatpush1.msra.mxu0 %v128
    %1304 = vmatprep.subr.mxu0 0.0
    %1305 = vmatpush1.msra.mxu0 %v127
    %1306 = vmatprep.subr.mxu0 0.0
    %1307 = vmatpush1.msra.mxu0 %v126
    %1308 = vmatprep.subr.mxu0 0.0
    %1309 = vmatpush1.msra.mxu0 %v125
    %1310 = vmatprep.subr.mxu0 0.0
    %1311 = vmatpush1.msra.mxu0 %v124
    %1312 = vmatprep.subr.mxu0 0.0
    %1313 = vmatpush1.msra.mxu0 %v123
    %1314 = vmatprep.subr.mxu0 0.0
    %1315 = vmatpush1.msra.mxu0 %v122
    %1316 = vmatprep.subr.mxu0 0.0
    %1317 = vmatpush1.msra.mxu0 %v121
    %1318 = vmatprep.subr.mxu0 0.0
    %1319 = vmatpush1.msra.mxu0 %v120
    %1320 = vmatprep.subr.mxu0 0.0
    %1321 = vmatpush1.msra.mxu0 %v119
    %1322 = vmatprep.subr.mxu0 0.0
    %1323 = vmatpush1.msra.mxu0 %v118
    %1324 = vmatprep.subr.mxu0 0.0
    %1325 = vmatpush1.msra.mxu0 %v117
    %1326 = vmatprep.subr.mxu0 0.0
    %1327 = vmatpush1.msra.mxu0 %v116
    %1328 = vmatprep.subr.mxu0 0.0
    %1329 = vmatpush2.msra.mxu0 0.0
    %1330 = vmatprep.subr.mxu0 0.0
    %1331 = vmatpush2.msra.mxu0 0.0
    %1332 = vmatprep.subr.mxu0 0.0
    %1333 = vmatpush2.msra.mxu0 0.0
    %1334 = vmatprep.subr.mxu0 0.0
    %1335 = vmatpush2.msra.mxu0 0.0
    %1336 = vmatprep.subr.mxu0 0.0
    %1337 = vmatpush2.msra.mxu0 0.0
    %1338 = vmatprep.subr.mxu0 0.0
    %1339 = vmatpush2.msra.mxu0 0.0
    %1340 = vmatprep.subr.mxu0 0.0
    %1341 = vmatpush2.msra.mxu0 0.0
    %1342 = vmatprep.subr.mxu0 0.0
    %1343 = vmatpush2.msra.mxu0 0.0
    %1344 = vmatprep.subr.mxu0 0.0
    %1345 = vmatpush2.msra.mxu0 0.0
    %1346 = vmatprep.subr.mxu0 0.0
    %1347 = vmatpush2.msra.mxu0 0.0
    %1348 = vmatprep.subr.mxu0 0.0
    %1349 = vmatpush2.msra.mxu0 0.0
    %1350 = vmatprep.subr.mxu0 0.0
    %1351 = vmatpush2.msra.mxu0 0.0
    %1352 = vmatprep.subr.mxu0 0.0
    %1353 = vmatpush2.msra.mxu0 0.0
    %1354 = vmatprep.subr.mxu0 0.0
    %1355 = vmatpush2.msra.mxu0 0.0
    %1356 = vmatprep.subr.mxu0 0.0
    %1357 = vmatpush2.msra.mxu0 0.0
    %1358 = vmatprep.subr.mxu0 0.0
    %1359 = vmatpush2.msra.mxu0 0.0
    %1360 = vmatprep.mubr.f32.mxu0 0.0
    %1361 = vmatmul.mubr.f32.gmra.mxu0 %v1289
    %v1362 = vpop.f32.mrf.mxu0
    %v1363 = vadd.f32 %v1294, %v1362
    %v1364 = vpop.f32.mrf.mxu0
    %1365 = vdwg.mxu0
    %v1366 = vsel %vm1140, %v1363, 0.0
    %v1367 = vrot.slane %v1366, 4
    %v1368 = vadd.f32 %v1366, %v1367
    %v1369 = vrot.slane %v1368, 2
    %v1370 = vadd.f32 %v1368, %v1369
    %v1371 = vrot.slane %v1370, 1
    %v1372 = vadd.f32 %v1370, %v1371
    %v1373 = vmul.f32 %v1372, %v1148
    %v1374 = vsub.f32 %v1363, %v1373
    %v1375 = vmul.f32 %v1374, %v1374
    %v1376 = vsel %vm1140, %v1375, 0.0
    %v1377 = vrot.slane %v1376, 4
    %v1378 = vadd.f32 %v1376, %v1377
    %v1379 = vrot.slane %v1378, 2
    %v1380 = vadd.f32 %v1378, %v1379
    %v1381 = vrot.slane %v1380, 1
    %v1382 = vadd.f32 %v1380, %v1381
    %v1383 = vmul.f32 %v1382, %v1148
    %v1384 = vadd.f32 %v1383, 1e-05
    %v1385 = vrsqrt.pop %v1384
    %v1386 = vmul.f32 %v1374, %v1385
    %v1388 = vlaneseq
    %v1389 = vshrl.u32 %v1388, 7
    %v1390 = vsub.s32 0, %v1389
    %v1391 = vrot.slane %v133, %v1390
    %v1393 = vmul.f32 %v1386, %v1391
    %v1395 = vlaneseq
    %v1396 = vshrl.u32 %v1395, 7
    %v1397 = vsub.s32 0, %v1396
    %v1398 = vrot.slane %v134, %v1397
    %v1400 = vadd.f32 %v1393, %v1398
    %s1401 = scalar_lea.vmem %s0, 512
    %v1402 = vld [vmem:[%s1401] sm:$0xff]
    %v1403 = vld [vmem:[%s1401 + $0x8] sm:$0xff]
    %v1404 = vld [vmem:[%s1401 + $0x10] sm:$0xff]
    %v1405 = vld [vmem:[%s1401 + $0x18] sm:$0xff]
    %v1406 = vld [vmem:[%s1401 + $0x20] sm:$0xff]
    %v1407 = vld [vmem:[%s1401 + $0x28] sm:$0xff]
    %v1408 = vld [vmem:[%s1401 + $0x30] sm:$0xff]
    %v1409 = vld [vmem:[%s1401 + $0x38] sm:$0xff]
    %v1410 = vld [vmem:[%s1401 + $0x40] sm:$0xff]
    %v1411 = vld [vmem:[%s1401 + $0x48] sm:$0xff]
    %v1412 = vld [vmem:[%s1401 + $0x50] sm:$0xff]
    %v1413 = vld [vmem:[%s1401 + $0x58] sm:$0xff]
    %v1414 = vld [vmem:[%s1401 + $0x60] sm:$0xff]
    %v1415 = vld [vmem:[%s1401 + $0x68] sm:$0xff]
    %v1416 = vld [vmem:[%s1401 + $0x70] sm:$0xff]
    %v1417 = vld [vmem:[%s1401 + $0x78] sm:$0xff]
    %v1418 = vld [vmem:[%s1401 + $0x80] sm:$0xff]
    %v1419 = vld [vmem:[%s1401 + $0x88] sm:$0xff]
    %v1420 = vld [vmem:[%s1401 + $0x90] sm:$0xff]
    %v1421 = vld [vmem:[%s1401 + $0x98] sm:$0xff]
    %v1422 = vld [vmem:[%s1401 + $0xa0] sm:$0xff]
    %v1423 = vld [vmem:[%s1401 + $0xa8] sm:$0xff]
    %v1424 = vld [vmem:[%s1401 + $0xb0] sm:$0xff]
    %v1425 = vld [vmem:[%s1401 + $0xb8] sm:$0xff]
    %v1426 = vld [vmem:[%s1401 + $0xc0] sm:$0xff]
    %v1427 = vld [vmem:[%s1401 + $0xc8] sm:$0xff]
    %v1428 = vld [vmem:[%s1401 + $0xd0] sm:$0xff]
    %v1429 = vld [vmem:[%s1401 + $0xd8] sm:$0xff]
    %v1430 = vld [vmem:[%s1401 + $0xe0] sm:$0xff]
    %v1431 = vld [vmem:[%s1401 + $0xe8] sm:$0xff]
    %v1432 = vld [vmem:[%s1401 + $0xf0] sm:$0xff]
    %v1433 = vld [vmem:[%s1401 + $0xf8] sm:$0xff]
    %v1434 = vld [vmem:[%s1401 + $0x100] sm:$0xff]
    %v1435 = vld [vmem:[%s1401 + $0x108] sm:$0xff]
    %v1436 = vld [vmem:[%s1401 + $0x110] sm:$0xff]
    %v1437 = vld [vmem:[%s1401 + $0x118] sm:$0xff]
    %v1438 = vld [vmem:[%s1401 + $0x120] sm:$0xff]
    %v1439 = vld [vmem:[%s1401 + $0x128] sm:$0xff]
    %v1440 = vld [vmem:[%s1401 + $0x130] sm:$0xff]
    %v1441 = vld [vmem:[%s1401 + $0x138] sm:$0xff]
    %v1442 = vld [vmem:[%s1401 + $0x140] sm:$0xff]
    %v1443 = vld [vmem:[%s1401 + $0x148] sm:$0xff]
    %v1444 = vld [vmem:[%s1401 + $0x150] sm:$0xff]
    %v1445 = vld [vmem:[%s1401 + $0x158] sm:$0xff]
    %v1446 = vld [vmem:[%s1401 + $0x160] sm:$0xff]
    %v1447 = vld [vmem:[%s1401 + $0x168] sm:$0xff]
    %v1448 = vld [vmem:[%s1401 + $0x170] sm:$0xff]
    %v1449 = vld [vmem:[%s1401 + $0x178] sm:$0xff]
    %v1450 = vld [vmem:[%s1401 + $0x180] sm:$0xff]
    %v1451 = vld [vmem:[%s1401 + $0x188] sm:$0xff]
    %v1452 = vld [vmem:[%s1401 + $0x190] sm:$0xff]
    %v1453 = vld [vmem:[%s1401 + $0x198] sm:$0xff]
    %v1454 = vld [vmem:[%s1401 + $0x1a0] sm:$0xff]
    %v1455 = vld [vmem:[%s1401 + $0x1a8] sm:$0xff]
    %v1456 = vld [vmem:[%s1401 + $0x1b0] sm:$0xff]
    %v1457 = vld [vmem:[%s1401 + $0x1b8] sm:$0xff]
    %v1458 = vld [vmem:[%s1401 + $0x1c0] sm:$0xff]
    %v1459 = vld [vmem:[%s1401 + $0x1c8] sm:$0xff]
    %v1460 = vld [vmem:[%s1401 + $0x1d0] sm:$0xff]
    %v1461 = vld [vmem:[%s1401 + $0x1d8] sm:$0xff]
    %v1462 = vld [vmem:[%s1401 + $0x1e0] sm:$0xff]
    %v1463 = vld [vmem:[%s1401 + $0x1e8] sm:$0xff]
    %v1464 = vld [vmem:[%s1401 + $0x1f0] sm:$0xff]
    %v1465 = vld [vmem:[%s1401 + $0x1f8] sm:$0xff]
    %v1467 = vsel %vm256, %v1402, 0
    %v1470 = vsel %vm256, %v1403, 0
    %v1473 = vsel %vm256, %v1404, 0
    %v1476 = vsel %vm256, %v1405, 0
    %v1479 = vsel %vm256, %v1406, 0
    %v1482 = vsel %vm256, %v1407, 0
    %v1485 = vsel %vm256, %v1408, 0
    %v1488 = vsel %vm256, %v1409, 0
    %v1491 = vsel %vm256, %v1410, 0
    %v1494 = vsel %vm256, %v1411, 0
    %v1497 = vsel %vm256, %v1412, 0
    %v1500 = vsel %vm256, %v1413, 0
    %v1503 = vsel %vm256, %v1414, 0
    %v1506 = vsel %vm256, %v1415, 0
    %v1509 = vsel %vm256, %v1416, 0
    %v1512 = vsel %vm256, %v1417, 0
    %v1515 = vsel %vm256, %v1418, 0
    %v1518 = vsel %vm256, %v1419, 0
    %v1521 = vsel %vm256, %v1420, 0
    %v1524 = vsel %vm256, %v1421, 0
    %v1527 = vsel %vm256, %v1422, 0
    %v1530 = vsel %vm256, %v1423, 0
    %v1533 = vsel %vm256, %v1424, 0
    %v1536 = vsel %vm256, %v1425, 0
    %v1539 = vsel %vm256, %v1426, 0
    %v1542 = vsel %vm256, %v1427, 0
    %v1545 = vsel %vm256, %v1428, 0
    %v1548 = vsel %vm256, %v1429, 0
    %v1551 = vsel %vm256, %v1430, 0
    %v1554 = vsel %vm256, %v1431, 0
    %v1557 = vsel %vm256, %v1432, 0
    %v1560 = vsel %vm256, %v1433, 0
    %v1563 = vsel %vm256, %v1434, 0
    %v1566 = vsel %vm256, %v1435, 0
    %v1569 = vsel %vm256, %v1436, 0
    %v1572 = vsel %vm256, %v1437, 0
    %v1575 = vsel %vm256, %v1438, 0
    %v1578 = vsel %vm256, %v1439, 0
    %v1581 = vsel %vm256, %v1440, 0
    %v1584 = vsel %vm256, %v1441, 0
    %v1587 = vsel %vm256, %v1442, 0
    %v1590 = vsel %vm256, %v1443, 0
    %v1593 = vsel %vm256, %v1444, 0
    %v1596 = vsel %vm256, %v1445, 0
    %v1599 = vsel %vm256, %v1446, 0
    %v1602 = vsel %vm256, %v1447, 0
    %v1605 = vsel %vm256, %v1448, 0
    %v1608 = vsel %vm256, %v1449, 0
    %v1611 = vsel %vm256, %v1450, 0
    %v1614 = vsel %vm256, %v1451, 0
    %v1617 = vsel %vm256, %v1452, 0
    %v1620 = vsel %vm256, %v1453, 0
    %v1623 = vsel %vm256, %v1454, 0
    %v1626 = vsel %vm256, %v1455, 0
    %v1629 = vsel %vm256, %v1456, 0
    %v1632 = vsel %vm256, %v1457, 0
    %v1635 = vsel %vm256, %v1458, 0
    %v1638 = vsel %vm256, %v1459, 0
    %v1641 = vsel %vm256, %v1460, 0
    %v1644 = vsel %vm256, %v1461, 0
    %v1647 = vsel %vm256, %v1462, 0
    %v1650 = vsel %vm256, %v1463, 0
    %v1653 = vsel %vm256, %v1464, 0
    %v1656 = vsel %vm256, %v1465, 0
    %1658 = vmatprep.subr.mxu0 0.0
    %1659 = vmatpush1.msra.mxu0 0.0
    %1660 = vmatprep.subr.mxu0 0.0
    %1661 = vmatpush1.msra.mxu0 0.0
    %1662 = vmatprep.subr.mxu0 0.0
    %1663 = vmatpush1.msra.mxu0 0.0
    %1664 = vmatprep.subr.mxu0 0.0
    %1665 = vmatpush1.msra.mxu0 0.0
    %1666 = vmatprep.subr.mxu0 0.0
    %1667 = vmatpush1.msra.mxu0 0.0
    %1668 = vmatprep.subr.mxu0 0.0
    %1669 = vmatpush1.msra.mxu0 0.0
    %1670 = vmatprep.subr.mxu0 0.0
    %1671 = vmatpush1.msra.mxu0 0.0
    %1672 = vmatprep.subr.mxu0 0.0
    %1673 = vmatpush1.msra.mxu0 0.0
    %1674 = vmatprep.subr.mxu0 0.0
    %1675 = vmatpush1.msra.mxu0 0.0
    %1676 = vmatprep.subr.mxu0 0.0
    %1677 = vmatpush1.msra.mxu0 0.0
    %1678 = vmatprep.subr.mxu0 0.0
    %1679 = vmatpush1.msra.mxu0 0.0
    %1680 = vmatprep.subr.mxu0 0.0
    %1681 = vmatpush1.msra.mxu0 0.0
    %1682 = vmatprep.subr.mxu0 0.0
    %1683 = vmatpush1.msra.mxu0 %v451
    %1684 = vmatprep.subr.mxu0 0.0
    %1685 = vmatpush1.msra.mxu0 %v74
    %1686 = vmatprep.subr.mxu0 0.0
    %1687 = vmatpush1.msra.mxu0 %v73
    %1688 = vmatprep.subr.mxu0 0.0
    %1689 = vmatpush1.msra.mxu0 %v72
    %1690 = vmatprep.subr.mxu0 0.0
    %1691 = vmatpush2.msra.mxu0 0.0
    %1692 = vmatprep.subr.mxu0 0.0
    %1693 = vmatpush2.msra.mxu0 0.0
    %1694 = vmatprep.subr.mxu0 0.0
    %1695 = vmatpush2.msra.mxu0 0.0
    %1696 = vmatprep.subr.mxu0 0.0
    %1697 = vmatpush2.msra.mxu0 0.0
    %1698 = vmatprep.subr.mxu0 0.0
    %1699 = vmatpush2.msra.mxu0 0.0
    %1700 = vmatprep.subr.mxu0 0.0
    %1701 = vmatpush2.msra.mxu0 0.0
    %1702 = vmatprep.subr.mxu0 0.0
    %1703 = vmatpush2.msra.mxu0 0.0
    %1704 = vmatprep.subr.mxu0 0.0
    %1705 = vmatpush2.msra.mxu0 0.0
    %1706 = vmatprep.subr.mxu0 0.0
    %1707 = vmatpush2.msra.mxu0 0.0
    %1708 = vmatprep.subr.mxu0 0.0
    %1709 = vmatpush2.msra.mxu0 0.0
    %1710 = vmatprep.subr.mxu0 0.0
    %1711 = vmatpush2.msra.mxu0 0.0
    %1712 = vmatprep.subr.mxu0 0.0
    %1713 = vmatpush2.msra.mxu0 0.0
    %1714 = vmatprep.subr.mxu0 0.0
    %1715 = vmatpush2.msra.mxu0 0.0
    %1716 = vmatprep.subr.mxu0 0.0
    %1717 = vmatpush2.msra.mxu0 0.0
    %1718 = vmatprep.subr.mxu0 0.0
    %1719 = vmatpush2.msra.mxu0 0.0
    %1720 = vmatprep.subr.mxu0 0.0
    %1721 = vmatpush2.msra.mxu0 0.0
    %1722 = vmatprep.mubr.f32.mxu0 0.0
    %1723 = vmatmul.mubr.f32.gmra.mxu0 %v1467
    %v1724 = vpop.f32.mrf.mxu0
    %v1725 = vadd.f32 %v254, %v1724
    %v1726 = vpop.f32.mrf.mxu0
    %1727 = vmatprep.mubr.f32.mxu0 0.0
    %1728 = vmatmul.mubr.f32.gmra.mxu0 %v1470
    %v1729 = vpop.f32.mrf.mxu0
    %v1730 = vadd.f32 %v254, %v1729
    %v1731 = vpop.f32.mrf.mxu0
    %1732 = vmatprep.mubr.f32.mxu0 0.0
    %1733 = vmatmul.mubr.f32.gmra.mxu0 %v1473
    %v1734 = vpop.f32.mrf.mxu0
    %v1735 = vadd.f32 %v254, %v1734
    %v1736 = vpop.f32.mrf.mxu0
    %1737 = vmatprep.mubr.f32.mxu0 0.0
    %1738 = vmatmul.mubr.f32.gmra.mxu0 %v1476
    %v1739 = vpop.f32.mrf.mxu0
    %v1740 = vadd.f32 %v254, %v1739
    %v1741 = vpop.f32.mrf.mxu0
    %1742 = vmatprep.mubr.f32.mxu0 0.0
    %1743 = vmatmul.mubr.f32.gmra.mxu0 %v1479
    %v1744 = vpop.f32.mrf.mxu0
    %v1745 = vadd.f32 %v254, %v1744
    %v1746 = vpop.f32.mrf.mxu0
    %1747 = vmatprep.mubr.f32.mxu0 0.0
    %1748 = vmatmul.mubr.f32.gmra.mxu0 %v1482
    %v1749 = vpop.f32.mrf.mxu0
    %v1750 = vadd.f32 %v254, %v1749
    %v1751 = vpop.f32.mrf.mxu0
    %1752 = vmatprep.mubr.f32.mxu0 0.0
    %1753 = vmatmul.mubr.f32.gmra.mxu0 %v1485
    %v1754 = vpop.f32.mrf.mxu0
    %v1755 = vadd.f32 %v254, %v1754
    %v1756 = vpop.f32.mrf.mxu0
    %1757 = vmatprep.mubr.f32.mxu0 0.0
    %1758 = vmatmul.mubr.f32.gmra.mxu0 %v1488
    %v1759 = vpop.f32.mrf.mxu0
    %v1760 = vadd.f32 %v254, %v1759
    %v1761 = vpop.f32.mrf.mxu0
    %1762 = vmatprep.mubr.f32.mxu0 0.0
    %1763 = vmatmul.mubr.f32.gmra.mxu0 %v1491
    %v1764 = vpop.f32.mrf.mxu0
    %v1765 = vadd.f32 %v254, %v1764
    %v1766 = vpop.f32.mrf.mxu0
    %1767 = vmatprep.mubr.f32.mxu0 0.0
    %1768 = vmatmul.mubr.f32.gmra.mxu0 %v1494
    %v1769 = vpop.f32.mrf.mxu0
    %v1770 = vadd.f32 %v254, %v1769
    %v1771 = vpop.f32.mrf.mxu0
    %1772 = vmatprep.mubr.f32.mxu0 0.0
    %1773 = vmatmul.mubr.f32.gmra.mxu0 %v1497
    %v1774 = vpop.f32.mrf.mxu0
    %v1775 = vadd.f32 %v254, %v1774
    %v1776 = vpop.f32.mrf.mxu0
    %1777 = vmatprep.mubr.f32.mxu0 0.0
    %1778 = vmatmul.mubr.f32.gmra.mxu0 %v1500
    %v1779 = vpop.f32.mrf.mxu0
    %v1780 = vadd.f32 %v254, %v1779
    %v1781 = vpop.f32.mrf.mxu0
    %1782 = vmatprep.mubr.f32.mxu0 0.0
    %1783 = vmatmul.mubr.f32.gmra.mxu0 %v1503
    %v1784 = vpop.f32.mrf.mxu0
    %v1785 = vadd.f32 %v254, %v1784
    %v1786 = vpop.f32.mrf.mxu0
    %1787 = vmatprep.mubr.f32.mxu0 0.0
    %1788 = vmatmul.mubr.f32.gmra.mxu0 %v1506
    %v1789 = vpop.f32.mrf.mxu0
    %v1790 = vadd.f32 %v254, %v1789
    %v1791 = vpop.f32.mrf.mxu0
    %1792 = vmatprep.mubr.f32.mxu0 0.0
    %1793 = vmatmul.mubr.f32.gmra.mxu0 %v1509
    %v1794 = vpop.f32.mrf.mxu0
    %v1795 = vadd.f32 %v254, %v1794
    %v1796 = vpop.f32.mrf.mxu0
    %1797 = vmatprep.mubr.f32.mxu0 0.0
    %1798 = vmatmul.mubr.f32.gmra.mxu0 %v1512
    %v1799 = vpop.f32.mrf.mxu0
    %v1800 = vadd.f32 %v254, %v1799
    %v1801 = vpop.f32.mrf.mxu0
    %1802 = vmatprep.mubr.f32.mxu0 0.0
    %1803 = vmatmul.mubr.f32.gmra.mxu0 %v1515
    %v1804 = vpop.f32.mrf.mxu0
    %v1805 = vadd.f32 %v254, %v1804
    %v1806 = vpop.f32.mrf.mxu0
    %1807 = vmatprep.mubr.f32.mxu0 0.0
    %1808 = vmatmul.mubr.f32.gmra.mxu0 %v1518
    %v1809 = vpop.f32.mrf.mxu0
    %v1810 = vadd.f32 %v254, %v1809
    %v1811 = vpop.f32.mrf.mxu0
    %1812 = vmatprep.mubr.f32.mxu0 0.0
    %1813 = vmatmul.mubr.f32.gmra.mxu0 %v1521
    %v1814 = vpop.f32.mrf.mxu0
    %v1815 = vadd.f32 %v254, %v1814
    %v1816 = vpop.f32.mrf.mxu0
    %1817 = vmatprep.mubr.f32.mxu0 0.0
    %1818 = vmatmul.mubr.f32.gmra.mxu0 %v1524
    %v1819 = vpop.f32.mrf.mxu0
    %v1820 = vadd.f32 %v254, %v1819
    %v1821 = vpop.f32.mrf.mxu0
    %1822 = vmatprep.mubr.f32.mxu0 0.0
    %1823 = vmatmul.mubr.f32.gmra.mxu0 %v1527
    %v1824 = vpop.f32.mrf.mxu0
    %v1825 = vadd.f32 %v254, %v1824
    %v1826 = vpop.f32.mrf.mxu0
    %1827 = vmatprep.mubr.f32.mxu0 0.0
    %1828 = vmatmul.mubr.f32.gmra.mxu0 %v1530
    %v1829 = vpop.f32.mrf.mxu0
    %v1830 = vadd.f32 %v254, %v1829
    %v1831 = vpop.f32.mrf.mxu0
    %1832 = vmatprep.mubr.f32.mxu0 0.0
    %1833 = vmatmul.mubr.f32.gmra.mxu0 %v1533
    %v1834 = vpop.f32.mrf.mxu0
    %v1835 = vadd.f32 %v254, %v1834
    %v1836 = vpop.f32.mrf.mxu0
    %1837 = vmatprep.mubr.f32.mxu0 0.0
    %1838 = vmatmul.mubr.f32.gmra.mxu0 %v1536
    %v1839 = vpop.f32.mrf.mxu0
    %v1840 = vadd.f32 %v254, %v1839
    %v1841 = vpop.f32.mrf.mxu0
    %1842 = vmatprep.mubr.f32.mxu0 0.0
    %1843 = vmatmul.mubr.f32.gmra.mxu0 %v1539
    %v1844 = vpop.f32.mrf.mxu0
    %v1845 = vadd.f32 %v254, %v1844
    %v1846 = vpop.f32.mrf.mxu0
    %1847 = vmatprep.mubr.f32.mxu0 0.0
    %1848 = vmatmul.mubr.f32.gmra.mxu0 %v1542
    %v1849 = vpop.f32.mrf.mxu0
    %v1850 = vadd.f32 %v254, %v1849
    %v1851 = vpop.f32.mrf.mxu0
    %1852 = vmatprep.mubr.f32.mxu0 0.0
    %1853 = vmatmul.mubr.f32.gmra.mxu0 %v1545
    %v1854 = vpop.f32.mrf.mxu0
    %v1855 = vadd.f32 %v254, %v1854
    %v1856 = vpop.f32.mrf.mxu0
    %1857 = vmatprep.mubr.f32.mxu0 0.0
    %1858 = vmatmul.mubr.f32.gmra.mxu0 %v1548
    %v1859 = vpop.f32.mrf.mxu0
    %v1860 = vadd.f32 %v254, %v1859
    %v1861 = vpop.f32.mrf.mxu0
    %1862 = vmatprep.mubr.f32.mxu0 0.0
    %1863 = vmatmul.mubr.f32.gmra.mxu0 %v1551
    %v1864 = vpop.f32.mrf.mxu0
    %v1865 = vadd.f32 %v254, %v1864
    %v1866 = vpop.f32.mrf.mxu0
    %1867 = vmatprep.mubr.f32.mxu0 0.0
    %1868 = vmatmul.mubr.f32.gmra.mxu0 %v1554
    %v1869 = vpop.f32.mrf.mxu0
    %v1870 = vadd.f32 %v254, %v1869
    %v1871 = vpop.f32.mrf.mxu0
    %1872 = vmatprep.mubr.f32.mxu0 0.0
    %1873 = vmatmul.mubr.f32.gmra.mxu0 %v1557
    %v1874 = vpop.f32.mrf.mxu0
    %v1875 = vadd.f32 %v254, %v1874
    %v1876 = vpop.f32.mrf.mxu0
    %1877 = vmatprep.mubr.f32.mxu0 0.0
    %1878 = vmatmul.mubr.f32.gmra.mxu0 %v1560
    %v1879 = vpop.f32.mrf.mxu0
    %v1880 = vadd.f32 %v254, %v1879
    %v1881 = vpop.f32.mrf.mxu0
    %1882 = vmatprep.mubr.f32.mxu0 0.0
    %1883 = vmatmul.mubr.f32.gmra.mxu0 %v1563
    %v1884 = vpop.f32.mrf.mxu0
    %v1885 = vadd.f32 %v254, %v1884
    %v1886 = vpop.f32.mrf.mxu0
    %1887 = vmatprep.mubr.f32.mxu0 0.0
    %1888 = vmatmul.mubr.f32.gmra.mxu0 %v1566
    %v1889 = vpop.f32.mrf.mxu0
    %v1890 = vadd.f32 %v254, %v1889
    %v1891 = vpop.f32.mrf.mxu0
    %1892 = vmatprep.mubr.f32.mxu0 0.0
    %1893 = vmatmul.mubr.f32.gmra.mxu0 %v1569
    %v1894 = vpop.f32.mrf.mxu0
    %v1895 = vadd.f32 %v254, %v1894
    %v1896 = vpop.f32.mrf.mxu0
    %1897 = vmatprep.mubr.f32.mxu0 0.0
    %1898 = vmatmul.mubr.f32.gmra.mxu0 %v1572
    %v1899 = vpop.f32.mrf.mxu0
    %v1900 = vadd.f32 %v254, %v1899
    %v1901 = vpop.f32.mrf.mxu0
    %1902 = vmatprep.mubr.f32.mxu0 0.0
    %1903 = vmatmul.mubr.f32.gmra.mxu0 %v1575
    %v1904 = vpop.f32.mrf.mxu0
    %v1905 = vadd.f32 %v254, %v1904
    %v1906 = vpop.f32.mrf.mxu0
    %1907 = vmatprep.mubr.f32.mxu0 0.0
    %1908 = vmatmul.mubr.f32.gmra.mxu0 %v1578
    %v1909 = vpop.f32.mrf.mxu0
    %v1910 = vadd.f32 %v254, %v1909
    %v1911 = vpop.f32.mrf.mxu0
    %1912 = vmatprep.mubr.f32.mxu0 0.0
    %1913 = vmatmul.mubr.f32.gmra.mxu0 %v1581
    %v1914 = vpop.f32.mrf.mxu0
    %v1915 = vadd.f32 %v254, %v1914
    %v1916 = vpop.f32.mrf.mxu0
    %1917 = vmatprep.mubr.f32.mxu0 0.0
    %1918 = vmatmul.mubr.f32.gmra.mxu0 %v1584
    %v1919 = vpop.f32.mrf.mxu0
    %v1920 = vadd.f32 %v254, %v1919
    %v1921 = vpop.f32.mrf.mxu0
    %1922 = vmatprep.mubr.f32.mxu0 0.0
    %1923 = vmatmul.mubr.f32.gmra.mxu0 %v1587
    %v1924 = vpop.f32.mrf.mxu0
    %v1925 = vadd.f32 %v254, %v1924
    %v1926 = vpop.f32.mrf.mxu0
    %1927 = vmatprep.mubr.f32.mxu0 0.0
    %1928 = vmatmul.mubr.f32.gmra.mxu0 %v1590
    %v1929 = vpop.f32.mrf.mxu0
    %v1930 = vadd.f32 %v254, %v1929
    %v1931 = vpop.f32.mrf.mxu0
    %1932 = vmatprep.mubr.f32.mxu0 0.0
    %1933 = vmatmul.mubr.f32.gmra.mxu0 %v1593
    %v1934 = vpop.f32.mrf.mxu0
    %v1935 = vadd.f32 %v254, %v1934
    %v1936 = vpop.f32.mrf.mxu0
    %1937 = vmatprep.mubr.f32.mxu0 0.0
    %1938 = vmatmul.mubr.f32.gmra.mxu0 %v1596
    %v1939 = vpop.f32.mrf.mxu0
    %v1940 = vadd.f32 %v254, %v1939
    %v1941 = vpop.f32.mrf.mxu0
    %1942 = vmatprep.mubr.f32.mxu0 0.0
    %1943 = vmatmul.mubr.f32.gmra.mxu0 %v1599
    %v1944 = vpop.f32.mrf.mxu0
    %v1945 = vadd.f32 %v254, %v1944
    %v1946 = vpop.f32.mrf.mxu0
    %1947 = vmatprep.mubr.f32.mxu0 0.0
    %1948 = vmatmul.mubr.f32.gmra.mxu0 %v1602
    %v1949 = vpop.f32.mrf.mxu0
    %v1950 = vadd.f32 %v254, %v1949
    %v1951 = vpop.f32.mrf.mxu0
    %1952 = vmatprep.mubr.f32.mxu0 0.0
    %1953 = vmatmul.mubr.f32.gmra.mxu0 %v1605
    %v1954 = vpop.f32.mrf.mxu0
    %v1955 = vadd.f32 %v254, %v1954
    %v1956 = vpop.f32.mrf.mxu0
    %1957 = vmatprep.mubr.f32.mxu0 0.0
    %1958 = vmatmul.mubr.f32.gmra.mxu0 %v1608
    %v1959 = vpop.f32.mrf.mxu0
    %v1960 = vadd.f32 %v254, %v1959
    %v1961 = vpop.f32.mrf.mxu0
    %1962 = vmatprep.mubr.f32.mxu0 0.0
    %1963 = vmatmul.mubr.f32.gmra.mxu0 %v1611
    %v1964 = vpop.f32.mrf.mxu0
    %v1965 = vadd.f32 %v254, %v1964
    %v1966 = vpop.f32.mrf.mxu0
    %1967 = vmatprep.mubr.f32.mxu0 0.0
    %1968 = vmatmul.mubr.f32.gmra.mxu0 %v1614
    %v1969 = vpop.f32.mrf.mxu0
    %v1970 = vadd.f32 %v254, %v1969
    %v1971 = vpop.f32.mrf.mxu0
    %1972 = vmatprep.mubr.f32.mxu0 0.0
    %1973 = vmatmul.mubr.f32.gmra.mxu0 %v1617
    %v1974 = vpop.f32.mrf.mxu0
    %v1975 = vadd.f32 %v254, %v1974
    %v1976 = vpop.f32.mrf.mxu0
    %1977 = vmatprep.mubr.f32.mxu0 0.0
    %1978 = vmatmul.mubr.f32.gmra.mxu0 %v1620
    %v1979 = vpop.f32.mrf.mxu0
    %v1980 = vadd.f32 %v254, %v1979
    %v1981 = vpop.f32.mrf.mxu0
    %1982 = vmatprep.mubr.f32.mxu0 0.0
    %1983 = vmatmul.mubr.f32.gmra.mxu0 %v1623
    %v1984 = vpop.f32.mrf.mxu0
    %v1985 = vadd.f32 %v254, %v1984
    %v1986 = vpop.f32.mrf.mxu0
    %1987 = vmatprep.mubr.f32.mxu0 0.0
    %1988 = vmatmul.mubr.f32.gmra.mxu0 %v1626
    %v1989 = vpop.f32.mrf.mxu0
    %v1990 = vadd.f32 %v254, %v1989
    %v1991 = vpop.f32.mrf.mxu0
    %1992 = vmatprep.mubr.f32.mxu0 0.0
    %1993 = vmatmul.mubr.f32.gmra.mxu0 %v1629
    %v1994 = vpop.f32.mrf.mxu0
    %v1995 = vadd.f32 %v254, %v1994
    %v1996 = vpop.f32.mrf.mxu0
    %1997 = vmatprep.mubr.f32.mxu0 0.0
    %1998 = vmatmul.mubr.f32.gmra.mxu0 %v1632
    %v1999 = vpop.f32.mrf.mxu0
    %v2000 = vadd.f32 %v254, %v1999
    %v2001 = vpop.f32.mrf.mxu0
    %2002 = vmatprep.mubr.f32.mxu0 0.0
    %2003 = vmatmul.mubr.f32.gmra.mxu0 %v1635
    %v2004 = vpop.f32.mrf.mxu0
    %v2005 = vadd.f32 %v254, %v2004
    %v2006 = vpop.f32.mrf.mxu0
    %2007 = vmatprep.mubr.f32.mxu0 0.0
    %2008 = vmatmul.mubr.f32.gmra.mxu0 %v1638
    %v2009 = vpop.f32.mrf.mxu0
    %v2010 = vadd.f32 %v254, %v2009
    %v2011 = vpop.f32.mrf.mxu0
    %2012 = vmatprep.mubr.f32.mxu0 0.0
    %2013 = vmatmul.mubr.f32.gmra.mxu0 %v1641
    %v2014 = vpop.f32.mrf.mxu0
    %v2015 = vadd.f32 %v254, %v2014
    %v2016 = vpop.f32.mrf.mxu0
    %2017 = vmatprep.mubr.f32.mxu0 0.0
    %2018 = vmatmul.mubr.f32.gmra.mxu0 %v1644
    %v2019 = vpop.f32.mrf.mxu0
    %v2020 = vadd.f32 %v254, %v2019
    %v2021 = vpop.f32.mrf.mxu0
    %2022 = vmatprep.mubr.f32.mxu0 0.0
    %2023 = vmatmul.mubr.f32.gmra.mxu0 %v1647
    %v2024 = vpop.f32.mrf.mxu0
    %v2025 = vadd.f32 %v254, %v2024
    %v2026 = vpop.f32.mrf.mxu0
    %2027 = vmatprep.mubr.f32.mxu0 0.0
    %2028 = vmatmul.mubr.f32.gmra.mxu0 %v1650
    %v2029 = vpop.f32.mrf.mxu0
    %v2030 = vadd.f32 %v254, %v2029
    %v2031 = vpop.f32.mrf.mxu0
    %2032 = vmatprep.mubr.f32.mxu0 0.0
    %2033 = vmatmul.mubr.f32.gmra.mxu0 %v1653
    %v2034 = vpop.f32.mrf.mxu0
    %v2035 = vadd.f32 %v254, %v2034
    %v2036 = vpop.f32.mrf.mxu0
    %2037 = vmatprep.mubr.f32.mxu0 0.0
    %2038 = vmatmul.mubr.f32.gmra.mxu0 %v1656
    %v2039 = vpop.f32.mrf.mxu0
    %v2040 = vadd.f32 %v254, %v2039
    %v2041 = vpop.f32.mrf.mxu0
    %2042 = vdwg.mxu0
    %v2043 = vmax.f32 %v1725, 0.0
    %v2044 = vmax.f32 %v1730, 0.0
    %v2045 = vmax.f32 %v1735, 0.0
    %v2046 = vmax.f32 %v1740, 0.0
    %v2047 = vmax.f32 %v1745, 0.0
    %v2048 = vmax.f32 %v1750, 0.0
    %v2049 = vmax.f32 %v1755, 0.0
    %v2050 = vmax.f32 %v1760, 0.0
    %v2051 = vmax.f32 %v1765, 0.0
    %v2052 = vmax.f32 %v1770, 0.0
    %v2053 = vmax.f32 %v1775, 0.0
    %v2054 = vmax.f32 %v1780, 0.0
    %v2055 = vmax.f32 %v1785, 0.0
    %v2056 = vmax.f32 %v1790, 0.0
    %v2057 = vmax.f32 %v1795, 0.0
    %v2058 = vmax.f32 %v1800, 0.0
    %v2059 = vmax.f32 %v1805, 0.0
    %v2060 = vmax.f32 %v1810, 0.0
    %v2061 = vmax.f32 %v1815, 0.0
    %v2062 = vmax.f32 %v1820, 0.0
    %v2063 = vmax.f32 %v1825, 0.0
    %v2064 = vmax.f32 %v1830, 0.0
    %v2065 = vmax.f32 %v1835, 0.0
    %v2066 = vmax.f32 %v1840, 0.0
    %v2067 = vmax.f32 %v1845, 0.0
    %v2068 = vmax.f32 %v1850, 0.0
    %v2069 = vmax.f32 %v1855, 0.0
    %v2070 = vmax.f32 %v1860, 0.0
    %v2071 = vmax.f32 %v1865, 0.0
    %v2072 = vmax.f32 %v1870, 0.0
    %v2073 = vmax.f32 %v1875, 0.0
    %v2074 = vmax.f32 %v1880, 0.0
    %v2075 = vmax.f32 %v1885, 0.0
    %v2076 = vmax.f32 %v1890, 0.0
    %v2077 = vmax.f32 %v1895, 0.0
    %v2078 = vmax.f32 %v1900, 0.0
    %v2079 = vmax.f32 %v1905, 0.0
    %v2080 = vmax.f32 %v1910, 0.0
    %v2081 = vmax.f32 %v1915, 0.0
    %v2082 = vmax.f32 %v1920, 0.0
    %v2083 = vmax.f32 %v1925, 0.0
    %v2084 = vmax.f32 %v1930, 0.0
    %v2085 = vmax.f32 %v1935, 0.0
    %v2086 = vmax.f32 %v1940, 0.0
    %v2087 = vmax.f32 %v1945, 0.0
    %v2088 = vmax.f32 %v1950, 0.0
    %v2089 = vmax.f32 %v1955, 0.0
    %v2090 = vmax.f32 %v1960, 0.0
    %v2091 = vmax.f32 %v1965, 0.0
    %v2092 = vmax.f32 %v1970, 0.0
    %v2093 = vmax.f32 %v1975, 0.0
    %v2094 = vmax.f32 %v1980, 0.0
    %v2095 = vmax.f32 %v1985, 0.0
    %v2096 = vmax.f32 %v1990, 0.0
    %v2097 = vmax.f32 %v1995, 0.0
    %v2098 = vmax.f32 %v2000, 0.0
    %v2099 = vmax.f32 %v2005, 0.0
    %v2100 = vmax.f32 %v2010, 0.0
    %v2101 = vmax.f32 %v2015, 0.0
    %v2102 = vmax.f32 %v2020, 0.0
    %v2103 = vmax.f32 %v2025, 0.0
    %v2104 = vmax.f32 %v2030, 0.0
    %v2105 = vmax.f32 %v2035, 0.0
    %v2106 = vmax.f32 %v2040, 0.0
    %2107 = vmatprep.subr.mxu0 0.0
    %2108 = vmatpush1.msra.mxu0 %v2058
    %2109 = vmatprep.subr.mxu0 0.0
    %2110 = vmatpush1.msra.mxu0 %v2057
    %2111 = vmatprep.subr.mxu0 0.0
    %2112 = vmatpush1.msra.mxu0 %v2056
    %2113 = vmatprep.subr.mxu0 0.0
    %2114 = vmatpush1.msra.mxu0 %v2055
    %2115 = vmatprep.subr.mxu0 0.0
    %2116 = vmatpush1.msra.mxu0 %v2054
    %2117 = vmatprep.subr.mxu0 0.0
    %2118 = vmatpush1.msra.mxu0 %v2053
    %2119 = vmatprep.subr.mxu0 0.0
    %2120 = vmatpush1.msra.mxu0 %v2052
    %2121 = vmatprep.subr.mxu0 0.0
    %2122 = vmatpush1.msra.mxu0 %v2051
    %2123 = vmatprep.subr.mxu0 0.0
    %2124 = vmatpush1.msra.mxu0 %v2050
    %2125 = vmatprep.subr.mxu0 0.0
    %2126 = vmatpush1.msra.mxu0 %v2049
    %2127 = vmatprep.subr.mxu0 0.0
    %2128 = vmatpush1.msra.mxu0 %v2048
    %2129 = vmatprep.subr.mxu0 0.0
    %2130 = vmatpush1.msra.mxu0 %v2047
    %2131 = vmatprep.subr.mxu0 0.0
    %2132 = vmatpush1.msra.mxu0 %v2046
    %2133 = vmatprep.subr.mxu0 0.0
    %2134 = vmatpush1.msra.mxu0 %v2045
    %2135 = vmatprep.subr.mxu0 0.0
    %2136 = vmatpush1.msra.mxu0 %v2044
    %2137 = vmatprep.subr.mxu0 0.0
    %2138 = vmatpush1.msra.mxu0 %v2043
    %2139 = vmatprep.subr.mxu0 0.0
    %2140 = vmatpush2.msra.mxu0 %v2074
    %2141 = vmatprep.subr.mxu0 0.0
    %2142 = vmatpush2.msra.mxu0 %v2073
    %2143 = vmatprep.subr.mxu0 0.0
    %2144 = vmatpush2.msra.mxu0 %v2072
    %2145 = vmatprep.subr.mxu0 0.0
    %2146 = vmatpush2.msra.mxu0 %v2071
    %2147 = vmatprep.subr.mxu0 0.0
    %2148 = vmatpush2.msra.mxu0 %v2070
    %2149 = vmatprep.subr.mxu0 0.0
    %2150 = vmatpush2.msra.mxu0 %v2069
    %2151 = vmatprep.subr.mxu0 0.0
    %2152 = vmatpush2.msra.mxu0 %v2068
    %2153 = vmatprep.subr.mxu0 0.0
    %2154 = vmatpush2.msra.mxu0 %v2067
    %2155 = vmatprep.subr.mxu0 0.0
    %2156 = vmatpush2.msra.mxu0 %v2066
    %2157 = vmatprep.subr.mxu0 0.0
    %2158 = vmatpush2.msra.mxu0 %v2065
    %2159 = vmatprep.subr.mxu0 0.0
    %2160 = vmatpush2.msra.mxu0 %v2064
    %2161 = vmatprep.subr.mxu0 0.0
    %2162 = vmatpush2.msra.mxu0 %v2063
    %2163 = vmatprep.subr.mxu0 0.0
    %2164 = vmatpush2.msra.mxu0 %v2062
    %2165 = vmatprep.subr.mxu0 0.0
    %2166 = vmatpush2.msra.mxu0 %v2061
    %2167 = vmatprep.subr.mxu0 0.0
    %2168 = vmatpush2.msra.mxu0 %v2060
    %2169 = vmatprep.subr.mxu0 0.0
    %2170 = vmatpush2.msra.mxu0 %v2059
    %2171 = vmatprep.mubr.f32.mxu0 %v918
    %2172 = vmatmul.mubr.f32.gmra.mxu0 %v910
    %v2173 = vpop.f32.mrf.mxu0
    %v2174 = vadd.f32 0.0, %v2173
    %v2175 = vpop.f32.mrf.mxu0
    %2176 = vdwg.mxu0
    %2177 = vmatprep.subr.mxu0 0.0
    %2178 = vmatpush1.msra.mxu0 %v2090
    %2179 = vmatprep.subr.mxu0 0.0
    %2180 = vmatpush1.msra.mxu0 %v2089
    %2181 = vmatprep.subr.mxu0 0.0
    %2182 = vmatpush1.msra.mxu0 %v2088
    %2183 = vmatprep.subr.mxu0 0.0
    %2184 = vmatpush1.msra.mxu0 %v2087
    %2185 = vmatprep.subr.mxu0 0.0
    %2186 = vmatpush1.msra.mxu0 %v2086
    %2187 = vmatprep.subr.mxu0 0.0
    %2188 = vmatpush1.msra.mxu0 %v2085
    %2189 = vmatprep.subr.mxu0 0.0
    %2190 = vmatpush1.msra.mxu0 %v2084
    %2191 = vmatprep.subr.mxu0 0.0
    %2192 = vmatpush1.msra.mxu0 %v2083
    %2193 = vmatprep.subr.mxu0 0.0
    %2194 = vmatpush1.msra.mxu0 %v2082
    %2195 = vmatprep.subr.mxu0 0.0
    %2196 = vmatpush1.msra.mxu0 %v2081
    %2197 = vmatprep.subr.mxu0 0.0
    %2198 = vmatpush1.msra.mxu0 %v2080
    %2199 = vmatprep.subr.mxu0 0.0
    %2200 = vmatpush1.msra.mxu0 %v2079
    %2201 = vmatprep.subr.mxu0 0.0
    %2202 = vmatpush1.msra.mxu0 %v2078
    %2203 = vmatprep.subr.mxu0 0.0
    %2204 = vmatpush1.msra.mxu0 %v2077
    %2205 = vmatprep.subr.mxu0 0.0
    %2206 = vmatpush1.msra.mxu0 %v2076
    %2207 = vmatprep.subr.mxu0 0.0
    %2208 = vmatpush1.msra.mxu0 %v2075
    %2209 = vmatprep.subr.mxu0 0.0
    %2210 = vmatpush2.msra.mxu0 %v2106
    %2211 = vmatprep.subr.mxu0 0.0
    %2212 = vmatpush2.msra.mxu0 %v2105
    %2213 = vmatprep.subr.mxu0 0.0
    %2214 = vmatpush2.msra.mxu0 %v2104
    %2215 = vmatprep.subr.mxu0 0.0
    %2216 = vmatpush2.msra.mxu0 %v2103
    %2217 = vmatprep.subr.mxu0 0.0
    %2218 = vmatpush2.msra.mxu0 %v2102
    %2219 = vmatprep.subr.mxu0 0.0
    %2220 = vmatpush2.msra.mxu0 %v2101
    %2221 = vmatprep.subr.mxu0 0.0
    %2222 = vmatpush2.msra.mxu0 %v2100
    %2223 = vmatprep.subr.mxu0 0.0
    %2224 = vmatpush2.msra.mxu0 %v2099
    %2225 = vmatprep.subr.mxu0 0.0
    %2226 = vmatpush2.msra.mxu0 %v2098
    %2227 = vmatprep.subr.mxu0 0.0
    %2228 = vmatpush2.msra.mxu0 %v2097
    %2229 = vmatprep.subr.mxu0 0.0
    %2230 = vmatpush2.msra.mxu0 %v2096
    %2231 = vmatprep.subr.mxu0 0.0
    %2232 = vmatpush2.msra.mxu0 %v2095
    %2233 = vmatprep.subr.mxu0 0.0
    %2234 = vmatpush2.msra.mxu0 %v2094
    %2235 = vmatprep.subr.mxu0 0.0
    %2236 = vmatpush2.msra.mxu0 %v2093
    %2237 = vmatprep.subr.mxu0 0.0
    %2238 = vmatpush2.msra.mxu0 %v2092
    %2239 = vmatprep.subr.mxu0 0.0
    %2240 = vmatpush2.msra.mxu0 %v2091
    %2241 = vmatprep.mubr.f32.mxu0 %v919
    %2242 = vmatmul.mubr.f32.gmra.mxu0 %v917
    %v2243 = vpop.f32.mrf.mxu0
    %v2244 = vadd.f32 %v2174, %v2243
    %v2245 = vpop.f32.mrf.mxu0
    %2246 = vdwg.mxu0
    %2247 = vmatprep.subr.mxu0 0.0
    %2248 = vmatpush1.msra.mxu0 %v93
    %2249 = vmatprep.subr.mxu0 0.0
    %2250 = vmatpush1.msra.mxu0 %v92
    %2251 = vmatprep.subr.mxu0 0.0
    %2252 = vmatpush1.msra.mxu0 %v91
    %2253 = vmatprep.subr.mxu0 0.0
    %2254 = vmatpush1.msra.mxu0 %v90
    %2255 = vmatprep.subr.mxu0 0.0
    %2256 = vmatpush1.msra.mxu0 %v89
    %2257 = vmatprep.subr.mxu0 0.0
    %2258 = vmatpush1.msra.mxu0 %v88
    %2259 = vmatprep.subr.mxu0 0.0
    %2260 = vmatpush1.msra.mxu0 %v87
    %2261 = vmatprep.subr.mxu0 0.0
    %2262 = vmatpush1.msra.mxu0 %v86
    %2263 = vmatprep.subr.mxu0 0.0
    %2264 = vmatpush1.msra.mxu0 %v85
    %2265 = vmatprep.subr.mxu0 0.0
    %2266 = vmatpush1.msra.mxu0 %v84
    %2267 = vmatprep.subr.mxu0 0.0
    %2268 = vmatpush1.msra.mxu0 %v83
    %2269 = vmatprep.subr.mxu0 0.0
    %2270 = vmatpush1.msra.mxu0 %v82
    %2271 = vmatprep.subr.mxu0 0.0
    %2272 = vmatpush1.msra.mxu0 %v81
    %2273 = vmatprep.subr.mxu0 0.0
    %2274 = vmatpush1.msra.mxu0 %v80
    %2275 = vmatprep.subr.mxu0 0.0
    %2276 = vmatpush1.msra.mxu0 %v79
    %2277 = vmatprep.subr.mxu0 0.0
    %2278 = vmatpush1.msra.mxu0 %v78
    %2279 = vmatprep.subr.mxu0 0.0
    %2280 = vmatpush2.msra.mxu0 0.0
    %2281 = vmatprep.subr.mxu0 0.0
    %2282 = vmatpush2.msra.mxu0 0.0
    %2283 = vmatprep.subr.mxu0 0.0
    %2284 = vmatpush2.msra.mxu0 0.0
    %2285 = vmatprep.subr.mxu0 0.0
    %2286 = vmatpush2.msra.mxu0 0.0
    %2287 = vmatprep.subr.mxu0 0.0
    %2288 = vmatpush2.msra.mxu0 0.0
    %2289 = vmatprep.subr.mxu0 0.0
    %2290 = vmatpush2.msra.mxu0 0.0
    %2291 = vmatprep.subr.mxu0 0.0
    %2292 = vmatpush2.msra.mxu0 0.0
    %2293 = vmatprep.subr.mxu0 0.0
    %2294 = vmatpush2.msra.mxu0 0.0
    %2295 = vmatprep.subr.mxu0 0.0
    %2296 = vmatpush2.msra.mxu0 0.0
    %2297 = vmatprep.subr.mxu0 0.0
    %2298 = vmatpush2.msra.mxu0 0.0
    %2299 = vmatprep.subr.mxu0 0.0
    %2300 = vmatpush2.msra.mxu0 0.0
    %2301 = vmatprep.subr.mxu0 0.0
    %2302 = vmatpush2.msra.mxu0 0.0
    %2303 = vmatprep.subr.mxu0 0.0
    %2304 = vmatpush2.msra.mxu0 0.0
    %2305 = vmatprep.subr.mxu0 0.0
    %2306 = vmatpush2.msra.mxu0 0.0
    %2307 = vmatprep.subr.mxu0 0.0
    %2308 = vmatpush2.msra.mxu0 0.0
    %2309 = vmatprep.subr.mxu0 0.0
    %2310 = vmatpush2.msra.mxu0 0.0
    %2311 = vmatprep.mubr.f32.mxu0 0.0
    %2312 = vmatmul.mubr.f32.gmra.mxu0 %v2244
    %v2313 = vpop.f32.mrf.mxu0
    %v2314 = vadd.f32 %v1068, %v2313
    %v2315 = vpop.f32.mrf.mxu0
    %2316 = vdwg.mxu0
    %v2317 = vsel %vm1140, %v2314, 0.0
    %v2318 = vrot.slane %v2317, 4
    %v2319 = vadd.f32 %v2317, %v2318
    %v2320 = vrot.slane %v2319, 2
    %v2321 = vadd.f32 %v2319, %v2320
    %v2322 = vrot.slane %v2321, 1
    %v2323 = vadd.f32 %v2321, %v2322
    %v2324 = vmul.f32 %v2323, %v1148
    %v2325 = vsub.f32 %v2314, %v2324
    %v2326 = vmul.f32 %v2325, %v2325
    %v2327 = vsel %vm1140, %v2326, 0.0
    %v2328 = vrot.slane %v2327, 4
    %v2329 = vadd.f32 %v2327, %v2328
    %v2330 = vrot.slane %v2329, 2
    %v2331 = vadd.f32 %v2329, %v2330
    %v2332 = vrot.slane %v2331, 1
    %v2333 = vadd.f32 %v2331, %v2332
    %v2334 = vmul.f32 %v2333, %v1148
    %v2335 = vadd.f32 %v2334, 1e-05
    %v2336 = vrsqrt.pop %v2335
    %v2337 = vmul.f32 %v2325, %v2336
    %v2338 = vmul.f32 %v2337, %v1167
    %v2339 = vadd.f32 %v2338, %v1174
    %v2340 = vmax.f32 %v2339, 0.0
    %2341 = vmatprep.subr.mxu0 0.0
    %2342 = vmatpush1.msra.mxu0 %v112
    %2343 = vmatprep.subr.mxu0 0.0
    %2344 = vmatpush1.msra.mxu0 %v111
    %2345 = vmatprep.subr.mxu0 0.0
    %2346 = vmatpush1.msra.mxu0 %v110
    %2347 = vmatprep.subr.mxu0 0.0
    %2348 = vmatpush1.msra.mxu0 %v109
    %2349 = vmatprep.subr.mxu0 0.0
    %2350 = vmatpush1.msra.mxu0 %v108
    %2351 = vmatprep.subr.mxu0 0.0
    %2352 = vmatpush1.msra.mxu0 %v107
    %2353 = vmatprep.subr.mxu0 0.0
    %2354 = vmatpush1.msra.mxu0 %v106
    %2355 = vmatprep.subr.mxu0 0.0
    %2356 = vmatpush1.msra.mxu0 %v105
    %2357 = vmatprep.subr.mxu0 0.0
    %2358 = vmatpush1.msra.mxu0 %v104
    %2359 = vmatprep.subr.mxu0 0.0
    %2360 = vmatpush1.msra.mxu0 %v103
    %2361 = vmatprep.subr.mxu0 0.0
    %2362 = vmatpush1.msra.mxu0 %v102
    %2363 = vmatprep.subr.mxu0 0.0
    %2364 = vmatpush1.msra.mxu0 %v101
    %2365 = vmatprep.subr.mxu0 0.0
    %2366 = vmatpush1.msra.mxu0 %v100
    %2367 = vmatprep.subr.mxu0 0.0
    %2368 = vmatpush1.msra.mxu0 %v99
    %2369 = vmatprep.subr.mxu0 0.0
    %2370 = vmatpush1.msra.mxu0 %v98
    %2371 = vmatprep.subr.mxu0 0.0
    %2372 = vmatpush1.msra.mxu0 %v97
    %2373 = vmatprep.subr.mxu0 0.0
    %2374 = vmatpush2.msra.mxu0 0.0
    %2375 = vmatprep.subr.mxu0 0.0
    %2376 = vmatpush2.msra.mxu0 0.0
    %2377 = vmatprep.subr.mxu0 0.0
    %2378 = vmatpush2.msra.mxu0 0.0
    %2379 = vmatprep.subr.mxu0 0.0
    %2380 = vmatpush2.msra.mxu0 0.0
    %2381 = vmatprep.subr.mxu0 0.0
    %2382 = vmatpush2.msra.mxu0 0.0
    %2383 = vmatprep.subr.mxu0 0.0
    %2384 = vmatpush2.msra.mxu0 0.0
    %2385 = vmatprep.subr.mxu0 0.0
    %2386 = vmatpush2.msra.mxu0 0.0
    %2387 = vmatprep.subr.mxu0 0.0
    %2388 = vmatpush2.msra.mxu0 0.0
    %2389 = vmatprep.subr.mxu0 0.0
    %2390 = vmatpush2.msra.mxu0 0.0
    %2391 = vmatprep.subr.mxu0 0.0
    %2392 = vmatpush2.msra.mxu0 0.0
    %2393 = vmatprep.subr.mxu0 0.0
    %2394 = vmatpush2.msra.mxu0 0.0
    %2395 = vmatprep.subr.mxu0 0.0
    %2396 = vmatpush2.msra.mxu0 0.0
    %2397 = vmatprep.subr.mxu0 0.0
    %2398 = vmatpush2.msra.mxu0 0.0
    %2399 = vmatprep.subr.mxu0 0.0
    %2400 = vmatpush2.msra.mxu0 0.0
    %2401 = vmatprep.subr.mxu0 0.0
    %2402 = vmatpush2.msra.mxu0 0.0
    %2403 = vmatprep.subr.mxu0 0.0
    %2404 = vmatpush2.msra.mxu0 0.0
    %2405 = vmatprep.mubr.f32.mxu0 0.0
    %2406 = vmatmul.mubr.f32.gmra.mxu0 %v2340
    %v2407 = vpop.f32.mrf.mxu0
    %v2408 = vadd.f32 %v1182, %v2407
    %v2409 = vpop.f32.mrf.mxu0
    %2410 = vdwg.mxu0
    %v2411 = vsel %vm1140, %v2408, 0.0
    %v2412 = vrot.slane %v2411, 4
    %v2413 = vadd.f32 %v2411, %v2412
    %v2414 = vrot.slane %v2413, 2
    %v2415 = vadd.f32 %v2413, %v2414
    %v2416 = vrot.slane %v2415, 1
    %v2417 = vadd.f32 %v2415, %v2416
    %v2418 = vmul.f32 %v2417, %v1148
    %v2419 = vsub.f32 %v2408, %v2418
    %v2420 = vmul.f32 %v2419, %v2419
    %v2421 = vsel %vm1140, %v2420, 0.0
    %v2422 = vrot.slane %v2421, 4
    %v2423 = vadd.f32 %v2421, %v2422
    %v2424 = vrot.slane %v2423, 2
    %v2425 = vadd.f32 %v2423, %v2424
    %v2426 = vrot.slane %v2425, 1
    %v2427 = vadd.f32 %v2425, %v2426
    %v2428 = vmul.f32 %v2427, %v1148
    %v2429 = vadd.f32 %v2428, 1e-05
    %v2430 = vrsqrt.pop %v2429
    %v2431 = vmul.f32 %v2419, %v2430
    %v2432 = vmul.f32 %v2431, %v1279
    %v2433 = vadd.f32 %v2432, %v1286
    %v2434 = vmax.f32 %v2433, 0.0
    %2435 = vmatprep.subr.mxu0 0.0
    %2436 = vmatpush1.msra.mxu0 %v131
    %2437 = vmatprep.subr.mxu0 0.0
    %2438 = vmatpush1.msra.mxu0 %v130
    %2439 = vmatprep.subr.mxu0 0.0
    %2440 = vmatpush1.msra.mxu0 %v129
    %2441 = vmatprep.subr.mxu0 0.0
    %2442 = vmatpush1.msra.mxu0 %v128
    %2443 = vmatprep.subr.mxu0 0.0
    %2444 = vmatpush1.msra.mxu0 %v127
    %2445 = vmatprep.subr.mxu0 0.0
    %2446 = vmatpush1.msra.mxu0 %v126
    %2447 = vmatprep.subr.mxu0 0.0
    %2448 = vmatpush1.msra.mxu0 %v125
    %2449 = vmatprep.subr.mxu0 0.0
    %2450 = vmatpush1.msra.mxu0 %v124
    %2451 = vmatprep.subr.mxu0 0.0
    %2452 = vmatpush1.msra.mxu0 %v123
    %2453 = vmatprep.subr.mxu0 0.0
    %2454 = vmatpush1.msra.mxu0 %v122
    %2455 = vmatprep.subr.mxu0 0.0
    %2456 = vmatpush1.msra.mxu0 %v121
    %2457 = vmatprep.subr.mxu0 0.0
    %2458 = vmatpush1.msra.mxu0 %v120
    %2459 = vmatprep.subr.mxu0 0.0
    %2460 = vmatpush1.msra.mxu0 %v119
    %2461 = vmatprep.subr.mxu0 0.0
    %2462 = vmatpush1.msra.mxu0 %v118
    %2463 = vmatprep.subr.mxu0 0.0
    %2464 = vmatpush1.msra.mxu0 %v117
    %2465 = vmatprep.subr.mxu0 0.0
    %2466 = vmatpush1.msra.mxu0 %v116
    %2467 = vmatprep.subr.mxu0 0.0
    %2468 = vmatpush2.msra.mxu0 0.0
    %2469 = vmatprep.subr.mxu0 0.0
    %2470 = vmatpush2.msra.mxu0 0.0
    %2471 = vmatprep.subr.mxu0 0.0
    %2472 = vmatpush2.msra.mxu0 0.0
    %2473 = vmatprep.subr.mxu0 0.0
    %2474 = vmatpush2.msra.mxu0 0.0
    %2475 = vmatprep.subr.mxu0 0.0
    %2476 = vmatpush2.msra.mxu0 0.0
    %2477 = vmatprep.subr.mxu0 0.0
    %2478 = vmatpush2.msra.mxu0 0.0
    %2479 = vmatprep.subr.mxu0 0.0
    %2480 = vmatpush2.msra.mxu0 0.0
    %2481 = vmatprep.subr.mxu0 0.0
    %2482 = vmatpush2.msra.mxu0 0.0
    %2483 = vmatprep.subr.mxu0 0.0
    %2484 = vmatpush2.msra.mxu0 0.0
    %2485 = vmatprep.subr.mxu0 0.0
    %2486 = vmatpush2.msra.mxu0 0.0
    %2487 = vmatprep.subr.mxu0 0.0
    %2488 = vmatpush2.msra.mxu0 0.0
    %2489 = vmatprep.subr.mxu0 0.0
    %2490 = vmatpush2.msra.mxu0 0.0
    %2491 = vmatprep.subr.mxu0 0.0
    %2492 = vmatpush2.msra.mxu0 0.0
    %2493 = vmatprep.subr.mxu0 0.0
    %2494 = vmatpush2.msra.mxu0 0.0
    %2495 = vmatprep.subr.mxu0 0.0
    %2496 = vmatpush2.msra.mxu0 0.0
    %2497 = vmatprep.subr.mxu0 0.0
    %2498 = vmatpush2.msra.mxu0 0.0
    %2499 = vmatprep.mubr.f32.mxu0 0.0
    %2500 = vmatmul.mubr.f32.gmra.mxu0 %v2434
    %v2501 = vpop.f32.mrf.mxu0
    %v2502 = vadd.f32 %v1294, %v2501
    %v2503 = vpop.f32.mrf.mxu0
    %2504 = vdwg.mxu0
    %v2505 = vsel %vm1140, %v2502, 0.0
    %v2506 = vrot.slane %v2505, 4
    %v2507 = vadd.f32 %v2505, %v2506
    %v2508 = vrot.slane %v2507, 2
    %v2509 = vadd.f32 %v2507, %v2508
    %v2510 = vrot.slane %v2509, 1
    %v2511 = vadd.f32 %v2509, %v2510
    %v2512 = vmul.f32 %v2511, %v1148
    %v2513 = vsub.f32 %v2502, %v2512
    %v2514 = vmul.f32 %v2513, %v2513
    %v2515 = vsel %vm1140, %v2514, 0.0
    %v2516 = vrot.slane %v2515, 4
    %v2517 = vadd.f32 %v2515, %v2516
    %v2518 = vrot.slane %v2517, 2
    %v2519 = vadd.f32 %v2517, %v2518
    %v2520 = vrot.slane %v2519, 1
    %v2521 = vadd.f32 %v2519, %v2520
    %v2522 = vmul.f32 %v2521, %v1148
    %v2523 = vadd.f32 %v2522, 1e-05
    %v2524 = vrsqrt.pop %v2523
    %v2525 = vmul.f32 %v2513, %v2524
    %v2526 = vmul.f32 %v2525, %v1391
    %v2527 = vadd.f32 %v2526, %v1398
    %s2528 = scalar_lea.vmem %s0, 1024
    %v2529 = vld [vmem:[%s2528] sm:$0xff]
    %v2530 = vld [vmem:[%s2528 + $0x8] sm:$0xff]
    %v2531 = vld [vmem:[%s2528 + $0x10] sm:$0xff]
    %v2532 = vld [vmem:[%s2528 + $0x18] sm:$0xff]
    %v2533 = vld [vmem:[%s2528 + $0x20] sm:$0xff]
    %v2534 = vld [vmem:[%s2528 + $0x28] sm:$0xff]
    %v2535 = vld [vmem:[%s2528 + $0x30] sm:$0xff]
    %v2536 = vld [vmem:[%s2528 + $0x38] sm:$0xff]
    %v2537 = vld [vmem:[%s2528 + $0x40] sm:$0xff]
    %v2538 = vld [vmem:[%s2528 + $0x48] sm:$0xff]
    %v2539 = vld [vmem:[%s2528 + $0x50] sm:$0xff]
    %v2540 = vld [vmem:[%s2528 + $0x58] sm:$0xff]
    %v2541 = vld [vmem:[%s2528 + $0x60] sm:$0xff]
    %v2542 = vld [vmem:[%s2528 + $0x68] sm:$0xff]
    %v2543 = vld [vmem:[%s2528 + $0x70] sm:$0xff]
    %v2544 = vld [vmem:[%s2528 + $0x78] sm:$0xff]
    %v2545 = vld [vmem:[%s2528 + $0x80] sm:$0xff]
    %v2546 = vld [vmem:[%s2528 + $0x88] sm:$0xff]
    %v2547 = vld [vmem:[%s2528 + $0x90] sm:$0xff]
    %v2548 = vld [vmem:[%s2528 + $0x98] sm:$0xff]
    %v2549 = vld [vmem:[%s2528 + $0xa0] sm:$0xff]
    %v2550 = vld [vmem:[%s2528 + $0xa8] sm:$0xff]
    %v2551 = vld [vmem:[%s2528 + $0xb0] sm:$0xff]
    %v2552 = vld [vmem:[%s2528 + $0xb8] sm:$0xff]
    %v2553 = vld [vmem:[%s2528 + $0xc0] sm:$0xff]
    %v2554 = vld [vmem:[%s2528 + $0xc8] sm:$0xff]
    %v2555 = vld [vmem:[%s2528 + $0xd0] sm:$0xff]
    %v2556 = vld [vmem:[%s2528 + $0xd8] sm:$0xff]
    %v2557 = vld [vmem:[%s2528 + $0xe0] sm:$0xff]
    %v2558 = vld [vmem:[%s2528 + $0xe8] sm:$0xff]
    %v2559 = vld [vmem:[%s2528 + $0xf0] sm:$0xff]
    %v2560 = vld [vmem:[%s2528 + $0xf8] sm:$0xff]
    %v2561 = vld [vmem:[%s2528 + $0x100] sm:$0xff]
    %v2562 = vld [vmem:[%s2528 + $0x108] sm:$0xff]
    %v2563 = vld [vmem:[%s2528 + $0x110] sm:$0xff]
    %v2564 = vld [vmem:[%s2528 + $0x118] sm:$0xff]
    %v2565 = vld [vmem:[%s2528 + $0x120] sm:$0xff]
    %v2566 = vld [vmem:[%s2528 + $0x128] sm:$0xff]
    %v2567 = vld [vmem:[%s2528 + $0x130] sm:$0xff]
    %v2568 = vld [vmem:[%s2528 + $0x138] sm:$0xff]
    %v2569 = vld [vmem:[%s2528 + $0x140] sm:$0xff]
    %v2570 = vld [vmem:[%s2528 + $0x148] sm:$0xff]
    %v2571 = vld [vmem:[%s2528 + $0x150] sm:$0xff]
    %v2572 = vld [vmem:[%s2528 + $0x158] sm:$0xff]
    %v2573 = vld [vmem:[%s2528 + $0x160] sm:$0xff]
    %v2574 = vld [vmem:[%s2528 + $0x168] sm:$0xff]
    %v2575 = vld [vmem:[%s2528 + $0x170] sm:$0xff]
    %v2576 = vld [vmem:[%s2528 + $0x178] sm:$0xff]
    %v2577 = vld [vmem:[%s2528 + $0x180] sm:$0xff]
    %v2578 = vld [vmem:[%s2528 + $0x188] sm:$0xff]
    %v2579 = vld [vmem:[%s2528 + $0x190] sm:$0xff]
    %v2580 = vld [vmem:[%s2528 + $0x198] sm:$0xff]
    %v2581 = vld [vmem:[%s2528 + $0x1a0] sm:$0xff]
    %v2582 = vld [vmem:[%s2528 + $0x1a8] sm:$0xff]
    %v2583 = vld [vmem:[%s2528 + $0x1b0] sm:$0xff]
    %v2584 = vld [vmem:[%s2528 + $0x1b8] sm:$0xff]
    %v2585 = vld [vmem:[%s2528 + $0x1c0] sm:$0xff]
    %v2586 = vld [vmem:[%s2528 + $0x1c8] sm:$0xff]
    %v2587 = vld [vmem:[%s2528 + $0x1d0] sm:$0xff]
    %v2588 = vld [vmem:[%s2528 + $0x1d8] sm:$0xff]
    %v2589 = vld [vmem:[%s2528 + $0x1e0] sm:$0xff]
    %v2590 = vld [vmem:[%s2528 + $0x1e8] sm:$0xff]
    %v2591 = vld [vmem:[%s2528 + $0x1f0] sm:$0xff]
    %v2592 = vld [vmem:[%s2528 + $0x1f8] sm:$0xff]
    %v2594 = vsel %vm256, %v2529, 0
    %v2597 = vsel %vm256, %v2530, 0
    %v2600 = vsel %vm256, %v2531, 0
    %v2603 = vsel %vm256, %v2532, 0
    %v2606 = vsel %vm256, %v2533, 0
    %v2609 = vsel %vm256, %v2534, 0
    %v2612 = vsel %vm256, %v2535, 0
    %v2615 = vsel %vm256, %v2536, 0
    %v2618 = vsel %vm256, %v2537, 0
    %v2621 = vsel %vm256, %v2538, 0
    %v2624 = vsel %vm256, %v2539, 0
    %v2627 = vsel %vm256, %v2540, 0
    %v2630 = vsel %vm256, %v2541, 0
    %v2633 = vsel %vm256, %v2542, 0
    %v2636 = vsel %vm256, %v2543, 0
    %v2639 = vsel %vm256, %v2544, 0
    %v2642 = vsel %vm256, %v2545, 0
    %v2645 = vsel %vm256, %v2546, 0
    %v2648 = vsel %vm256, %v2547, 0
    %v2651 = vsel %vm256, %v2548, 0
    %v2654 = vsel %vm256, %v2549, 0
    %v2657 = vsel %vm256, %v2550, 0
    %v2660 = vsel %vm256, %v2551, 0
    %v2663 = vsel %vm256, %v2552, 0
    %v2666 = vsel %vm256, %v2553, 0
    %v2669 = vsel %vm256, %v2554, 0
    %v2672 = vsel %vm256, %v2555, 0
    %v2675 = vsel %vm256, %v2556, 0
    %v2678 = vsel %vm256, %v2557, 0
    %v2681 = vsel %vm256, %v2558, 0
    %v2684 = vsel %vm256, %v2559, 0
    %v2687 = vsel %vm256, %v2560, 0
    %v2690 = vsel %vm256, %v2561, 0
    %v2693 = vsel %vm256, %v2562, 0
    %v2696 = vsel %vm256, %v2563, 0
    %v2699 = vsel %vm256, %v2564, 0
    %v2702 = vsel %vm256, %v2565, 0
    %v2705 = vsel %vm256, %v2566, 0
    %v2708 = vsel %vm256, %v2567, 0
    %v2711 = vsel %vm256, %v2568, 0
    %v2714 = vsel %vm256, %v2569, 0
    %v2717 = vsel %vm256, %v2570, 0
    %v2720 = vsel %vm256, %v2571, 0
    %v2723 = vsel %vm256, %v2572, 0
    %v2726 = vsel %vm256, %v2573, 0
    %v2729 = vsel %vm256, %v2574, 0
    %v2732 = vsel %vm256, %v2575, 0
    %v2735 = vsel %vm256, %v2576, 0
    %v2738 = vsel %vm256, %v2577, 0
    %v2741 = vsel %vm256, %v2578, 0
    %v2744 = vsel %vm256, %v2579, 0
    %v2747 = vsel %vm256, %v2580, 0
    %v2750 = vsel %vm256, %v2581, 0
    %v2753 = vsel %vm256, %v2582, 0
    %v2756 = vsel %vm256, %v2583, 0
    %v2759 = vsel %vm256, %v2584, 0
    %v2762 = vsel %vm256, %v2585, 0
    %v2765 = vsel %vm256, %v2586, 0
    %v2768 = vsel %vm256, %v2587, 0
    %v2771 = vsel %vm256, %v2588, 0
    %v2774 = vsel %vm256, %v2589, 0
    %v2777 = vsel %vm256, %v2590, 0
    %v2780 = vsel %vm256, %v2591, 0
    %v2783 = vsel %vm256, %v2592, 0
    %2785 = vmatprep.subr.mxu0 0.0
    %2786 = vmatpush1.msra.mxu0 0.0
    %2787 = vmatprep.subr.mxu0 0.0
    %2788 = vmatpush1.msra.mxu0 0.0
    %2789 = vmatprep.subr.mxu0 0.0
    %2790 = vmatpush1.msra.mxu0 0.0
    %2791 = vmatprep.subr.mxu0 0.0
    %2792 = vmatpush1.msra.mxu0 0.0
    %2793 = vmatprep.subr.mxu0 0.0
    %2794 = vmatpush1.msra.mxu0 0.0
    %2795 = vmatprep.subr.mxu0 0.0
    %2796 = vmatpush1.msra.mxu0 0.0
    %2797 = vmatprep.subr.mxu0 0.0
    %2798 = vmatpush1.msra.mxu0 0.0
    %2799 = vmatprep.subr.mxu0 0.0
    %2800 = vmatpush1.msra.mxu0 0.0
    %2801 = vmatprep.subr.mxu0 0.0
    %2802 = vmatpush1.msra.mxu0 0.0
    %2803 = vmatprep.subr.mxu0 0.0
    %2804 = vmatpush1.msra.mxu0 0.0
    %2805 = vmatprep.subr.mxu0 0.0
    %2806 = vmatpush1.msra.mxu0 0.0
    %2807 = vmatprep.subr.mxu0 0.0
    %2808 = vmatpush1.msra.mxu0 0.0
    %2809 = vmatprep.subr.mxu0 0.0
    %2810 = vmatpush1.msra.mxu0 %v451
    %2811 = vmatprep.subr.mxu0 0.0
    %2812 = vmatpush1.msra.mxu0 %v74
    %2813 = vmatprep.subr.mxu0 0.0
    %2814 = vmatpush1.msra.mxu0 %v73
    %2815 = vmatprep.subr.mxu0 0.0
    %2816 = vmatpush1.msra.mxu0 %v72
    %2817 = vmatprep.subr.mxu0 0.0
    %2818 = vmatpush2.msra.mxu0 0.0
    %2819 = vmatprep.subr.mxu0 0.0
    %2820 = vmatpush2.msra.mxu0 0.0
    %2821 = vmatprep.subr.mxu0 0.0
    %2822 = vmatpush2.msra.mxu0 0.0
    %2823 = vmatprep.subr.mxu0 0.0
    %2824 = vmatpush2.msra.mxu0 0.0
    %2825 = vmatprep.subr.mxu0 0.0
    %2826 = vmatpush2.msra.mxu0 0.0
    %2827 = vmatprep.subr.mxu0 0.0
    %2828 = vmatpush2.msra.mxu0 0.0
    %2829 = vmatprep.subr.mxu0 0.0
    %2830 = vmatpush2.msra.mxu0 0.0
    %2831 = vmatprep.subr.mxu0 0.0
    %2832 = vmatpush2.msra.mxu0 0.0
    %2833 = vmatprep.subr.mxu0 0.0
    %2834 = vmatpush2.msra.mxu0 0.0
    %2835 = vmatprep.subr.mxu0 0.0
    %2836 = vmatpush2.msra.mxu0 0.0
    %2837 = vmatprep.subr.mxu0 0.0
    %2838 = vmatpush2.msra.mxu0 0.0
    %2839 = vmatprep.subr.mxu0 0.0
    %2840 = vmatpush2.msra.mxu0 0.0
    %2841 = vmatprep.subr.mxu0 0.0
    %2842 = vmatpush2.msra.mxu0 0.0
    %2843 = vmatprep.subr.mxu0 0.0
    %2844 = vmatpush2.msra.mxu0 0.0
    %2845 = vmatprep.subr.mxu0 0.0
    %2846 = vmatpush2.msra.mxu0 0.0
    %2847 = vmatprep.subr.mxu0 0.0
    %2848 = vmatpush2.msra.mxu0 0.0
    %2849 = vmatprep.mubr.f32.mxu0 0.0
    %2850 = vmatmul.mubr.f32.gmra.mxu0 %v2594
    %v2851 = vpop.f32.mrf.mxu0
    %v2852 = vadd.f32 %v254, %v2851
    %v2853 = vpop.f32.mrf.mxu0
    %2854 = vmatprep.mubr.f32.mxu0 0.0
    %2855 = vmatmul.mubr.f32.gmra.mxu0 %v2597
    %v2856 = vpop.f32.mrf.mxu0
    %v2857 = vadd.f32 %v254, %v2856
    %v2858 = vpop.f32.mrf.mxu0
    %2859 = vmatprep.mubr.f32.mxu0 0.0
    %2860 = vmatmul.mubr.f32.gmra.mxu0 %v2600
    %v2861 = vpop.f32.mrf.mxu0
    %v2862 = vadd.f32 %v254, %v2861
    %v2863 = vpop.f32.mrf.mxu0
    %2864 = vmatprep.mubr.f32.mxu0 0.0
    %2865 = vmatmul.mubr.f32.gmra.mxu0 %v2603
    %v2866 = vpop.f32.mrf.mxu0
    %v2867 = vadd.f32 %v254, %v2866
    %v2868 = vpop.f32.mrf.mxu0
    %2869 = vmatprep.mubr.f32.mxu0 0.0
    %2870 = vmatmul.mubr.f32.gmra.mxu0 %v2606
    %v2871 = vpop.f32.mrf.mxu0
    %v2872 = vadd.f32 %v254, %v2871
    %v2873 = vpop.f32.mrf.mxu0
    %2874 = vmatprep.mubr.f32.mxu0 0.0
    %2875 = vmatmul.mubr.f32.gmra.mxu0 %v2609
    %v2876 = vpop.f32.mrf.mxu0
    %v2877 = vadd.f32 %v254, %v2876
    %v2878 = vpop.f32.mrf.mxu0
    %2879 = vmatprep.mubr.f32.mxu0 0.0
    %2880 = vmatmul.mubr.f32.gmra.mxu0 %v2612
    %v2881 = vpop.f32.mrf.mxu0
    %v2882 = vadd.f32 %v254, %v2881
    %v2883 = vpop.f32.mrf.mxu0
    %2884 = vmatprep.mubr.f32.mxu0 0.0
    %2885 = vmatmul.mubr.f32.gmra.mxu0 %v2615
    %v2886 = vpop.f32.mrf.mxu0
    %v2887 = vadd.f32 %v254, %v2886
    %v2888 = vpop.f32.mrf.mxu0
    %2889 = vmatprep.mubr.f32.mxu0 0.0
    %2890 = vmatmul.mubr.f32.gmra.mxu0 %v2618
    %v2891 = vpop.f32.mrf.mxu0
    %v2892 = vadd.f32 %v254, %v2891
    %v2893 = vpop.f32.mrf.mxu0
    %2894 = vmatprep.mubr.f32.mxu0 0.0
    %2895 = vmatmul.mubr.f32.gmra.mxu0 %v2621
    %v2896 = vpop.f32.mrf.mxu0
    %v2897 = vadd.f32 %v254, %v2896
    %v2898 = vpop.f32.mrf.mxu0
    %2899 = vmatprep.mubr.f32.mxu0 0.0
    %2900 = vmatmul.mubr.f32.gmra.mxu0 %v2624
    %v2901 = vpop.f32.mrf.mxu0
    %v2902 = vadd.f32 %v254, %v2901
    %v2903 = vpop.f32.mrf.mxu0
    %2904 = vmatprep.mubr.f32.mxu0 0.0
    %2905 = vmatmul.mubr.f32.gmra.mxu0 %v2627
    %v2906 = vpop.f32.mrf.mxu0
    %v2907 = vadd.f32 %v254, %v2906
    %v2908 = vpop.f32.mrf.mxu0
    %2909 = vmatprep.mubr.f32.mxu0 0.0
    %2910 = vmatmul.mubr.f32.gmra.mxu0 %v2630
    %v2911 = vpop.f32.mrf.mxu0
    %v2912 = vadd.f32 %v254, %v2911
    %v2913 = vpop.f32.mrf.mxu0
    %2914 = vmatprep.mubr.f32.mxu0 0.0
    %2915 = vmatmul.mubr.f32.gmra.mxu0 %v2633
    %v2916 = vpop.f32.mrf.mxu0
    %v2917 = vadd.f32 %v254, %v2916
    %v2918 = vpop.f32.mrf.mxu0
    %2919 = vmatprep.mubr.f32.mxu0 0.0
    %2920 = vmatmul.mubr.f32.gmra.mxu0 %v2636
    %v2921 = vpop.f32.mrf.mxu0
    %v2922 = vadd.f32 %v254, %v2921
    %v2923 = vpop.f32.mrf.mxu0
    %2924 = vmatprep.mubr.f32.mxu0 0.0
    %2925 = vmatmul.mubr.f32.gmra.mxu0 %v2639
    %v2926 = vpop.f32.mrf.mxu0
    %v2927 = vadd.f32 %v254, %v2926
    %v2928 = vpop.f32.mrf.mxu0
    %2929 = vmatprep.mubr.f32.mxu0 0.0
    %2930 = vmatmul.mubr.f32.gmra.mxu0 %v2642
    %v2931 = vpop.f32.mrf.mxu0
    %v2932 = vadd.f32 %v254, %v2931
    %v2933 = vpop.f32.mrf.mxu0
    %2934 = vmatprep.mubr.f32.mxu0 0.0
    %2935 = vmatmul.mubr.f32.gmra.mxu0 %v2645
    %v2936 = vpop.f32.mrf.mxu0
    %v2937 = vadd.f32 %v254, %v2936
    %v2938 = vpop.f32.mrf.mxu0
    %2939 = vmatprep.mubr.f32.mxu0 0.0
    %2940 = vmatmul.mubr.f32.gmra.mxu0 %v2648
    %v2941 = vpop.f32.mrf.mxu0
    %v2942 = vadd.f32 %v254, %v2941
    %v2943 = vpop.f32.mrf.mxu0
    %2944 = vmatprep.mubr.f32.mxu0 0.0
    %2945 = vmatmul.mubr.f32.gmra.mxu0 %v2651
    %v2946 = vpop.f32.mrf.mxu0
    %v2947 = vadd.f32 %v254, %v2946
    %v2948 = vpop.f32.mrf.mxu0
    %2949 = vmatprep.mubr.f32.mxu0 0.0
    %2950 = vmatmul.mubr.f32.gmra.mxu0 %v2654
    %v2951 = vpop.f32.mrf.mxu0
    %v2952 = vadd.f32 %v254, %v2951
    %v2953 = vpop.f32.mrf.mxu0
    %2954 = vmatprep.mubr.f32.mxu0 0.0
    %2955 = vmatmul.mubr.f32.gmra.mxu0 %v2657
    %v2956 = vpop.f32.mrf.mxu0
    %v2957 = vadd.f32 %v254, %v2956
    %v2958 = vpop.f32.mrf.mxu0
    %2959 = vmatprep.mubr.f32.mxu0 0.0
    %2960 = vmatmul.mubr.f32.gmra.mxu0 %v2660
    %v2961 = vpop.f32.mrf.mxu0
    %v2962 = vadd.f32 %v254, %v2961
    %v2963 = vpop.f32.mrf.mxu0
    %2964 = vmatprep.mubr.f32.mxu0 0.0
    %2965 = vmatmul.mubr.f32.gmra.mxu0 %v2663
    %v2966 = vpop.f32.mrf.mxu0
    %v2967 = vadd.f32 %v254, %v2966
    %v2968 = vpop.f32.mrf.mxu0
    %2969 = vmatprep.mubr.f32.mxu0 0.0
    %2970 = vmatmul.mubr.f32.gmra.mxu0 %v2666
    %v2971 = vpop.f32.mrf.mxu0
    %v2972 = vadd.f32 %v254, %v2971
    %v2973 = vpop.f32.mrf.mxu0
    %2974 = vmatprep.mubr.f32.mxu0 0.0
    %2975 = vmatmul.mubr.f32.gmra.mxu0 %v2669
    %v2976 = vpop.f32.mrf.mxu0
    %v2977 = vadd.f32 %v254, %v2976
    %v2978 = vpop.f32.mrf.mxu0
    %2979 = vmatprep.mubr.f32.mxu0 0.0
    %2980 = vmatmul.mubr.f32.gmra.mxu0 %v2672
    %v2981 = vpop.f32.mrf.mxu0
    %v2982 = vadd.f32 %v254, %v2981
    %v2983 = vpop.f32.mrf.mxu0
    %2984 = vmatprep.mubr.f32.mxu0 0.0
    %2985 = vmatmul.mubr.f32.gmra.mxu0 %v2675
    %v2986 = vpop.f32.mrf.mxu0
    %v2987 = vadd.f32 %v254, %v2986
    %v2988 = vpop.f32.mrf.mxu0
    %2989 = vmatprep.mubr.f32.mxu0 0.0
    %2990 = vmatmul.mubr.f32.gmra.mxu0 %v2678
    %v2991 = vpop.f32.mrf.mxu0
    %v2992 = vadd.f32 %v254, %v2991
    %v2993 = vpop.f32.mrf.mxu0
    %2994 = vmatprep.mubr.f32.mxu0 0.0
    %2995 = vmatmul.mubr.f32.gmra.mxu0 %v2681
    %v2996 = vpop.f32.mrf.mxu0
    %v2997 = vadd.f32 %v254, %v2996
    %v2998 = vpop.f32.mrf.mxu0
    %2999 = vmatprep.mubr.f32.mxu0 0.0
    %3000 = vmatmul.mubr.f32.gmra.mxu0 %v2684
    %v3001 = vpop.f32.mrf.mxu0
    %v3002 = vadd.f32 %v254, %v3001
    %v3003 = vpop.f32.mrf.mxu0
    %3004 = vmatprep.mubr.f32.mxu0 0.0
    %3005 = vmatmul.mubr.f32.gmra.mxu0 %v2687
    %v3006 = vpop.f32.mrf.mxu0
    %v3007 = vadd.f32 %v254, %v3006
    %v3008 = vpop.f32.mrf.mxu0
    %3009 = vmatprep.mubr.f32.mxu0 0.0
    %3010 = vmatmul.mubr.f32.gmra.mxu0 %v2690
    %v3011 = vpop.f32.mrf.mxu0
    %v3012 = vadd.f32 %v254, %v3011
    %v3013 = vpop.f32.mrf.mxu0
    %3014 = vmatprep.mubr.f32.mxu0 0.0
    %3015 = vmatmul.mubr.f32.gmra.mxu0 %v2693
    %v3016 = vpop.f32.mrf.mxu0
    %v3017 = vadd.f32 %v254, %v3016
    %v3018 = vpop.f32.mrf.mxu0
    %3019 = vmatprep.mubr.f32.mxu0 0.0
    %3020 = vmatmul.mubr.f32.gmra.mxu0 %v2696
    %v3021 = vpop.f32.mrf.mxu0
    %v3022 = vadd.f32 %v254, %v3021
    %v3023 = vpop.f32.mrf.mxu0
    %3024 = vmatprep.mubr.f32.mxu0 0.0
    %3025 = vmatmul.mubr.f32.gmra.mxu0 %v2699
    %v3026 = vpop.f32.mrf.mxu0
    %v3027 = vadd.f32 %v254, %v3026
    %v3028 = vpop.f32.mrf.mxu0
    %3029 = vmatprep.mubr.f32.mxu0 0.0
    %3030 = vmatmul.mubr.f32.gmra.mxu0 %v2702
    %v3031 = vpop.f32.mrf.mxu0
    %v3032 = vadd.f32 %v254, %v3031
    %v3033 = vpop.f32.mrf.mxu0
    %3034 = vmatprep.mubr.f32.mxu0 0.0
    %3035 = vmatmul.mubr.f32.gmra.mxu0 %v2705
    %v3036 = vpop.f32.mrf.mxu0
    %v3037 = vadd.f32 %v254, %v3036
    %v3038 = vpop.f32.mrf.mxu0
    %3039 = vmatprep.mubr.f32.mxu0 0.0
    %3040 = vmatmul.mubr.f32.gmra.mxu0 %v2708
    %v3041 = vpop.f32.mrf.mxu0
    %v3042 = vadd.f32 %v254, %v3041
    %v3043 = vpop.f32.mrf.mxu0
    %3044 = vmatprep.mubr.f32.mxu0 0.0
    %3045 = vmatmul.mubr.f32.gmra.mxu0 %v2711
    %v3046 = vpop.f32.mrf.mxu0
    %v3047 = vadd.f32 %v254, %v3046
    %v3048 = vpop.f32.mrf.mxu0
    %3049 = vmatprep.mubr.f32.mxu0 0.0
    %3050 = vmatmul.mubr.f32.gmra.mxu0 %v2714
    %v3051 = vpop.f32.mrf.mxu0
    %v3052 = vadd.f32 %v254, %v3051
    %v3053 = vpop.f32.mrf.mxu0
    %3054 = vmatprep.mubr.f32.mxu0 0.0
    %3055 = vmatmul.mubr.f32.gmra.mxu0 %v2717
    %v3056 = vpop.f32.mrf.mxu0
    %v3057 = vadd.f32 %v254, %v3056
    %v3058 = vpop.f32.mrf.mxu0
    %3059 = vmatprep.mubr.f32.mxu0 0.0
    %3060 = vmatmul.mubr.f32.gmra.mxu0 %v2720
    %v3061 = vpop.f32.mrf.mxu0
    %v3062 = vadd.f32 %v254, %v3061
    %v3063 = vpop.f32.mrf.mxu0
    %3064 = vmatprep.mubr.f32.mxu0 0.0
    %3065 = vmatmul.mubr.f32.gmra.mxu0 %v2723
    %v3066 = vpop.f32.mrf.mxu0
    %v3067 = vadd.f32 %v254, %v3066
    %v3068 = vpop.f32.mrf.mxu0
    %3069 = vmatprep.mubr.f32.mxu0 0.0
    %3070 = vmatmul.mubr.f32.gmra.mxu0 %v2726
    %v3071 = vpop.f32.mrf.mxu0
    %v3072 = vadd.f32 %v254, %v3071
    %v3073 = vpop.f32.mrf.mxu0
    %3074 = vmatprep.mubr.f32.mxu0 0.0
    %3075 = vmatmul.mubr.f32.gmra.mxu0 %v2729
    %v3076 = vpop.f32.mrf.mxu0
    %v3077 = vadd.f32 %v254, %v3076
    %v3078 = vpop.f32.mrf.mxu0
    %3079 = vmatprep.mubr.f32.mxu0 0.0
    %3080 = vmatmul.mubr.f32.gmra.mxu0 %v2732
    %v3081 = vpop.f32.mrf.mxu0
    %v3082 = vadd.f32 %v254, %v3081
    %v3083 = vpop.f32.mrf.mxu0
    %3084 = vmatprep.mubr.f32.mxu0 0.0
    %3085 = vmatmul.mubr.f32.gmra.mxu0 %v2735
    %v3086 = vpop.f32.mrf.mxu0
    %v3087 = vadd.f32 %v254, %v3086
    %v3088 = vpop.f32.mrf.mxu0
    %3089 = vmatprep.mubr.f32.mxu0 0.0
    %3090 = vmatmul.mubr.f32.gmra.mxu0 %v2738
    %v3091 = vpop.f32.mrf.mxu0
    %v3092 = vadd.f32 %v254, %v3091
    %v3093 = vpop.f32.mrf.mxu0
    %3094 = vmatprep.mubr.f32.mxu0 0.0
    %3095 = vmatmul.mubr.f32.gmra.mxu0 %v2741
    %v3096 = vpop.f32.mrf.mxu0
    %v3097 = vadd.f32 %v254, %v3096
    %v3098 = vpop.f32.mrf.mxu0
    %3099 = vmatprep.mubr.f32.mxu0 0.0
    %3100 = vmatmul.mubr.f32.gmra.mxu0 %v2744
    %v3101 = vpop.f32.mrf.mxu0
    %v3102 = vadd.f32 %v254, %v3101
    %v3103 = vpop.f32.mrf.mxu0
    %3104 = vmatprep.mubr.f32.mxu0 0.0
    %3105 = vmatmul.mubr.f32.gmra.mxu0 %v2747
    %v3106 = vpop.f32.mrf.mxu0
    %v3107 = vadd.f32 %v254, %v3106
    %v3108 = vpop.f32.mrf.mxu0
    %3109 = vmatprep.mubr.f32.mxu0 0.0
    %3110 = vmatmul.mubr.f32.gmra.mxu0 %v2750
    %v3111 = vpop.f32.mrf.mxu0
    %v3112 = vadd.f32 %v254, %v3111
    %v3113 = vpop.f32.mrf.mxu0
    %3114 = vmatprep.mubr.f32.mxu0 0.0
    %3115 = vmatmul.mubr.f32.gmra.mxu0 %v2753
    %v3116 = vpop.f32.mrf.mxu0
    %v3117 = vadd.f32 %v254, %v3116
    %v3118 = vpop.f32.mrf.mxu0
    %3119 = vmatprep.mubr.f32.mxu0 0.0
    %3120 = vmatmul.mubr.f32.gmra.mxu0 %v2756
    %v3121 = vpop.f32.mrf.mxu0
    %v3122 = vadd.f32 %v254, %v3121
    %v3123 = vpop.f32.mrf.mxu0
    %3124 = vmatprep.mubr.f32.mxu0 0.0
    %3125 = vmatmul.mubr.f32.gmra.mxu0 %v2759
    %v3126 = vpop.f32.mrf.mxu0
    %v3127 = vadd.f32 %v254, %v3126
    %v3128 = vpop.f32.mrf.mxu0
    %3129 = vmatprep.mubr.f32.mxu0 0.0
    %3130 = vmatmul.mubr.f32.gmra.mxu0 %v2762
    %v3131 = vpop.f32.mrf.mxu0
    %v3132 = vadd.f32 %v254, %v3131
    %v3133 = vpop.f32.mrf.mxu0
    %3134 = vmatprep.mubr.f32.mxu0 0.0
    %3135 = vmatmul.mubr.f32.gmra.mxu0 %v2765
    %v3136 = vpop.f32.mrf.mxu0
    %v3137 = vadd.f32 %v254, %v3136
    %v3138 = vpop.f32.mrf.mxu0
    %3139 = vmatprep.mubr.f32.mxu0 0.0
    %3140 = vmatmul.mubr.f32.gmra.mxu0 %v2768
    %v3141 = vpop.f32.mrf.mxu0
    %v3142 = vadd.f32 %v254, %v3141
    %v3143 = vpop.f32.mrf.mxu0
    %3144 = vmatprep.mubr.f32.mxu0 0.0
    %3145 = vmatmul.mubr.f32.gmra.mxu0 %v2771
    %v3146 = vpop.f32.mrf.mxu0
    %v3147 = vadd.f32 %v254, %v3146
    %v3148 = vpop.f32.mrf.mxu0
    %3149 = vmatprep.mubr.f32.mxu0 0.0
    %3150 = vmatmul.mubr.f32.gmra.mxu0 %v2774
    %v3151 = vpop.f32.mrf.mxu0
    %v3152 = vadd.f32 %v254, %v3151
    %v3153 = vpop.f32.mrf.mxu0
    %3154 = vmatprep.mubr.f32.mxu0 0.0
    %3155 = vmatmul.mubr.f32.gmra.mxu0 %v2777
    %v3156 = vpop.f32.mrf.mxu0
    %v3157 = vadd.f32 %v254, %v3156
    %v3158 = vpop.f32.mrf.mxu0
    %3159 = vmatprep.mubr.f32.mxu0 0.0
    %3160 = vmatmul.mubr.f32.gmra.mxu0 %v2780
    %v3161 = vpop.f32.mrf.mxu0
    %v3162 = vadd.f32 %v254, %v3161
    %v3163 = vpop.f32.mrf.mxu0
    %3164 = vmatprep.mubr.f32.mxu0 0.0
    %3165 = vmatmul.mubr.f32.gmra.mxu0 %v2783
    %v3166 = vpop.f32.mrf.mxu0
    %v3167 = vadd.f32 %v254, %v3166
    %v3168 = vpop.f32.mrf.mxu0
    %3169 = vdwg.mxu0
    %v3170 = vmax.f32 %v2852, 0.0
    %v3171 = vmax.f32 %v2857, 0.0
    %v3172 = vmax.f32 %v2862, 0.0
    %v3173 = vmax.f32 %v2867, 0.0
    %v3174 = vmax.f32 %v2872, 0.0
    %v3175 = vmax.f32 %v2877, 0.0
    %v3176 = vmax.f32 %v2882, 0.0
    %v3177 = vmax.f32 %v2887, 0.0
    %v3178 = vmax.f32 %v2892, 0.0
    %v3179 = vmax.f32 %v2897, 0.0
    %v3180 = vmax.f32 %v2902, 0.0
    %v3181 = vmax.f32 %v2907, 0.0
    %v3182 = vmax.f32 %v2912, 0.0
    %v3183 = vmax.f32 %v2917, 0.0
    %v3184 = vmax.f32 %v2922, 0.0
    %v3185 = vmax.f32 %v2927, 0.0
    %v3186 = vmax.f32 %v2932, 0.0
    %v3187 = vmax.f32 %v2937, 0.0
    %v3188 = vmax.f32 %v2942, 0.0
    %v3189 = vmax.f32 %v2947, 0.0
    %v3190 = vmax.f32 %v2952, 0.0
    %v3191 = vmax.f32 %v2957, 0.0
    %v3192 = vmax.f32 %v2962, 0.0
    %v3193 = vmax.f32 %v2967, 0.0
    %v3194 = vmax.f32 %v2972, 0.0
    %v3195 = vmax.f32 %v2977, 0.0
    %v3196 = vmax.f32 %v2982, 0.0
    %v3197 = vmax.f32 %v2987, 0.0
    %v3198 = vmax.f32 %v2992, 0.0
    %v3199 = vmax.f32 %v2997, 0.0
    %v3200 = vmax.f32 %v3002, 0.0
    %v3201 = vmax.f32 %v3007, 0.0
    %v3202 = vmax.f32 %v3012, 0.0
    %v3203 = vmax.f32 %v3017, 0.0
    %v3204 = vmax.f32 %v3022, 0.0
    %v3205 = vmax.f32 %v3027, 0.0
    %v3206 = vmax.f32 %v3032, 0.0
    %v3207 = vmax.f32 %v3037, 0.0
    %v3208 = vmax.f32 %v3042, 0.0
    %v3209 = vmax.f32 %v3047, 0.0
    %v3210 = vmax.f32 %v3052, 0.0
    %v3211 = vmax.f32 %v3057, 0.0
    %v3212 = vmax.f32 %v3062, 0.0
    %v3213 = vmax.f32 %v3067, 0.0
    %v3214 = vmax.f32 %v3072, 0.0
    %v3215 = vmax.f32 %v3077, 0.0
    %v3216 = vmax.f32 %v3082, 0.0
    %v3217 = vmax.f32 %v3087, 0.0
    %v3218 = vmax.f32 %v3092, 0.0
    %v3219 = vmax.f32 %v3097, 0.0
    %v3220 = vmax.f32 %v3102, 0.0
    %v3221 = vmax.f32 %v3107, 0.0
    %v3222 = vmax.f32 %v3112, 0.0
    %v3223 = vmax.f32 %v3117, 0.0
    %v3224 = vmax.f32 %v3122, 0.0
    %v3225 = vmax.f32 %v3127, 0.0
    %v3226 = vmax.f32 %v3132, 0.0
    %v3227 = vmax.f32 %v3137, 0.0
    %v3228 = vmax.f32 %v3142, 0.0
    %v3229 = vmax.f32 %v3147, 0.0
    %v3230 = vmax.f32 %v3152, 0.0
    %v3231 = vmax.f32 %v3157, 0.0
    %v3232 = vmax.f32 %v3162, 0.0
    %v3233 = vmax.f32 %v3167, 0.0
    %3234 = vmatprep.subr.mxu0 0.0
    %3235 = vmatpush1.msra.mxu0 %v3185
    %3236 = vmatprep.subr.mxu0 0.0
    %3237 = vmatpush1.msra.mxu0 %v3184
    %3238 = vmatprep.subr.mxu0 0.0
    %3239 = vmatpush1.msra.mxu0 %v3183
    %3240 = vmatprep.subr.mxu0 0.0
    %3241 = vmatpush1.msra.mxu0 %v3182
    %3242 = vmatprep.subr.mxu0 0.0
    %3243 = vmatpush1.msra.mxu0 %v3181
    %3244 = vmatprep.subr.mxu0 0.0
    %3245 = vmatpush1.msra.mxu0 %v3180
    %3246 = vmatprep.subr.mxu0 0.0
    %3247 = vmatpush1.msra.mxu0 %v3179
    %3248 = vmatprep.subr.mxu0 0.0
    %3249 = vmatpush1.msra.mxu0 %v3178
    %3250 = vmatprep.subr.mxu0 0.0
    %3251 = vmatpush1.msra.mxu0 %v3177
    %3252 = vmatprep.subr.mxu0 0.0
    %3253 = vmatpush1.msra.mxu0 %v3176
    %3254 = vmatprep.subr.mxu0 0.0
    %3255 = vmatpush1.msra.mxu0 %v3175
    %3256 = vmatprep.subr.mxu0 0.0
    %3257 = vmatpush1.msra.mxu0 %v3174
    %3258 = vmatprep.subr.mxu0 0.0
    %3259 = vmatpush1.msra.mxu0 %v3173
    %3260 = vmatprep.subr.mxu0 0.0
    %3261 = vmatpush1.msra.mxu0 %v3172
    %3262 = vmatprep.subr.mxu0 0.0
    %3263 = vmatpush1.msra.mxu0 %v3171
    %3264 = vmatprep.subr.mxu0 0.0
    %3265 = vmatpush1.msra.mxu0 %v3170
    %3266 = vmatprep.subr.mxu0 0.0
    %3267 = vmatpush2.msra.mxu0 %v3201
    %3268 = vmatprep.subr.mxu0 0.0
    %3269 = vmatpush2.msra.mxu0 %v3200
    %3270 = vmatprep.subr.mxu0 0.0
    %3271 = vmatpush2.msra.mxu0 %v3199
    %3272 = vmatprep.subr.mxu0 0.0
    %3273 = vmatpush2.msra.mxu0 %v3198
    %3274 = vmatprep.subr.mxu0 0.0
    %3275 = vmatpush2.msra.mxu0 %v3197
    %3276 = vmatprep.subr.mxu0 0.0
    %3277 = vmatpush2.msra.mxu0 %v3196
    %3278 = vmatprep.subr.mxu0 0.0
    %3279 = vmatpush2.msra.mxu0 %v3195
    %3280 = vmatprep.subr.mxu0 0.0
    %3281 = vmatpush2.msra.mxu0 %v3194
    %3282 = vmatprep.subr.mxu0 0.0
    %3283 = vmatpush2.msra.mxu0 %v3193
    %3284 = vmatprep.subr.mxu0 0.0
    %3285 = vmatpush2.msra.mxu0 %v3192
    %3286 = vmatprep.subr.mxu0 0.0
    %3287 = vmatpush2.msra.mxu0 %v3191
    %3288 = vmatprep.subr.mxu0 0.0
    %3289 = vmatpush2.msra.mxu0 %v3190
    %3290 = vmatprep.subr.mxu0 0.0
    %3291 = vmatpush2.msra.mxu0 %v3189
    %3292 = vmatprep.subr.mxu0 0.0
    %3293 = vmatpush2.msra.mxu0 %v3188
    %3294 = vmatprep.subr.mxu0 0.0
    %3295 = vmatpush2.msra.mxu0 %v3187
    %3296 = vmatprep.subr.mxu0 0.0
    %3297 = vmatpush2.msra.mxu0 %v3186
    %3298 = vmatprep.mubr.f32.mxu0 %v918
    %3299 = vmatmul.mubr.f32.gmra.mxu0 %v910
    %v3300 = vpop.f32.mrf.mxu0
    %v3301 = vadd.f32 0.0, %v3300
    %v3302 = vpop.f32.mrf.mxu0
    %3303 = vdwg.mxu0
    %3304 = vmatprep.subr.mxu0 0.0
    %3305 = vmatpush1.msra.mxu0 %v3217
    %3306 = vmatprep.subr.mxu0 0.0
    %3307 = vmatpush1.msra.mxu0 %v3216
    %3308 = vmatprep.subr.mxu0 0.0
    %3309 = vmatpush1.msra.mxu0 %v3215
    %3310 = vmatprep.subr.mxu0 0.0
    %3311 = vmatpush1.msra.mxu0 %v3214
    %3312 = vmatprep.subr.mxu0 0.0
    %3313 = vmatpush1.msra.mxu0 %v3213
    %3314 = vmatprep.subr.mxu0 0.0
    %3315 = vmatpush1.msra.mxu0 %v3212
    %3316 = vmatprep.subr.mxu0 0.0
    %3317 = vmatpush1.msra.mxu0 %v3211
    %3318 = vmatprep.subr.mxu0 0.0
    %3319 = vmatpush1.msra.mxu0 %v3210
    %3320 = vmatprep.subr.mxu0 0.0
    %3321 = vmatpush1.msra.mxu0 %v3209
    %3322 = vmatprep.subr.mxu0 0.0
    %3323 = vmatpush1.msra.mxu0 %v3208
    %3324 = vmatprep.subr.mxu0 0.0
    %3325 = vmatpush1.msra.mxu0 %v3207
    %3326 = vmatprep.subr.mxu0 0.0
    %3327 = vmatpush1.msra.mxu0 %v3206
    %3328 = vmatprep.subr.mxu0 0.0
    %3329 = vmatpush1.msra.mxu0 %v3205
    %3330 = vmatprep.subr.mxu0 0.0
    %3331 = vmatpush1.msra.mxu0 %v3204
    %3332 = vmatprep.subr.mxu0 0.0
    %3333 = vmatpush1.msra.mxu0 %v3203
    %3334 = vmatprep.subr.mxu0 0.0
    %3335 = vmatpush1.msra.mxu0 %v3202
    %3336 = vmatprep.subr.mxu0 0.0
    %3337 = vmatpush2.msra.mxu0 %v3233
    %3338 = vmatprep.subr.mxu0 0.0
    %3339 = vmatpush2.msra.mxu0 %v3232
    %3340 = vmatprep.subr.mxu0 0.0
    %3341 = vmatpush2.msra.mxu0 %v3231
    %3342 = vmatprep.subr.mxu0 0.0
    %3343 = vmatpush2.msra.mxu0 %v3230
    %3344 = vmatprep.subr.mxu0 0.0
    %3345 = vmatpush2.msra.mxu0 %v3229
    %3346 = vmatprep.subr.mxu0 0.0
    %3347 = vmatpush2.msra.mxu0 %v3228
    %3348 = vmatprep.subr.mxu0 0.0
    %3349 = vmatpush2.msra.mxu0 %v3227
    %3350 = vmatprep.subr.mxu0 0.0
    %3351 = vmatpush2.msra.mxu0 %v3226
    %3352 = vmatprep.subr.mxu0 0.0
    %3353 = vmatpush2.msra.mxu0 %v3225
    %3354 = vmatprep.subr.mxu0 0.0
    %3355 = vmatpush2.msra.mxu0 %v3224
    %3356 = vmatprep.subr.mxu0 0.0
    %3357 = vmatpush2.msra.mxu0 %v3223
    %3358 = vmatprep.subr.mxu0 0.0
    %3359 = vmatpush2.msra.mxu0 %v3222
    %3360 = vmatprep.subr.mxu0 0.0
    %3361 = vmatpush2.msra.mxu0 %v3221
    %3362 = vmatprep.subr.mxu0 0.0
    %3363 = vmatpush2.msra.mxu0 %v3220
    %3364 = vmatprep.subr.mxu0 0.0
    %3365 = vmatpush2.msra.mxu0 %v3219
    %3366 = vmatprep.subr.mxu0 0.0
    %3367 = vmatpush2.msra.mxu0 %v3218
    %3368 = vmatprep.mubr.f32.mxu0 %v919
    %3369 = vmatmul.mubr.f32.gmra.mxu0 %v917
    %v3370 = vpop.f32.mrf.mxu0
    %v3371 = vadd.f32 %v3301, %v3370
    %v3372 = vpop.f32.mrf.mxu0
    %3373 = vdwg.mxu0
    %3374 = vmatprep.subr.mxu0 0.0
    %3375 = vmatpush1.msra.mxu0 %v93
    %3376 = vmatprep.subr.mxu0 0.0
    %3377 = vmatpush1.msra.mxu0 %v92
    %3378 = vmatprep.subr.mxu0 0.0
    %3379 = vmatpush1.msra.mxu0 %v91
    %3380 = vmatprep.subr.mxu0 0.0
    %3381 = vmatpush1.msra.mxu0 %v90
    %3382 = vmatprep.subr.mxu0 0.0
    %3383 = vmatpush1.msra.mxu0 %v89
    %3384 = vmatprep.subr.mxu0 0.0
    %3385 = vmatpush1.msra.mxu0 %v88
    %3386 = vmatprep.subr.mxu0 0.0
    %3387 = vmatpush1.msra.mxu0 %v87
    %3388 = vmatprep.subr.mxu0 0.0
    %3389 = vmatpush1.msra.mxu0 %v86
    %3390 = vmatprep.subr.mxu0 0.0
    %3391 = vmatpush1.msra.mxu0 %v85
    %3392 = vmatprep.subr.mxu0 0.0
    %3393 = vmatpush1.msra.mxu0 %v84
    %3394 = vmatprep.subr.mxu0 0.0
    %3395 = vmatpush1.msra.mxu0 %v83
    %3396 = vmatprep.subr.mxu0 0.0
    %3397 = vmatpush1.msra.mxu0 %v82
    %3398 = vmatprep.subr.mxu0 0.0
    %3399 = vmatpush1.msra.mxu0 %v81
    %3400 = vmatprep.subr.mxu0 0.0
    %3401 = vmatpush1.msra.mxu0 %v80
    %3402 = vmatprep.subr.mxu0 0.0
    %3403 = vmatpush1.msra.mxu0 %v79
    %3404 = vmatprep.subr.mxu0 0.0
    %3405 = vmatpush1.msra.mxu0 %v78
    %3406 = vmatprep.subr.mxu0 0.0
    %3407 = vmatpush2.msra.mxu0 0.0
    %3408 = vmatprep.subr.mxu0 0.0
    %3409 = vmatpush2.msra.mxu0 0.0
    %3410 = vmatprep.subr.mxu0 0.0
    %3411 = vmatpush2.msra.mxu0 0.0
    %3412 = vmatprep.subr.mxu0 0.0
    %3413 = vmatpush2.msra.mxu0 0.0
    %3414 = vmatprep.subr.mxu0 0.0
    %3415 = vmatpush2.msra.mxu0 0.0
    %3416 = vmatprep.subr.mxu0 0.0
    %3417 = vmatpush2.msra.mxu0 0.0
    %3418 = vmatprep.subr.mxu0 0.0
    %3419 = vmatpush2.msra.mxu0 0.0
    %3420 = vmatprep.subr.mxu0 0.0
    %3421 = vmatpush2.msra.mxu0 0.0
    %3422 = vmatprep.subr.mxu0 0.0
    %3423 = vmatpush2.msra.mxu0 0.0
    %3424 = vmatprep.subr.mxu0 0.0
    %3425 = vmatpush2.msra.mxu0 0.0
    %3426 = vmatprep.subr.mxu0 0.0
    %3427 = vmatpush2.msra.mxu0 0.0
    %3428 = vmatprep.subr.mxu0 0.0
    %3429 = vmatpush2.msra.mxu0 0.0
    %3430 = vmatprep.subr.mxu0 0.0
    %3431 = vmatpush2.msra.mxu0 0.0
    %3432 = vmatprep.subr.mxu0 0.0
    %3433 = vmatpush2.msra.mxu0 0.0
    %3434 = vmatprep.subr.mxu0 0.0
    %3435 = vmatpush2.msra.mxu0 0.0
    %3436 = vmatprep.subr.mxu0 0.0
    %3437 = vmatpush2.msra.mxu0 0.0
    %3438 = vmatprep.mubr.f32.mxu0 0.0
    %3439 = vmatmul.mubr.f32.gmra.mxu0 %v3371
    %v3440 = vpop.f32.mrf.mxu0
    %v3441 = vadd.f32 %v1068, %v3440
    %v3442 = vpop.f32.mrf.mxu0
    %3443 = vdwg.mxu0
    %v3444 = vsel %vm1140, %v3441, 0.0
    %v3445 = vrot.slane %v3444, 4
    %v3446 = vadd.f32 %v3444, %v3445
    %v3447 = vrot.slane %v3446, 2
    %v3448 = vadd.f32 %v3446, %v3447
    %v3449 = vrot.slane %v3448, 1
    %v3450 = vadd.f32 %v3448, %v3449
    %v3451 = vmul.f32 %v3450, %v1148
    %v3452 = vsub.f32 %v3441, %v3451
    %v3453 = vmul.f32 %v3452, %v3452
    %v3454 = vsel %vm1140, %v3453, 0.0
    %v3455 = vrot.slane %v3454, 4
    %v3456 = vadd.f32 %v3454, %v3455
    %v3457 = vrot.slane %v3456, 2
    %v3458 = vadd.f32 %v3456, %v3457
    %v3459 = vrot.slane %v3458, 1
    %v3460 = vadd.f32 %v3458, %v3459
    %v3461 = vmul.f32 %v3460, %v1148
    %v3462 = vadd.f32 %v3461, 1e-05
    %v3463 = vrsqrt.pop %v3462
    %v3464 = vmul.f32 %v3452, %v3463
    %v3465 = vmul.f32 %v3464, %v1167
    %v3466 = vadd.f32 %v3465, %v1174
    %v3467 = vmax.f32 %v3466, 0.0
    %3468 = vmatprep.subr.mxu0 0.0
    %3469 = vmatpush1.msra.mxu0 %v112
    %3470 = vmatprep.subr.mxu0 0.0
    %3471 = vmatpush1.msra.mxu0 %v111
    %3472 = vmatprep.subr.mxu0 0.0
    %3473 = vmatpush1.msra.mxu0 %v110
    %3474 = vmatprep.subr.mxu0 0.0
    %3475 = vmatpush1.msra.mxu0 %v109
    %3476 = vmatprep.subr.mxu0 0.0
    %3477 = vmatpush1.msra.mxu0 %v108
    %3478 = vmatprep.subr.mxu0 0.0
    %3479 = vmatpush1.msra.mxu0 %v107
    %3480 = vmatprep.subr.mxu0 0.0
    %3481 = vmatpush1.msra.mxu0 %v106
    %3482 = vmatprep.subr.mxu0 0.0
    %3483 = vmatpush1.msra.mxu0 %v105
    %3484 = vmatprep.subr.mxu0 0.0
    %3485 = vmatpush1.msra.mxu0 %v104
    %3486 = vmatprep.subr.mxu0 0.0
    %3487 = vmatpush1.msra.mxu0 %v103
    %3488 = vmatprep.subr.mxu0 0.0
    %3489 = vmatpush1.msra.mxu0 %v102
    %3490 = vmatprep.subr.mxu0 0.0
    %3491 = vmatpush1.msra.mxu0 %v101
    %3492 = vmatprep.subr.mxu0 0.0
    %3493 = vmatpush1.msra.mxu0 %v100
    %3494 = vmatprep.subr.mxu0 0.0
    %3495 = vmatpush1.msra.mxu0 %v99
    %3496 = vmatprep.subr.mxu0 0.0
    %3497 = vmatpush1.msra.mxu0 %v98
    %3498 = vmatprep.subr.mxu0 0.0
    %3499 = vmatpush1.msra.mxu0 %v97
    %3500 = vmatprep.subr.mxu0 0.0
    %3501 = vmatpush2.msra.mxu0 0.0
    %3502 = vmatprep.subr.mxu0 0.0
    %3503 = vmatpush2.msra.mxu0 0.0
    %3504 = vmatprep.subr.mxu0 0.0
    %3505 = vmatpush2.msra.mxu0 0.0
    %3506 = vmatprep.subr.mxu0 0.0
    %3507 = vmatpush2.msra.mxu0 0.0
    %3508 = vmatprep.subr.mxu0 0.0
    %3509 = vmatpush2.msra.mxu0 0.0
    %3510 = vmatprep.subr.mxu0 0.0
    %3511 = vmatpush2.msra.mxu0 0.0
    %3512 = vmatprep.subr.mxu0 0.0
    %3513 = vmatpush2.msra.mxu0 0.0
    %3514 = vmatprep.subr.mxu0 0.0
    %3515 = vmatpush2.msra.mxu0 0.0
    %3516 = vmatprep.subr.mxu0 0.0
    %3517 = vmatpush2.msra.mxu0 0.0
    %3518 = vmatprep.subr.mxu0 0.0
    %3519 = vmatpush2.msra.mxu0 0.0
    %3520 = vmatprep.subr.mxu0 0.0
    %3521 = vmatpush2.msra.mxu0 0.0
    %3522 = vmatprep.subr.mxu0 0.0
    %3523 = vmatpush2.msra.mxu0 0.0
    %3524 = vmatprep.subr.mxu0 0.0
    %3525 = vmatpush2.msra.mxu0 0.0
    %3526 = vmatprep.subr.mxu0 0.0
    %3527 = vmatpush2.msra.mxu0 0.0
    %3528 = vmatprep.subr.mxu0 0.0
    %3529 = vmatpush2.msra.mxu0 0.0
    %3530 = vmatprep.subr.mxu0 0.0
    %3531 = vmatpush2.msra.mxu0 0.0
    %3532 = vmatprep.mubr.f32.mxu0 0.0
    %3533 = vmatmul.mubr.f32.gmra.mxu0 %v3467
    %v3534 = vpop.f32.mrf.mxu0
    %v3535 = vadd.f32 %v1182, %v3534
    %v3536 = vpop.f32.mrf.mxu0
    %3537 = vdwg.mxu0
    %v3538 = vsel %vm1140, %v3535, 0.0
    %v3539 = vrot.slane %v3538, 4
    %v3540 = vadd.f32 %v3538, %v3539
    %v3541 = vrot.slane %v3540, 2
    %v3542 = vadd.f32 %v3540, %v3541
    %v3543 = vrot.slane %v3542, 1
    %v3544 = vadd.f32 %v3542, %v3543
    %v3545 = vmul.f32 %v3544, %v1148
    %v3546 = vsub.f32 %v3535, %v3545
    %v3547 = vmul.f32 %v3546, %v3546
    %v3548 = vsel %vm1140, %v3547, 0.0
    %v3549 = vrot.slane %v3548, 4
    %v3550 = vadd.f32 %v3548, %v3549
    %v3551 = vrot.slane %v3550, 2
    %v3552 = vadd.f32 %v3550, %v3551
    %v3553 = vrot.slane %v3552, 1
    %v3554 = vadd.f32 %v3552, %v3553
    %v3555 = vmul.f32 %v3554, %v1148
    %v3556 = vadd.f32 %v3555, 1e-05
    %v3557 = vrsqrt.pop %v3556
    %v3558 = vmul.f32 %v3546, %v3557
    %v3559 = vmul.f32 %v3558, %v1279
    %v3560 = vadd.f32 %v3559, %v1286
    %v3561 = vmax.f32 %v3560, 0.0
    %3562 = vmatprep.subr.mxu0 0.0
    %3563 = vmatpush1.msra.mxu0 %v131
    %3564 = vmatprep.subr.mxu0 0.0
    %3565 = vmatpush1.msra.mxu0 %v130
    %3566 = vmatprep.subr.mxu0 0.0
    %3567 = vmatpush1.msra.mxu0 %v129
    %3568 = vmatprep.subr.mxu0 0.0
    %3569 = vmatpush1.msra.mxu0 %v128
    %3570 = vmatprep.subr.mxu0 0.0
    %3571 = vmatpush1.msra.mxu0 %v127
    %3572 = vmatprep.subr.mxu0 0.0
    %3573 = vmatpush1.msra.mxu0 %v126
    %3574 = vmatprep.subr.mxu0 0.0
    %3575 = vmatpush1.msra.mxu0 %v125
    %3576 = vmatprep.subr.mxu0 0.0
    %3577 = vmatpush1.msra.mxu0 %v124
    %3578 = vmatprep.subr.mxu0 0.0
    %3579 = vmatpush1.msra.mxu0 %v123
    %3580 = vmatprep.subr.mxu0 0.0
    %3581 = vmatpush1.msra.mxu0 %v122
    %3582 = vmatprep.subr.mxu0 0.0
    %3583 = vmatpush1.msra.mxu0 %v121
    %3584 = vmatprep.subr.mxu0 0.0
    %3585 = vmatpush1.msra.mxu0 %v120
    %3586 = vmatprep.subr.mxu0 0.0
    %3587 = vmatpush1.msra.mxu0 %v119
    %3588 = vmatprep.subr.mxu0 0.0
    %3589 = vmatpush1.msra.mxu0 %v118
    %3590 = vmatprep.subr.mxu0 0.0
    %3591 = vmatpush1.msra.mxu0 %v117
    %3592 = vmatprep.subr.mxu0 0.0
    %3593 = vmatpush1.msra.mxu0 %v116
    %3594 = vmatprep.subr.mxu0 0.0
    %3595 = vmatpush2.msra.mxu0 0.0
    %3596 = vmatprep.subr.mxu0 0.0
    %3597 = vmatpush2.msra.mxu0 0.0
    %3598 = vmatprep.subr.mxu0 0.0
    %3599 = vmatpush2.msra.mxu0 0.0
    %3600 = vmatprep.subr.mxu0 0.0
    %3601 = vmatpush2.msra.mxu0 0.0
    %3602 = vmatprep.subr.mxu0 0.0
    %3603 = vmatpush2.msra.mxu0 0.0
    %3604 = vmatprep.subr.mxu0 0.0
    %3605 = vmatpush2.msra.mxu0 0.0
    %3606 = vmatprep.subr.mxu0 0.0
    %3607 = vmatpush2.msra.mxu0 0.0
    %3608 = vmatprep.subr.mxu0 0.0
    %3609 = vmatpush2.msra.mxu0 0.0
    %3610 = vmatprep.subr.mxu0 0.0
    %3611 = vmatpush2.msra.mxu0 0.0
    %3612 = vmatprep.subr.mxu0 0.0
    %3613 = vmatpush2.msra.mxu0 0.0
    %3614 = vmatprep.subr.mxu0 0.0
    %3615 = vmatpush2.msra.mxu0 0.0
    %3616 = vmatprep.subr.mxu0 0.0
    %3617 = vmatpush2.msra.mxu0 0.0
    %3618 = vmatprep.subr.mxu0 0.0
    %3619 = vmatpush2.msra.mxu0 0.0
    %3620 = vmatprep.subr.mxu0 0.0
    %3621 = vmatpush2.msra.mxu0 0.0
    %3622 = vmatprep.subr.mxu0 0.0
    %3623 = vmatpush2.msra.mxu0 0.0
    %3624 = vmatprep.subr.mxu0 0.0
    %3625 = vmatpush2.msra.mxu0 0.0
    %3626 = vmatprep.mubr.f32.mxu0 0.0
    %3627 = vmatmul.mubr.f32.gmra.mxu0 %v3561
    %v3628 = vpop.f32.mrf.mxu0
    %v3629 = vadd.f32 %v1294, %v3628
    %v3630 = vpop.f32.mrf.mxu0
    %3631 = vdwg.mxu0
    %v3632 = vsel %vm1140, %v3629, 0.0
    %v3633 = vrot.slane %v3632, 4
    %v3634 = vadd.f32 %v3632, %v3633
    %v3635 = vrot.slane %v3634, 2
    %v3636 = vadd.f32 %v3634, %v3635
    %v3637 = vrot.slane %v3636, 1
    %v3638 = vadd.f32 %v3636, %v3637
    %v3639 = vmul.f32 %v3638, %v1148
    %v3640 = vsub.f32 %v3629, %v3639
    %v3641 = vmul.f32 %v3640, %v3640
    %v3642 = vsel %vm1140, %v3641, 0.0
    %v3643 = vrot.slane %v3642, 4
    %v3644 = vadd.f32 %v3642, %v3643
    %v3645 = vrot.slane %v3644, 2
    %v3646 = vadd.f32 %v3644, %v3645
    %v3647 = vrot.slane %v3646, 1
    %v3648 = vadd.f32 %v3646, %v3647
    %v3649 = vmul.f32 %v3648, %v1148
    %v3650 = vadd.f32 %v3649, 1e-05
    %v3651 = vrsqrt.pop %v3650
    %v3652 = vmul.f32 %v3640, %v3651
    %v3653 = vmul.f32 %v3652, %v1391
    %v3654 = vadd.f32 %v3653, %v1398
    %s3655 = scalar_lea.vmem %s0, 1536
    %v3656 = vld [vmem:[%s3655] sm:$0xff]
    %v3657 = vld [vmem:[%s3655 + $0x8] sm:$0xff]
    %v3658 = vld [vmem:[%s3655 + $0x10] sm:$0xff]
    %v3659 = vld [vmem:[%s3655 + $0x18] sm:$0xff]
    %v3660 = vld [vmem:[%s3655 + $0x20] sm:$0xff]
    %v3661 = vld [vmem:[%s3655 + $0x28] sm:$0xff]
    %v3662 = vld [vmem:[%s3655 + $0x30] sm:$0xff]
    %v3663 = vld [vmem:[%s3655 + $0x38] sm:$0xff]
    %v3664 = vld [vmem:[%s3655 + $0x40] sm:$0xff]
    %v3665 = vld [vmem:[%s3655 + $0x48] sm:$0xff]
    %v3666 = vld [vmem:[%s3655 + $0x50] sm:$0xff]
    %v3667 = vld [vmem:[%s3655 + $0x58] sm:$0xff]
    %v3668 = vld [vmem:[%s3655 + $0x60] sm:$0xff]
    %v3669 = vld [vmem:[%s3655 + $0x68] sm:$0xff]
    %v3670 = vld [vmem:[%s3655 + $0x70] sm:$0xff]
    %v3671 = vld [vmem:[%s3655 + $0x78] sm:$0xff]
    %v3672 = vld [vmem:[%s3655 + $0x80] sm:$0xff]
    %v3673 = vld [vmem:[%s3655 + $0x88] sm:$0xff]
    %v3674 = vld [vmem:[%s3655 + $0x90] sm:$0xff]
    %v3675 = vld [vmem:[%s3655 + $0x98] sm:$0xff]
    %v3676 = vld [vmem:[%s3655 + $0xa0] sm:$0xff]
    %v3677 = vld [vmem:[%s3655 + $0xa8] sm:$0xff]
    %v3678 = vld [vmem:[%s3655 + $0xb0] sm:$0xff]
    %v3679 = vld [vmem:[%s3655 + $0xb8] sm:$0xff]
    %v3680 = vld [vmem:[%s3655 + $0xc0] sm:$0xff]
    %v3681 = vld [vmem:[%s3655 + $0xc8] sm:$0xff]
    %v3682 = vld [vmem:[%s3655 + $0xd0] sm:$0xff]
    %v3683 = vld [vmem:[%s3655 + $0xd8] sm:$0xff]
    %v3684 = vld [vmem:[%s3655 + $0xe0] sm:$0xff]
    %v3685 = vld [vmem:[%s3655 + $0xe8] sm:$0xff]
    %v3686 = vld [vmem:[%s3655 + $0xf0] sm:$0xff]
    %v3687 = vld [vmem:[%s3655 + $0xf8] sm:$0xff]
    %v3688 = vld [vmem:[%s3655 + $0x100] sm:$0xff]
    %v3689 = vld [vmem:[%s3655 + $0x108] sm:$0xff]
    %v3690 = vld [vmem:[%s3655 + $0x110] sm:$0xff]
    %v3691 = vld [vmem:[%s3655 + $0x118] sm:$0xff]
    %v3692 = vld [vmem:[%s3655 + $0x120] sm:$0xff]
    %v3693 = vld [vmem:[%s3655 + $0x128] sm:$0xff]
    %v3694 = vld [vmem:[%s3655 + $0x130] sm:$0xff]
    %v3695 = vld [vmem:[%s3655 + $0x138] sm:$0xff]
    %v3696 = vld [vmem:[%s3655 + $0x140] sm:$0xff]
    %v3697 = vld [vmem:[%s3655 + $0x148] sm:$0xff]
    %v3698 = vld [vmem:[%s3655 + $0x150] sm:$0xff]
    %v3699 = vld [vmem:[%s3655 + $0x158] sm:$0xff]
    %v3700 = vld [vmem:[%s3655 + $0x160] sm:$0xff]
    %v3701 = vld [vmem:[%s3655 + $0x168] sm:$0xff]
    %v3702 = vld [vmem:[%s3655 + $0x170] sm:$0xff]
    %v3703 = vld [vmem:[%s3655 + $0x178] sm:$0xff]
    %v3704 = vld [vmem:[%s3655 + $0x180] sm:$0xff]
    %v3705 = vld [vmem:[%s3655 + $0x188] sm:$0xff]
    %v3706 = vld [vmem:[%s3655 + $0x190] sm:$0xff]
    %v3707 = vld [vmem:[%s3655 + $0x198] sm:$0xff]
    %v3708 = vld [vmem:[%s3655 + $0x1a0] sm:$0xff]
    %v3709 = vld [vmem:[%s3655 + $0x1a8] sm:$0xff]
    %v3710 = vld [vmem:[%s3655 + $0x1b0] sm:$0xff]
    %v3711 = vld [vmem:[%s3655 + $0x1b8] sm:$0xff]
    %v3712 = vld [vmem:[%s3655 + $0x1c0] sm:$0xff]
    %v3713 = vld [vmem:[%s3655 + $0x1c8] sm:$0xff]
    %v3714 = vld [vmem:[%s3655 + $0x1d0] sm:$0xff]
    %v3715 = vld [vmem:[%s3655 + $0x1d8] sm:$0xff]
    %v3716 = vld [vmem:[%s3655 + $0x1e0] sm:$0xff]
    %v3717 = vld [vmem:[%s3655 + $0x1e8] sm:$0xff]
    %v3718 = vld [vmem:[%s3655 + $0x1f0] sm:$0xff]
    %v3719 = vld [vmem:[%s3655 + $0x1f8] sm:$0xff]
    %v3721 = vsel %vm256, %v3656, 0
    %v3724 = vsel %vm256, %v3657, 0
    %v3727 = vsel %vm256, %v3658, 0
    %v3730 = vsel %vm256, %v3659, 0
    %v3733 = vsel %vm256, %v3660, 0
    %v3736 = vsel %vm256, %v3661, 0
    %v3739 = vsel %vm256, %v3662, 0
    %v3742 = vsel %vm256, %v3663, 0
    %v3745 = vsel %vm256, %v3664, 0
    %v3748 = vsel %vm256, %v3665, 0
    %v3751 = vsel %vm256, %v3666, 0
    %v3754 = vsel %vm256, %v3667, 0
    %v3757 = vsel %vm256, %v3668, 0
    %v3760 = vsel %vm256, %v3669, 0
    %v3763 = vsel %vm256, %v3670, 0
    %v3766 = vsel %vm256, %v3671, 0
    %v3769 = vsel %vm256, %v3672, 0
    %v3772 = vsel %vm256, %v3673, 0
    %v3775 = vsel %vm256, %v3674, 0
    %v3778 = vsel %vm256, %v3675, 0
    %v3781 = vsel %vm256, %v3676, 0
    %v3784 = vsel %vm256, %v3677, 0
    %v3787 = vsel %vm256, %v3678, 0
    %v3790 = vsel %vm256, %v3679, 0
    %v3793 = vsel %vm256, %v3680, 0
    %v3796 = vsel %vm256, %v3681, 0
    %v3799 = vsel %vm256, %v3682, 0
    %v3802 = vsel %vm256, %v3683, 0
    %v3805 = vsel %vm256, %v3684, 0
    %v3808 = vsel %vm256, %v3685, 0
    %v3811 = vsel %vm256, %v3686, 0
    %v3814 = vsel %vm256, %v3687, 0
    %v3817 = vsel %vm256, %v3688, 0
    %v3820 = vsel %vm256, %v3689, 0
    %v3823 = vsel %vm256, %v3690, 0
    %v3826 = vsel %vm256, %v3691, 0
    %v3829 = vsel %vm256, %v3692, 0
    %v3832 = vsel %vm256, %v3693, 0
    %v3835 = vsel %vm256, %v3694, 0
    %v3838 = vsel %vm256, %v3695, 0
    %v3841 = vsel %vm256, %v3696, 0
    %v3844 = vsel %vm256, %v3697, 0
    %v3847 = vsel %vm256, %v3698, 0
    %v3850 = vsel %vm256, %v3699, 0
    %v3853 = vsel %vm256, %v3700, 0
    %v3856 = vsel %vm256, %v3701, 0
    %v3859 = vsel %vm256, %v3702, 0
    %v3862 = vsel %vm256, %v3703, 0
    %v3865 = vsel %vm256, %v3704, 0
    %v3868 = vsel %vm256, %v3705, 0
    %v3871 = vsel %vm256, %v3706, 0
    %v3874 = vsel %vm256, %v3707, 0
    %v3877 = vsel %vm256, %v3708, 0
    %v3880 = vsel %vm256, %v3709, 0
    %v3883 = vsel %vm256, %v3710, 0
    %v3886 = vsel %vm256, %v3711, 0
    %v3889 = vsel %vm256, %v3712, 0
    %v3892 = vsel %vm256, %v3713, 0
    %v3895 = vsel %vm256, %v3714, 0
    %v3898 = vsel %vm256, %v3715, 0
    %v3901 = vsel %vm256, %v3716, 0
    %v3904 = vsel %vm256, %v3717, 0
    %v3907 = vsel %vm256, %v3718, 0
    %v3910 = vsel %vm256, %v3719, 0
    %3912 = vmatprep.subr.mxu0 0.0
    %3913 = vmatpush1.msra.mxu0 0.0
    %3914 = vmatprep.subr.mxu0 0.0
    %3915 = vmatpush1.msra.mxu0 0.0
    %3916 = vmatprep.subr.mxu0 0.0
    %3917 = vmatpush1.msra.mxu0 0.0
    %3918 = vmatprep.subr.mxu0 0.0
    %3919 = vmatpush1.msra.mxu0 0.0
    %3920 = vmatprep.subr.mxu0 0.0
    %3921 = vmatpush1.msra.mxu0 0.0
    %3922 = vmatprep.subr.mxu0 0.0
    %3923 = vmatpush1.msra.mxu0 0.0
    %3924 = vmatprep.subr.mxu0 0.0
    %3925 = vmatpush1.msra.mxu0 0.0
    %3926 = vmatprep.subr.mxu0 0.0
    %3927 = vmatpush1.msra.mxu0 0.0
    %3928 = vmatprep.subr.mxu0 0.0
    %3929 = vmatpush1.msra.mxu0 0.0
    %3930 = vmatprep.subr.mxu0 0.0
    %3931 = vmatpush1.msra.mxu0 0.0
    %3932 = vmatprep.subr.mxu0 0.0
    %3933 = vmatpush1.msra.mxu0 0.0
    %3934 = vmatprep.subr.mxu0 0.0
    %3935 = vmatpush1.msra.mxu0 0.0
    %3936 = vmatprep.subr.mxu0 0.0
    %3937 = vmatpush1.msra.mxu0 %v451
    %3938 = vmatprep.subr.mxu0 0.0
    %3939 = vmatpush1.msra.mxu0 %v74
    %3940 = vmatprep.subr.mxu0 0.0
    %3941 = vmatpush1.msra.mxu0 %v73
    %3942 = vmatprep.subr.mxu0 0.0
    %3943 = vmatpush1.msra.mxu0 %v72
    %3944 = vmatprep.subr.mxu0 0.0
    %3945 = vmatpush2.msra.mxu0 0.0
    %3946 = vmatprep.subr.mxu0 0.0
    %3947 = vmatpush2.msra.mxu0 0.0
    %3948 = vmatprep.subr.mxu0 0.0
    %3949 = vmatpush2.msra.mxu0 0.0
    %3950 = vmatprep.subr.mxu0 0.0
    %3951 = vmatpush2.msra.mxu0 0.0
    %3952 = vmatprep.subr.mxu0 0.0
    %3953 = vmatpush2.msra.mxu0 0.0
    %3954 = vmatprep.subr.mxu0 0.0
    %3955 = vmatpush2.msra.mxu0 0.0
    %3956 = vmatprep.subr.mxu0 0.0
    %3957 = vmatpush2.msra.mxu0 0.0
    %3958 = vmatprep.subr.mxu0 0.0
    %3959 = vmatpush2.msra.mxu0 0.0
    %3960 = vmatprep.subr.mxu0 0.0
    %3961 = vmatpush2.msra.mxu0 0.0
    %3962 = vmatprep.subr.mxu0 0.0
    %3963 = vmatpush2.msra.mxu0 0.0
    %3964 = vmatprep.subr.mxu0 0.0
    %3965 = vmatpush2.msra.mxu0 0.0
    %3966 = vmatprep.subr.mxu0 0.0
    %3967 = vmatpush2.msra.mxu0 0.0
    %3968 = vmatprep.subr.mxu0 0.0
    %3969 = vmatpush2.msra.mxu0 0.0
    %3970 = vmatprep.subr.mxu0 0.0
    %3971 = vmatpush2.msra.mxu0 0.0
    %3972 = vmatprep.subr.mxu0 0.0
    %3973 = vmatpush2.msra.mxu0 0.0
    %3974 = vmatprep.subr.mxu0 0.0
    %3975 = vmatpush2.msra.mxu0 0.0
    %3976 = vmatprep.mubr.f32.mxu0 0.0
    %3977 = vmatmul.mubr.f32.gmra.mxu0 %v3721
    %v3978 = vpop.f32.mrf.mxu0
    %v3979 = vadd.f32 %v254, %v3978
    %v3980 = vpop.f32.mrf.mxu0
    %3981 = vmatprep.mubr.f32.mxu0 0.0
    %3982 = vmatmul.mubr.f32.gmra.mxu0 %v3724
    %v3983 = vpop.f32.mrf.mxu0
    %v3984 = vadd.f32 %v254, %v3983
    %v3985 = vpop.f32.mrf.mxu0
    %3986 = vmatprep.mubr.f32.mxu0 0.0
    %3987 = vmatmul.mubr.f32.gmra.mxu0 %v3727
    %v3988 = vpop.f32.mrf.mxu0
    %v3989 = vadd.f32 %v254, %v3988
    %v3990 = vpop.f32.mrf.mxu0
    %3991 = vmatprep.mubr.f32.mxu0 0.0
    %3992 = vmatmul.mubr.f32.gmra.mxu0 %v3730
    %v3993 = vpop.f32.mrf.mxu0
    %v3994 = vadd.f32 %v254, %v3993
    %v3995 = vpop.f32.mrf.mxu0
    %3996 = vmatprep.mubr.f32.mxu0 0.0
    %3997 = vmatmul.mubr.f32.gmra.mxu0 %v3733
    %v3998 = vpop.f32.mrf.mxu0
    %v3999 = vadd.f32 %v254, %v3998
    %v4000 = vpop.f32.mrf.mxu0
    %4001 = vmatprep.mubr.f32.mxu0 0.0
    %4002 = vmatmul.mubr.f32.gmra.mxu0 %v3736
    %v4003 = vpop.f32.mrf.mxu0
    %v4004 = vadd.f32 %v254, %v4003
    %v4005 = vpop.f32.mrf.mxu0
    %4006 = vmatprep.mubr.f32.mxu0 0.0
    %4007 = vmatmul.mubr.f32.gmra.mxu0 %v3739
    %v4008 = vpop.f32.mrf.mxu0
    %v4009 = vadd.f32 %v254, %v4008
    %v4010 = vpop.f32.mrf.mxu0
    %4011 = vmatprep.mubr.f32.mxu0 0.0
    %4012 = vmatmul.mubr.f32.gmra.mxu0 %v3742
    %v4013 = vpop.f32.mrf.mxu0
    %v4014 = vadd.f32 %v254, %v4013
    %v4015 = vpop.f32.mrf.mxu0
    %4016 = vmatprep.mubr.f32.mxu0 0.0
    %4017 = vmatmul.mubr.f32.gmra.mxu0 %v3745
    %v4018 = vpop.f32.mrf.mxu0
    %v4019 = vadd.f32 %v254, %v4018
    %v4020 = vpop.f32.mrf.mxu0
    %4021 = vmatprep.mubr.f32.mxu0 0.0
    %4022 = vmatmul.mubr.f32.gmra.mxu0 %v3748
    %v4023 = vpop.f32.mrf.mxu0
    %v4024 = vadd.f32 %v254, %v4023
    %v4025 = vpop.f32.mrf.mxu0
    %4026 = vmatprep.mubr.f32.mxu0 0.0
    %4027 = vmatmul.mubr.f32.gmra.mxu0 %v3751
    %v4028 = vpop.f32.mrf.mxu0
    %v4029 = vadd.f32 %v254, %v4028
    %v4030 = vpop.f32.mrf.mxu0
    %4031 = vmatprep.mubr.f32.mxu0 0.0
    %4032 = vmatmul.mubr.f32.gmra.mxu0 %v3754
    %v4033 = vpop.f32.mrf.mxu0
    %v4034 = vadd.f32 %v254, %v4033
    %v4035 = vpop.f32.mrf.mxu0
    %4036 = vmatprep.mubr.f32.mxu0 0.0
    %4037 = vmatmul.mubr.f32.gmra.mxu0 %v3757
    %v4038 = vpop.f32.mrf.mxu0
    %v4039 = vadd.f32 %v254, %v4038
    %v4040 = vpop.f32.mrf.mxu0
    %4041 = vmatprep.mubr.f32.mxu0 0.0
    %4042 = vmatmul.mubr.f32.gmra.mxu0 %v3760
    %v4043 = vpop.f32.mrf.mxu0
    %v4044 = vadd.f32 %v254, %v4043
    %v4045 = vpop.f32.mrf.mxu0
    %4046 = vmatprep.mubr.f32.mxu0 0.0
    %4047 = vmatmul.mubr.f32.gmra.mxu0 %v3763
    %v4048 = vpop.f32.mrf.mxu0
    %v4049 = vadd.f32 %v254, %v4048
    %v4050 = vpop.f32.mrf.mxu0
    %4051 = vmatprep.mubr.f32.mxu0 0.0
    %4052 = vmatmul.mubr.f32.gmra.mxu0 %v3766
    %v4053 = vpop.f32.mrf.mxu0
    %v4054 = vadd.f32 %v254, %v4053
    %v4055 = vpop.f32.mrf.mxu0
    %4056 = vmatprep.mubr.f32.mxu0 0.0
    %4057 = vmatmul.mubr.f32.gmra.mxu0 %v3769
    %v4058 = vpop.f32.mrf.mxu0
    %v4059 = vadd.f32 %v254, %v4058
    %v4060 = vpop.f32.mrf.mxu0
    %4061 = vmatprep.mubr.f32.mxu0 0.0
    %4062 = vmatmul.mubr.f32.gmra.mxu0 %v3772
    %v4063 = vpop.f32.mrf.mxu0
    %v4064 = vadd.f32 %v254, %v4063
    %v4065 = vpop.f32.mrf.mxu0
    %4066 = vmatprep.mubr.f32.mxu0 0.0
    %4067 = vmatmul.mubr.f32.gmra.mxu0 %v3775
    %v4068 = vpop.f32.mrf.mxu0
    %v4069 = vadd.f32 %v254, %v4068
    %v4070 = vpop.f32.mrf.mxu0
    %4071 = vmatprep.mubr.f32.mxu0 0.0
    %4072 = vmatmul.mubr.f32.gmra.mxu0 %v3778
    %v4073 = vpop.f32.mrf.mxu0
    %v4074 = vadd.f32 %v254, %v4073
    %v4075 = vpop.f32.mrf.mxu0
    %4076 = vmatprep.mubr.f32.mxu0 0.0
    %4077 = vmatmul.mubr.f32.gmra.mxu0 %v3781
    %v4078 = vpop.f32.mrf.mxu0
    %v4079 = vadd.f32 %v254, %v4078
    %v4080 = vpop.f32.mrf.mxu0
    %4081 = vmatprep.mubr.f32.mxu0 0.0
    %4082 = vmatmul.mubr.f32.gmra.mxu0 %v3784
    %v4083 = vpop.f32.mrf.mxu0
    %v4084 = vadd.f32 %v254, %v4083
    %v4085 = vpop.f32.mrf.mxu0
    %4086 = vmatprep.mubr.f32.mxu0 0.0
    %4087 = vmatmul.mubr.f32.gmra.mxu0 %v3787
    %v4088 = vpop.f32.mrf.mxu0
    %v4089 = vadd.f32 %v254, %v4088
    %v4090 = vpop.f32.mrf.mxu0
    %4091 = vmatprep.mubr.f32.mxu0 0.0
    %4092 = vmatmul.mubr.f32.gmra.mxu0 %v3790
    %v4093 = vpop.f32.mrf.mxu0
    %v4094 = vadd.f32 %v254, %v4093
    %v4095 = vpop.f32.mrf.mxu0
    %4096 = vmatprep.mubr.f32.mxu0 0.0
    %4097 = vmatmul.mubr.f32.gmra.mxu0 %v3793
    %v4098 = vpop.f32.mrf.mxu0
    %v4099 = vadd.f32 %v254, %v4098
    %v4100 = vpop.f32.mrf.mxu0
    %4101 = vmatprep.mubr.f32.mxu0 0.0
    %4102 = vmatmul.mubr.f32.gmra.mxu0 %v3796
    %v4103 = vpop.f32.mrf.mxu0
    %v4104 = vadd.f32 %v254, %v4103
    %v4105 = vpop.f32.mrf.mxu0
    %4106 = vmatprep.mubr.f32.mxu0 0.0
    %4107 = vmatmul.mubr.f32.gmra.mxu0 %v3799
    %v4108 = vpop.f32.mrf.mxu0
    %v4109 = vadd.f32 %v254, %v4108
    %v4110 = vpop.f32.mrf.mxu0
    %4111 = vmatprep.mubr.f32.mxu0 0.0
    %4112 = vmatmul.mubr.f32.gmra.mxu0 %v3802
    %v4113 = vpop.f32.mrf.mxu0
    %v4114 = vadd.f32 %v254, %v4113
    %v4115 = vpop.f32.mrf.mxu0
    %4116 = vmatprep.mubr.f32.mxu0 0.0
    %4117 = vmatmul.mubr.f32.gmra.mxu0 %v3805
    %v4118 = vpop.f32.mrf.mxu0
    %v4119 = vadd.f32 %v254, %v4118
    %v4120 = vpop.f32.mrf.mxu0
    %4121 = vmatprep.mubr.f32.mxu0 0.0
    %4122 = vmatmul.mubr.f32.gmra.mxu0 %v3808
    %v4123 = vpop.f32.mrf.mxu0
    %v4124 = vadd.f32 %v254, %v4123
    %v4125 = vpop.f32.mrf.mxu0
    %4126 = vmatprep.mubr.f32.mxu0 0.0
    %4127 = vmatmul.mubr.f32.gmra.mxu0 %v3811
    %v4128 = vpop.f32.mrf.mxu0
    %v4129 = vadd.f32 %v254, %v4128
    %v4130 = vpop.f32.mrf.mxu0
    %4131 = vmatprep.mubr.f32.mxu0 0.0
    %4132 = vmatmul.mubr.f32.gmra.mxu0 %v3814
    %v4133 = vpop.f32.mrf.mxu0
    %v4134 = vadd.f32 %v254, %v4133
    %v4135 = vpop.f32.mrf.mxu0
    %4136 = vmatprep.mubr.f32.mxu0 0.0
    %4137 = vmatmul.mubr.f32.gmra.mxu0 %v3817
    %v4138 = vpop.f32.mrf.mxu0
    %v4139 = vadd.f32 %v254, %v4138
    %v4140 = vpop.f32.mrf.mxu0
    %4141 = vmatprep.mubr.f32.mxu0 0.0
    %4142 = vmatmul.mubr.f32.gmra.mxu0 %v3820
    %v4143 = vpop.f32.mrf.mxu0
    %v4144 = vadd.f32 %v254, %v4143
    %v4145 = vpop.f32.mrf.mxu0
    %4146 = vmatprep.mubr.f32.mxu0 0.0
    %4147 = vmatmul.mubr.f32.gmra.mxu0 %v3823
    %v4148 = vpop.f32.mrf.mxu0
    %v4149 = vadd.f32 %v254, %v4148
    %v4150 = vpop.f32.mrf.mxu0
    %4151 = vmatprep.mubr.f32.mxu0 0.0
    %4152 = vmatmul.mubr.f32.gmra.mxu0 %v3826
    %v4153 = vpop.f32.mrf.mxu0
    %v4154 = vadd.f32 %v254, %v4153
    %v4155 = vpop.f32.mrf.mxu0
    %4156 = vmatprep.mubr.f32.mxu0 0.0
    %4157 = vmatmul.mubr.f32.gmra.mxu0 %v3829
    %v4158 = vpop.f32.mrf.mxu0
    %v4159 = vadd.f32 %v254, %v4158
    %v4160 = vpop.f32.mrf.mxu0
    %4161 = vmatprep.mubr.f32.mxu0 0.0
    %4162 = vmatmul.mubr.f32.gmra.mxu0 %v3832
    %v4163 = vpop.f32.mrf.mxu0
    %v4164 = vadd.f32 %v254, %v4163
    %v4165 = vpop.f32.mrf.mxu0
    %4166 = vmatprep.mubr.f32.mxu0 0.0
    %4167 = vmatmul.mubr.f32.gmra.mxu0 %v3835
    %v4168 = vpop.f32.mrf.mxu0
    %v4169 = vadd.f32 %v254, %v4168
    %v4170 = vpop.f32.mrf.mxu0
    %4171 = vmatprep.mubr.f32.mxu0 0.0
    %4172 = vmatmul.mubr.f32.gmra.mxu0 %v3838
    %v4173 = vpop.f32.mrf.mxu0
    %v4174 = vadd.f32 %v254, %v4173
    %v4175 = vpop.f32.mrf.mxu0
    %4176 = vmatprep.mubr.f32.mxu0 0.0
    %4177 = vmatmul.mubr.f32.gmra.mxu0 %v3841
    %v4178 = vpop.f32.mrf.mxu0
    %v4179 = vadd.f32 %v254, %v4178
    %v4180 = vpop.f32.mrf.mxu0
    %4181 = vmatprep.mubr.f32.mxu0 0.0
    %4182 = vmatmul.mubr.f32.gmra.mxu0 %v3844
    %v4183 = vpop.f32.mrf.mxu0
    %v4184 = vadd.f32 %v254, %v4183
    %v4185 = vpop.f32.mrf.mxu0
    %4186 = vmatprep.mubr.f32.mxu0 0.0
    %4187 = vmatmul.mubr.f32.gmra.mxu0 %v3847
    %v4188 = vpop.f32.mrf.mxu0
    %v4189 = vadd.f32 %v254, %v4188
    %v4190 = vpop.f32.mrf.mxu0
    %4191 = vmatprep.mubr.f32.mxu0 0.0
    %4192 = vmatmul.mubr.f32.gmra.mxu0 %v3850
    %v4193 = vpop.f32.mrf.mxu0
    %v4194 = vadd.f32 %v254, %v4193
    %v4195 = vpop.f32.mrf.mxu0
    %4196 = vmatprep.mubr.f32.mxu0 0.0
    %4197 = vmatmul.mubr.f32.gmra.mxu0 %v3853
    %v4198 = vpop.f32.mrf.mxu0
    %v4199 = vadd.f32 %v254, %v4198
    %v4200 = vpop.f32.mrf.mxu0
    %4201 = vmatprep.mubr.f32.mxu0 0.0
    %4202 = vmatmul.mubr.f32.gmra.mxu0 %v3856
    %v4203 = vpop.f32.mrf.mxu0
    %v4204 = vadd.f32 %v254, %v4203
    %v4205 = vpop.f32.mrf.mxu0
    %4206 = vmatprep.mubr.f32.mxu0 0.0
    %4207 = vmatmul.mubr.f32.gmra.mxu0 %v3859
    %v4208 = vpop.f32.mrf.mxu0
    %v4209 = vadd.f32 %v254, %v4208
    %v4210 = vpop.f32.mrf.mxu0
    %4211 = vmatprep.mubr.f32.mxu0 0.0
    %4212 = vmatmul.mubr.f32.gmra.mxu0 %v3862
    %v4213 = vpop.f32.mrf.mxu0
    %v4214 = vadd.f32 %v254, %v4213
    %v4215 = vpop.f32.mrf.mxu0
    %4216 = vmatprep.mubr.f32.mxu0 0.0
    %4217 = vmatmul.mubr.f32.gmra.mxu0 %v3865
    %v4218 = vpop.f32.mrf.mxu0
    %v4219 = vadd.f32 %v254, %v4218
    %v4220 = vpop.f32.mrf.mxu0
    %4221 = vmatprep.mubr.f32.mxu0 0.0
    %4222 = vmatmul.mubr.f32.gmra.mxu0 %v3868
    %v4223 = vpop.f32.mrf.mxu0
    %v4224 = vadd.f32 %v254, %v4223
    %v4225 = vpop.f32.mrf.mxu0
    %4226 = vmatprep.mubr.f32.mxu0 0.0
    %4227 = vmatmul.mubr.f32.gmra.mxu0 %v3871
    %v4228 = vpop.f32.mrf.mxu0
    %v4229 = vadd.f32 %v254, %v4228
    %v4230 = vpop.f32.mrf.mxu0
    %4231 = vmatprep.mubr.f32.mxu0 0.0
    %4232 = vmatmul.mubr.f32.gmra.mxu0 %v3874
    %v4233 = vpop.f32.mrf.mxu0
    %v4234 = vadd.f32 %v254, %v4233
    %v4235 = vpop.f32.mrf.mxu0
    %4236 = vmatprep.mubr.f32.mxu0 0.0
    %4237 = vmatmul.mubr.f32.gmra.mxu0 %v3877
    %v4238 = vpop.f32.mrf.mxu0
    %v4239 = vadd.f32 %v254, %v4238
    %v4240 = vpop.f32.mrf.mxu0
    %4241 = vmatprep.mubr.f32.mxu0 0.0
    %4242 = vmatmul.mubr.f32.gmra.mxu0 %v3880
    %v4243 = vpop.f32.mrf.mxu0
    %v4244 = vadd.f32 %v254, %v4243
    %v4245 = vpop.f32.mrf.mxu0
    %4246 = vmatprep.mubr.f32.mxu0 0.0
    %4247 = vmatmul.mubr.f32.gmra.mxu0 %v3883
    %v4248 = vpop.f32.mrf.mxu0
    %v4249 = vadd.f32 %v254, %v4248
    %v4250 = vpop.f32.mrf.mxu0
    %4251 = vmatprep.mubr.f32.mxu0 0.0
    %4252 = vmatmul.mubr.f32.gmra.mxu0 %v3886
    %v4253 = vpop.f32.mrf.mxu0
    %v4254 = vadd.f32 %v254, %v4253
    %v4255 = vpop.f32.mrf.mxu0
    %4256 = vmatprep.mubr.f32.mxu0 0.0
    %4257 = vmatmul.mubr.f32.gmra.mxu0 %v3889
    %v4258 = vpop.f32.mrf.mxu0
    %v4259 = vadd.f32 %v254, %v4258
    %v4260 = vpop.f32.mrf.mxu0
    %4261 = vmatprep.mubr.f32.mxu0 0.0
    %4262 = vmatmul.mubr.f32.gmra.mxu0 %v3892
    %v4263 = vpop.f32.mrf.mxu0
    %v4264 = vadd.f32 %v254, %v4263
    %v4265 = vpop.f32.mrf.mxu0
    %4266 = vmatprep.mubr.f32.mxu0 0.0
    %4267 = vmatmul.mubr.f32.gmra.mxu0 %v3895
    %v4268 = vpop.f32.mrf.mxu0
    %v4269 = vadd.f32 %v254, %v4268
    %v4270 = vpop.f32.mrf.mxu0
    %4271 = vmatprep.mubr.f32.mxu0 0.0
    %4272 = vmatmul.mubr.f32.gmra.mxu0 %v3898
    %v4273 = vpop.f32.mrf.mxu0
    %v4274 = vadd.f32 %v254, %v4273
    %v4275 = vpop.f32.mrf.mxu0
    %4276 = vmatprep.mubr.f32.mxu0 0.0
    %4277 = vmatmul.mubr.f32.gmra.mxu0 %v3901
    %v4278 = vpop.f32.mrf.mxu0
    %v4279 = vadd.f32 %v254, %v4278
    %v4280 = vpop.f32.mrf.mxu0
    %4281 = vmatprep.mubr.f32.mxu0 0.0
    %4282 = vmatmul.mubr.f32.gmra.mxu0 %v3904
    %v4283 = vpop.f32.mrf.mxu0
    %v4284 = vadd.f32 %v254, %v4283
    %v4285 = vpop.f32.mrf.mxu0
    %4286 = vmatprep.mubr.f32.mxu0 0.0
    %4287 = vmatmul.mubr.f32.gmra.mxu0 %v3907
    %v4288 = vpop.f32.mrf.mxu0
    %v4289 = vadd.f32 %v254, %v4288
    %v4290 = vpop.f32.mrf.mxu0
    %4291 = vmatprep.mubr.f32.mxu0 0.0
    %4292 = vmatmul.mubr.f32.gmra.mxu0 %v3910
    %v4293 = vpop.f32.mrf.mxu0
    %v4294 = vadd.f32 %v254, %v4293
    %v4295 = vpop.f32.mrf.mxu0
    %4296 = vdwg.mxu0
    %v4297 = vmax.f32 %v3979, 0.0
    %v4298 = vmax.f32 %v3984, 0.0
    %v4299 = vmax.f32 %v3989, 0.0
    %v4300 = vmax.f32 %v3994, 0.0
    %v4301 = vmax.f32 %v3999, 0.0
    %v4302 = vmax.f32 %v4004, 0.0
    %v4303 = vmax.f32 %v4009, 0.0
    %v4304 = vmax.f32 %v4014, 0.0
    %v4305 = vmax.f32 %v4019, 0.0
    %v4306 = vmax.f32 %v4024, 0.0
    %v4307 = vmax.f32 %v4029, 0.0
    %v4308 = vmax.f32 %v4034, 0.0
    %v4309 = vmax.f32 %v4039, 0.0
    %v4310 = vmax.f32 %v4044, 0.0
    %v4311 = vmax.f32 %v4049, 0.0
    %v4312 = vmax.f32 %v4054, 0.0
    %v4313 = vmax.f32 %v4059, 0.0
    %v4314 = vmax.f32 %v4064, 0.0
    %v4315 = vmax.f32 %v4069, 0.0
    %v4316 = vmax.f32 %v4074, 0.0
    %v4317 = vmax.f32 %v4079, 0.0
    %v4318 = vmax.f32 %v4084, 0.0
    %v4319 = vmax.f32 %v4089, 0.0
    %v4320 = vmax.f32 %v4094, 0.0
    %v4321 = vmax.f32 %v4099, 0.0
    %v4322 = vmax.f32 %v4104, 0.0
    %v4323 = vmax.f32 %v4109, 0.0
    %v4324 = vmax.f32 %v4114, 0.0
    %v4325 = vmax.f32 %v4119, 0.0
    %v4326 = vmax.f32 %v4124, 0.0
    %v4327 = vmax.f32 %v4129, 0.0
    %v4328 = vmax.f32 %v4134, 0.0
    %v4329 = vmax.f32 %v4139, 0.0
    %v4330 = vmax.f32 %v4144, 0.0
    %v4331 = vmax.f32 %v4149, 0.0
    %v4332 = vmax.f32 %v4154, 0.0
    %v4333 = vmax.f32 %v4159, 0.0
    %v4334 = vmax.f32 %v4164, 0.0
    %v4335 = vmax.f32 %v4169, 0.0
    %v4336 = vmax.f32 %v4174, 0.0
    %v4337 = vmax.f32 %v4179, 0.0
    %v4338 = vmax.f32 %v4184, 0.0
    %v4339 = vmax.f32 %v4189, 0.0
    %v4340 = vmax.f32 %v4194, 0.0
    %v4341 = vmax.f32 %v4199, 0.0
    %v4342 = vmax.f32 %v4204, 0.0
    %v4343 = vmax.f32 %v4209, 0.0
    %v4344 = vmax.f32 %v4214, 0.0
    %v4345 = vmax.f32 %v4219, 0.0
    %v4346 = vmax.f32 %v4224, 0.0
    %v4347 = vmax.f32 %v4229, 0.0
    %v4348 = vmax.f32 %v4234, 0.0
    %v4349 = vmax.f32 %v4239, 0.0
    %v4350 = vmax.f32 %v4244, 0.0
    %v4351 = vmax.f32 %v4249, 0.0
    %v4352 = vmax.f32 %v4254, 0.0
    %v4353 = vmax.f32 %v4259, 0.0
    %v4354 = vmax.f32 %v4264, 0.0
    %v4355 = vmax.f32 %v4269, 0.0
    %v4356 = vmax.f32 %v4274, 0.0
    %v4357 = vmax.f32 %v4279, 0.0
    %v4358 = vmax.f32 %v4284, 0.0
    %v4359 = vmax.f32 %v4289, 0.0
    %v4360 = vmax.f32 %v4294, 0.0
    %4361 = vmatprep.subr.mxu0 0.0
    %4362 = vmatpush1.msra.mxu0 %v4312
    %4363 = vmatprep.subr.mxu0 0.0
    %4364 = vmatpush1.msra.mxu0 %v4311
    %4365 = vmatprep.subr.mxu0 0.0
    %4366 = vmatpush1.msra.mxu0 %v4310
    %4367 = vmatprep.subr.mxu0 0.0
    %4368 = vmatpush1.msra.mxu0 %v4309
    %4369 = vmatprep.subr.mxu0 0.0
    %4370 = vmatpush1.msra.mxu0 %v4308
    %4371 = vmatprep.subr.mxu0 0.0
    %4372 = vmatpush1.msra.mxu0 %v4307
    %4373 = vmatprep.subr.mxu0 0.0
    %4374 = vmatpush1.msra.mxu0 %v4306
    %4375 = vmatprep.subr.mxu0 0.0
    %4376 = vmatpush1.msra.mxu0 %v4305
    %4377 = vmatprep.subr.mxu0 0.0
    %4378 = vmatpush1.msra.mxu0 %v4304
    %4379 = vmatprep.subr.mxu0 0.0
    %4380 = vmatpush1.msra.mxu0 %v4303
    %4381 = vmatprep.subr.mxu0 0.0
    %4382 = vmatpush1.msra.mxu0 %v4302
    %4383 = vmatprep.subr.mxu0 0.0
    %4384 = vmatpush1.msra.mxu0 %v4301
    %4385 = vmatprep.subr.mxu0 0.0
    %4386 = vmatpush1.msra.mxu0 %v4300
    %4387 = vmatprep.subr.mxu0 0.0
    %4388 = vmatpush1.msra.mxu0 %v4299
    %4389 = vmatprep.subr.mxu0 0.0
    %4390 = vmatpush1.msra.mxu0 %v4298
    %4391 = vmatprep.subr.mxu0 0.0
    %4392 = vmatpush1.msra.mxu0 %v4297
    %4393 = vmatprep.subr.mxu0 0.0
    %4394 = vmatpush2.msra.mxu0 %v4328
    %4395 = vmatprep.subr.mxu0 0.0
    %4396 = vmatpush2.msra.mxu0 %v4327
    %4397 = vmatprep.subr.mxu0 0.0
    %4398 = vmatpush2.msra.mxu0 %v4326
    %4399 = vmatprep.subr.mxu0 0.0
    %4400 = vmatpush2.msra.mxu0 %v4325
    %4401 = vmatprep.subr.mxu0 0.0
    %4402 = vmatpush2.msra.mxu0 %v4324
    %4403 = vmatprep.subr.mxu0 0.0
    %4404 = vmatpush2.msra.mxu0 %v4323
    %4405 = vmatprep.subr.mxu0 0.0
    %4406 = vmatpush2.msra.mxu0 %v4322
    %4407 = vmatprep.subr.mxu0 0.0
    %4408 = vmatpush2.msra.mxu0 %v4321
    %4409 = vmatprep.subr.mxu0 0.0
    %4410 = vmatpush2.msra.mxu0 %v4320
    %4411 = vmatprep.subr.mxu0 0.0
    %4412 = vmatpush2.msra.mxu0 %v4319
    %4413 = vmatprep.subr.mxu0 0.0
    %4414 = vmatpush2.msra.mxu0 %v4318
    %4415 = vmatprep.subr.mxu0 0.0
    %4416 = vmatpush2.msra.mxu0 %v4317
    %4417 = vmatprep.subr.mxu0 0.0
    %4418 = vmatpush2.msra.mxu0 %v4316
    %4419 = vmatprep.subr.mxu0 0.0
    %4420 = vmatpush2.msra.mxu0 %v4315
    %4421 = vmatprep.subr.mxu0 0.0
    %4422 = vmatpush2.msra.mxu0 %v4314
    %4423 = vmatprep.subr.mxu0 0.0
    %4424 = vmatpush2.msra.mxu0 %v4313
    %4425 = vmatprep.mubr.f32.mxu0 %v918
    %4426 = vmatmul.mubr.f32.gmra.mxu0 %v910
    %v4427 = vpop.f32.mrf.mxu0
    %v4428 = vadd.f32 0.0, %v4427
    %v4429 = vpop.f32.mrf.mxu0
    %4430 = vdwg.mxu0
    %4431 = vmatprep.subr.mxu0 0.0
    %4432 = vmatpush1.msra.mxu0 %v4344
    %4433 = vmatprep.subr.mxu0 0.0
    %4434 = vmatpush1.msra.mxu0 %v4343
    %4435 = vmatprep.subr.mxu0 0.0
    %4436 = vmatpush1.msra.mxu0 %v4342
    %4437 = vmatprep.subr.mxu0 0.0
    %4438 = vmatpush1.msra.mxu0 %v4341
    %4439 = vmatprep.subr.mxu0 0.0
    %4440 = vmatpush1.msra.mxu0 %v4340
    %4441 = vmatprep.subr.mxu0 0.0
    %4442 = vmatpush1.msra.mxu0 %v4339
    %4443 = vmatprep.subr.mxu0 0.0
    %4444 = vmatpush1.msra.mxu0 %v4338
    %4445 = vmatprep.subr.mxu0 0.0
    %4446 = vmatpush1.msra.mxu0 %v4337
    %4447 = vmatprep.subr.mxu0 0.0
    %4448 = vmatpush1.msra.mxu0 %v4336
    %4449 = vmatprep.subr.mxu0 0.0
    %4450 = vmatpush1.msra.mxu0 %v4335
    %4451 = vmatprep.subr.mxu0 0.0
    %4452 = vmatpush1.msra.mxu0 %v4334
    %4453 = vmatprep.subr.mxu0 0.0
    %4454 = vmatpush1.msra.mxu0 %v4333
    %4455 = vmatprep.subr.mxu0 0.0
    %4456 = vmatpush1.msra.mxu0 %v4332
    %4457 = vmatprep.subr.mxu0 0.0
    %4458 = vmatpush1.msra.mxu0 %v4331
    %4459 = vmatprep.subr.mxu0 0.0
    %4460 = vmatpush1.msra.mxu0 %v4330
    %4461 = vmatprep.subr.mxu0 0.0
    %4462 = vmatpush1.msra.mxu0 %v4329
    %4463 = vmatprep.subr.mxu0 0.0
    %4464 = vmatpush2.msra.mxu0 %v4360
    %4465 = vmatprep.subr.mxu0 0.0
    %4466 = vmatpush2.msra.mxu0 %v4359
    %4467 = vmatprep.subr.mxu0 0.0
    %4468 = vmatpush2.msra.mxu0 %v4358
    %4469 = vmatprep.subr.mxu0 0.0
    %4470 = vmatpush2.msra.mxu0 %v4357
    %4471 = vmatprep.subr.mxu0 0.0
    %4472 = vmatpush2.msra.mxu0 %v4356
    %4473 = vmatprep.subr.mxu0 0.0
    %4474 = vmatpush2.msra.mxu0 %v4355
    %4475 = vmatprep.subr.mxu0 0.0
    %4476 = vmatpush2.msra.mxu0 %v4354
    %4477 = vmatprep.subr.mxu0 0.0
    %4478 = vmatpush2.msra.mxu0 %v4353
    %4479 = vmatprep.subr.mxu0 0.0
    %4480 = vmatpush2.msra.mxu0 %v4352
    %4481 = vmatprep.subr.mxu0 0.0
    %4482 = vmatpush2.msra.mxu0 %v4351
    %4483 = vmatprep.subr.mxu0 0.0
    %4484 = vmatpush2.msra.mxu0 %v4350
    %4485 = vmatprep.subr.mxu0 0.0
    %4486 = vmatpush2.msra.mxu0 %v4349
    %4487 = vmatprep.subr.mxu0 0.0
    %4488 = vmatpush2.msra.mxu0 %v4348
    %4489 = vmatprep.subr.mxu0 0.0
    %4490 = vmatpush2.msra.mxu0 %v4347
    %4491 = vmatprep.subr.mxu0 0.0
    %4492 = vmatpush2.msra.mxu0 %v4346
    %4493 = vmatprep.subr.mxu0 0.0
    %4494 = vmatpush2.msra.mxu0 %v4345
    %4495 = vmatprep.mubr.f32.mxu0 %v919
    %4496 = vmatmul.mubr.f32.gmra.mxu0 %v917
    %v4497 = vpop.f32.mrf.mxu0
    %v4498 = vadd.f32 %v4428, %v4497
    %v4499 = vpop.f32.mrf.mxu0
    %4500 = vdwg.mxu0
    %4501 = vmatprep.subr.mxu0 0.0
    %4502 = vmatpush1.msra.mxu0 %v93
    %4503 = vmatprep.subr.mxu0 0.0
    %4504 = vmatpush1.msra.mxu0 %v92
    %4505 = vmatprep.subr.mxu0 0.0
    %4506 = vmatpush1.msra.mxu0 %v91
    %4507 = vmatprep.subr.mxu0 0.0
    %4508 = vmatpush1.msra.mxu0 %v90
    %4509 = vmatprep.subr.mxu0 0.0
    %4510 = vmatpush1.msra.mxu0 %v89
    %4511 = vmatprep.subr.mxu0 0.0
    %4512 = vmatpush1.msra.mxu0 %v88
    %4513 = vmatprep.subr.mxu0 0.0
    %4514 = vmatpush1.msra.mxu0 %v87
    %4515 = vmatprep.subr.mxu0 0.0
    %4516 = vmatpush1.msra.mxu0 %v86
    %4517 = vmatprep.subr.mxu0 0.0
    %4518 = vmatpush1.msra.mxu0 %v85
    %4519 = vmatprep.subr.mxu0 0.0
    %4520 = vmatpush1.msra.mxu0 %v84
    %4521 = vmatprep.subr.mxu0 0.0
    %4522 = vmatpush1.msra.mxu0 %v83
    %4523 = vmatprep.subr.mxu0 0.0
    %4524 = vmatpush1.msra.mxu0 %v82
    %4525 = vmatprep.subr.mxu0 0.0
    %4526 = vmatpush1.msra.mxu0 %v81
    %4527 = vmatprep.subr.mxu0 0.0
    %4528 = vmatpush1.msra.mxu0 %v80
    %4529 = vmatprep.subr.mxu0 0.0
    %4530 = vmatpush1.msra.mxu0 %v79
    %4531 = vmatprep.subr.mxu0 0.0
    %4532 = vmatpush1.msra.mxu0 %v78
    %4533 = vmatprep.subr.mxu0 0.0
    %4534 = vmatpush2.msra.mxu0 0.0
    %4535 = vmatprep.subr.mxu0 0.0
    %4536 = vmatpush2.msra.mxu0 0.0
    %4537 = vmatprep.subr.mxu0 0.0
    %4538 = vmatpush2.msra.mxu0 0.0
    %4539 = vmatprep.subr.mxu0 0.0
    %4540 = vmatpush2.msra.mxu0 0.0
    %4541 = vmatprep.subr.mxu0 0.0
    %4542 = vmatpush2.msra.mxu0 0.0
    %4543 = vmatprep.subr.mxu0 0.0
    %4544 = vmatpush2.msra.mxu0 0.0
    %4545 = vmatprep.subr.mxu0 0.0
    %4546 = vmatpush2.msra.mxu0 0.0
    %4547 = vmatprep.subr.mxu0 0.0
    %4548 = vmatpush2.msra.mxu0 0.0
    %4549 = vmatprep.subr.mxu0 0.0
    %4550 = vmatpush2.msra.mxu0 0.0
    %4551 = vmatprep.subr.mxu0 0.0
    %4552 = vmatpush2.msra.mxu0 0.0
    %4553 = vmatprep.subr.mxu0 0.0
    %4554 = vmatpush2.msra.mxu0 0.0
    %4555 = vmatprep.subr.mxu0 0.0
    %4556 = vmatpush2.msra.mxu0 0.0
    %4557 = vmatprep.subr.mxu0 0.0
    %4558 = vmatpush2.msra.mxu0 0.0
    %4559 = vmatprep.subr.mxu0 0.0
    %4560 = vmatpush2.msra.mxu0 0.0
    %4561 = vmatprep.subr.mxu0 0.0
    %4562 = vmatpush2.msra.mxu0 0.0
    %4563 = vmatprep.subr.mxu0 0.0
    %4564 = vmatpush2.msra.mxu0 0.0
    %4565 = vmatprep.mubr.f32.mxu0 0.0
    %4566 = vmatmul.mubr.f32.gmra.mxu0 %v4498
    %v4567 = vpop.f32.mrf.mxu0
    %v4568 = vadd.f32 %v1068, %v4567
    %v4569 = vpop.f32.mrf.mxu0
    %4570 = vdwg.mxu0
    %v4571 = vsel %vm1140, %v4568, 0.0
    %v4572 = vrot.slane %v4571, 4
    %v4573 = vadd.f32 %v4571, %v4572
    %v4574 = vrot.slane %v4573, 2
    %v4575 = vadd.f32 %v4573, %v4574
    %v4576 = vrot.slane %v4575, 1
    %v4577 = vadd.f32 %v4575, %v4576
    %v4578 = vmul.f32 %v4577, %v1148
    %v4579 = vsub.f32 %v4568, %v4578
    %v4580 = vmul.f32 %v4579, %v4579
    %v4581 = vsel %vm1140, %v4580, 0.0
    %v4582 = vrot.slane %v4581, 4
    %v4583 = vadd.f32 %v4581, %v4582
    %v4584 = vrot.slane %v4583, 2
    %v4585 = vadd.f32 %v4583, %v4584
    %v4586 = vrot.slane %v4585, 1
    %v4587 = vadd.f32 %v4585, %v4586
    %v4588 = vmul.f32 %v4587, %v1148
    %v4589 = vadd.f32 %v4588, 1e-05
    %v4590 = vrsqrt.pop %v4589
    %v4591 = vmul.f32 %v4579, %v4590
    %v4592 = vmul.f32 %v4591, %v1167
    %v4593 = vadd.f32 %v4592, %v1174
    %v4594 = vmax.f32 %v4593, 0.0
    %4595 = vmatprep.subr.mxu0 0.0
    %4596 = vmatpush1.msra.mxu0 %v112
    %4597 = vmatprep.subr.mxu0 0.0
    %4598 = vmatpush1.msra.mxu0 %v111
    %4599 = vmatprep.subr.mxu0 0.0
    %4600 = vmatpush1.msra.mxu0 %v110
    %4601 = vmatprep.subr.mxu0 0.0
    %4602 = vmatpush1.msra.mxu0 %v109
    %4603 = vmatprep.subr.mxu0 0.0
    %4604 = vmatpush1.msra.mxu0 %v108
    %4605 = vmatprep.subr.mxu0 0.0
    %4606 = vmatpush1.msra.mxu0 %v107
    %4607 = vmatprep.subr.mxu0 0.0
    %4608 = vmatpush1.msra.mxu0 %v106
    %4609 = vmatprep.subr.mxu0 0.0
    %4610 = vmatpush1.msra.mxu0 %v105
    %4611 = vmatprep.subr.mxu0 0.0
    %4612 = vmatpush1.msra.mxu0 %v104
    %4613 = vmatprep.subr.mxu0 0.0
    %4614 = vmatpush1.msra.mxu0 %v103
    %4615 = vmatprep.subr.mxu0 0.0
    %4616 = vmatpush1.msra.mxu0 %v102
    %4617 = vmatprep.subr.mxu0 0.0
    %4618 = vmatpush1.msra.mxu0 %v101
    %4619 = vmatprep.subr.mxu0 0.0
    %4620 = vmatpush1.msra.mxu0 %v100
    %4621 = vmatprep.subr.mxu0 0.0
    %4622 = vmatpush1.msra.mxu0 %v99
    %4623 = vmatprep.subr.mxu0 0.0
    %4624 = vmatpush1.msra.mxu0 %v98
    %4625 = vmatprep.subr.mxu0 0.0
    %4626 = vmatpush1.msra.mxu0 %v97
    %4627 = vmatprep.subr.mxu0 0.0
    %4628 = vmatpush2.msra.mxu0 0.0
    %4629 = vmatprep.subr.mxu0 0.0
    %4630 = vmatpush2.msra.mxu0 0.0
    %4631 = vmatprep.subr.mxu0 0.0
    %4632 = vmatpush2.msra.mxu0 0.0
    %4633 = vmatprep.subr.mxu0 0.0
    %4634 = vmatpush2.msra.mxu0 0.0
    %4635 = vmatprep.subr.mxu0 0.0
    %4636 = vmatpush2.msra.mxu0 0.0
    %4637 = vmatprep.subr.mxu0 0.0
    %4638 = vmatpush2.msra.mxu0 0.0
    %4639 = vmatprep.subr.mxu0 0.0
    %4640 = vmatpush2.msra.mxu0 0.0
    %4641 = vmatprep.subr.mxu0 0.0
    %4642 = vmatpush2.msra.mxu0 0.0
    %4643 = vmatprep.subr.mxu0 0.0
    %4644 = vmatpush2.msra.mxu0 0.0
    %4645 = vmatprep.subr.mxu0 0.0
    %4646 = vmatpush2.msra.mxu0 0.0
    %4647 = vmatprep.subr.mxu0 0.0
    %4648 = vmatpush2.msra.mxu0 0.0
    %4649 = vmatprep.subr.mxu0 0.0
    %4650 = vmatpush2.msra.mxu0 0.0
    %4651 = vmatprep.subr.mxu0 0.0
    %4652 = vmatpush2.msra.mxu0 0.0
    %4653 = vmatprep.subr.mxu0 0.0
    %4654 = vmatpush2.msra.mxu0 0.0
    %4655 = vmatprep.subr.mxu0 0.0
    %4656 = vmatpush2.msra.mxu0 0.0
    %4657 = vmatprep.subr.mxu0 0.0
    %4658 = vmatpush2.msra.mxu0 0.0
    %4659 = vmatprep.mubr.f32.mxu0 0.0
    %4660 = vmatmul.mubr.f32.gmra.mxu0 %v4594
    %v4661 = vpop.f32.mrf.mxu0
    %v4662 = vadd.f32 %v1182, %v4661
    %v4663 = vpop.f32.mrf.mxu0
    %4664 = vdwg.mxu0
    %v4665 = vsel %vm1140, %v4662, 0.0
    %v4666 = vrot.slane %v4665, 4
    %v4667 = vadd.f32 %v4665, %v4666
    %v4668 = vrot.slane %v4667, 2
    %v4669 = vadd.f32 %v4667, %v4668
    %v4670 = vrot.slane %v4669, 1
    %v4671 = vadd.f32 %v4669, %v4670
    %v4672 = vmul.f32 %v4671, %v1148
    %v4673 = vsub.f32 %v4662, %v4672
    %v4674 = vmul.f32 %v4673, %v4673
    %v4675 = vsel %vm1140, %v4674, 0.0
    %v4676 = vrot.slane %v4675, 4
    %v4677 = vadd.f32 %v4675, %v4676
    %v4678 = vrot.slane %v4677, 2
    %v4679 = vadd.f32 %v4677, %v4678
    %v4680 = vrot.slane %v4679, 1
    %v4681 = vadd.f32 %v4679, %v4680
    %v4682 = vmul.f32 %v4681, %v1148
    %v4683 = vadd.f32 %v4682, 1e-05
    %v4684 = vrsqrt.pop %v4683
    %v4685 = vmul.f32 %v4673, %v4684
    %v4686 = vmul.f32 %v4685, %v1279
    %v4687 = vadd.f32 %v4686, %v1286
    %v4688 = vmax.f32 %v4687, 0.0
    %4689 = vmatprep.subr.mxu0 0.0
    %4690 = vmatpush1.msra.mxu0 %v131
    %4691 = vmatprep.subr.mxu0 0.0
    %4692 = vmatpush1.msra.mxu0 %v130
    %4693 = vmatprep.subr.mxu0 0.0
    %4694 = vmatpush1.msra.mxu0 %v129
    %4695 = vmatprep.subr.mxu0 0.0
    %4696 = vmatpush1.msra.mxu0 %v128
    %4697 = vmatprep.subr.mxu0 0.0
    %4698 = vmatpush1.msra.mxu0 %v127
    %4699 = vmatprep.subr.mxu0 0.0
    %4700 = vmatpush1.msra.mxu0 %v126
    %4701 = vmatprep.subr.mxu0 0.0
    %4702 = vmatpush1.msra.mxu0 %v125
    %4703 = vmatprep.subr.mxu0 0.0
    %4704 = vmatpush1.msra.mxu0 %v124
    %4705 = vmatprep.subr.mxu0 0.0
    %4706 = vmatpush1.msra.mxu0 %v123
    %4707 = vmatprep.subr.mxu0 0.0
    %4708 = vmatpush1.msra.mxu0 %v122
    %4709 = vmatprep.subr.mxu0 0.0
    %4710 = vmatpush1.msra.mxu0 %v121
    %4711 = vmatprep.subr.mxu0 0.0
    %4712 = vmatpush1.msra.mxu0 %v120
    %4713 = vmatprep.subr.mxu0 0.0
    %4714 = vmatpush1.msra.mxu0 %v119
    %4715 = vmatprep.subr.mxu0 0.0
    %4716 = vmatpush1.msra.mxu0 %v118
    %4717 = vmatprep.subr.mxu0 0.0
    %4718 = vmatpush1.msra.mxu0 %v117
    %4719 = vmatprep.subr.mxu0 0.0
    %4720 = vmatpush1.msra.mxu0 %v116
    %4721 = vmatprep.subr.mxu0 0.0
    %4722 = vmatpush2.msra.mxu0 0.0
    %4723 = vmatprep.subr.mxu0 0.0
    %4724 = vmatpush2.msra.mxu0 0.0
    %4725 = vmatprep.subr.mxu0 0.0
    %4726 = vmatpush2.msra.mxu0 0.0
    %4727 = vmatprep.subr.mxu0 0.0
    %4728 = vmatpush2.msra.mxu0 0.0
    %4729 = vmatprep.subr.mxu0 0.0
    %4730 = vmatpush2.msra.mxu0 0.0
    %4731 = vmatprep.subr.mxu0 0.0
    %4732 = vmatpush2.msra.mxu0 0.0
    %4733 = vmatprep.subr.mxu0 0.0
    %4734 = vmatpush2.msra.mxu0 0.0
    %4735 = vmatprep.subr.mxu0 0.0
    %4736 = vmatpush2.msra.mxu0 0.0
    %4737 = vmatprep.subr.mxu0 0.0
    %4738 = vmatpush2.msra.mxu0 0.0
    %4739 = vmatprep.subr.mxu0 0.0
    %4740 = vmatpush2.msra.mxu0 0.0
    %4741 = vmatprep.subr.mxu0 0.0
    %4742 = vmatpush2.msra.mxu0 0.0
    %4743 = vmatprep.subr.mxu0 0.0
    %4744 = vmatpush2.msra.mxu0 0.0
    %4745 = vmatprep.subr.mxu0 0.0
    %4746 = vmatpush2.msra.mxu0 0.0
    %4747 = vmatprep.subr.mxu0 0.0
    %4748 = vmatpush2.msra.mxu0 0.0
    %4749 = vmatprep.subr.mxu0 0.0
    %4750 = vmatpush2.msra.mxu0 0.0
    %4751 = vmatprep.subr.mxu0 0.0
    %4752 = vmatpush2.msra.mxu0 0.0
    %4753 = vmatprep.mubr.f32.mxu0 0.0
    %4754 = vmatmul.mubr.f32.gmra.mxu0 %v4688
    %v4755 = vpop.f32.mrf.mxu0
    %v4756 = vadd.f32 %v1294, %v4755
    %v4757 = vpop.f32.mrf.mxu0
    %4758 = vdwg.mxu0
    %v4759 = vsel %vm1140, %v4756, 0.0
    %v4760 = vrot.slane %v4759, 4
    %v4761 = vadd.f32 %v4759, %v4760
    %v4762 = vrot.slane %v4761, 2
    %v4763 = vadd.f32 %v4761, %v4762
    %v4764 = vrot.slane %v4763, 1
    %v4765 = vadd.f32 %v4763, %v4764
    %v4766 = vmul.f32 %v4765, %v1148
    %v4767 = vsub.f32 %v4756, %v4766
    %v4768 = vmul.f32 %v4767, %v4767
    %v4769 = vsel %vm1140, %v4768, 0.0
    %v4770 = vrot.slane %v4769, 4
    %v4771 = vadd.f32 %v4769, %v4770
    %v4772 = vrot.slane %v4771, 2
    %v4773 = vadd.f32 %v4771, %v4772
    %v4774 = vrot.slane %v4773, 1
    %v4775 = vadd.f32 %v4773, %v4774
    %v4776 = vmul.f32 %v4775, %v1148
    %v4777 = vadd.f32 %v4776, 1e-05
    %v4778 = vrsqrt.pop %v4777
    %v4779 = vmul.f32 %v4767, %v4778
    %v4780 = vmul.f32 %v4779, %v1391
    %v4781 = vadd.f32 %v4780, %v1398
    %v4783 = vlaneseq
    %v4784 = vshrl.u32 %v4783, 7
    %v4785 = vsub.s32 0, %v4784
    %v4786 = vrot.slane %v151, %v4785
    %4788 = vmatprep.subr.mxu0 0.0
    %4789 = vmatpush1.msra.mxu0 %v150
    %4790 = vmatprep.subr.mxu0 0.0
    %4791 = vmatpush1.msra.mxu0 %v149
    %4792 = vmatprep.subr.mxu0 0.0
    %4793 = vmatpush1.msra.mxu0 %v148
    %4794 = vmatprep.subr.mxu0 0.0
    %4795 = vmatpush1.msra.mxu0 %v147
    %4796 = vmatprep.subr.mxu0 0.0
    %4797 = vmatpush1.msra.mxu0 %v146
    %4798 = vmatprep.subr.mxu0 0.0
    %4799 = vmatpush1.msra.mxu0 %v145
    %4800 = vmatprep.subr.mxu0 0.0
    %4801 = vmatpush1.msra.mxu0 %v144
    %4802 = vmatprep.subr.mxu0 0.0
    %4803 = vmatpush1.msra.mxu0 %v143
    %4804 = vmatprep.subr.mxu0 0.0
    %4805 = vmatpush1.msra.mxu0 %v142
    %4806 = vmatprep.subr.mxu0 0.0
    %4807 = vmatpush1.msra.mxu0 %v141
    %4808 = vmatprep.subr.mxu0 0.0
    %4809 = vmatpush1.msra.mxu0 %v140
    %4810 = vmatprep.subr.mxu0 0.0
    %4811 = vmatpush1.msra.mxu0 %v139
    %4812 = vmatprep.subr.mxu0 0.0
    %4813 = vmatpush1.msra.mxu0 %v138
    %4814 = vmatprep.subr.mxu0 0.0
    %4815 = vmatpush1.msra.mxu0 %v137
    %4816 = vmatprep.subr.mxu0 0.0
    %4817 = vmatpush1.msra.mxu0 %v136
    %4818 = vmatprep.subr.mxu0 0.0
    %4819 = vmatpush1.msra.mxu0 %v135
    %4820 = vmatprep.subr.mxu0 0.0
    %4821 = vmatpush2.msra.mxu0 0.0
    %4822 = vmatprep.subr.mxu0 0.0
    %4823 = vmatpush2.msra.mxu0 0.0
    %4824 = vmatprep.subr.mxu0 0.0
    %4825 = vmatpush2.msra.mxu0 0.0
    %4826 = vmatprep.subr.mxu0 0.0
    %4827 = vmatpush2.msra.mxu0 0.0
    %4828 = vmatprep.subr.mxu0 0.0
    %4829 = vmatpush2.msra.mxu0 0.0
    %4830 = vmatprep.subr.mxu0 0.0
    %4831 = vmatpush2.msra.mxu0 0.0
    %4832 = vmatprep.subr.mxu0 0.0
    %4833 = vmatpush2.msra.mxu0 0.0
    %4834 = vmatprep.subr.mxu0 0.0
    %4835 = vmatpush2.msra.mxu0 0.0
    %4836 = vmatprep.subr.mxu0 0.0
    %4837 = vmatpush2.msra.mxu0 0.0
    %4838 = vmatprep.subr.mxu0 0.0
    %4839 = vmatpush2.msra.mxu0 0.0
    %4840 = vmatprep.subr.mxu0 0.0
    %4841 = vmatpush2.msra.mxu0 0.0
    %4842 = vmatprep.subr.mxu0 0.0
    %4843 = vmatpush2.msra.mxu0 0.0
    %4844 = vmatprep.subr.mxu0 0.0
    %4845 = vmatpush2.msra.mxu0 0.0
    %4846 = vmatprep.subr.mxu0 0.0
    %4847 = vmatpush2.msra.mxu0 0.0
    %4848 = vmatprep.subr.mxu0 0.0
    %4849 = vmatpush2.msra.mxu0 0.0
    %4850 = vmatprep.subr.mxu0 0.0
    %4851 = vmatpush2.msra.mxu0 0.0
    %4852 = vmatprep.mubr.f32.mxu0 0.0
    %4853 = vmatmul.mubr.f32.gmra.mxu0 %v1400
    %v4854 = vpop.f32.mrf.mxu0
    %v4855 = vadd.f32 %v4786, %v4854
    %v4856 = vpop.f32.mrf.mxu0
    %4857 = vdwg.mxu0
    %v4859 = vlaneseq
    %v4860 = vshrl.u32 %v4859, 7
    %v4861 = vsub.s32 0, %v4860
    %v4862 = vrot.slane %v168, %v4861
    %v4864 = vadd.f32 %v4855, %v4862
    %4865 = vmatprep.subr.mxu0 0.0
    %4866 = vmatpush1.msra.mxu0 %v167
    %4867 = vmatprep.subr.mxu0 0.0
    %4868 = vmatpush1.msra.mxu0 %v166
    %4869 = vmatprep.subr.mxu0 0.0
    %4870 = vmatpush1.msra.mxu0 %v165
    %4871 = vmatprep.subr.mxu0 0.0
    %4872 = vmatpush1.msra.mxu0 %v164
    %4873 = vmatprep.subr.mxu0 0.0
    %4874 = vmatpush1.msra.mxu0 %v163
    %4875 = vmatprep.subr.mxu0 0.0
    %4876 = vmatpush1.msra.mxu0 %v162
    %4877 = vmatprep.subr.mxu0 0.0
    %4878 = vmatpush1.msra.mxu0 %v161
    %4879 = vmatprep.subr.mxu0 0.0
    %4880 = vmatpush1.msra.mxu0 %v160
    %4881 = vmatprep.subr.mxu0 0.0
    %4882 = vmatpush1.msra.mxu0 %v159
    %4883 = vmatprep.subr.mxu0 0.0
    %4884 = vmatpush1.msra.mxu0 %v158
    %4885 = vmatprep.subr.mxu0 0.0
    %4886 = vmatpush1.msra.mxu0 %v157
    %4887 = vmatprep.subr.mxu0 0.0
    %4888 = vmatpush1.msra.mxu0 %v156
    %4889 = vmatprep.subr.mxu0 0.0
    %4890 = vmatpush1.msra.mxu0 %v155
    %4891 = vmatprep.subr.mxu0 0.0
    %4892 = vmatpush1.msra.mxu0 %v154
    %4893 = vmatprep.subr.mxu0 0.0
    %4894 = vmatpush1.msra.mxu0 %v153
    %4895 = vmatprep.subr.mxu0 0.0
    %4896 = vmatpush1.msra.mxu0 %v152
    %4897 = vmatprep.subr.mxu0 0.0
    %4898 = vmatpush2.msra.mxu0 0.0
    %4899 = vmatprep.subr.mxu0 0.0
    %4900 = vmatpush2.msra.mxu0 0.0
    %4901 = vmatprep.subr.mxu0 0.0
    %4902 = vmatpush2.msra.mxu0 0.0
    %4903 = vmatprep.subr.mxu0 0.0
    %4904 = vmatpush2.msra.mxu0 0.0
    %4905 = vmatprep.subr.mxu0 0.0
    %4906 = vmatpush2.msra.mxu0 0.0
    %4907 = vmatprep.subr.mxu0 0.0
    %4908 = vmatpush2.msra.mxu0 0.0
    %4909 = vmatprep.subr.mxu0 0.0
    %4910 = vmatpush2.msra.mxu0 0.0
    %4911 = vmatprep.subr.mxu0 0.0
    %4912 = vmatpush2.msra.mxu0 0.0
    %4913 = vmatprep.subr.mxu0 0.0
    %4914 = vmatpush2.msra.mxu0 0.0
    %4915 = vmatprep.subr.mxu0 0.0
    %4916 = vmatpush2.msra.mxu0 0.0
    %4917 = vmatprep.subr.mxu0 0.0
    %4918 = vmatpush2.msra.mxu0 0.0
    %4919 = vmatprep.subr.mxu0 0.0
    %4920 = vmatpush2.msra.mxu0 0.0
    %4921 = vmatprep.subr.mxu0 0.0
    %4922 = vmatpush2.msra.mxu0 0.0
    %4923 = vmatprep.subr.mxu0 0.0
    %4924 = vmatpush2.msra.mxu0 0.0
    %4925 = vmatprep.subr.mxu0 0.0
    %4926 = vmatpush2.msra.mxu0 0.0
    %4927 = vmatprep.subr.mxu0 0.0
    %4928 = vmatpush2.msra.mxu0 0.0
    %4929 = vmatprep.mubr.f32.mxu0 0.0
    %4930 = vmatmul.mubr.f32.gmra.mxu0 0.0
    %v4931 = vpop.f32.mrf.mxu0
    %v4932 = vadd.f32 0.0, %v4931
    %v4933 = vpop.f32.mrf.mxu0
    %4934 = vdwg.mxu0
    %v4935 = vadd.f32 %v4864, %v4932
    %v4936 = vtanh.pop %v4935
    %v4938 = vlaneseq
    %v4939 = vshrl.u32 %v4938, 7
    %v4940 = vsub.s32 0, %v4939
    %v4941 = vrot.slane %v185, %v4940
    %4943 = vmatprep.subr.mxu0 0.0
    %4944 = vmatpush1.msra.mxu0 %v184
    %4945 = vmatprep.subr.mxu0 0.0
    %4946 = vmatpush1.msra.mxu0 %v183
    %4947 = vmatprep.subr.mxu0 0.0
    %4948 = vmatpush1.msra.mxu0 %v182
    %4949 = vmatprep.subr.mxu0 0.0
    %4950 = vmatpush1.msra.mxu0 %v181
    %4951 = vmatprep.subr.mxu0 0.0
    %4952 = vmatpush1.msra.mxu0 %v180
    %4953 = vmatprep.subr.mxu0 0.0
    %4954 = vmatpush1.msra.mxu0 %v179
    %4955 = vmatprep.subr.mxu0 0.0
    %4956 = vmatpush1.msra.mxu0 %v178
    %4957 = vmatprep.subr.mxu0 0.0
    %4958 = vmatpush1.msra.mxu0 %v177
    %4959 = vmatprep.subr.mxu0 0.0
    %4960 = vmatpush1.msra.mxu0 %v176
    %4961 = vmatprep.subr.mxu0 0.0
    %4962 = vmatpush1.msra.mxu0 %v175
    %4963 = vmatprep.subr.mxu0 0.0
    %4964 = vmatpush1.msra.mxu0 %v174
    %4965 = vmatprep.subr.mxu0 0.0
    %4966 = vmatpush1.msra.mxu0 %v173
    %4967 = vmatprep.subr.mxu0 0.0
    %4968 = vmatpush1.msra.mxu0 %v172
    %4969 = vmatprep.subr.mxu0 0.0
    %4970 = vmatpush1.msra.mxu0 %v171
    %4971 = vmatprep.subr.mxu0 0.0
    %4972 = vmatpush1.msra.mxu0 %v170
    %4973 = vmatprep.subr.mxu0 0.0
    %4974 = vmatpush1.msra.mxu0 %v169
    %4975 = vmatprep.subr.mxu0 0.0
    %4976 = vmatpush2.msra.mxu0 0.0
    %4977 = vmatprep.subr.mxu0 0.0
    %4978 = vmatpush2.msra.mxu0 0.0
    %4979 = vmatprep.subr.mxu0 0.0
    %4980 = vmatpush2.msra.mxu0 0.0
    %4981 = vmatprep.subr.mxu0 0.0
    %4982 = vmatpush2.msra.mxu0 0.0
    %4983 = vmatprep.subr.mxu0 0.0
    %4984 = vmatpush2.msra.mxu0 0.0
    %4985 = vmatprep.subr.mxu0 0.0
    %4986 = vmatpush2.msra.mxu0 0.0
    %4987 = vmatprep.subr.mxu0 0.0
    %4988 = vmatpush2.msra.mxu0 0.0
    %4989 = vmatprep.subr.mxu0 0.0
    %4990 = vmatpush2.msra.mxu0 0.0
    %4991 = vmatprep.subr.mxu0 0.0
    %4992 = vmatpush2.msra.mxu0 0.0
    %4993 = vmatprep.subr.mxu0 0.0
    %4994 = vmatpush2.msra.mxu0 0.0
    %4995 = vmatprep.subr.mxu0 0.0
    %4996 = vmatpush2.msra.mxu0 0.0
    %4997 = vmatprep.subr.mxu0 0.0
    %4998 = vmatpush2.msra.mxu0 0.0
    %4999 = vmatprep.subr.mxu0 0.0
    %5000 = vmatpush2.msra.mxu0 0.0
    %5001 = vmatprep.subr.mxu0 0.0
    %5002 = vmatpush2.msra.mxu0 0.0
    %5003 = vmatprep.subr.mxu0 0.0
    %5004 = vmatpush2.msra.mxu0 0.0
    %5005 = vmatprep.subr.mxu0 0.0
    %5006 = vmatpush2.msra.mxu0 0.0
    %5007 = vmatprep.mubr.f32.mxu0 0.0
    %5008 = vmatmul.mubr.f32.gmra.mxu0 %v4936
    %v5009 = vpop.f32.mrf.mxu0
    %v5010 = vadd.f32 %v4941, %v5009
    %v5011 = vpop.f32.mrf.mxu0
    %5012 = vdwg.mxu0
    %5013 = vmatprep.subr.mxu0 0.0
    %5014 = vmatpush1.msra.mxu0 %v167
    %5015 = vmatprep.subr.mxu0 0.0
    %5016 = vmatpush1.msra.mxu0 %v166
    %5017 = vmatprep.subr.mxu0 0.0
    %5018 = vmatpush1.msra.mxu0 %v165
    %5019 = vmatprep.subr.mxu0 0.0
    %5020 = vmatpush1.msra.mxu0 %v164
    %5021 = vmatprep.subr.mxu0 0.0
    %5022 = vmatpush1.msra.mxu0 %v163
    %5023 = vmatprep.subr.mxu0 0.0
    %5024 = vmatpush1.msra.mxu0 %v162
    %5025 = vmatprep.subr.mxu0 0.0
    %5026 = vmatpush1.msra.mxu0 %v161
    %5027 = vmatprep.subr.mxu0 0.0
    %5028 = vmatpush1.msra.mxu0 %v160
    %5029 = vmatprep.subr.mxu0 0.0
    %5030 = vmatpush1.msra.mxu0 %v159
    %5031 = vmatprep.subr.mxu0 0.0
    %5032 = vmatpush1.msra.mxu0 %v158
    %5033 = vmatprep.subr.mxu0 0.0
    %5034 = vmatpush1.msra.mxu0 %v157
    %5035 = vmatprep.subr.mxu0 0.0
    %5036 = vmatpush1.msra.mxu0 %v156
    %5037 = vmatprep.subr.mxu0 0.0
    %5038 = vmatpush1.msra.mxu0 %v155
    %5039 = vmatprep.subr.mxu0 0.0
    %5040 = vmatpush1.msra.mxu0 %v154
    %5041 = vmatprep.subr.mxu0 0.0
    %5042 = vmatpush1.msra.mxu0 %v153
    %5043 = vmatprep.subr.mxu0 0.0
    %5044 = vmatpush1.msra.mxu0 %v152
    %5045 = vmatprep.subr.mxu0 0.0
    %5046 = vmatpush2.msra.mxu0 0.0
    %5047 = vmatprep.subr.mxu0 0.0
    %5048 = vmatpush2.msra.mxu0 0.0
    %5049 = vmatprep.subr.mxu0 0.0
    %5050 = vmatpush2.msra.mxu0 0.0
    %5051 = vmatprep.subr.mxu0 0.0
    %5052 = vmatpush2.msra.mxu0 0.0
    %5053 = vmatprep.subr.mxu0 0.0
    %5054 = vmatpush2.msra.mxu0 0.0
    %5055 = vmatprep.subr.mxu0 0.0
    %5056 = vmatpush2.msra.mxu0 0.0
    %5057 = vmatprep.subr.mxu0 0.0
    %5058 = vmatpush2.msra.mxu0 0.0
    %5059 = vmatprep.subr.mxu0 0.0
    %5060 = vmatpush2.msra.mxu0 0.0
    %5061 = vmatprep.subr.mxu0 0.0
    %5062 = vmatpush2.msra.mxu0 0.0
    %5063 = vmatprep.subr.mxu0 0.0
    %5064 = vmatpush2.msra.mxu0 0.0
    %5065 = vmatprep.subr.mxu0 0.0
    %5066 = vmatpush2.msra.mxu0 0.0
    %5067 = vmatprep.subr.mxu0 0.0
    %5068 = vmatpush2.msra.mxu0 0.0
    %5069 = vmatprep.subr.mxu0 0.0
    %5070 = vmatpush2.msra.mxu0 0.0
    %5071 = vmatprep.subr.mxu0 0.0
    %5072 = vmatpush2.msra.mxu0 0.0
    %5073 = vmatprep.subr.mxu0 0.0
    %5074 = vmatpush2.msra.mxu0 0.0
    %5075 = vmatprep.subr.mxu0 0.0
    %5076 = vmatpush2.msra.mxu0 0.0
    %5077 = vmatprep.mubr.f32.mxu0 0.0
    %5078 = vmatmul.mubr.f32.gmra.mxu0 %v4936
    %v5079 = vpop.f32.mrf.mxu0
    %v5080 = vadd.f32 0.0, %v5079
    %v5081 = vpop.f32.mrf.mxu0
    %5082 = vdwg.mxu0
    %v5083 = vadd.f32 %v4864, %v5080
    %v5084 = vtanh.pop %v5083
    %5085 = vmatprep.subr.mxu0 0.0
    %5086 = vmatpush1.msra.mxu0 %v184
    %5087 = vmatprep.subr.mxu0 0.0
    %5088 = vmatpush1.msra.mxu0 %v183
    %5089 = vmatprep.subr.mxu0 0.0
    %5090 = vmatpush1.msra.mxu0 %v182
    %5091 = vmatprep.subr.mxu0 0.0
    %5092 = vmatpush1.msra.mxu0 %v181
    %5093 = vmatprep.subr.mxu0 0.0
    %5094 = vmatpush1.msra.mxu0 %v180
    %5095 = vmatprep.subr.mxu0 0.0
    %5096 = vmatpush1.msra.mxu0 %v179
    %5097 = vmatprep.subr.mxu0 0.0
    %5098 = vmatpush1.msra.mxu0 %v178
    %5099 = vmatprep.subr.mxu0 0.0
    %5100 = vmatpush1.msra.mxu0 %v177
    %5101 = vmatprep.subr.mxu0 0.0
    %5102 = vmatpush1.msra.mxu0 %v176
    %5103 = vmatprep.subr.mxu0 0.0
    %5104 = vmatpush1.msra.mxu0 %v175
    %5105 = vmatprep.subr.mxu0 0.0
    %5106 = vmatpush1.msra.mxu0 %v174
    %5107 = vmatprep.subr.mxu0 0.0
    %5108 = vmatpush1.msra.mxu0 %v173
    %5109 = vmatprep.subr.mxu0 0.0
    %5110 = vmatpush1.msra.mxu0 %v172
    %5111 = vmatprep.subr.mxu0 0.0
    %5112 = vmatpush1.msra.mxu0 %v171
    %5113 = vmatprep.subr.mxu0 0.0
    %5114 = vmatpush1.msra.mxu0 %v170
    %5115 = vmatprep.subr.mxu0 0.0
    %5116 = vmatpush1.msra.mxu0 %v169
    %5117 = vmatprep.subr.mxu0 0.0
    %5118 = vmatpush2.msra.mxu0 0.0
    %5119 = vmatprep.subr.mxu0 0.0
    %5120 = vmatpush2.msra.mxu0 0.0
    %5121 = vmatprep.subr.mxu0 0.0
    %5122 = vmatpush2.msra.mxu0 0.0
    %5123 = vmatprep.subr.mxu0 0.0
    %5124 = vmatpush2.msra.mxu0 0.0
    %5125 = vmatprep.subr.mxu0 0.0
    %5126 = vmatpush2.msra.mxu0 0.0
    %5127 = vmatprep.subr.mxu0 0.0
    %5128 = vmatpush2.msra.mxu0 0.0
    %5129 = vmatprep.subr.mxu0 0.0
    %5130 = vmatpush2.msra.mxu0 0.0
    %5131 = vmatprep.subr.mxu0 0.0
    %5132 = vmatpush2.msra.mxu0 0.0
    %5133 = vmatprep.subr.mxu0 0.0
    %5134 = vmatpush2.msra.mxu0 0.0
    %5135 = vmatprep.subr.mxu0 0.0
    %5136 = vmatpush2.msra.mxu0 0.0
    %5137 = vmatprep.subr.mxu0 0.0
    %5138 = vmatpush2.msra.mxu0 0.0
    %5139 = vmatprep.subr.mxu0 0.0
    %5140 = vmatpush2.msra.mxu0 0.0
    %5141 = vmatprep.subr.mxu0 0.0
    %5142 = vmatpush2.msra.mxu0 0.0
    %5143 = vmatprep.subr.mxu0 0.0
    %5144 = vmatpush2.msra.mxu0 0.0
    %5145 = vmatprep.subr.mxu0 0.0
    %5146 = vmatpush2.msra.mxu0 0.0
    %5147 = vmatprep.subr.mxu0 0.0
    %5148 = vmatpush2.msra.mxu0 0.0
    %5149 = vmatprep.mubr.f32.mxu0 0.0
    %5150 = vmatmul.mubr.f32.gmra.mxu0 %v5084
    %v5151 = vpop.f32.mrf.mxu0
    %v5152 = vadd.f32 %v4941, %v5151
    %v5153 = vpop.f32.mrf.mxu0
    %5154 = vdwg.mxu0
    %v5155 = vmul.f32 %v5010, %v1400
    %v5156 = vsel %vm1140, %v5155, 0.0
    %5157 = vadd.xlane.f32.xlu0 %v5156
    %v5158 = vpop.xlane.xlu0 %5157
    %v5159 = vmul.f32 %v5010, %v5010
    %v5160 = vsel %vm1140, %v5159, 0.0
    %5161 = vadd.xlane.f32.xlu0 %v5160
    %v5162 = vpop.xlane.xlu0 %5161
    %v5163 = vrsqrt.pop %v5162
    %v5164 = vmul.f32 %v5162, %v5163
    %vm5165 = vcmp.eq.f32.partialorder %v5162, inf
    %v5166 = vsel %vm5165, %v5162, %v5164
    %vm5167 = vcmp.eq.f32.partialorder %v5162, 0.0
    %v5168 = vand.u32 %v5162, 2147483648
    %v5169 = vsel %vm5167, %v5168, %v5166
    %v5170 = vmul.f32 %v1400, %v1400
    %v5171 = vsel %vm1140, %v5170, 0.0
    %5172 = vadd.xlane.f32.xlu0 %v5171
    %v5173 = vpop.xlane.xlu0 %5172
    %v5174 = vrsqrt.pop %v5173
    %v5175 = vmul.f32 %v5173, %v5174
    %vm5176 = vcmp.eq.f32.partialorder %v5173, inf
    %v5177 = vsel %vm5176, %v5173, %v5175
    %vm5178 = vcmp.eq.f32.partialorder %v5173, 0.0
    %v5179 = vand.u32 %v5173, 2147483648
    %v5180 = vsel %vm5178, %v5179, %v5177
    %v5181 = vmul.f32 %v5169, %v5180
    %v5182 = vmax.f32 %v5181, 1e-08
    %v5183 = vrcp.pop %v5182
    %v5184 = vmul.f32 %v5158, %v5183
    %v5185 = vsel %vm1140, %v5184, 0.0
    %v5186 = vrot.slane %v5185, 4
    %v5187 = vadd.f32 %v5185, %v5186
    %v5188 = vrot.slane %v5187, 2
    %v5189 = vadd.f32 %v5187, %v5188
    %v5190 = vrot.slane %v5189, 1
    %v5191 = vadd.f32 %v5189, %v5190
    %v5192 = vmul.f32 %v5191, %v1148
    %v5193 = vsub.f32 0.0, %v5192
    %v5194 = vmul.f32 %v5152, %v1400
    %v5195 = vsel %vm1140, %v5194, 0.0
    %5196 = vadd.xlane.f32.xlu0 %v5195
    %v5197 = vpop.xlane.xlu0 %5196
    %v5198 = vmul.f32 %v5152, %v5152
    %v5199 = vsel %vm1140, %v5198, 0.0
    %5200 = vadd.xlane.f32.xlu0 %v5199
    %v5201 = vpop.xlane.xlu0 %5200
    %v5202 = vrsqrt.pop %v5201
    %v5203 = vmul.f32 %v5201, %v5202
    %vm5204 = vcmp.eq.f32.partialorder %v5201, inf
    %v5205 = vsel %vm5204, %v5201, %v5203
    %vm5206 = vcmp.eq.f32.partialorder %v5201, 0.0
    %v5207 = vand.u32 %v5201, 2147483648
    %v5208 = vsel %vm5206, %v5207, %v5205
    %v5209 = vmul.f32 %v5208, %v5180
    %v5210 = vmax.f32 %v5209, 1e-08
    %v5211 = vrcp.pop %v5210
    %v5212 = vmul.f32 %v5197, %v5211
    %v5213 = vsel %vm1140, %v5212, 0.0
    %v5214 = vrot.slane %v5213, 4
    %v5215 = vadd.f32 %v5213, %v5214
    %v5216 = vrot.slane %v5215, 2
    %v5217 = vadd.f32 %v5215, %v5216
    %v5218 = vrot.slane %v5217, 1
    %v5219 = vadd.f32 %v5217, %v5218
    %v5220 = vmul.f32 %v5219, %v1148
    %v5221 = vsub.f32 0.0, %v5220
    %v5222 = vadd.f32 %v5193, %v5221
    %v5223 = vmul.f32 %v5222, 0.5
    %5224 = vmatprep.subr.mxu0 0.0
    %5225 = vmatpush1.msra.mxu0 %v167
    %5226 = vmatprep.subr.mxu0 0.0
    %5227 = vmatpush1.msra.mxu0 %v166
    %5228 = vmatprep.subr.mxu0 0.0
    %5229 = vmatpush1.msra.mxu0 %v165
    %5230 = vmatprep.subr.mxu0 0.0
    %5231 = vmatpush1.msra.mxu0 %v164
    %5232 = vmatprep.subr.mxu0 0.0
    %5233 = vmatpush1.msra.mxu0 %v163
    %5234 = vmatprep.subr.mxu0 0.0
    %5235 = vmatpush1.msra.mxu0 %v162
    %5236 = vmatprep.subr.mxu0 0.0
    %5237 = vmatpush1.msra.mxu0 %v161
    %5238 = vmatprep.subr.mxu0 0.0
    %5239 = vmatpush1.msra.mxu0 %v160
    %5240 = vmatprep.subr.mxu0 0.0
    %5241 = vmatpush1.msra.mxu0 %v159
    %5242 = vmatprep.subr.mxu0 0.0
    %5243 = vmatpush1.msra.mxu0 %v158
    %5244 = vmatprep.subr.mxu0 0.0
    %5245 = vmatpush1.msra.mxu0 %v157
    %5246 = vmatprep.subr.mxu0 0.0
    %5247 = vmatpush1.msra.mxu0 %v156
    %5248 = vmatprep.subr.mxu0 0.0
    %5249 = vmatpush1.msra.mxu0 %v155
    %5250 = vmatprep.subr.mxu0 0.0
    %5251 = vmatpush1.msra.mxu0 %v154
    %5252 = vmatprep.subr.mxu0 0.0
    %5253 = vmatpush1.msra.mxu0 %v153
    %5254 = vmatprep.subr.mxu0 0.0
    %5255 = vmatpush1.msra.mxu0 %v152
    %5256 = vmatprep.subr.mxu0 0.0
    %5257 = vmatpush2.msra.mxu0 0.0
    %5258 = vmatprep.subr.mxu0 0.0
    %5259 = vmatpush2.msra.mxu0 0.0
    %5260 = vmatprep.subr.mxu0 0.0
    %5261 = vmatpush2.msra.mxu0 0.0
    %5262 = vmatprep.subr.mxu0 0.0
    %5263 = vmatpush2.msra.mxu0 0.0
    %5264 = vmatprep.subr.mxu0 0.0
    %5265 = vmatpush2.msra.mxu0 0.0
    %5266 = vmatprep.subr.mxu0 0.0
    %5267 = vmatpush2.msra.mxu0 0.0
    %5268 = vmatprep.subr.mxu0 0.0
    %5269 = vmatpush2.msra.mxu0 0.0
    %5270 = vmatprep.subr.mxu0 0.0
    %5271 = vmatpush2.msra.mxu0 0.0
    %5272 = vmatprep.subr.mxu0 0.0
    %5273 = vmatpush2.msra.mxu0 0.0
    %5274 = vmatprep.subr.mxu0 0.0
    %5275 = vmatpush2.msra.mxu0 0.0
    %5276 = vmatprep.subr.mxu0 0.0
    %5277 = vmatpush2.msra.mxu0 0.0
    %5278 = vmatprep.subr.mxu0 0.0
    %5279 = vmatpush2.msra.mxu0 0.0
    %5280 = vmatprep.subr.mxu0 0.0
    %5281 = vmatpush2.msra.mxu0 0.0
    %5282 = vmatprep.subr.mxu0 0.0
    %5283 = vmatpush2.msra.mxu0 0.0
    %5284 = vmatprep.subr.mxu0 0.0
    %5285 = vmatpush2.msra.mxu0 0.0
    %5286 = vmatprep.subr.mxu0 0.0
    %5287 = vmatpush2.msra.mxu0 0.0
    %5288 = vmatprep.mubr.f32.mxu0 0.0
    %5289 = vmatmul.mubr.f32.gmra.mxu0 %v5084
    %v5290 = vpop.f32.mrf.mxu0
    %v5291 = vadd.f32 0.0, %v5290
    %v5292 = vpop.f32.mrf.mxu0
    %5293 = vdwg.mxu0
    %v5294 = vadd.f32 %v4864, %v5291
    %v5295 = vtanh.pop %v5294
    %5296 = vmatprep.subr.mxu0 0.0
    %5297 = vmatpush1.msra.mxu0 %v184
    %5298 = vmatprep.subr.mxu0 0.0
    %5299 = vmatpush1.msra.mxu0 %v183
    %5300 = vmatprep.subr.mxu0 0.0
    %5301 = vmatpush1.msra.mxu0 %v182
    %5302 = vmatprep.subr.mxu0 0.0
    %5303 = vmatpush1.msra.mxu0 %v181
    %5304 = vmatprep.subr.mxu0 0.0
    %5305 = vmatpush1.msra.mxu0 %v180
    %5306 = vmatprep.subr.mxu0 0.0
    %5307 = vmatpush1.msra.mxu0 %v179
    %5308 = vmatprep.subr.mxu0 0.0
    %5309 = vmatpush1.msra.mxu0 %v178
    %5310 = vmatprep.subr.mxu0 0.0
    %5311 = vmatpush1.msra.mxu0 %v177
    %5312 = vmatprep.subr.mxu0 0.0
    %5313 = vmatpush1.msra.mxu0 %v176
    %5314 = vmatprep.subr.mxu0 0.0
    %5315 = vmatpush1.msra.mxu0 %v175
    %5316 = vmatprep.subr.mxu0 0.0
    %5317 = vmatpush1.msra.mxu0 %v174
    %5318 = vmatprep.subr.mxu0 0.0
    %5319 = vmatpush1.msra.mxu0 %v173
    %5320 = vmatprep.subr.mxu0 0.0
    %5321 = vmatpush1.msra.mxu0 %v172
    %5322 = vmatprep.subr.mxu0 0.0
    %5323 = vmatpush1.msra.mxu0 %v171
    %5324 = vmatprep.subr.mxu0 0.0
    %5325 = vmatpush1.msra.mxu0 %v170
    %5326 = vmatprep.subr.mxu0 0.0
    %5327 = vmatpush1.msra.mxu0 %v169
    %5328 = vmatprep.subr.mxu0 0.0
    %5329 = vmatpush2.msra.mxu0 0.0
    %5330 = vmatprep.subr.mxu0 0.0
    %5331 = vmatpush2.msra.mxu0 0.0
    %5332 = vmatprep.subr.mxu0 0.0
    %5333 = vmatpush2.msra.mxu0 0.0
    %5334 = vmatprep.subr.mxu0 0.0
    %5335 = vmatpush2.msra.mxu0 0.0
    %5336 = vmatprep.subr.mxu0 0.0
    %5337 = vmatpush2.msra.mxu0 0.0
    %5338 = vmatprep.subr.mxu0 0.0
    %5339 = vmatpush2.msra.mxu0 0.0
    %5340 = vmatprep.subr.mxu0 0.0
    %5341 = vmatpush2.msra.mxu0 0.0
    %5342 = vmatprep.subr.mxu0 0.0
    %5343 = vmatpush2.msra.mxu0 0.0
    %5344 = vmatprep.subr.mxu0 0.0
    %5345 = vmatpush2.msra.mxu0 0.0
    %5346 = vmatprep.subr.mxu0 0.0
    %5347 = vmatpush2.msra.mxu0 0.0
    %5348 = vmatprep.subr.mxu0 0.0
    %5349 = vmatpush2.msra.mxu0 0.0
    %5350 = vmatprep.subr.mxu0 0.0
    %5351 = vmatpush2.msra.mxu0 0.0
    %5352 = vmatprep.subr.mxu0 0.0
    %5353 = vmatpush2.msra.mxu0 0.0
    %5354 = vmatprep.subr.mxu0 0.0
    %5355 = vmatpush2.msra.mxu0 0.0
    %5356 = vmatprep.subr.mxu0 0.0
    %5357 = vmatpush2.msra.mxu0 0.0
    %5358 = vmatprep.subr.mxu0 0.0
    %5359 = vmatpush2.msra.mxu0 0.0
    %5360 = vmatprep.mubr.f32.mxu0 0.0
    %5361 = vmatmul.mubr.f32.gmra.mxu0 %v5295
    %v5362 = vpop.f32.mrf.mxu0
    %v5363 = vadd.f32 %v4941, %v5362
    %v5364 = vpop.f32.mrf.mxu0
    %5365 = vdwg.mxu0
    %5366 = vmatprep.subr.mxu0 0.0
    %5367 = vmatpush1.msra.mxu0 %v167
    %5368 = vmatprep.subr.mxu0 0.0
    %5369 = vmatpush1.msra.mxu0 %v166
    %5370 = vmatprep.subr.mxu0 0.0
    %5371 = vmatpush1.msra.mxu0 %v165
    %5372 = vmatprep.subr.mxu0 0.0
    %5373 = vmatpush1.msra.mxu0 %v164
    %5374 = vmatprep.subr.mxu0 0.0
    %5375 = vmatpush1.msra.mxu0 %v163
    %5376 = vmatprep.subr.mxu0 0.0
    %5377 = vmatpush1.msra.mxu0 %v162
    %5378 = vmatprep.subr.mxu0 0.0
    %5379 = vmatpush1.msra.mxu0 %v161
    %5380 = vmatprep.subr.mxu0 0.0
    %5381 = vmatpush1.msra.mxu0 %v160
    %5382 = vmatprep.subr.mxu0 0.0
    %5383 = vmatpush1.msra.mxu0 %v159
    %5384 = vmatprep.subr.mxu0 0.0
    %5385 = vmatpush1.msra.mxu0 %v158
    %5386 = vmatprep.subr.mxu0 0.0
    %5387 = vmatpush1.msra.mxu0 %v157
    %5388 = vmatprep.subr.mxu0 0.0
    %5389 = vmatpush1.msra.mxu0 %v156
    %5390 = vmatprep.subr.mxu0 0.0
    %5391 = vmatpush1.msra.mxu0 %v155
    %5392 = vmatprep.subr.mxu0 0.0
    %5393 = vmatpush1.msra.mxu0 %v154
    %5394 = vmatprep.subr.mxu0 0.0
    %5395 = vmatpush1.msra.mxu0 %v153
    %5396 = vmatprep.subr.mxu0 0.0
    %5397 = vmatpush1.msra.mxu0 %v152
    %5398 = vmatprep.subr.mxu0 0.0
    %5399 = vmatpush2.msra.mxu0 0.0
    %5400 = vmatprep.subr.mxu0 0.0
    %5401 = vmatpush2.msra.mxu0 0.0
    %5402 = vmatprep.subr.mxu0 0.0
    %5403 = vmatpush2.msra.mxu0 0.0
    %5404 = vmatprep.subr.mxu0 0.0
    %5405 = vmatpush2.msra.mxu0 0.0
    %5406 = vmatprep.subr.mxu0 0.0
    %5407 = vmatpush2.msra.mxu0 0.0
    %5408 = vmatprep.subr.mxu0 0.0
    %5409 = vmatpush2.msra.mxu0 0.0
    %5410 = vmatprep.subr.mxu0 0.0
    %5411 = vmatpush2.msra.mxu0 0.0
    %5412 = vmatprep.subr.mxu0 0.0
    %5413 = vmatpush2.msra.mxu0 0.0
    %5414 = vmatprep.subr.mxu0 0.0
    %5415 = vmatpush2.msra.mxu0 0.0
    %5416 = vmatprep.subr.mxu0 0.0
    %5417 = vmatpush2.msra.mxu0 0.0
    %5418 = vmatprep.subr.mxu0 0.0
    %5419 = vmatpush2.msra.mxu0 0.0
    %5420 = vmatprep.subr.mxu0 0.0
    %5421 = vmatpush2.msra.mxu0 0.0
    %5422 = vmatprep.subr.mxu0 0.0
    %5423 = vmatpush2.msra.mxu0 0.0
    %5424 = vmatprep.subr.mxu0 0.0
    %5425 = vmatpush2.msra.mxu0 0.0
    %5426 = vmatprep.subr.mxu0 0.0
    %5427 = vmatpush2.msra.mxu0 0.0
    %5428 = vmatprep.subr.mxu0 0.0
    %5429 = vmatpush2.msra.mxu0 0.0
    %5430 = vmatprep.mubr.f32.mxu0 0.0
    %5431 = vmatmul.mubr.f32.gmra.mxu0 %v5295
    %v5432 = vpop.f32.mrf.mxu0
    %v5433 = vadd.f32 0.0, %v5432
    %v5434 = vpop.f32.mrf.mxu0
    %5435 = vdwg.mxu0
    %v5436 = vadd.f32 %v4864, %v5433
    %v5437 = vtanh.pop %v5436
    %5438 = vmatprep.subr.mxu0 0.0
    %5439 = vmatpush1.msra.mxu0 %v184
    %5440 = vmatprep.subr.mxu0 0.0
    %5441 = vmatpush1.msra.mxu0 %v183
    %5442 = vmatprep.subr.mxu0 0.0
    %5443 = vmatpush1.msra.mxu0 %v182
    %5444 = vmatprep.subr.mxu0 0.0
    %5445 = vmatpush1.msra.mxu0 %v181
    %5446 = vmatprep.subr.mxu0 0.0
    %5447 = vmatpush1.msra.mxu0 %v180
    %5448 = vmatprep.subr.mxu0 0.0
    %5449 = vmatpush1.msra.mxu0 %v179
    %5450 = vmatprep.subr.mxu0 0.0
    %5451 = vmatpush1.msra.mxu0 %v178
    %5452 = vmatprep.subr.mxu0 0.0
    %5453 = vmatpush1.msra.mxu0 %v177
    %5454 = vmatprep.subr.mxu0 0.0
    %5455 = vmatpush1.msra.mxu0 %v176
    %5456 = vmatprep.subr.mxu0 0.0
    %5457 = vmatpush1.msra.mxu0 %v175
    %5458 = vmatprep.subr.mxu0 0.0
    %5459 = vmatpush1.msra.mxu0 %v174
    %5460 = vmatprep.subr.mxu0 0.0
    %5461 = vmatpush1.msra.mxu0 %v173
    %5462 = vmatprep.subr.mxu0 0.0
    %5463 = vmatpush1.msra.mxu0 %v172
    %5464 = vmatprep.subr.mxu0 0.0
    %5465 = vmatpush1.msra.mxu0 %v171
    %5466 = vmatprep.subr.mxu0 0.0
    %5467 = vmatpush1.msra.mxu0 %v170
    %5468 = vmatprep.subr.mxu0 0.0
    %5469 = vmatpush1.msra.mxu0 %v169
    %5470 = vmatprep.subr.mxu0 0.0
    %5471 = vmatpush2.msra.mxu0 0.0
    %5472 = vmatprep.subr.mxu0 0.0
    %5473 = vmatpush2.msra.mxu0 0.0
    %5474 = vmatprep.subr.mxu0 0.0
    %5475 = vmatpush2.msra.mxu0 0.0
    %5476 = vmatprep.subr.mxu0 0.0
    %5477 = vmatpush2.msra.mxu0 0.0
    %5478 = vmatprep.subr.mxu0 0.0
    %5479 = vmatpush2.msra.mxu0 0.0
    %5480 = vmatprep.subr.mxu0 0.0
    %5481 = vmatpush2.msra.mxu0 0.0
    %5482 = vmatprep.subr.mxu0 0.0
    %5483 = vmatpush2.msra.mxu0 0.0
    %5484 = vmatprep.subr.mxu0 0.0
    %5485 = vmatpush2.msra.mxu0 0.0
    %5486 = vmatprep.subr.mxu0 0.0
    %5487 = vmatpush2.msra.mxu0 0.0
    %5488 = vmatprep.subr.mxu0 0.0
    %5489 = vmatpush2.msra.mxu0 0.0
    %5490 = vmatprep.subr.mxu0 0.0
    %5491 = vmatpush2.msra.mxu0 0.0
    %5492 = vmatprep.subr.mxu0 0.0
    %5493 = vmatpush2.msra.mxu0 0.0
    %5494 = vmatprep.subr.mxu0 0.0
    %5495 = vmatpush2.msra.mxu0 0.0
    %5496 = vmatprep.subr.mxu0 0.0
    %5497 = vmatpush2.msra.mxu0 0.0
    %5498 = vmatprep.subr.mxu0 0.0
    %5499 = vmatpush2.msra.mxu0 0.0
    %5500 = vmatprep.subr.mxu0 0.0
    %5501 = vmatpush2.msra.mxu0 0.0
    %5502 = vmatprep.mubr.f32.mxu0 0.0
    %5503 = vmatmul.mubr.f32.gmra.mxu0 %v5437
    %v5504 = vpop.f32.mrf.mxu0
    %v5505 = vadd.f32 %v4941, %v5504
    %v5506 = vpop.f32.mrf.mxu0
    %5507 = vdwg.mxu0
    %v5508 = vmul.f32 %v5363, %v2527
    %v5509 = vsel %vm1140, %v5508, 0.0
    %5510 = vadd.xlane.f32.xlu0 %v5509
    %v5511 = vpop.xlane.xlu0 %5510
    %v5512 = vmul.f32 %v5363, %v5363
    %v5513 = vsel %vm1140, %v5512, 0.0
    %5514 = vadd.xlane.f32.xlu0 %v5513
    %v5515 = vpop.xlane.xlu0 %5514
    %v5516 = vrsqrt.pop %v5515
    %v5517 = vmul.f32 %v5515, %v5516
    %vm5518 = vcmp.eq.f32.partialorder %v5515, inf
    %v5519 = vsel %vm5518, %v5515, %v5517
    %vm5520 = vcmp.eq.f32.partialorder %v5515, 0.0
    %v5521 = vand.u32 %v5515, 2147483648
    %v5522 = vsel %vm5520, %v5521, %v5519
    %v5523 = vmul.f32 %v2527, %v2527
    %v5524 = vsel %vm1140, %v5523, 0.0
    %5525 = vadd.xlane.f32.xlu0 %v5524
    %v5526 = vpop.xlane.xlu0 %5525
    %v5527 = vrsqrt.pop %v5526
    %v5528 = vmul.f32 %v5526, %v5527
    %vm5529 = vcmp.eq.f32.partialorder %v5526, inf
    %v5530 = vsel %vm5529, %v5526, %v5528
    %vm5531 = vcmp.eq.f32.partialorder %v5526, 0.0
    %v5532 = vand.u32 %v5526, 2147483648
    %v5533 = vsel %vm5531, %v5532, %v5530
    %v5534 = vmul.f32 %v5522, %v5533
    %v5535 = vmax.f32 %v5534, 1e-08
    %v5536 = vrcp.pop %v5535
    %v5537 = vmul.f32 %v5511, %v5536
    %v5538 = vsel %vm1140, %v5537, 0.0
    %v5539 = vrot.slane %v5538, 4
    %v5540 = vadd.f32 %v5538, %v5539
    %v5541 = vrot.slane %v5540, 2
    %v5542 = vadd.f32 %v5540, %v5541
    %v5543 = vrot.slane %v5542, 1
    %v5544 = vadd.f32 %v5542, %v5543
    %v5545 = vmul.f32 %v5544, %v1148
    %v5546 = vsub.f32 0.0, %v5545
    %v5547 = vmul.f32 %v5505, %v2527
    %v5548 = vsel %vm1140, %v5547, 0.0
    %5549 = vadd.xlane.f32.xlu0 %v5548
    %v5550 = vpop.xlane.xlu0 %5549
    %v5551 = vmul.f32 %v5505, %v5505
    %v5552 = vsel %vm1140, %v5551, 0.0
    %5553 = vadd.xlane.f32.xlu0 %v5552
    %v5554 = vpop.xlane.xlu0 %5553
    %v5555 = vrsqrt.pop %v5554
    %v5556 = vmul.f32 %v5554, %v5555
    %vm5557 = vcmp.eq.f32.partialorder %v5554, inf
    %v5558 = vsel %vm5557, %v5554, %v5556
    %vm5559 = vcmp.eq.f32.partialorder %v5554, 0.0
    %v5560 = vand.u32 %v5554, 2147483648
    %v5561 = vsel %vm5559, %v5560, %v5558
    %v5562 = vmul.f32 %v5561, %v5533
    %v5563 = vmax.f32 %v5562, 1e-08
    %v5564 = vrcp.pop %v5563
    %v5565 = vmul.f32 %v5550, %v5564
    %v5566 = vsel %vm1140, %v5565, 0.0
    %v5567 = vrot.slane %v5566, 4
    %v5568 = vadd.f32 %v5566, %v5567
    %v5569 = vrot.slane %v5568, 2
    %v5570 = vadd.f32 %v5568, %v5569
    %v5571 = vrot.slane %v5570, 1
    %v5572 = vadd.f32 %v5570, %v5571
    %v5573 = vmul.f32 %v5572, %v1148
    %v5574 = vsub.f32 0.0, %v5573
    %v5575 = vadd.f32 %v5546, %v5574
    %v5576 = vmul.f32 %v5575, 0.5
    %v5577 = vadd.f32 %v5223, %v5576
    %5578 = vmatprep.subr.mxu0 0.0
    %5579 = vmatpush1.msra.mxu0 %v167
    %5580 = vmatprep.subr.mxu0 0.0
    %5581 = vmatpush1.msra.mxu0 %v166
    %5582 = vmatprep.subr.mxu0 0.0
    %5583 = vmatpush1.msra.mxu0 %v165
    %5584 = vmatprep.subr.mxu0 0.0
    %5585 = vmatpush1.msra.mxu0 %v164
    %5586 = vmatprep.subr.mxu0 0.0
    %5587 = vmatpush1.msra.mxu0 %v163
    %5588 = vmatprep.subr.mxu0 0.0
    %5589 = vmatpush1.msra.mxu0 %v162
    %5590 = vmatprep.subr.mxu0 0.0
    %5591 = vmatpush1.msra.mxu0 %v161
    %5592 = vmatprep.subr.mxu0 0.0
    %5593 = vmatpush1.msra.mxu0 %v160
    %5594 = vmatprep.subr.mxu0 0.0
    %5595 = vmatpush1.msra.mxu0 %v159
    %5596 = vmatprep.subr.mxu0 0.0
    %5597 = vmatpush1.msra.mxu0 %v158
    %5598 = vmatprep.subr.mxu0 0.0
    %5599 = vmatpush1.msra.mxu0 %v157
    %5600 = vmatprep.subr.mxu0 0.0
    %5601 = vmatpush1.msra.mxu0 %v156
    %5602 = vmatprep.subr.mxu0 0.0
    %5603 = vmatpush1.msra.mxu0 %v155
    %5604 = vmatprep.subr.mxu0 0.0
    %5605 = vmatpush1.msra.mxu0 %v154
    %5606 = vmatprep.subr.mxu0 0.0
    %5607 = vmatpush1.msra.mxu0 %v153
    %5608 = vmatprep.subr.mxu0 0.0
    %5609 = vmatpush1.msra.mxu0 %v152
    %5610 = vmatprep.subr.mxu0 0.0
    %5611 = vmatpush2.msra.mxu0 0.0
    %5612 = vmatprep.subr.mxu0 0.0
    %5613 = vmatpush2.msra.mxu0 0.0
    %5614 = vmatprep.subr.mxu0 0.0
    %5615 = vmatpush2.msra.mxu0 0.0
    %5616 = vmatprep.subr.mxu0 0.0
    %5617 = vmatpush2.msra.mxu0 0.0
    %5618 = vmatprep.subr.mxu0 0.0
    %5619 = vmatpush2.msra.mxu0 0.0
    %5620 = vmatprep.subr.mxu0 0.0
    %5621 = vmatpush2.msra.mxu0 0.0
    %5622 = vmatprep.subr.mxu0 0.0
    %5623 = vmatpush2.msra.mxu0 0.0
    %5624 = vmatprep.subr.mxu0 0.0
    %5625 = vmatpush2.msra.mxu0 0.0
    %5626 = vmatprep.subr.mxu0 0.0
    %5627 = vmatpush2.msra.mxu0 0.0
    %5628 = vmatprep.subr.mxu0 0.0
    %5629 = vmatpush2.msra.mxu0 0.0
    %5630 = vmatprep.subr.mxu0 0.0
    %5631 = vmatpush2.msra.mxu0 0.0
    %5632 = vmatprep.subr.mxu0 0.0
    %5633 = vmatpush2.msra.mxu0 0.0
    %5634 = vmatprep.subr.mxu0 0.0
    %5635 = vmatpush2.msra.mxu0 0.0
    %5636 = vmatprep.subr.mxu0 0.0
    %5637 = vmatpush2.msra.mxu0 0.0
    %5638 = vmatprep.subr.mxu0 0.0
    %5639 = vmatpush2.msra.mxu0 0.0
    %5640 = vmatprep.subr.mxu0 0.0
    %5641 = vmatpush2.msra.mxu0 0.0
    %5642 = vmatprep.mubr.f32.mxu0 0.0
    %5643 = vmatmul.mubr.f32.gmra.mxu0 %v5437
    %v5644 = vpop.f32.mrf.mxu0
    %v5645 = vadd.f32 0.0, %v5644
    %v5646 = vpop.f32.mrf.mxu0
    %5647 = vdwg.mxu0
    %v5648 = vadd.f32 %v4864, %v5645
    %v5649 = vtanh.pop %v5648
    %5650 = vmatprep.subr.mxu0 0.0
    %5651 = vmatpush1.msra.mxu0 %v184
    %5652 = vmatprep.subr.mxu0 0.0
    %5653 = vmatpush1.msra.mxu0 %v183
    %5654 = vmatprep.subr.mxu0 0.0
    %5655 = vmatpush1.msra.mxu0 %v182
    %5656 = vmatprep.subr.mxu0 0.0
    %5657 = vmatpush1.msra.mxu0 %v181
    %5658 = vmatprep.subr.mxu0 0.0
    %5659 = vmatpush1.msra.mxu0 %v180
    %5660 = vmatprep.subr.mxu0 0.0
    %5661 = vmatpush1.msra.mxu0 %v179
    %5662 = vmatprep.subr.mxu0 0.0
    %5663 = vmatpush1.msra.mxu0 %v178
    %5664 = vmatprep.subr.mxu0 0.0
    %5665 = vmatpush1.msra.mxu0 %v177
    %5666 = vmatprep.subr.mxu0 0.0
    %5667 = vmatpush1.msra.mxu0 %v176
    %5668 = vmatprep.subr.mxu0 0.0
    %5669 = vmatpush1.msra.mxu0 %v175
    %5670 = vmatprep.subr.mxu0 0.0
    %5671 = vmatpush1.msra.mxu0 %v174
    %5672 = vmatprep.subr.mxu0 0.0
    %5673 = vmatpush1.msra.mxu0 %v173
    %5674 = vmatprep.subr.mxu0 0.0
    %5675 = vmatpush1.msra.mxu0 %v172
    %5676 = vmatprep.subr.mxu0 0.0
    %5677 = vmatpush1.msra.mxu0 %v171
    %5678 = vmatprep.subr.mxu0 0.0
    %5679 = vmatpush1.msra.mxu0 %v170
    %5680 = vmatprep.subr.mxu0 0.0
    %5681 = vmatpush1.msra.mxu0 %v169
    %5682 = vmatprep.subr.mxu0 0.0
    %5683 = vmatpush2.msra.mxu0 0.0
    %5684 = vmatprep.subr.mxu0 0.0
    %5685 = vmatpush2.msra.mxu0 0.0
    %5686 = vmatprep.subr.mxu0 0.0
    %5687 = vmatpush2.msra.mxu0 0.0
    %5688 = vmatprep.subr.mxu0 0.0
    %5689 = vmatpush2.msra.mxu0 0.0
    %5690 = vmatprep.subr.mxu0 0.0
    %5691 = vmatpush2.msra.mxu0 0.0
    %5692 = vmatprep.subr.mxu0 0.0
    %5693 = vmatpush2.msra.mxu0 0.0
    %5694 = vmatprep.subr.mxu0 0.0
    %5695 = vmatpush2.msra.mxu0 0.0
    %5696 = vmatprep.subr.mxu0 0.0
    %5697 = vmatpush2.msra.mxu0 0.0
    %5698 = vmatprep.subr.mxu0 0.0
    %5699 = vmatpush2.msra.mxu0 0.0
    %5700 = vmatprep.subr.mxu0 0.0
    %5701 = vmatpush2.msra.mxu0 0.0
    %5702 = vmatprep.subr.mxu0 0.0
    %5703 = vmatpush2.msra.mxu0 0.0
    %5704 = vmatprep.subr.mxu0 0.0
    %5705 = vmatpush2.msra.mxu0 0.0
    %5706 = vmatprep.subr.mxu0 0.0
    %5707 = vmatpush2.msra.mxu0 0.0
    %5708 = vmatprep.subr.mxu0 0.0
    %5709 = vmatpush2.msra.mxu0 0.0
    %5710 = vmatprep.subr.mxu0 0.0
    %5711 = vmatpush2.msra.mxu0 0.0
    %5712 = vmatprep.subr.mxu0 0.0
    %5713 = vmatpush2.msra.mxu0 0.0
    %5714 = vmatprep.mubr.f32.mxu0 0.0
    %5715 = vmatmul.mubr.f32.gmra.mxu0 %v5649
    %v5716 = vpop.f32.mrf.mxu0
    %v5717 = vadd.f32 %v4941, %v5716
    %v5718 = vpop.f32.mrf.mxu0
    %5719 = vdwg.mxu0
    %5720 = vmatprep.subr.mxu0 0.0
    %5721 = vmatpush1.msra.mxu0 %v167
    %5722 = vmatprep.subr.mxu0 0.0
    %5723 = vmatpush1.msra.mxu0 %v166
    %5724 = vmatprep.subr.mxu0 0.0
    %5725 = vmatpush1.msra.mxu0 %v165
    %5726 = vmatprep.subr.mxu0 0.0
    %5727 = vmatpush1.msra.mxu0 %v164
    %5728 = vmatprep.subr.mxu0 0.0
    %5729 = vmatpush1.msra.mxu0 %v163
    %5730 = vmatprep.subr.mxu0 0.0
    %5731 = vmatpush1.msra.mxu0 %v162
    %5732 = vmatprep.subr.mxu0 0.0
    %5733 = vmatpush1.msra.mxu0 %v161
    %5734 = vmatprep.subr.mxu0 0.0
    %5735 = vmatpush1.msra.mxu0 %v160
    %5736 = vmatprep.subr.mxu0 0.0
    %5737 = vmatpush1.msra.mxu0 %v159
    %5738 = vmatprep.subr.mxu0 0.0
    %5739 = vmatpush1.msra.mxu0 %v158
    %5740 = vmatprep.subr.mxu0 0.0
    %5741 = vmatpush1.msra.mxu0 %v157
    %5742 = vmatprep.subr.mxu0 0.0
    %5743 = vmatpush1.msra.mxu0 %v156
    %5744 = vmatprep.subr.mxu0 0.0
    %5745 = vmatpush1.msra.mxu0 %v155
    %5746 = vmatprep.subr.mxu0 0.0
    %5747 = vmatpush1.msra.mxu0 %v154
    %5748 = vmatprep.subr.mxu0 0.0
    %5749 = vmatpush1.msra.mxu0 %v153
    %5750 = vmatprep.subr.mxu0 0.0
    %5751 = vmatpush1.msra.mxu0 %v152
    %5752 = vmatprep.subr.mxu0 0.0
    %5753 = vmatpush2.msra.mxu0 0.0
    %5754 = vmatprep.subr.mxu0 0.0
    %5755 = vmatpush2.msra.mxu0 0.0
    %5756 = vmatprep.subr.mxu0 0.0
    %5757 = vmatpush2.msra.mxu0 0.0
    %5758 = vmatprep.subr.mxu0 0.0
    %5759 = vmatpush2.msra.mxu0 0.0
    %5760 = vmatprep.subr.mxu0 0.0
    %5761 = vmatpush2.msra.mxu0 0.0
    %5762 = vmatprep.subr.mxu0 0.0
    %5763 = vmatpush2.msra.mxu0 0.0
    %5764 = vmatprep.subr.mxu0 0.0
    %5765 = vmatpush2.msra.mxu0 0.0
    %5766 = vmatprep.subr.mxu0 0.0
    %5767 = vmatpush2.msra.mxu0 0.0
    %5768 = vmatprep.subr.mxu0 0.0
    %5769 = vmatpush2.msra.mxu0 0.0
    %5770 = vmatprep.subr.mxu0 0.0
    %5771 = vmatpush2.msra.mxu0 0.0
    %5772 = vmatprep.subr.mxu0 0.0
    %5773 = vmatpush2.msra.mxu0 0.0
    %5774 = vmatprep.subr.mxu0 0.0
    %5775 = vmatpush2.msra.mxu0 0.0
    %5776 = vmatprep.subr.mxu0 0.0
    %5777 = vmatpush2.msra.mxu0 0.0
    %5778 = vmatprep.subr.mxu0 0.0
    %5779 = vmatpush2.msra.mxu0 0.0
    %5780 = vmatprep.subr.mxu0 0.0
    %5781 = vmatpush2.msra.mxu0 0.0
    %5782 = vmatprep.subr.mxu0 0.0
    %5783 = vmatpush2.msra.mxu0 0.0
    %5784 = vmatprep.mubr.f32.mxu0 0.0
    %5785 = vmatmul.mubr.f32.gmra.mxu0 %v5649
    %v5786 = vpop.f32.mrf.mxu0
    %v5787 = vadd.f32 0.0, %v5786
    %v5788 = vpop.f32.mrf.mxu0
    %5789 = vdwg.mxu0
    %v5790 = vadd.f32 %v4864, %v5787
    %v5791 = vtanh.pop %v5790
    %5792 = vmatprep.subr.mxu0 0.0
    %5793 = vmatpush1.msra.mxu0 %v184
    %5794 = vmatprep.subr.mxu0 0.0
    %5795 = vmatpush1.msra.mxu0 %v183
    %5796 = vmatprep.subr.mxu0 0.0
    %5797 = vmatpush1.msra.mxu0 %v182
    %5798 = vmatprep.subr.mxu0 0.0
    %5799 = vmatpush1.msra.mxu0 %v181
    %5800 = vmatprep.subr.mxu0 0.0
    %5801 = vmatpush1.msra.mxu0 %v180
    %5802 = vmatprep.subr.mxu0 0.0
    %5803 = vmatpush1.msra.mxu0 %v179
    %5804 = vmatprep.subr.mxu0 0.0
    %5805 = vmatpush1.msra.mxu0 %v178
    %5806 = vmatprep.subr.mxu0 0.0
    %5807 = vmatpush1.msra.mxu0 %v177
    %5808 = vmatprep.subr.mxu0 0.0
    %5809 = vmatpush1.msra.mxu0 %v176
    %5810 = vmatprep.subr.mxu0 0.0
    %5811 = vmatpush1.msra.mxu0 %v175
    %5812 = vmatprep.subr.mxu0 0.0
    %5813 = vmatpush1.msra.mxu0 %v174
    %5814 = vmatprep.subr.mxu0 0.0
    %5815 = vmatpush1.msra.mxu0 %v173
    %5816 = vmatprep.subr.mxu0 0.0
    %5817 = vmatpush1.msra.mxu0 %v172
    %5818 = vmatprep.subr.mxu0 0.0
    %5819 = vmatpush1.msra.mxu0 %v171
    %5820 = vmatprep.subr.mxu0 0.0
    %5821 = vmatpush1.msra.mxu0 %v170
    %5822 = vmatprep.subr.mxu0 0.0
    %5823 = vmatpush1.msra.mxu0 %v169
    %5824 = vmatprep.subr.mxu0 0.0
    %5825 = vmatpush2.msra.mxu0 0.0
    %5826 = vmatprep.subr.mxu0 0.0
    %5827 = vmatpush2.msra.mxu0 0.0
    %5828 = vmatprep.subr.mxu0 0.0
    %5829 = vmatpush2.msra.mxu0 0.0
    %5830 = vmatprep.subr.mxu0 0.0
    %5831 = vmatpush2.msra.mxu0 0.0
    %5832 = vmatprep.subr.mxu0 0.0
    %5833 = vmatpush2.msra.mxu0 0.0
    %5834 = vmatprep.subr.mxu0 0.0
    %5835 = vmatpush2.msra.mxu0 0.0
    %5836 = vmatprep.subr.mxu0 0.0
    %5837 = vmatpush2.msra.mxu0 0.0
    %5838 = vmatprep.subr.mxu0 0.0
    %5839 = vmatpush2.msra.mxu0 0.0
    %5840 = vmatprep.subr.mxu0 0.0
    %5841 = vmatpush2.msra.mxu0 0.0
    %5842 = vmatprep.subr.mxu0 0.0
    %5843 = vmatpush2.msra.mxu0 0.0
    %5844 = vmatprep.subr.mxu0 0.0
    %5845 = vmatpush2.msra.mxu0 0.0
    %5846 = vmatprep.subr.mxu0 0.0
    %5847 = vmatpush2.msra.mxu0 0.0
    %5848 = vmatprep.subr.mxu0 0.0
    %5849 = vmatpush2.msra.mxu0 0.0
    %5850 = vmatprep.subr.mxu0 0.0
    %5851 = vmatpush2.msra.mxu0 0.0
    %5852 = vmatprep.subr.mxu0 0.0
    %5853 = vmatpush2.msra.mxu0 0.0
    %5854 = vmatprep.subr.mxu0 0.0
    %5855 = vmatpush2.msra.mxu0 0.0
    %5856 = vmatprep.mubr.f32.mxu0 0.0
    %5857 = vmatmul.mubr.f32.gmra.mxu0 %v5791
    %v5858 = vpop.f32.mrf.mxu0
    %v5859 = vadd.f32 %v4941, %v5858
    %v5860 = vpop.f32.mrf.mxu0
    %5861 = vdwg.mxu0
    %v5862 = vmul.f32 %v5717, %v3654
    %v5863 = vsel %vm1140, %v5862, 0.0
    %5864 = vadd.xlane.f32.xlu0 %v5863
    %v5865 = vpop.xlane.xlu0 %5864
    %v5866 = vmul.f32 %v5717, %v5717
    %v5867 = vsel %vm1140, %v5866, 0.0
    %5868 = vadd.xlane.f32.xlu0 %v5867
    %v5869 = vpop.xlane.xlu0 %5868
    %v5870 = vrsqrt.pop %v5869
    %v5871 = vmul.f32 %v5869, %v5870
    %vm5872 = vcmp.eq.f32.partialorder %v5869, inf
    %v5873 = vsel %vm5872, %v5869, %v5871
    %vm5874 = vcmp.eq.f32.partialorder %v5869, 0.0
    %v5875 = vand.u32 %v5869, 2147483648
    %v5876 = vsel %vm5874, %v5875, %v5873
    %v5877 = vmul.f32 %v3654, %v3654
    %v5878 = vsel %vm1140, %v5877, 0.0
    %5879 = vadd.xlane.f32.xlu0 %v5878
    %v5880 = vpop.xlane.xlu0 %5879
    %v5881 = vrsqrt.pop %v5880
    %v5882 = vmul.f32 %v5880, %v5881
    %vm5883 = vcmp.eq.f32.partialorder %v5880, inf
    %v5884 = vsel %vm5883, %v5880, %v5882
    %vm5885 = vcmp.eq.f32.partialorder %v5880, 0.0
    %v5886 = vand.u32 %v5880, 2147483648
    %v5887 = vsel %vm5885, %v5886, %v5884
    %v5888 = vmul.f32 %v5876, %v5887
    %v5889 = vmax.f32 %v5888, 1e-08
    %v5890 = vrcp.pop %v5889
    %v5891 = vmul.f32 %v5865, %v5890
    %v5892 = vsel %vm1140, %v5891, 0.0
    %v5893 = vrot.slane %v5892, 4
    %v5894 = vadd.f32 %v5892, %v5893
    %v5895 = vrot.slane %v5894, 2
    %v5896 = vadd.f32 %v5894, %v5895
    %v5897 = vrot.slane %v5896, 1
    %v5898 = vadd.f32 %v5896, %v5897
    %v5899 = vmul.f32 %v5898, %v1148
    %v5900 = vsub.f32 0.0, %v5899
    %v5901 = vmul.f32 %v5859, %v3654
    %v5902 = vsel %vm1140, %v5901, 0.0
    %5903 = vadd.xlane.f32.xlu0 %v5902
    %v5904 = vpop.xlane.xlu0 %5903
    %v5905 = vmul.f32 %v5859, %v5859
    %v5906 = vsel %vm1140, %v5905, 0.0
    %5907 = vadd.xlane.f32.xlu0 %v5906
    %v5908 = vpop.xlane.xlu0 %5907
    %v5909 = vrsqrt.pop %v5908
    %v5910 = vmul.f32 %v5908, %v5909
    %vm5911 = vcmp.eq.f32.partialorder %v5908, inf
    %v5912 = vsel %vm5911, %v5908, %v5910
    %vm5913 = vcmp.eq.f32.partialorder %v5908, 0.0
    %v5914 = vand.u32 %v5908, 2147483648
    %v5915 = vsel %vm5913, %v5914, %v5912
    %v5916 = vmul.f32 %v5915, %v5887
    %v5917 = vmax.f32 %v5916, 1e-08
    %v5918 = vrcp.pop %v5917
    %v5919 = vmul.f32 %v5904, %v5918
    %v5920 = vsel %vm1140, %v5919, 0.0
    %v5921 = vrot.slane %v5920, 4
    %v5922 = vadd.f32 %v5920, %v5921
    %v5923 = vrot.slane %v5922, 2
    %v5924 = vadd.f32 %v5922, %v5923
    %v5925 = vrot.slane %v5924, 1
    %v5926 = vadd.f32 %v5924, %v5925
    %v5927 = vmul.f32 %v5926, %v1148
    %v5928 = vsub.f32 0.0, %v5927
    %v5929 = vadd.f32 %v5900, %v5928
    %v5930 = vmul.f32 %v5929, 0.5
    %v5931 = vadd.f32 %v5577, %v5930
    %5932 = vmatprep.subr.mxu0 0.0
    %5933 = vmatpush1.msra.mxu0 %v167
    %5934 = vmatprep.subr.mxu0 0.0
    %5935 = vmatpush1.msra.mxu0 %v166
    %5936 = vmatprep.subr.mxu0 0.0
    %5937 = vmatpush1.msra.mxu0 %v165
    %5938 = vmatprep.subr.mxu0 0.0
    %5939 = vmatpush1.msra.mxu0 %v164
    %5940 = vmatprep.subr.mxu0 0.0
    %5941 = vmatpush1.msra.mxu0 %v163
    %5942 = vmatprep.subr.mxu0 0.0
    %5943 = vmatpush1.msra.mxu0 %v162
    %5944 = vmatprep.subr.mxu0 0.0
    %5945 = vmatpush1.msra.mxu0 %v161
    %5946 = vmatprep.subr.mxu0 0.0
    %5947 = vmatpush1.msra.mxu0 %v160
    %5948 = vmatprep.subr.mxu0 0.0
    %5949 = vmatpush1.msra.mxu0 %v159
    %5950 = vmatprep.subr.mxu0 0.0
    %5951 = vmatpush1.msra.mxu0 %v158
    %5952 = vmatprep.subr.mxu0 0.0
    %5953 = vmatpush1.msra.mxu0 %v157
    %5954 = vmatprep.subr.mxu0 0.0
    %5955 = vmatpush1.msra.mxu0 %v156
    %5956 = vmatprep.subr.mxu0 0.0
    %5957 = vmatpush1.msra.mxu0 %v155
    %5958 = vmatprep.subr.mxu0 0.0
    %5959 = vmatpush1.msra.mxu0 %v154
    %5960 = vmatprep.subr.mxu0 0.0
    %5961 = vmatpush1.msra.mxu0 %v153
    %5962 = vmatprep.subr.mxu0 0.0
    %5963 = vmatpush1.msra.mxu0 %v152
    %5964 = vmatprep.subr.mxu0 0.0
    %5965 = vmatpush2.msra.mxu0 0.0
    %5966 = vmatprep.subr.mxu0 0.0
    %5967 = vmatpush2.msra.mxu0 0.0
    %5968 = vmatprep.subr.mxu0 0.0
    %5969 = vmatpush2.msra.mxu0 0.0
    %5970 = vmatprep.subr.mxu0 0.0
    %5971 = vmatpush2.msra.mxu0 0.0
    %5972 = vmatprep.subr.mxu0 0.0
    %5973 = vmatpush2.msra.mxu0 0.0
    %5974 = vmatprep.subr.mxu0 0.0
    %5975 = vmatpush2.msra.mxu0 0.0
    %5976 = vmatprep.subr.mxu0 0.0
    %5977 = vmatpush2.msra.mxu0 0.0
    %5978 = vmatprep.subr.mxu0 0.0
    %5979 = vmatpush2.msra.mxu0 0.0
    %5980 = vmatprep.subr.mxu0 0.0
    %5981 = vmatpush2.msra.mxu0 0.0
    %5982 = vmatprep.subr.mxu0 0.0
    %5983 = vmatpush2.msra.mxu0 0.0
    %5984 = vmatprep.subr.mxu0 0.0
    %5985 = vmatpush2.msra.mxu0 0.0
    %5986 = vmatprep.subr.mxu0 0.0
    %5987 = vmatpush2.msra.mxu0 0.0
    %5988 = vmatprep.subr.mxu0 0.0
    %5989 = vmatpush2.msra.mxu0 0.0
    %5990 = vmatprep.subr.mxu0 0.0
    %5991 = vmatpush2.msra.mxu0 0.0
    %5992 = vmatprep.subr.mxu0 0.0
    %5993 = vmatpush2.msra.mxu0 0.0
    %5994 = vmatprep.subr.mxu0 0.0
    %5995 = vmatpush2.msra.mxu0 0.0
    %5996 = vmatprep.mubr.f32.mxu0 0.0
    %5997 = vmatmul.mubr.f32.gmra.mxu0 %v5791
    %v5998 = vpop.f32.mrf.mxu0
    %v5999 = vadd.f32 0.0, %v5998
    %v6000 = vpop.f32.mrf.mxu0
    %6001 = vdwg.mxu0
    %v6002 = vadd.f32 %v4864, %v5999
    %v6003 = vtanh.pop %v6002
    %6004 = vmatprep.subr.mxu0 0.0
    %6005 = vmatpush1.msra.mxu0 %v184
    %6006 = vmatprep.subr.mxu0 0.0
    %6007 = vmatpush1.msra.mxu0 %v183
    %6008 = vmatprep.subr.mxu0 0.0
    %6009 = vmatpush1.msra.mxu0 %v182
    %6010 = vmatprep.subr.mxu0 0.0
    %6011 = vmatpush1.msra.mxu0 %v181
    %6012 = vmatprep.subr.mxu0 0.0
    %6013 = vmatpush1.msra.mxu0 %v180
    %6014 = vmatprep.subr.mxu0 0.0
    %6015 = vmatpush1.msra.mxu0 %v179
    %6016 = vmatprep.subr.mxu0 0.0
    %6017 = vmatpush1.msra.mxu0 %v178
    %6018 = vmatprep.subr.mxu0 0.0
    %6019 = vmatpush1.msra.mxu0 %v177
    %6020 = vmatprep.subr.mxu0 0.0
    %6021 = vmatpush1.msra.mxu0 %v176
    %6022 = vmatprep.subr.mxu0 0.0
    %6023 = vmatpush1.msra.mxu0 %v175
    %6024 = vmatprep.subr.mxu0 0.0
    %6025 = vmatpush1.msra.mxu0 %v174
    %6026 = vmatprep.subr.mxu0 0.0
    %6027 = vmatpush1.msra.mxu0 %v173
    %6028 = vmatprep.subr.mxu0 0.0
    %6029 = vmatpush1.msra.mxu0 %v172
    %6030 = vmatprep.subr.mxu0 0.0
    %6031 = vmatpush1.msra.mxu0 %v171
    %6032 = vmatprep.subr.mxu0 0.0
    %6033 = vmatpush1.msra.mxu0 %v170
    %6034 = vmatprep.subr.mxu0 0.0
    %6035 = vmatpush1.msra.mxu0 %v169
    %6036 = vmatprep.subr.mxu0 0.0
    %6037 = vmatpush2.msra.mxu0 0.0
    %6038 = vmatprep.subr.mxu0 0.0
    %6039 = vmatpush2.msra.mxu0 0.0
    %6040 = vmatprep.subr.mxu0 0.0
    %6041 = vmatpush2.msra.mxu0 0.0
    %6042 = vmatprep.subr.mxu0 0.0
    %6043 = vmatpush2.msra.mxu0 0.0
    %6044 = vmatprep.subr.mxu0 0.0
    %6045 = vmatpush2.msra.mxu0 0.0
    %6046 = vmatprep.subr.mxu0 0.0
    %6047 = vmatpush2.msra.mxu0 0.0
    %6048 = vmatprep.subr.mxu0 0.0
    %6049 = vmatpush2.msra.mxu0 0.0
    %6050 = vmatprep.subr.mxu0 0.0
    %6051 = vmatpush2.msra.mxu0 0.0
    %6052 = vmatprep.subr.mxu0 0.0
    %6053 = vmatpush2.msra.mxu0 0.0
    %6054 = vmatprep.subr.mxu0 0.0
    %6055 = vmatpush2.msra.mxu0 0.0
    %6056 = vmatprep.subr.mxu0 0.0
    %6057 = vmatpush2.msra.mxu0 0.0
    %6058 = vmatprep.subr.mxu0 0.0
    %6059 = vmatpush2.msra.mxu0 0.0
    %6060 = vmatprep.subr.mxu0 0.0
    %6061 = vmatpush2.msra.mxu0 0.0
    %6062 = vmatprep.subr.mxu0 0.0
    %6063 = vmatpush2.msra.mxu0 0.0
    %6064 = vmatprep.subr.mxu0 0.0
    %6065 = vmatpush2.msra.mxu0 0.0
    %6066 = vmatprep.subr.mxu0 0.0
    %6067 = vmatpush2.msra.mxu0 0.0
    %6068 = vmatprep.mubr.f32.mxu0 0.0
    %6069 = vmatmul.mubr.f32.gmra.mxu0 %v6003
    %v6070 = vpop.f32.mrf.mxu0
    %v6071 = vadd.f32 %v4941, %v6070
    %v6072 = vpop.f32.mrf.mxu0
    %6073 = vdwg.mxu0
    %6074 = vmatprep.subr.mxu0 0.0
    %6075 = vmatpush1.msra.mxu0 %v167
    %6076 = vmatprep.subr.mxu0 0.0
    %6077 = vmatpush1.msra.mxu0 %v166
    %6078 = vmatprep.subr.mxu0 0.0
    %6079 = vmatpush1.msra.mxu0 %v165
    %6080 = vmatprep.subr.mxu0 0.0
    %6081 = vmatpush1.msra.mxu0 %v164
    %6082 = vmatprep.subr.mxu0 0.0
    %6083 = vmatpush1.msra.mxu0 %v163
    %6084 = vmatprep.subr.mxu0 0.0
    %6085 = vmatpush1.msra.mxu0 %v162
    %6086 = vmatprep.subr.mxu0 0.0
    %6087 = vmatpush1.msra.mxu0 %v161
    %6088 = vmatprep.subr.mxu0 0.0
    %6089 = vmatpush1.msra.mxu0 %v160
    %6090 = vmatprep.subr.mxu0 0.0
    %6091 = vmatpush1.msra.mxu0 %v159
    %6092 = vmatprep.subr.mxu0 0.0
    %6093 = vmatpush1.msra.mxu0 %v158
    %6094 = vmatprep.subr.mxu0 0.0
    %6095 = vmatpush1.msra.mxu0 %v157
    %6096 = vmatprep.subr.mxu0 0.0
    %6097 = vmatpush1.msra.mxu0 %v156
    %6098 = vmatprep.subr.mxu0 0.0
    %6099 = vmatpush1.msra.mxu0 %v155
    %6100 = vmatprep.subr.mxu0 0.0
    %6101 = vmatpush1.msra.mxu0 %v154
    %6102 = vmatprep.subr.mxu0 0.0
    %6103 = vmatpush1.msra.mxu0 %v153
    %6104 = vmatprep.subr.mxu0 0.0
    %6105 = vmatpush1.msra.mxu0 %v152
    %6106 = vmatprep.subr.mxu0 0.0
    %6107 = vmatpush2.msra.mxu0 0.0
    %6108 = vmatprep.subr.mxu0 0.0
    %6109 = vmatpush2.msra.mxu0 0.0
    %6110 = vmatprep.subr.mxu0 0.0
    %6111 = vmatpush2.msra.mxu0 0.0
    %6112 = vmatprep.subr.mxu0 0.0
    %6113 = vmatpush2.msra.mxu0 0.0
    %6114 = vmatprep.subr.mxu0 0.0
    %6115 = vmatpush2.msra.mxu0 0.0
    %6116 = vmatprep.subr.mxu0 0.0
    %6117 = vmatpush2.msra.mxu0 0.0
    %6118 = vmatprep.subr.mxu0 0.0
    %6119 = vmatpush2.msra.mxu0 0.0
    %6120 = vmatprep.subr.mxu0 0.0
    %6121 = vmatpush2.msra.mxu0 0.0
    %6122 = vmatprep.subr.mxu0 0.0
    %6123 = vmatpush2.msra.mxu0 0.0
    %6124 = vmatprep.subr.mxu0 0.0
    %6125 = vmatpush2.msra.mxu0 0.0
    %6126 = vmatprep.subr.mxu0 0.0
    %6127 = vmatpush2.msra.mxu0 0.0
    %6128 = vmatprep.subr.mxu0 0.0
    %6129 = vmatpush2.msra.mxu0 0.0
    %6130 = vmatprep.subr.mxu0 0.0
    %6131 = vmatpush2.msra.mxu0 0.0
    %6132 = vmatprep.subr.mxu0 0.0
    %6133 = vmatpush2.msra.mxu0 0.0
    %6134 = vmatprep.subr.mxu0 0.0
    %6135 = vmatpush2.msra.mxu0 0.0
    %6136 = vmatprep.subr.mxu0 0.0
    %6137 = vmatpush2.msra.mxu0 0.0
    %6138 = vmatprep.mubr.f32.mxu0 0.0
    %6139 = vmatmul.mubr.f32.gmra.mxu0 %v6003
    %v6140 = vpop.f32.mrf.mxu0
    %v6141 = vadd.f32 0.0, %v6140
    %v6142 = vpop.f32.mrf.mxu0
    %6143 = vdwg.mxu0
    %v6144 = vadd.f32 %v4864, %v6141
    %v6145 = vtanh.pop %v6144
    %6146 = vmatprep.subr.mxu0 0.0
    %6147 = vmatpush1.msra.mxu0 %v184
    %6148 = vmatprep.subr.mxu0 0.0
    %6149 = vmatpush1.msra.mxu0 %v183
    %6150 = vmatprep.subr.mxu0 0.0
    %6151 = vmatpush1.msra.mxu0 %v182
    %6152 = vmatprep.subr.mxu0 0.0
    %6153 = vmatpush1.msra.mxu0 %v181
    %6154 = vmatprep.subr.mxu0 0.0
    %6155 = vmatpush1.msra.mxu0 %v180
    %6156 = vmatprep.subr.mxu0 0.0
    %6157 = vmatpush1.msra.mxu0 %v179
    %6158 = vmatprep.subr.mxu0 0.0
    %6159 = vmatpush1.msra.mxu0 %v178
    %6160 = vmatprep.subr.mxu0 0.0
    %6161 = vmatpush1.msra.mxu0 %v177
    %6162 = vmatprep.subr.mxu0 0.0
    %6163 = vmatpush1.msra.mxu0 %v176
    %6164 = vmatprep.subr.mxu0 0.0
    %6165 = vmatpush1.msra.mxu0 %v175
    %6166 = vmatprep.subr.mxu0 0.0
    %6167 = vmatpush1.msra.mxu0 %v174
    %6168 = vmatprep.subr.mxu0 0.0
    %6169 = vmatpush1.msra.mxu0 %v173
    %6170 = vmatprep.subr.mxu0 0.0
    %6171 = vmatpush1.msra.mxu0 %v172
    %6172 = vmatprep.subr.mxu0 0.0
    %6173 = vmatpush1.msra.mxu0 %v171
    %6174 = vmatprep.subr.mxu0 0.0
    %6175 = vmatpush1.msra.mxu0 %v170
    %6176 = vmatprep.subr.mxu0 0.0
    %6177 = vmatpush1.msra.mxu0 %v169
    %6178 = vmatprep.subr.mxu0 0.0
    %6179 = vmatpush2.msra.mxu0 0.0
    %6180 = vmatprep.subr.mxu0 0.0
    %6181 = vmatpush2.msra.mxu0 0.0
    %6182 = vmatprep.subr.mxu0 0.0
    %6183 = vmatpush2.msra.mxu0 0.0
    %6184 = vmatprep.subr.mxu0 0.0
    %6185 = vmatpush2.msra.mxu0 0.0
    %6186 = vmatprep.subr.mxu0 0.0
    %6187 = vmatpush2.msra.mxu0 0.0
    %6188 = vmatprep.subr.mxu0 0.0
    %6189 = vmatpush2.msra.mxu0 0.0
    %6190 = vmatprep.subr.mxu0 0.0
    %6191 = vmatpush2.msra.mxu0 0.0
    %6192 = vmatprep.subr.mxu0 0.0
    %6193 = vmatpush2.msra.mxu0 0.0
    %6194 = vmatprep.subr.mxu0 0.0
    %6195 = vmatpush2.msra.mxu0 0.0
    %6196 = vmatprep.subr.mxu0 0.0
    %6197 = vmatpush2.msra.mxu0 0.0
    %6198 = vmatprep.subr.mxu0 0.0
    %6199 = vmatpush2.msra.mxu0 0.0
    %6200 = vmatprep.subr.mxu0 0.0
    %6201 = vmatpush2.msra.mxu0 0.0
    %6202 = vmatprep.subr.mxu0 0.0
    %6203 = vmatpush2.msra.mxu0 0.0
    %6204 = vmatprep.subr.mxu0 0.0
    %6205 = vmatpush2.msra.mxu0 0.0
    %6206 = vmatprep.subr.mxu0 0.0
    %6207 = vmatpush2.msra.mxu0 0.0
    %6208 = vmatprep.subr.mxu0 0.0
    %6209 = vmatpush2.msra.mxu0 0.0
    %6210 = vmatprep.mubr.f32.mxu0 0.0
    %6211 = vmatmul.mubr.f32.gmra.mxu0 %v6145
    %v6212 = vpop.f32.mrf.mxu0
    %v6213 = vadd.f32 %v4941, %v6212
    %v6214 = vpop.f32.mrf.mxu0
    %6215 = vdwg.mxu0
    %v6216 = vmul.f32 %v6071, %v4781
    %v6217 = vsel %vm1140, %v6216, 0.0
    %6218 = vadd.xlane.f32.xlu0 %v6217
    %v6219 = vpop.xlane.xlu0 %6218
    %v6220 = vmul.f32 %v6071, %v6071
    %v6221 = vsel %vm1140, %v6220, 0.0
    %6222 = vadd.xlane.f32.xlu0 %v6221
    %v6223 = vpop.xlane.xlu0 %6222
    %v6224 = vrsqrt.pop %v6223
    %v6225 = vmul.f32 %v6223, %v6224
    %vm6226 = vcmp.eq.f32.partialorder %v6223, inf
    %v6227 = vsel %vm6226, %v6223, %v6225
    %vm6228 = vcmp.eq.f32.partialorder %v6223, 0.0
    %v6229 = vand.u32 %v6223, 2147483648
    %v6230 = vsel %vm6228, %v6229, %v6227
    %v6231 = vmul.f32 %v4781, %v4781
    %v6232 = vsel %vm1140, %v6231, 0.0
    %6233 = vadd.xlane.f32.xlu0 %v6232
    %v6234 = vpop.xlane.xlu0 %6233
    %v6235 = vrsqrt.pop %v6234
    %v6236 = vmul.f32 %v6234, %v6235
    %vm6237 = vcmp.eq.f32.partialorder %v6234, inf
    %v6238 = vsel %vm6237, %v6234, %v6236
    %vm6239 = vcmp.eq.f32.partialorder %v6234, 0.0
    %v6240 = vand.u32 %v6234, 2147483648
    %v6241 = vsel %vm6239, %v6240, %v6238
    %v6242 = vmul.f32 %v6230, %v6241
    %v6243 = vmax.f32 %v6242, 1e-08
    %v6244 = vrcp.pop %v6243
    %v6245 = vmul.f32 %v6219, %v6244
    %v6246 = vsel %vm1140, %v6245, 0.0
    %v6247 = vrot.slane %v6246, 4
    %v6248 = vadd.f32 %v6246, %v6247
    %v6249 = vrot.slane %v6248, 2
    %v6250 = vadd.f32 %v6248, %v6249
    %v6251 = vrot.slane %v6250, 1
    %v6252 = vadd.f32 %v6250, %v6251
    %v6253 = vmul.f32 %v6252, %v1148
    %v6254 = vsub.f32 0.0, %v6253
    %v6255 = vmul.f32 %v6213, %v4781
    %v6256 = vsel %vm1140, %v6255, 0.0
    %6257 = vadd.xlane.f32.xlu0 %v6256
    %v6258 = vpop.xlane.xlu0 %6257
    %v6259 = vmul.f32 %v6213, %v6213
    %v6260 = vsel %vm1140, %v6259, 0.0
    %6261 = vadd.xlane.f32.xlu0 %v6260
    %v6262 = vpop.xlane.xlu0 %6261
    %v6263 = vrsqrt.pop %v6262
    %v6264 = vmul.f32 %v6262, %v6263
    %vm6265 = vcmp.eq.f32.partialorder %v6262, inf
    %v6266 = vsel %vm6265, %v6262, %v6264
    %vm6267 = vcmp.eq.f32.partialorder %v6262, 0.0
    %v6268 = vand.u32 %v6262, 2147483648
    %v6269 = vsel %vm6267, %v6268, %v6266
    %v6270 = vmul.f32 %v6269, %v6241
    %v6271 = vmax.f32 %v6270, 1e-08
    %v6272 = vrcp.pop %v6271
    %v6273 = vmul.f32 %v6258, %v6272
    %v6274 = vsel %vm1140, %v6273, 0.0
    %v6275 = vrot.slane %v6274, 4
    %v6276 = vadd.f32 %v6274, %v6275
    %v6277 = vrot.slane %v6276, 2
    %v6278 = vadd.f32 %v6276, %v6277
    %v6279 = vrot.slane %v6278, 1
    %v6280 = vadd.f32 %v6278, %v6279
    %v6281 = vmul.f32 %v6280, %v1148
    %v6282 = vsub.f32 0.0, %v6281
    %v6283 = vadd.f32 %v6254, %v6282
    %v6284 = vmul.f32 %v6283, 0.5
    %v6285 = vadd.f32 %v5931, %v6284
    %v6286 = vrcp.pop 4.0
    %v6287 = vmul.f32 %v6285, %v6286
    %vm6288 = vcmask 0
    %6289 = vst.msk [vmem:[#allocation2] sm:$0x1] %vm6288, %v6287
    // Predicated region
    $region90: #{hipposiam_forward.1} parent=1 // pred_check
      _
    $region91: #{hipposiam_forward.1} parent=1 // pred_check_branch
      %6291 = sbr.rel (0) target = $region93
    $region92: #{hipposiam_forward.1} parent=1 // pred_region
      %s6293 = ssub.s32 16, 16
      %6294 = vsyncadd [#allocation3], %s6293
      %s6296 = sshll.u32 [#allocation2], 4
      %s6297 = int_to_ptr.vmem [resolvable:$true] %s6296
      %6299 = dma.vmem_to_hbm [thread:$0]  %s6297, 16, %s22, [#allocation3]
    $region93: #{hipposiam_forward.1} parent=1 // pred_fallthru
      _
    // Predicated region
    $region94: #{hipposiam_forward.1} parent=1 // pred_check
      _
    $region95: #{hipposiam_forward.1} parent=1 // pred_check_branch
      %6301 = sbr.rel (0) target = $region97
    $region96: #{hipposiam_forward.1} parent=1 // pred_region
      %6302 = dma.done [#allocation3], 16
    $region97: #{hipposiam_forward.1} parent=1 // pred_fallthru
      _
    %6303 = vsyncpa [#allocation3], 1

</llo_original>
